<compile_context>
chip_gen: v7x
topology: tpu7x:2x2x1
jax: 0.10.0
libtpu: 0.0.40
codegen_flags: <defaults>
</compile_context>

<pallas_src>
import functools

import jax
import jax.numpy as jnp
from jax.experimental import pallas as pl
from jax.experimental.pallas import tpu as pltpu

LN_EPS = 1e-5
_SQRT1_2 = 0.7071067811865476


# --------------------------------------------------------------------------
# small helpers
# --------------------------------------------------------------------------
def _row_tile(m, target=512):
    """Largest multiple-of-8 divisor of m that is <= target (or m itself)."""
    if m <= target:
        return m
    for t in range(target, 7, -1):
        if m % t == 0 and t % 8 == 0:
            return t
    return m


def _ln(x, gamma, beta):
    mu = jnp.mean(x, axis=-1, keepdims=True)
    xc = x - mu
    var = jnp.mean(xc * xc, axis=-1, keepdims=True)
    return xc * jax.lax.rsqrt(var + LN_EPS) * gamma + beta


def _gelu_exact(x):
    # Matches torch.nn.GELU(approximate='none').
    # TODO(synk): applied at the JAX level between the two Pallas matmuls of each
    # MLP; Mosaic has no guaranteed erf lowering to fuse it inside the kernel.
    return 0.5 * x * (1.0 + jax.scipy.special.erf(x * _SQRT1_2))


# --------------------------------------------------------------------------
# Pallas kernels + wrappers
# --------------------------------------------------------------------------
def _linear_kernel(x_ref, w_ref, b_ref, o_ref):
    acc = jnp.dot(x_ref[...], w_ref[...], preferred_element_type=jnp.float32)
    o_ref[...] = (acc + b_ref[...]).astype(o_ref.dtype)


def linear(x, w, b=None):
    """x:(M,K) @ w:(K,N) (+ b:(N,)) -> (M,N).  Used for all 1x1 convs / Linear."""
    m, k = x.shape
    n = w.shape[1]
    if b is None:
        b = jnp.zeros((n,), x.dtype)
    tm = _row_tile(m)
    return pl.pallas_call(
        _linear_kernel,
        out_shape=jax.ShapeDtypeStruct((m, n), x.dtype),
        grid_spec=pl.GridSpec(
            grid=(m // tm,),
            in_specs=[
                pl.BlockSpec((tm, k), lambda i: (i, 0)),
                pl.BlockSpec((k, n), lambda i: (0, 0)),
                pl.BlockSpec((1, n), lambda i: (0, 0)),
            ],
            out_specs=pl.BlockSpec((tm, n), lambda i: (i, 0)),
        ),
        compiler_params=pltpu.CompilerParams(dimension_semantics=("parallel",)),
    )(x, w, b.reshape(1, n).astype(x.dtype))


def _bn_relu_linear_kernel(x_ref, s_ref, t_ref, w_ref, o_ref):
    h = jnp.maximum(x_ref[...] * s_ref[...] + t_ref[...], 0.0)
    o_ref[...] = jnp.dot(h, w_ref[...],
                         preferred_element_type=jnp.float32).astype(o_ref.dtype)


def bn_relu_linear(x, scale, shift, w):
    """Folded eval-mode BatchNorm2d + ReLU + 1x1 conv on channel-last rows."""
    m, c = x.shape
    n = w.shape[1]
    tm = _row_tile(m)
    return pl.pallas_call(
        _bn_relu_linear_kernel,
        out_shape=jax.ShapeDtypeStruct((m, n), x.dtype),
        grid_spec=pl.GridSpec(
            grid=(m // tm,),
            in_specs=[
                pl.BlockSpec((tm, c), lambda i: (i, 0)),
                pl.BlockSpec((1, c), lambda i: (0, 0)),
                pl.BlockSpec((1, c), lambda i: (0, 0)),
                pl.BlockSpec((c, n), lambda i: (0, 0)),
            ],
            out_specs=pl.BlockSpec((tm, n), lambda i: (i, 0)),
        ),
        compiler_params=pltpu.CompilerParams(dimension_semantics=("parallel",)),
    )(x, scale.reshape(1, c), shift.reshape(1, c), w)


def _ln_linear_kernel(x_ref, g_ref, be_ref, w_ref, b_ref, o_ref):
    h = _ln(x_ref[...].astype(jnp.float32), g_ref[...], be_ref[...])
    acc = jnp.dot(h, w_ref[...], preferred_element_type=jnp.float32) + b_ref[...]
    o_ref[...] = acc.astype(o_ref.dtype)


def ln_linear(x, gamma, beta, w, b=None):
    """Fused LayerNorm (last dim) + Linear."""
    m, k = x.shape
    n = w.shape[1]
    if b is None:
        b = jnp.zeros((n,), x.dtype)
    tm = _row_tile(m)
    return pl.pallas_call(
        _ln_linear_kernel,
        out_shape=jax.ShapeDtypeStruct((m, n), x.dtype),
        grid_spec=pl.GridSpec(
            grid=(m // tm,),
            in_specs=[
                pl.BlockSpec((tm, k), lambda i: (i, 0)),
                pl.BlockSpec((1, k), lambda i: (0, 0)),
                pl.BlockSpec((1, k), lambda i: (0, 0)),
                pl.BlockSpec((k, n), lambda i: (0, 0)),
                pl.BlockSpec((1, n), lambda i: (0, 0)),
            ],
            out_specs=pl.BlockSpec((tm, n), lambda i: (i, 0)),
        ),
        compiler_params=pltpu.CompilerParams(dimension_semantics=("parallel",)),
    )(x, gamma.reshape(1, k), beta.reshape(1, k), w, b.reshape(1, n).astype(x.dtype))


def _layernorm_kernel(x_ref, g_ref, b_ref, o_ref):
    o_ref[...] = _ln(x_ref[...].astype(jnp.float32),
                     g_ref[...], b_ref[...]).astype(o_ref.dtype)


def layernorm(x, gamma, beta):
    m, k = x.shape
    tm = _row_tile(m)
    return pl.pallas_call(
        _layernorm_kernel,
        out_shape=jax.ShapeDtypeStruct((m, k), x.dtype),
        grid_spec=pl.GridSpec(
            grid=(m // tm,),
            in_specs=[
                pl.BlockSpec((tm, k), lambda i: (i, 0)),
                pl.BlockSpec((1, k), lambda i: (0, 0)),
                pl.BlockSpec((1, k), lambda i: (0, 0)),
            ],
            out_specs=pl.BlockSpec((tm, k), lambda i: (i, 0)),
        ),
        compiler_params=pltpu.CompilerParams(dimension_semantics=("parallel",)),
    )(x, gamma.reshape(1, k), beta.reshape(1, k))


def _sub_l2norm_kernel(a_ref, c_ref, o_ref):
    d = a_ref[...] - c_ref[...]
    nrm = jnp.sqrt(jnp.sum(d * d, axis=-1, keepdims=True))
    o_ref[...] = (d / (nrm + 1e-7)).astype(o_ref.dtype)


def sub_l2norm(a, c):
    """a:(Ga,S,D) with Ga in {1,G};  c:(G,1,D)  ->  (a - c)/||a - c||  (G,S,D)."""
    ga, s, d = a.shape
    g = c.shape[0]
    a_map = (lambda i: (0, 0, 0)) if ga == 1 else (lambda i: (i, 0, 0))
    return pl.pallas_call(
        _sub_l2norm_kernel,
        out_shape=jax.ShapeDtypeStruct((g, s, d), a.dtype),
        grid_spec=pl.GridSpec(
            grid=(g,),
            in_specs=[
                pl.BlockSpec((None, s, d), a_map),
                pl.BlockSpec((None, 1, d), lambda i: (i, 0, 0)),
            ],
            out_specs=pl.BlockSpec((None, s, d), lambda i: (i, 0, 0)),
        ),
        compiler_params=pltpu.CompilerParams(dimension_semantics=("parallel",)),
    )(a, c)


def _mh_attn_kernel(q_ref, k_ref, v_ref, o_ref, *, heads, dim_head, scale):
    outs = []
    for h in range(heads):                    # static unroll over heads
        sl = pl.ds(h * dim_head, dim_head)
        q = q_ref[:, sl].astype(jnp.float32)
        k = k_ref[:, sl].astype(jnp.float32)
        v = v_ref[:, sl].astype(jnp.float32)
        s = scale * jax.lax.dot_general(
            q, k, (((1,), (1,)), ((), ())), preferred_element_type=jnp.float32)
        s = s - jnp.max(s, axis=-1, keepdims=True)
        p = jnp.exp(s)
        p = p / jnp.sum(p, axis=-1, keepdims=True)
        outs.append(jnp.dot(p, v, preferred_element_type=jnp.float32))
    # single full-width store of all heads
    o_ref[...] = jnp.concatenate(outs, axis=-1).astype(o_ref.dtype)


def mh_window_attention(q, k, v, heads, dim_head, scale):
    """q:(G,Sq,heads*dh), k/v:(G,Sk,heads*dh) -> (G,Sq,heads*dh); grid over windows."""
    g, sq, hd = q.shape
    sk = k.shape[1]
    kern = functools.partial(_mh_attn_kernel, heads=heads, dim_head=dim_head,
                             scale=scale)
    return pl.pallas_call(
        kern,
        out_shape=jax.ShapeDtypeStruct((g, sq, hd), q.dtype),
        grid_spec=pl.GridSpec(
            grid=(g,),
            in_specs=[
                pl.BlockSpec((None, sq, hd), lambda i: (i, 0, 0)),
                pl.BlockSpec((None, sk, hd), lambda i: (i, 0, 0)),
                pl.BlockSpec((None, sk, hd), lambda i: (i, 0, 0)),
            ],
            out_specs=pl.BlockSpec((None, sq, hd), lambda i: (i, 0, 0)),
        ),
        compiler_params=pltpu.CompilerParams(dimension_semantics=("parallel",)),
    )(q, k, v)


# --------------------------------------------------------------------------
# pure-jnp reference ops (same signatures) -> used to verify the Pallas path
# --------------------------------------------------------------------------
def _ref_linear(x, w, b=None):
    y = jnp.dot(x, w)
    return y if b is None else y + b


def _ref_bn_relu_linear(x, scale, shift, w):
    return jnp.dot(jnp.maximum(x * scale + shift, 0.0), w)


def _ref_ln_linear(x, gamma, beta, w, b=None):
    y = jnp.dot(_ln(x, gamma, beta), w)
    return y if b is None else y + b


def _ref_layernorm(x, gamma, beta):
    return _ln(x, gamma, beta)


def _ref_sub_l2norm(a, c):
    d = a - c
    return d / (jnp.sqrt(jnp.sum(d * d, axis=-1, keepdims=True)) + 1e-7)


def _ref_mh_window_attention(q, k, v, heads, dim_head, scale):
    g, sq, hd = q.shape
    qh = q.reshape(g, sq, heads, dim_head).transpose(0, 2, 1, 3)
    kh = k.reshape(g, -1, heads, dim_head).transpose(0, 2, 1, 3)
    vh = v.reshape(g, -1, heads, dim_head).transpose(0, 2, 1, 3)
    s = scale * jnp.einsum('ghqd,ghkd->ghqk', qh, kh)
    s = s - jnp.max(s, axis=-1, keepdims=True)
    p = jnp.exp(s)
    p = p / jnp.sum(p, axis=-1, keepdims=True)
    o = jnp.einsum('ghqk,ghkd->ghqd', p, vh)
    return o.transpose(0, 2, 1, 3).reshape(g, sq, hd)


PALLAS_OPS = dict(linear=linear, bn_relu_linear=bn_relu_linear, ln_linear=ln_linear,
                  layernorm=layernorm, sub_l2norm=sub_l2norm,
                  mh_attention=mh_window_attention)
REF_OPS = dict(linear=_ref_linear, bn_relu_linear=_ref_bn_relu_linear,
               ln_linear=_ref_ln_linear, layernorm=_ref_layernorm,
               sub_l2norm=_ref_sub_l2norm, mh_attention=_ref_mh_window_attention)


# --------------------------------------------------------------------------
# geometry buffers (generate_grid / get_view_matrix / BEVEmbedding.grid0)
# --------------------------------------------------------------------------
def generate_grid(height, width):
    xs = jnp.linspace(0.0, 1.0, width)
    ys = jnp.linspace(0.0, 1.0, height)
    gx, gy = jnp.meshgrid(xs, ys, indexing='xy')           # (height, width)
    ind = jnp.stack([gx, gy], axis=0)
    ind = jnp.concatenate([ind, jnp.ones((1, height, width), jnp.float32)], axis=0)
    return ind[None].astype(jnp.float32)                   # (1, 3, h, w)


def get_view_matrix(h, w, h_meters, w_meters, offset):
    sh = h / h_meters
    sw = w / w_meters
    return jnp.array([[0.0, -sw, w / 2.0],
                      [-sh, 0.0, h * offset + h / 2.0],
                      [0.0, 0.0, 1.0]], jnp.float32)


def build_bev_grid(bev_h, bev_w, h_meters, w_meters, offset, scale):
    v = get_view_matrix(bev_h, bev_w, h_meters, w_meters, offset)
    v_inv = jnp.linalg.inv(v)
    h, w = bev_h // scale, bev_w // scale
    grid = generate_grid(h, w)[0]                           # (3, h, w)
    grid = grid.at[0].multiply(float(bev_w))
    grid = grid.at[1].multiply(float(bev_h))
    grid = (v_inv @ grid.reshape(3, h * w)).reshape(3, h, w)
    return grid


# --------------------------------------------------------------------------
# window helpers (channel-last)
# --------------------------------------------------------------------------
def _window(t, w1, w2):
    # (..., H, W, d) -> (..., H//w1, W//w2, w1, w2, d)   ['(x w1) (y w2)' split]
    *lead, H, W, d = t.shape
    x, y = H // w1, W // w2
    t = t.reshape(*lead, x, w1, y, w2, d)
    nl = len(lead)
    perm = list(range(nl)) + [nl, nl + 2, nl + 1, nl + 3, nl + 4]
    return jnp.transpose(t, perm)


def _unwindow(t):
    # (..., x, y, w1, w2, d) -> (..., x*w1, y*w2, d)
    *lead, x, y, w1, w2, d = t.shape
    nl = len(lead)
    perm = list(range(nl)) + [nl, nl + 2, nl + 1, nl + 3, nl + 4]
    return jnp.transpose(t, perm).reshape(*lead, x * w1, y * w2, d)


def _pad_divisible(t, win_h, win_w):
    # t: (b, n, h, w, d) channel-last; pads h/w at the end (== F.pad in torch code)
    h, w = t.shape[2], t.shape[3]
    padh = (-h) % win_h
    padw = (-w) % win_w
    if padh == 0 and padw == 0:
        return t
    return jnp.pad(t, ((0, 0), (0, 0), (0, padh), (0, padw), (0, 0)))


# --------------------------------------------------------------------------
# CrossWinAttention / MLP block / CrossViewSwapAttention forward
# --------------------------------------------------------------------------
def cross_win_attention(ops, ap, heads, dim_head, q7, k7, v7, skip):
    b_, n_, X, Y, W1, W2, d = q7.shape
    _, _, kx, ky, w1, w2, _ = k7.shape
    assert X * Y == kx * ky
    L = X * Y
    hd = heads * dim_head
    Sq = n_ * W1 * W2
    Sk = n_ * w1 * w2

    # 'b n x y w1 w2 d -> b (x y) (n w1 w2) d'
    q = q7.transpose(0, 2, 3, 1, 4, 5, 6).reshape(b_ * L, Sq, d)
    k = k7.transpose(0, 2, 3, 1, 4, 5, 6).reshape(b_ * L, Sk, d)
    v = v7.transpose(0, 2, 3, 1, 4, 5, 6).reshape(b_ * L, Sk, d)

    qp = ops['ln_linear'](q.reshape(-1, d), ap['q_ln_g'], ap['q_ln_b'],
                          ap['q_w'], ap['q_b']).reshape(b_ * L, Sq, hd)
    kp = ops['ln_linear'](k.reshape(-1, d), ap['k_ln_g'], ap['k_ln_b'],
                          ap['k_w'], ap['k_b']).reshape(b_ * L, Sk, hd)
    vp = ops['ln_linear'](v.reshape(-1, d), ap['v_ln_g'], ap['v_ln_b'],
                          ap['v_w'], ap['v_b']).reshape(b_ * L, Sk, hd)

    scale = float(dim_head) ** (-0.5)
    a = ops['mh_attention'](qp, kp, vp, heads, dim_head, scale)   # (b*L, Sq, hd)

    # 'b (x y) (n w1 w2) hd -> b n x y w1 w2 hd'
    a = a.reshape(b_, X, Y, n_, W1, W2, hd).transpose(0, 3, 1, 2, 4, 5, 6)
    z = ops['linear'](a.reshape(-1, hd), ap['proj_w'], ap['proj_b'])
    z = z.reshape(b_, n_, X, Y, W1, W2, d)
    z = jnp.mean(z, axis=1)                                       # mean over cameras
    if skip is not None:
        z = z + skip
    return z


def mlp_block(ops, x2d, g, be, w1, b1, w2, b2):
    # x + fc2(GELU(fc1(LayerNorm(x))))  -- prenorm + MLP + residual
    h = ops['ln_linear'](x2d, g, be, w1, b1)
    h = _gelu_exact(h)
    return x2d + ops['linear'](h, w2, b2)


def cross_view_swap_attention(ops, cfg, params, x, feature, I_inv, E_inv):
    # NOTE: the torch module's debug print of object_count is intentionally omitted.
    p = params
    b_, n_, feat_dim, fh, fw = feature.shape
    _, dim, H, W = x.shape
    bn = b_ * n_
    qw1, qw2 = cfg['q_win_size']
    fwin1, fwin2 = cfg['feat_win_size']
    heads, dim_head = cfg['heads'], cfg['dim_head']

    # ---- camera / image-plane geometric embeddings ----
    pixel_flat = p['image_plane'].reshape(1, 1, 3, fh * fw)
    c_rows = E_inv[..., -1].reshape(bn, 4)
    c_embed = ops['linear'](c_rows, p['cam_embed_w']).reshape(bn, 1, dim)

    cam = jnp.matmul(I_inv, pixel_flat)                               # (b, n, 3, h*w)
    cam = jnp.concatenate(
        [cam, jnp.ones((b_, n_, 1, fh * fw), cam.dtype)], axis=2)     # homogeneous pad
    d = jnp.matmul(E_inv, cam)                                        # (b, n, 4, h*w)
    d_rows = d.transpose(0, 1, 3, 2).reshape(bn * fh * fw, 4)
    d_embed = ops['linear'](d_rows, p['img_embed_w']).reshape(bn, fh * fw, dim)
    img_embed = ops['sub_l2norm'](d_embed, c_embed)                   # (bn, h*w, dim)

    # ---- BEV positional embedding (bev_embedding_flag = True) ----
    world = p['grid0'][:2]                                            # (2, H, W)
    w_rows = world.transpose(1, 2, 0).reshape(H * W, 2)
    w_embed = ops['linear'](w_rows, p['bev_embed_w'],
                            p['bev_embed_b']).reshape(1, H * W, dim)
    bev_embed = ops['sub_l2norm'](w_embed, c_embed)                   # (bn, H*W, dim)
    query_pos = bev_embed.reshape(b_, n_, H, W, dim)

    # ---- image features -> key / value ----
    feat_rows = feature.transpose(0, 1, 3, 4, 2).reshape(bn * fh * fw, feat_dim)
    key_flat = img_embed + ops['bn_relu_linear'](
        feat_rows, p['fproj_bn_scale'], p['fproj_bn_shift'], p['fproj_w']
    ).reshape(bn, fh * fw, dim)
    val_flat = ops['bn_relu_linear'](
        feat_rows, p['flin_bn_scale'], p['flin_bn_shift'], p['flin_w']
    ).reshape(bn, fh * fw, dim)

    # ---- query / key / value windowing ----
    x_cl = x.transpose(0, 2, 3, 1)                                    # (b, H, W, dim)
    query = query_pos + x_cl[:, None]                                 # (b, n, H, W, dim)

    key = key_flat.reshape(b_, n_, fh, fw, dim)
    val = val_flat.reshape(b_, n_, fh, fw, dim)
    key = _pad_divisible(key, fwin1, fwin2)
    val = _pad_divisible(val, fwin1, fwin2)
    kh, kw = key.shape[2], key.shape[3]

    q_w = _window(query, qw1, qw2)
    k_w = _window(key, fwin1, fwin2)
    v_w = _window(val, fwin1, fwin2)
    skip1 = _window(x_cl, qw1, qw2) if cfg['skip'] else None

    # ---- stage 1: cross-window attention + MLP ----
    z = cross_win_attention(ops, p['attn1'], heads, dim_head, q_w, k_w, v_w, skip1)
    q_flat = mlp_block(ops, _unwindow(z).reshape(b_ * H * W, dim),
                       p['pre1_g'], p['pre1_b'],
                       p['mlp1_w1'], p['mlp1_b1'], p['mlp1_w2'], p['mlp1_b2'])
    q2d = q_flat.reshape(b_, H, W, dim)
    x_skip = q2d

    # ---- stage 2: swapped windows ----
    q_rep = jnp.broadcast_to(q2d[:, None], (b_, n_, H, W, dim))
    q_w2 = _window(q_rep, qw1, qw2)

    def swap_windows(t_w):
        merged = _unwindow(t_w)                         # (b, n, kh, kw, d)
        x2, y2 = kh // fwin1, kw // fwin2
        # '(w1 x) (w2 y)' re-split: window size becomes the *outer* factor
        tt = merged.reshape(b_, n_, fwin1, x2, fwin2, y2, dim)
        return tt.transpose(0, 1, 3, 5, 2, 4, 6)        # (b, n, x2, y2, w1, w2, d)

    k_w2 = swap_windows(k_w)
    v_w2 = swap_windows(v_w)
    skip2 = _window(x_skip, qw1, qw2) if cfg['skip'] else None

    z2 = cross_win_attention(ops, p['attn2'], heads, dim_head, q_w2, k_w2, v_w2, skip2)
    q_flat = mlp_block(ops, _unwindow(z2).reshape(b_ * H * W, dim),
                       p['pre2_g'], p['pre2_b'],
                       p['mlp2_w1'], p['mlp2_b1'], p['mlp2_w2'], p['mlp2_b2'])
    q_flat = ops['layernorm'](q_flat, p['post_g'], p['post_b'])
    return q_flat.reshape(b_, H, W, dim).transpose(0, 3, 1, 2)        # (b, dim, H, W)


# --------------------------------------------------------------------------
# deterministic parameter construction
# --------------------------------------------------------------------------
def init_params(key, cfg):
    dim, feat_dim = cfg['dim'], cfg['feat_dim']
    heads, dh = cfg['heads'], cfg['dim_head']
    hd = heads * dh
    keys = iter(jax.random.split(key, 128))

    def rnd(shape, s=1.0):
        return (s * jax.random.normal(next(keys), shape)).astype(jnp.float32)

    def ln_pair(d_):
        return 1.0 + 0.1 * rnd((d_,)), 0.1 * rnd((d_,))

    def folded_bn(c):
        # eval-mode BatchNorm2d folded into per-channel scale / shift
        gamma = 1.0 + 0.1 * rnd((c,))
        beta = 0.1 * rnd((c,))
        mean = 0.1 * rnd((c,))
        var = 1.0 + 0.1 * jnp.abs(rnd((c,)))
        scale = gamma * jax.lax.rsqrt(var + 1e-5)
        shift = beta - mean * scale
        return scale, shift

    def attn_block():
        qg, qb = ln_pair(dim)
        kg, kb = ln_pair(dim)
        vg, vb = ln_pair(dim)
        return dict(
            q_ln_g=qg, q_ln_b=qb, q_w=0.2 * rnd((dim, hd)), q_b=0.05 * rnd((hd,)),
            k_ln_g=kg, k_ln_b=kb, k_w=0.2 * rnd((dim, hd)), k_b=0.05 * rnd((hd,)),
            v_ln_g=vg, v_ln_b=vb, v_w=0.2 * rnd((dim, hd)), v_b=0.05 * rnd((hd,)),
            proj_w=0.2 * rnd((hd, dim)), proj_b=0.05 * rnd((dim,)),
        )

    fproj_s, fproj_t = folded_bn(feat_dim)
    flin_s, flin_t = folded_bn(feat_dim)
    pre1_g, pre1_b = ln_pair(dim)
    pre2_g, pre2_b = ln_pair(dim)
    post_g, post_b = ln_pair(dim)

    image_plane = generate_grid(cfg['feat_height'], cfg['feat_width'])[None]
    image_plane = image_plane.at[:, :, 0].multiply(float(cfg['image_width']))
    image_plane = image_plane.at[:, :, 1].multiply(float(cfg['image_height']))
    grid0 = build_bev_grid(cfg['bev_height'], cfg['bev_width'], cfg['h_meters'],
                           cfg['w_meters'], cfg['offset'], cfg['upsample_scale'])

    return dict(
        image_plane=image_plane, grid0=grid0,
        cam_embed_w=0.3 * rnd((4, dim)),
        img_embed_w=0.3 * rnd((4, dim)),
        bev_embed_w=0.3 * rnd((2, dim)), bev_embed_b=0.05 * rnd((dim,)),
        fproj_bn_scale=fproj_s, fproj_bn_shift=fproj_t, fproj_w=0.2 * rnd((feat_dim, dim)),
        flin_bn_scale=flin_s, flin_bn_shift=flin_t, flin_w=0.2 * rnd((feat_dim, dim)),
        attn1=attn_block(), attn2=attn_block(),
        pre1_g=pre1_g, pre1_b=pre1_b,
        mlp1_w1=0.2 * rnd((dim, 2 * dim)), mlp1_b1=0.05 * rnd((2 * dim,)),
        mlp1_w2=0.2 * rnd((2 * dim, dim)), mlp1_b2=0.05 * rnd((dim,)),
        pre2_g=pre2_g, pre2_b=pre2_b,
        mlp2_w1=0.2 * rnd((dim, 2 * dim)), mlp2_b1=0.05 * rnd((2 * dim,)),
        mlp2_w2=0.2 * rnd((2 * dim, dim)), mlp2_b2=0.05 * rnd((dim,)),
        post_g=post_g, post_b=post_b,
    )


# --------------------------------------------------------------------------
# test
# --------------------------------------------------------------------------
if __name__ == "__main__":
    cfg = dict(
        batch=1, n_cameras=2,
        dim=32, feat_dim=16,
        bev_height=16, bev_width=16, upsample_scale=1,
        feat_height=8, feat_width=8,
        image_height=64, image_width=64,
        q_win_size=(8, 8), feat_win_size=(4, 4),
        heads=4, dim_head=8,
        h_meters=100.0, w_meters=100.0, offset=0.0,
        skip=True,
    )
    b_, n_ = cfg['batch'], cfg['n_cameras']
    H, W = cfg['bev_height'], cfg['bev_width']

    root = jax.random.PRNGKey(0)
    kp, kx, kf, ke = jax.random.split(root, 4)

    params = init_params(kp, cfg)
    x = jax.random.normal(kx, (b_, cfg['dim'], H, W), jnp.float32)
    feature = jax.random.normal(
        kf, (b_, n_, cfg['feat_dim'], cfg['feat_height'], cfg['feat_width']), jnp.float32)

    focal = 48.0
    intrinsics = jnp.array([[focal, 0.0, cfg['image_width'] / 2.0],
                            [0.0, focal, cfg['image_height'] / 2.0],
                            [0.0, 0.0, 1.0]], jnp.float32)
    I_inv = jnp.broadcast_to(jnp.linalg.inv(intrinsics), (b_, n_, 3, 3))
    E_inv = (jnp.broadcast_to(jnp.eye(4, dtype=jnp.float32), (b_, n_, 4, 4))
             + 0.05 * jax.random.normal(ke, (b_, n_, 4, 4), jnp.float32))

    fwd_pallas = jax.jit(functools.partial(cross_view_swap_attention, PALLAS_OPS, cfg))
    fwd_ref = jax.jit(functools.partial(cross_view_swap_attention, REF_OPS, cfg))

    out = jax.block_until_ready(fwd_pallas(params, x, feature, I_inv, E_inv))
    ref = jax.block_until_ready(fwd_ref(params, x, feature, I_inv, E_inv))

    assert out.shape == (b_, cfg['dim'], H, W) and out.dtype == jnp.float32
    assert bool(jnp.all(jnp.isfinite(out)))
    max_err = float(jnp.max(jnp.abs(out - ref)))
    assert jnp.allclose(out, ref, atol=3e-3, rtol=3e-3), max_err

    print("KERNEL_OK")
</pallas_src>

<mosaic_0001>
module attributes {stable_mosaic.version = 11 : i64} {
  func.func @_linear_kernel(%arg0: i32, %arg1: memref<2x4xf32, #tpu.memory_space<vmem>>, %arg2: memref<4x32xf32, #tpu.memory_space<vmem>>, %arg3: memref<1x32xf32, #tpu.memory_space<vmem>>, %arg4: memref<2x32xf32, #tpu.memory_space<vmem>>) attributes {dimension_semantics = [#tpu.dimension_semantics<parallel>], iteration_bounds = array<i64: 1>, scalar_prefetch = 0 : i64, scratch_operands = 0 : i64, tpu.core_type = #tpu.core_type<tc>, window_params = [{transform_indices = @transform_0, window_bounds = array<i64: 2, 4>}, {pipeline_mode = #tpu.pipeline_mode<synchronous>, transform_indices = @transform_1, window_bounds = array<i64: 4, 32>}, {pipeline_mode = #tpu.pipeline_mode<synchronous>, transform_indices = @transform_2, window_bounds = array<i64: 1, 32>}, {transform_indices = @transform_3, window_bounds = array<i64: 2, 32>}]} {
    %c0 = arith.constant 0 : index
    %c0_0 = arith.constant 0 : index
    %0 = vector.load %arg1[%c0, %c0_0] : memref<2x4xf32, #tpu.memory_space<vmem>>, vector<2x4xf32>
    %c0_1 = arith.constant 0 : index
    %c0_2 = arith.constant 0 : index
    %1 = vector.load %arg2[%c0_1, %c0_2] : memref<4x32xf32, #tpu.memory_space<vmem>>, vector<4x32xf32>
    %cst = arith.constant dense<0.000000e+00> : vector<2x32xf32>
    %2 = tpu.matmul %0, %1, %cst {dimension_numbers = #tpu.dot_dimension_numbers<[1], [0], [0], [1], [0, 0, 1, 1], [], []>} : vector<2x4xf32>, vector<4x32xf32>, vector<2x32xf32> -> vector<2x32xf32>
    %c0_3 = arith.constant 0 : index
    %c0_4 = arith.constant 0 : index
    %3 = vector.load %arg3[%c0_3, %c0_4] : memref<1x32xf32, #tpu.memory_space<vmem>>, vector<1x32xf32>
    %4 = vector.broadcast %3 : vector<1x32xf32> to vector<2x32xf32>
    %5 = arith.addf %2, %4 : vector<2x32xf32>
    %c0_5 = arith.constant 0 : index
    %c0_6 = arith.constant 0 : index
    %6 = vector.load %arg4[%c0_5, %c0_6] : memref<2x32xf32, #tpu.memory_space<vmem>>, vector<2x32xf32>
    tpu.vector_store %arg4[%c0_5, %c0_6], %5 {strides = array<i32>} : memref<2x32xf32, #tpu.memory_space<vmem>>, vector<2x32xf32>,
    return
  }
  func.func @transform_0(%arg0: i32) -> (i32, i32) {
    %c0_i32 = arith.constant 0 : i32
    %c0_i32_0 = arith.constant 0 : i32
    return %arg0, %c0_i32 : i32, i32
  }
  func.func @transform_1(%arg0: i32) -> (i32, i32) {
    %c0_i32 = arith.constant 0 : i32
    %c0_i32_0 = arith.constant 0 : i32
    %c0_i32_1 = arith.constant 0 : i32
    return %c0_i32, %c0_i32_0 : i32, i32
  }
  func.func @transform_2(%arg0: i32) -> (i32, i32) {
    %c0_i32 = arith.constant 0 : i32
    %c0_i32_0 = arith.constant 0 : i32
    %c0_i32_1 = arith.constant 0 : i32
    return %c0_i32, %c0_i32_0 : i32, i32
  }
  func.func @transform_3(%arg0: i32) -> (i32, i32) {
    %c0_i32 = arith.constant 0 : i32
    %c0_i32_0 = arith.constant 0 : i32
    return %arg0, %c0_i32 : i32, i32
  }
}

module attributes {stable_mosaic.version = 11 : i64} {
  func.func @_linear_kernel(%arg0: i32, %arg1: memref<128x4xf32, #tpu.memory_space<vmem>>, %arg2: memref<4x32xf32, #tpu.memory_space<vmem>>, %arg3: memref<1x32xf32, #tpu.memory_space<vmem>>, %arg4: memref<128x32xf32, #tpu.memory_space<vmem>>) attributes {dimension_semantics = [#tpu.dimension_semantics<parallel>], iteration_bounds = array<i64: 1>, scalar_prefetch = 0 : i64, scratch_operands = 0 : i64, tpu.core_type = #tpu.core_type<tc>, window_params = [{transform_indices = @transform_0, window_bounds = array<i64: 128, 4>}, {pipeline_mode = #tpu.pipeline_mode<synchronous>, transform_indices = @transform_1, window_bounds = array<i64: 4, 32>}, {pipeline_mode = #tpu.pipeline_mode<synchronous>, transform_indices = @transform_2, window_bounds = array<i64: 1, 32>}, {transform_indices = @transform_3, window_bounds = array<i64: 128, 32>}]} {
    %c0 = arith.constant 0 : index
    %c0_0 = arith.constant 0 : index
    %0 = vector.load %arg1[%c0, %c0_0] : memref<128x4xf32, #tpu.memory_space<vmem>>, vector<128x4xf32>
    %c0_1 = arith.constant 0 : index
    %c0_2 = arith.constant 0 : index
    %1 = vector.load %arg2[%c0_1, %c0_2] : memref<4x32xf32, #tpu.memory_space<vmem>>, vector<4x32xf32>
    %cst = arith.constant dense<0.000000e+00> : vector<128x32xf32>
    %2 = tpu.matmul %0, %1, %cst {dimension_numbers = #tpu.dot_dimension_numbers<[1], [0], [0], [1], [0, 0, 1, 1], [], []>} : vector<128x4xf32>, vector<4x32xf32>, vector<128x32xf32> -> vector<128x32xf32>
    %c0_3 = arith.constant 0 : index
    %c0_4 = arith.constant 0 : index
    %3 = vector.load %arg3[%c0_3, %c0_4] : memref<1x32xf32, #tpu.memory_space<vmem>>, vector<1x32xf32>
    %4 = vector.broadcast %3 : vector<1x32xf32> to vector<128x32xf32>
    %5 = arith.addf %2, %4 : vector<128x32xf32>
    %c0_5 = arith.constant 0 : index
    %c0_6 = arith.constant 0 : index
    %6 = vector.load %arg4[%c0_5, %c0_6] : memref<128x32xf32, #tpu.memory_space<vmem>>, vector<128x32xf32>
    tpu.vector_store %arg4[%c0_5, %c0_6], %5 {strides = array<i32>} : memref<128x32xf32, #tpu.memory_space<vmem>>, vector<128x32xf32>,
    return
  }
  func.func @transform_0(%arg0: i32) -> (i32, i32) {
    %c0_i32 = arith.constant 0 : i32
    %c0_i32_0 = arith.constant 0 : i32
    return %arg0, %c0_i32 : i32, i32
  }
  func.func @transform_1(%arg0: i32) -> (i32, i32) {
    %c0_i32 = arith.constant 0 : i32
    %c0_i32_0 = arith.constant 0 : i32
    %c0_i32_1 = arith.constant 0 : i32
    return %c0_i32, %c0_i32_0 : i32, i32
  }
  func.func @transform_2(%arg0: i32) -> (i32, i32) {
    %c0_i32 = arith.constant 0 : i32
    %c0_i32_0 = arith.constant 0 : i32
    %c0_i32_1 = arith.constant 0 : i32
    return %c0_i32, %c0_i32_0 : i32, i32
  }
  func.func @transform_3(%arg0: i32) -> (i32, i32) {
    %c0_i32 = arith.constant 0 : i32
    %c0_i32_0 = arith.constant 0 : i32
    return %arg0, %c0_i32 : i32, i32
  }
}

module attributes {stable_mosaic.version = 11 : i64} {
  func.func @_sub_l2norm_kernel(%arg0: i32, %arg1: memref<1x64x32xf32, #tpu.memory_space<vmem>>, %arg2: memref<1x1x32xf32, #tpu.memory_space<vmem>>, %arg3: memref<1x64x32xf32, #tpu.memory_space<vmem>>) attributes {dimension_semantics = [#tpu.dimension_semantics<parallel>], iteration_bounds = array<i64: 2>, scalar_prefetch = 0 : i64, scratch_operands = 0 : i64, tpu.core_type = #tpu.core_type<tc>, window_params = [{transform_indices = @transform_0, window_bounds = array<i64: 1, 64, 32>}, {transform_indices = @transform_1, window_bounds = array<i64: 1, 1, 32>}, {transform_indices = @transform_2, window_bounds = array<i64: 1, 64, 32>}]} {
    %c0 = arith.constant 0 : index
    %c0_0 = arith.constant 0 : index
    %c0_1 = arith.constant 0 : index
    %0 = vector.load %arg1[%c0, %c0_0, %c0_1] : memref<1x64x32xf32, #tpu.memory_space<vmem>>, vector<1x64x32xf32>
    %1 = vector.shape_cast %0 : vector<1x64x32xf32> to vector<64x32xf32>
    %c0_2 = arith.constant 0 : index
    %c0_3 = arith.constant 0 : index
    %c0_4 = arith.constant 0 : index
    %2 = vector.load %arg2[%c0_2, %c0_3, %c0_4] : memref<1x1x32xf32, #tpu.memory_space<vmem>>, vector<1x1x32xf32>
    %3 = vector.shape_cast %2 : vector<1x1x32xf32> to vector<1x32xf32>
    %4 = vector.broadcast %3 : vector<1x32xf32> to vector<64x32xf32>
    %5 = arith.subf %1, %4 : vector<64x32xf32>
    %6 = arith.mulf %5, %5 : vector<64x32xf32>
    %cst = arith.constant dense<0.000000e+00> : vector<64xf32>
    %7 = vector.multi_reduction <add>, %6, %cst [1] : vector<64x32xf32> to vector<64xf32>
    %8 = vector.shape_cast %7 : vector<64xf32> to vector<64x1xf32>
    %9 = math.sqrt %8 : vector<64x1xf32>
    %cst_5 = arith.constant 1.000000e-07 : f32
    %10 = vector.broadcast %cst_5 : f32 to vector<64x1xf32>
    %11 = arith.addf %9, %10 : vector<64x1xf32>
    %12 = vector.broadcast %11 : vector<64x1xf32> to vector<64x32xf32>
    %13 = arith.divf %5, %12 : vector<64x32xf32>
    %c0_6 = arith.constant 0 : index
    %c0_7 = arith.constant 0 : index
    %c0_8 = arith.constant 0 : index
    %14 = vector.load %arg3[%c0_6, %c0_7, %c0_8] : memref<1x64x32xf32, #tpu.memory_space<vmem>>, vector<1x64x32xf32>
    %15 = vector.shape_cast %14 : vector<1x64x32xf32> to vector<64x32xf32>
    %16 = vector.shape_cast %13 : vector<64x32xf32> to vector<1x64x32xf32>
    tpu.vector_store %arg3[%c0_6, %c0_7, %c0_8], %16 {strides = array<i32>} : memref<1x64x32xf32, #tpu.memory_space<vmem>>, vector<1x64x32xf32>,
    return
  }
  func.func @transform_0(%arg0: i32) -> (i32, i32, i32) {
    %c0_i32 = arith.constant 0 : i32
    %c0_i32_0 = arith.constant 0 : i32
    %c0_i32_1 = arith.constant 0 : i32
    return %arg0, %c0_i32, %c0_i32_0 : i32, i32, i32
  }
  func.func @transform_1(%arg0: i32) -> (i32, i32, i32) {
    %c0_i32 = arith.constant 0 : i32
    %c0_i32_0 = arith.constant 0 : i32
    %c0_i32_1 = arith.constant 0 : i32
    return %arg0, %c0_i32, %c0_i32_0 : i32, i32, i32
  }
  func.func @transform_2(%arg0: i32) -> (i32, i32, i32) {
    %c0_i32 = arith.constant 0 : i32
    %c0_i32_0 = arith.constant 0 : i32
    %c0_i32_1 = arith.constant 0 : i32
    return %arg0, %c0_i32, %c0_i32_0 : i32, i32, i32
  }
}

module attributes {stable_mosaic.version = 11 : i64} {
  func.func @_bn_relu_linear_kernel(%arg0: i32, %arg1: memref<128x16xf32, #tpu.memory_space<vmem>>, %arg2: memref<1x16xf32, #tpu.memory_space<vmem>>, %arg3: memref<1x16xf32, #tpu.memory_space<vmem>>, %arg4: memref<16x32xf32, #tpu.memory_space<vmem>>, %arg5: memref<128x32xf32, #tpu.memory_space<vmem>>) attributes {dimension_semantics = [#tpu.dimension_semantics<parallel>], iteration_bounds = array<i64: 1>, scalar_prefetch = 0 : i64, scratch_operands = 0 : i64, tpu.core_type = #tpu.core_type<tc>, window_params = [{transform_indices = @transform_0, window_bounds = array<i64: 128, 16>}, {pipeline_mode = #tpu.pipeline_mode<synchronous>, transform_indices = @transform_1, window_bounds = array<i64: 1, 16>}, {pipeline_mode = #tpu.pipeline_mode<synchronous>, transform_indices = @transform_2, window_bounds = array<i64: 1, 16>}, {pipeline_mode = #tpu.pipeline_mode<synchronous>, transform_indices = @transform_3, window_bounds = array<i64: 16, 32>}, {transform_indices = @transform_4, window_bounds = array<i64: 128, 32>}]} {
    %c0 = arith.constant 0 : index
    %c0_0 = arith.constant 0 : index
    %0 = vector.load %arg1[%c0, %c0_0] : memref<128x16xf32, #tpu.memory_space<vmem>>, vector<128x16xf32>
    %c0_1 = arith.constant 0 : index
    %c0_2 = arith.constant 0 : index
    %1 = vector.load %arg2[%c0_1, %c0_2] : memref<1x16xf32, #tpu.memory_space<vmem>>, vector<1x16xf32>
    %2 = vector.broadcast %1 : vector<1x16xf32> to vector<128x16xf32>
    %3 = arith.mulf %0, %2 : vector<128x16xf32>
    %c0_3 = arith.constant 0 : index
    %c0_4 = arith.constant 0 : index
    %4 = vector.load %arg3[%c0_3, %c0_4] : memref<1x16xf32, #tpu.memory_space<vmem>>, vector<1x16xf32>
    %5 = vector.broadcast %4 : vector<1x16xf32> to vector<128x16xf32>
    %6 = arith.addf %3, %5 : vector<128x16xf32>
    %cst = arith.constant 0.000000e+00 : f32
    %7 = vector.broadcast %cst : f32 to vector<128x16xf32>
    %8 = arith.maximumf %6, %7 : vector<128x16xf32>
    %c0_5 = arith.constant 0 : index
    %c0_6 = arith.constant 0 : index
    %9 = vector.load %arg4[%c0_5, %c0_6] : memref<16x32xf32, #tpu.memory_space<vmem>>, vector<16x32xf32>
    %cst_7 = arith.constant dense<0.000000e+00> : vector<128x32xf32>
    %10 = tpu.matmul %8, %9, %cst_7 {dimension_numbers = #tpu.dot_dimension_numbers<[1], [0], [0], [1], [0, 0, 1, 1], [], []>} : vector<128x16xf32>, vector<16x32xf32>, vector<128x32xf32> -> vector<128x32xf32>
    %c0_8 = arith.constant 0 : index
    %c0_9 = arith.constant 0 : index
    %11 = vector.load %arg5[%c0_8, %c0_9] : memref<128x32xf32, #tpu.memory_space<vmem>>, vector<128x32xf32>
    tpu.vector_store %arg5[%c0_8, %c0_9], %10 {strides = array<i32>} : memref<128x32xf32, #tpu.memory_space<vmem>>, vector<128x32xf32>,
    return
  }
  func.func @transform_0(%arg0: i32) -> (i32, i32) {
    %c0_i32 = arith.constant 0 : i32
    %c0_i32_0 = arith.constant 0 : i32
    return %arg0, %c0_i32 : i32, i32
  }
  func.func @transform_1(%arg0: i32) -> (i32, i32) {
    %c0_i32 = arith.constant 0 : i32
    %c0_i32_0 = arith.constant 0 : i32
    %c0_i32_1 = arith.constant 0 : i32
    return %c0_i32, %c0_i32_0 : i32, i32
  }
  func.func @transform_2(%arg0: i32) -> (i32, i32) {
    %c0_i32 = arith.constant 0 : i32
    %c0_i32_0 = arith.constant 0 : i32
    %c0_i32_1 = arith.constant 0 : i32
    return %c0_i32, %c0_i32_0 : i32, i32
  }
  func.func @transform_3(%arg0: i32) -> (i32, i32) {
    %c0_i32 = arith.constant 0 : i32
    %c0_i32_0 = arith.constant 0 : i32
    %c0_i32_1 = arith.constant 0 : i32
    return %c0_i32, %c0_i32_0 : i32, i32
  }
  func.func @transform_4(%arg0: i32) -> (i32, i32) {
    %c0_i32 = arith.constant 0 : i32
    %c0_i32_0 = arith.constant 0 : i32
    return %arg0, %c0_i32 : i32, i32
  }
}

module attributes {stable_mosaic.version = 11 : i64} {
  func.func @_ln_linear_kernel(%arg0: i32, %arg1: memref<128x32xf32, #tpu.memory_space<vmem>>, %arg2: memref<1x32xf32, #tpu.memory_space<vmem>>, %arg3: memref<1x32xf32, #tpu.memory_space<vmem>>, %arg4: memref<32x32xf32, #tpu.memory_space<vmem>>, %arg5: memref<1x32xf32, #tpu.memory_space<vmem>>, %arg6: memref<128x32xf32, #tpu.memory_space<vmem>>) attributes {dimension_semantics = [#tpu.dimension_semantics<parallel>], iteration_bounds = array<i64: 1>, scalar_prefetch = 0 : i64, scratch_operands = 0 : i64, tpu.core_type = #tpu.core_type<tc>, window_params = [{transform_indices = @transform_0, window_bounds = array<i64: 128, 32>}, {pipeline_mode = #tpu.pipeline_mode<synchronous>, transform_indices = @transform_1, window_bounds = array<i64: 1, 32>}, {pipeline_mode = #tpu.pipeline_mode<synchronous>, transform_indices = @transform_2, window_bounds = array<i64: 1, 32>}, {pipeline_mode = #tpu.pipeline_mode<synchronous>, transform_indices = @transform_3, window_bounds = array<i64: 32, 32>}, {pipeline_mode = #tpu.pipeline_mode<synchronous>, transform_indices = @transform_4, window_bounds = array<i64: 1, 32>}, {transform_indices = @transform_5, window_bounds = array<i64: 128, 32>}]} {
    %c0 = arith.constant 0 : index
    %c0_0 = arith.constant 0 : index
    %0 = vector.load %arg1[%c0, %c0_0] : memref<128x32xf32, #tpu.memory_space<vmem>>, vector<128x32xf32>
    %c0_1 = arith.constant 0 : index
    %c0_2 = arith.constant 0 : index
    %1 = vector.load %arg2[%c0_1, %c0_2] : memref<1x32xf32, #tpu.memory_space<vmem>>, vector<1x32xf32>
    %c0_3 = arith.constant 0 : index
    %c0_4 = arith.constant 0 : index
    %2 = vector.load %arg3[%c0_3, %c0_4] : memref<1x32xf32, #tpu.memory_space<vmem>>, vector<1x32xf32>
    %cst = arith.constant dense<0.000000e+00> : vector<128xf32>
    %3 = vector.multi_reduction <add>, %0, %cst [1] : vector<128x32xf32> to vector<128xf32>
    %4 = vector.shape_cast %3 : vector<128xf32> to vector<128x1xf32>
    %cst_5 = arith.constant 3.200000e+01 : f32
    %5 = vector.broadcast %cst_5 : f32 to vector<128x1xf32>
    %6 = arith.divf %4, %5 : vector<128x1xf32>
    %7 = vector.broadcast %6 : vector<128x1xf32> to vector<128x32xf32>
    %8 = arith.subf %0, %7 : vector<128x32xf32>
    %9 = arith.mulf %8, %8 : vector<128x32xf32>
    %cst_6 = arith.constant dense<0.000000e+00> : vector<128xf32>
    %10 = vector.multi_reduction <add>, %9, %cst_6 [1] : vector<128x32xf32> to vector<128xf32>
    %11 = vector.shape_cast %10 : vector<128xf32> to vector<128x1xf32>
    %cst_7 = arith.constant 3.200000e+01 : f32
    %12 = vector.broadcast %cst_7 : f32 to vector<128x1xf32>
    %13 = arith.divf %11, %12 : vector<128x1xf32>
    %cst_8 = arith.constant 9.99999974E-6 : f32
    %14 = vector.broadcast %cst_8 : f32 to vector<128x1xf32>
    %15 = arith.addf %13, %14 : vector<128x1xf32>
    %16 = math.rsqrt %15 : vector<128x1xf32>
    %17 = vector.broadcast %16 : vector<128x1xf32> to vector<128x32xf32>
    %18 = arith.mulf %8, %17 : vector<128x32xf32>
    %19 = vector.broadcast %1 : vector<1x32xf32> to vector<128x32xf32>
    %20 = arith.mulf %18, %19 : vector<128x32xf32>
    %21 = vector.broadcast %2 : vector<1x32xf32> to vector<128x32xf32>
    %22 = arith.addf %20, %21 : vector<128x32xf32>
    %c0_9 = arith.constant 0 : index
    %c0_10 = arith.constant 0 : index
    %23 = vector.load %arg4[%c0_9, %c0_10] : memref<32x32xf32, #tpu.memory_space<vmem>>, vector<32x32xf32>
    %cst_11 = arith.constant dense<0.000000e+00> : vector<128x32xf32>
    %24 = tpu.matmul %22, %23, %cst_11 {dimension_numbers = #tpu.dot_dimension_numbers<[1], [0], [0], [1], [0, 0, 1, 1], [], []>} : vector<128x32xf32>, vector<32x32xf32>, vector<128x32xf32> -> vector<128x32xf32>
    %c0_12 = arith.constant 0 : index
    %c0_13 = arith.constant 0 : index
    %25 = vector.load %arg5[%c0_12, %c0_13] : memref<1x32xf32, #tpu.memory_space<vmem>>, vector<1x32xf32>
    %26 = vector.broadcast %25 : vector<1x32xf32> to vector<128x32xf32>
    %27 = arith.addf %24, %26 : vector<128x32xf32>
    %c0_14 = arith.constant 0 : index
    %c0_15 = arith.constant 0 : index
    %28 = vector.load %arg6[%c0_14, %c0_15] : memref<128x32xf32, #tpu.memory_space<vmem>>, vector<128x32xf32>
    tpu.vector_store %arg6[%c0_14, %c0_15], %27 {strides = array<i32>} : memref<128x32xf32, #tpu.memory_space<vmem>>, vector<128x32xf32>,
    return
  }
  func.func @transform_0(%arg0: i32) -> (i32, i32) {
    %c0_i32 = arith.constant 0 : i32
    %c0_i32_0 = arith.constant 0 : i32
    return %arg0, %c0_i32 : i32, i32
  }
  func.func @transform_1(%arg0: i32) -> (i32, i32) {
    %c0_i32 = arith.constant 0 : i32
    %c0_i32_0 = arith.constant 0 : i32
    %c0_i32_1 = arith.constant 0 : i32
    return %c0_i32, %c0_i32_0 : i32, i32
  }
  func.func @transform_2(%arg0: i32) -> (i32, i32) {
    %c0_i32 = arith.constant 0 : i32
    %c0_i32_0 = arith.constant 0 : i32
    %c0_i32_1 = arith.constant 0 : i32
    return %c0_i32, %c0_i32_0 : i32, i32
  }
  func.func @transform_3(%arg0: i32) -> (i32, i32) {
    %c0_i32 = arith.constant 0 : i32
    %c0_i32_0 = arith.constant 0 : i32
    %c0_i32_1 = arith.constant 0 : i32
    return %c0_i32, %c0_i32_0 : i32, i32
  }
  func.func @transform_4(%arg0: i32) -> (i32, i32) {
    %c0_i32 = arith.constant 0 : i32
    %c0_i32_0 = arith.constant 0 : i32
    %c0_i32_1 = arith.constant 0 : i32
    return %c0_i32, %c0_i32_0 : i32, i32
  }
  func.func @transform_5(%arg0: i32) -> (i32, i32) {
    %c0_i32 = arith.constant 0 : i32
    %c0_i32_0 = arith.constant 0 : i32
    return %arg0, %c0_i32 : i32, i32
  }
}

module attributes {stable_mosaic.version = 11 : i64} {
  func.func @_linear_kernel(%arg0: i32, %arg1: memref<256x2xf32, #tpu.memory_space<vmem>>, %arg2: memref<2x32xf32, #tpu.memory_space<vmem>>, %arg3: memref<1x32xf32, #tpu.memory_space<vmem>>, %arg4: memref<256x32xf32, #tpu.memory_space<vmem>>) attributes {dimension_semantics = [#tpu.dimension_semantics<parallel>], iteration_bounds = array<i64: 1>, scalar_prefetch = 0 : i64, scratch_operands = 0 : i64, tpu.core_type = #tpu.core_type<tc>, window_params = [{transform_indices = @transform_0, window_bounds = array<i64: 256, 2>}, {pipeline_mode = #tpu.pipeline_mode<synchronous>, transform_indices = @transform_1, window_bounds = array<i64: 2, 32>}, {pipeline_mode = #tpu.pipeline_mode<synchronous>, transform_indices = @transform_2, window_bounds = array<i64: 1, 32>}, {transform_indices = @transform_3, window_bounds = array<i64: 256, 32>}]} {
    %c0 = arith.constant 0 : index
    %c0_0 = arith.constant 0 : index
    %0 = vector.load %arg1[%c0, %c0_0] : memref<256x2xf32, #tpu.memory_space<vmem>>, vector<256x2xf32>
    %c0_1 = arith.constant 0 : index
    %c0_2 = arith.constant 0 : index
    %1 = vector.load %arg2[%c0_1, %c0_2] : memref<2x32xf32, #tpu.memory_space<vmem>>, vector<2x32xf32>
    %cst = arith.constant dense<0.000000e+00> : vector<256x32xf32>
    %2 = tpu.matmul %0, %1, %cst {dimension_numbers = #tpu.dot_dimension_numbers<[1], [0], [0], [1], [0, 0, 1, 1], [], []>} : vector<256x2xf32>, vector<2x32xf32>, vector<256x32xf32> -> vector<256x32xf32>
    %c0_3 = arith.constant 0 : index
    %c0_4 = arith.constant 0 : index
    %3 = vector.load %arg3[%c0_3, %c0_4] : memref<1x32xf32, #tpu.memory_space<vmem>>, vector<1x32xf32>
    %4 = vector.broadcast %3 : vector<1x32xf32> to vector<256x32xf32>
    %5 = arith.addf %2, %4 : vector<256x32xf32>
    %c0_5 = arith.constant 0 : index
    %c0_6 = arith.constant 0 : index
    %6 = vector.load %arg4[%c0_5, %c0_6] : memref<256x32xf32, #tpu.memory_space<vmem>>, vector<256x32xf32>
    tpu.vector_store %arg4[%c0_5, %c0_6], %5 {strides = array<i32>} : memref<256x32xf32, #tpu.memory_space<vmem>>, vector<256x32xf32>,
    return
  }
  func.func @transform_0(%arg0: i32) -> (i32, i32) {
    %c0_i32 = arith.constant 0 : i32
    %c0_i32_0 = arith.constant 0 : i32
    return %arg0, %c0_i32 : i32, i32
  }
  func.func @transform_1(%arg0: i32) -> (i32, i32) {
    %c0_i32 = arith.constant 0 : i32
    %c0_i32_0 = arith.constant 0 : i32
    %c0_i32_1 = arith.constant 0 : i32
    return %c0_i32, %c0_i32_0 : i32, i32
  }
  func.func @transform_2(%arg0: i32) -> (i32, i32) {
    %c0_i32 = arith.constant 0 : i32
    %c0_i32_0 = arith.constant 0 : i32
    %c0_i32_1 = arith.constant 0 : i32
    return %c0_i32, %c0_i32_0 : i32, i32
  }
  func.func @transform_3(%arg0: i32) -> (i32, i32) {
    %c0_i32 = arith.constant 0 : i32
    %c0_i32_0 = arith.constant 0 : i32
    return %arg0, %c0_i32 : i32, i32
  }
}

module attributes {stable_mosaic.version = 11 : i64} {
  func.func @_sub_l2norm_kernel(%arg0: i32, %arg1: memref<1x256x32xf32, #tpu.memory_space<vmem>>, %arg2: memref<1x1x32xf32, #tpu.memory_space<vmem>>, %arg3: memref<1x256x32xf32, #tpu.memory_space<vmem>>) attributes {dimension_semantics = [#tpu.dimension_semantics<parallel>], iteration_bounds = array<i64: 2>, scalar_prefetch = 0 : i64, scratch_operands = 0 : i64, tpu.core_type = #tpu.core_type<tc>, window_params = [{pipeline_mode = #tpu.pipeline_mode<synchronous>, transform_indices = @transform_0, window_bounds = array<i64: 1, 256, 32>}, {transform_indices = @transform_1, window_bounds = array<i64: 1, 1, 32>}, {transform_indices = @transform_2, window_bounds = array<i64: 1, 256, 32>}]} {
    %c0 = arith.constant 0 : index
    %c0_0 = arith.constant 0 : index
    %c0_1 = arith.constant 0 : index
    %0 = vector.load %arg1[%c0, %c0_0, %c0_1] : memref<1x256x32xf32, #tpu.memory_space<vmem>>, vector<1x256x32xf32>
    %1 = vector.shape_cast %0 : vector<1x256x32xf32> to vector<256x32xf32>
    %c0_2 = arith.constant 0 : index
    %c0_3 = arith.constant 0 : index
    %c0_4 = arith.constant 0 : index
    %2 = vector.load %arg2[%c0_2, %c0_3, %c0_4] : memref<1x1x32xf32, #tpu.memory_space<vmem>>, vector<1x1x32xf32>
    %3 = vector.shape_cast %2 : vector<1x1x32xf32> to vector<1x32xf32>
    %4 = vector.broadcast %3 : vector<1x32xf32> to vector<256x32xf32>
    %5 = arith.subf %1, %4 : vector<256x32xf32>
    %6 = arith.mulf %5, %5 : vector<256x32xf32>
    %cst = arith.constant dense<0.000000e+00> : vector<256xf32>
    %7 = vector.multi_reduction <add>, %6, %cst [1] : vector<256x32xf32> to vector<256xf32>
    %8 = vector.shape_cast %7 : vector<256xf32> to vector<256x1xf32>
    %9 = math.sqrt %8 : vector<256x1xf32>
    %cst_5 = arith.constant 1.000000e-07 : f32
    %10 = vector.broadcast %cst_5 : f32 to vector<256x1xf32>
    %11 = arith.addf %9, %10 : vector<256x1xf32>
    %12 = vector.broadcast %11 : vector<256x1xf32> to vector<256x32xf32>
    %13 = arith.divf %5, %12 : vector<256x32xf32>
    %c0_6 = arith.constant 0 : index
    %c0_7 = arith.constant 0 : index
    %c0_8 = arith.constant 0 : index
    %14 = vector.load %arg3[%c0_6, %c0_7, %c0_8] : memref<1x256x32xf32, #tpu.memory_space<vmem>>, vector<1x256x32xf32>
    %15 = vector.shape_cast %14 : vector<1x256x32xf32> to vector<256x32xf32>
    %16 = vector.shape_cast %13 : vector<256x32xf32> to vector<1x256x32xf32>
    tpu.vector_store %arg3[%c0_6, %c0_7, %c0_8], %16 {strides = array<i32>} : memref<1x256x32xf32, #tpu.memory_space<vmem>>, vector<1x256x32xf32>,
    return
  }
  func.func @transform_0(%arg0: i32) -> (i32, i32, i32) {
    %c0_i32 = arith.constant 0 : i32
    %c0_i32_0 = arith.constant 0 : i32
    %c0_i32_1 = arith.constant 0 : i32
    %c0_i32_2 = arith.constant 0 : i32
    return %c0_i32, %c0_i32_0, %c0_i32_1 : i32, i32, i32
  }
  func.func @transform_1(%arg0: i32) -> (i32, i32, i32) {
    %c0_i32 = arith.constant 0 : i32
    %c0_i32_0 = arith.constant 0 : i32
    %c0_i32_1 = arith.constant 0 : i32
    return %arg0, %c0_i32, %c0_i32_0 : i32, i32, i32
  }
  func.func @transform_2(%arg0: i32) -> (i32, i32, i32) {
    %c0_i32 = arith.constant 0 : i32
    %c0_i32_0 = arith.constant 0 : i32
    %c0_i32_1 = arith.constant 0 : i32
    return %arg0, %c0_i32, %c0_i32_0 : i32, i32, i32
  }
}

module attributes {stable_mosaic.version = 11 : i64} {
  func.func @_ln_linear_kernel(%arg0: i32, %arg1: memref<512x32xf32, #tpu.memory_space<vmem>>, %arg2: memref<1x32xf32, #tpu.memory_space<vmem>>, %arg3: memref<1x32xf32, #tpu.memory_space<vmem>>, %arg4: memref<32x32xf32, #tpu.memory_space<vmem>>, %arg5: memref<1x32xf32, #tpu.memory_space<vmem>>, %arg6: memref<512x32xf32, #tpu.memory_space<vmem>>) attributes {dimension_semantics = [#tpu.dimension_semantics<parallel>], iteration_bounds = array<i64: 1>, scalar_prefetch = 0 : i64, scratch_operands = 0 : i64, tpu.core_type = #tpu.core_type<tc>, window_params = [{transform_indices = @transform_0, window_bounds = array<i64: 512, 32>}, {pipeline_mode = #tpu.pipeline_mode<synchronous>, transform_indices = @transform_1, window_bounds = array<i64: 1, 32>}, {pipeline_mode = #tpu.pipeline_mode<synchronous>, transform_indices = @transform_2, window_bounds = array<i64: 1, 32>}, {pipeline_mode = #tpu.pipeline_mode<synchronous>, transform_indices = @transform_3, window_bounds = array<i64: 32, 32>}, {pipeline_mode = #tpu.pipeline_mode<synchronous>, transform_indices = @transform_4, window_bounds = array<i64: 1, 32>}, {transform_indices = @transform_5, window_bounds = array<i64: 512, 32>}]} {
    %c0 = arith.constant 0 : index
    %c0_0 = arith.constant 0 : index
    %0 = vector.load %arg1[%c0, %c0_0] : memref<512x32xf32, #tpu.memory_space<vmem>>, vector<512x32xf32>
    %c0_1 = arith.constant 0 : index
    %c0_2 = arith.constant 0 : index
    %1 = vector.load %arg2[%c0_1, %c0_2] : memref<1x32xf32, #tpu.memory_space<vmem>>, vector<1x32xf32>
    %c0_3 = arith.constant 0 : index
    %c0_4 = arith.constant 0 : index
    %2 = vector.load %arg3[%c0_3, %c0_4] : memref<1x32xf32, #tpu.memory_space<vmem>>, vector<1x32xf32>
    %cst = arith.constant dense<0.000000e+00> : vector<512xf32>
    %3 = vector.multi_reduction <add>, %0, %cst [1] : vector<512x32xf32> to vector<512xf32>
    %4 = vector.shape_cast %3 : vector<512xf32> to vector<512x1xf32>
    %cst_5 = arith.constant 3.200000e+01 : f32
    %5 = vector.broadcast %cst_5 : f32 to vector<512x1xf32>
    %6 = arith.divf %4, %5 : vector<512x1xf32>
    %7 = vector.broadcast %6 : vector<512x1xf32> to vector<512x32xf32>
    %8 = arith.subf %0, %7 : vector<512x32xf32>
    %9 = arith.mulf %8, %8 : vector<512x32xf32>
    %cst_6 = arith.constant dense<0.000000e+00> : vector<512xf32>
    %10 = vector.multi_reduction <add>, %9, %cst_6 [1] : vector<512x32xf32> to vector<512xf32>
    %11 = vector.shape_cast %10 : vector<512xf32> to vector<512x1xf32>
    %cst_7 = arith.constant 3.200000e+01 : f32
    %12 = vector.broadcast %cst_7 : f32 to vector<512x1xf32>
    %13 = arith.divf %11, %12 : vector<512x1xf32>
    %cst_8 = arith.constant 9.99999974E-6 : f32
    %14 = vector.broadcast %cst_8 : f32 to vector<512x1xf32>
    %15 = arith.addf %13, %14 : vector<512x1xf32>
    %16 = math.rsqrt %15 : vector<512x1xf32>
    %17 = vector.broadcast %16 : vector<512x1xf32> to vector<512x32xf32>
    %18 = arith.mulf %8, %17 : vector<512x32xf32>
    %19 = vector.broadcast %1 : vector<1x32xf32> to vector<512x32xf32>
    %20 = arith.mulf %18, %19 : vector<512x32xf32>
    %21 = vector.broadcast %2 : vector<1x32xf32> to vector<512x32xf32>
    %22 = arith.addf %20, %21 : vector<512x32xf32>
    %c0_9 = arith.constant 0 : index
    %c0_10 = arith.constant 0 : index
    %23 = vector.load %arg4[%c0_9, %c0_10] : memref<32x32xf32, #tpu.memory_space<vmem>>, vector<32x32xf32>
    %cst_11 = arith.constant dense<0.000000e+00> : vector<512x32xf32>
    %24 = tpu.matmul %22, %23, %cst_11 {dimension_numbers = #tpu.dot_dimension_numbers<[1], [0], [0], [1], [0, 0, 1, 1], [], []>} : vector<512x32xf32>, vector<32x32xf32>, vector<512x32xf32> -> vector<512x32xf32>
    %c0_12 = arith.constant 0 : index
    %c0_13 = arith.constant 0 : index
    %25 = vector.load %arg5[%c0_12, %c0_13] : memref<1x32xf32, #tpu.memory_space<vmem>>, vector<1x32xf32>
    %26 = vector.broadcast %25 : vector<1x32xf32> to vector<512x32xf32>
    %27 = arith.addf %24, %26 : vector<512x32xf32>
    %c0_14 = arith.constant 0 : index
    %c0_15 = arith.constant 0 : index
    %28 = vector.load %arg6[%c0_14, %c0_15] : memref<512x32xf32, #tpu.memory_space<vmem>>, vector<512x32xf32>
    tpu.vector_store %arg6[%c0_14, %c0_15], %27 {strides = array<i32>} : memref<512x32xf32, #tpu.memory_space<vmem>>, vector<512x32xf32>,
    return
  }
  func.func @transform_0(%arg0: i32) -> (i32, i32) {
    %c0_i32 = arith.constant 0 : i32
    %c0_i32_0 = arith.constant 0 : i32
    return %arg0, %c0_i32 : i32, i32
  }
  func.func @transform_1(%arg0: i32) -> (i32, i32) {
    %c0_i32 = arith.constant 0 : i32
    %c0_i32_0 = arith.constant 0 : i32
    %c0_i32_1 = arith.constant 0 : i32
    return %c0_i32, %c0_i32_0 : i32, i32
  }
  func.func @transform_2(%arg0: i32) -> (i32, i32) {
    %c0_i32 = arith.constant 0 : i32
    %c0_i32_0 = arith.constant 0 : i32
    %c0_i32_1 = arith.constant 0 : i32
    return %c0_i32, %c0_i32_0 : i32, i32
  }
  func.func @transform_3(%arg0: i32) -> (i32, i32) {
    %c0_i32 = arith.constant 0 : i32
    %c0_i32_0 = arith.constant 0 : i32
    %c0_i32_1 = arith.constant 0 : i32
    return %c0_i32, %c0_i32_0 : i32, i32
  }
  func.func @transform_4(%arg0: i32) -> (i32, i32) {
    %c0_i32 = arith.constant 0 : i32
    %c0_i32_0 = arith.constant 0 : i32
    %c0_i32_1 = arith.constant 0 : i32
    return %c0_i32, %c0_i32_0 : i32, i32
  }
  func.func @transform_5(%arg0: i32) -> (i32, i32) {
    %c0_i32 = arith.constant 0 : i32
    %c0_i32_0 = arith.constant 0 : i32
    return %arg0, %c0_i32 : i32, i32
  }
}

module attributes {stable_mosaic.version = 11 : i64} {
  func.func @_mh_attn_kernel(%arg0: i32, %arg1: memref<1x128x32xf32, #tpu.memory_space<vmem>>, %arg2: memref<1x32x32xf32, #tpu.memory_space<vmem>>, %arg3: memref<1x32x32xf32, #tpu.memory_space<vmem>>, %arg4: memref<1x128x32xf32, #tpu.memory_space<vmem>>) attributes {dimension_semantics = [#tpu.dimension_semantics<parallel>], iteration_bounds = array<i64: 4>, scalar_prefetch = 0 : i64, scratch_operands = 0 : i64, tpu.core_type = #tpu.core_type<tc>, window_params = [{transform_indices = @transform_0, window_bounds = array<i64: 1, 128, 32>}, {transform_indices = @transform_1, window_bounds = array<i64: 1, 32, 32>}, {transform_indices = @transform_2, window_bounds = array<i64: 1, 32, 32>}, {transform_indices = @transform_3, window_bounds = array<i64: 1, 128, 32>}]} {
    %c0 = arith.constant 0 : index
    %c0_0 = arith.constant 0 : index
    %c0_1 = arith.constant 0 : index
    %0 = vector.load %arg1[%c0, %c0_0, %c0_1] : memref<1x128x32xf32, #tpu.memory_space<vmem>>, vector<1x128x8xf32>
    %1 = vector.shape_cast %0 : vector<1x128x8xf32> to vector<128x8xf32>
    %c0_2 = arith.constant 0 : index
    %c0_3 = arith.constant 0 : index
    %c0_4 = arith.constant 0 : index
    %2 = vector.load %arg2[%c0_2, %c0_3, %c0_4] : memref<1x32x32xf32, #tpu.memory_space<vmem>>, vector<1x32x8xf32>
    %3 = vector.shape_cast %2 : vector<1x32x8xf32> to vector<32x8xf32>
    %c0_5 = arith.constant 0 : index
    %c0_6 = arith.constant 0 : index
    %c0_7 = arith.constant 0 : index
    %4 = vector.load %arg3[%c0_5, %c0_6, %c0_7] : memref<1x32x32xf32, #tpu.memory_space<vmem>>, vector<1x32x8xf32>
    %5 = vector.shape_cast %4 : vector<1x32x8xf32> to vector<32x8xf32>
    %cst = arith.constant dense<0.000000e+00> : vector<128x32xf32>
    %6 = tpu.matmul %1, %3, %cst {dimension_numbers = #tpu.dot_dimension_numbers<[1], [1], [0], [0], [0, 0, 1, 0], [], []>} : vector<128x8xf32>, vector<32x8xf32>, vector<128x32xf32> -> vector<128x32xf32>
    %cst_8 = arith.constant 0.353553385 : f32
    %7 = vector.broadcast %cst_8 : f32 to vector<128x32xf32>
    %8 = arith.mulf %7, %6 : vector<128x32xf32>
    %cst_9 = arith.constant dense<0xFF800000> : vector<128xf32>
    %9 = vector.multi_reduction <maximumf>, %8, %cst_9 [1] : vector<128x32xf32> to vector<128xf32>
    %10 = vector.shape_cast %9 : vector<128xf32> to vector<128x1xf32>
    %11 = vector.broadcast %10 : vector<128x1xf32> to vector<128x32xf32>
    %12 = arith.subf %8, %11 : vector<128x32xf32>
    %13 = math.exp %12 : vector<128x32xf32>
    %cst_10 = arith.constant dense<0.000000e+00> : vector<128xf32>
    %14 = vector.multi_reduction <add>, %13, %cst_10 [1] : vector<128x32xf32> to vector<128xf32>
    %15 = vector.shape_cast %14 : vector<128xf32> to vector<128x1xf32>
    %16 = vector.broadcast %15 : vector<128x1xf32> to vector<128x32xf32>
    %17 = arith.divf %13, %16 : vector<128x32xf32>
    %cst_11 = arith.constant dense<0.000000e+00> : vector<128x8xf32>
    %18 = tpu.matmul %17, %5, %cst_11 {dimension_numbers = #tpu.dot_dimension_numbers<[1], [0], [0], [1], [0, 0, 1, 1], [], []>} : vector<128x32xf32>, vector<32x8xf32>, vector<128x8xf32> -> vector<128x8xf32>
    %c0_12 = arith.constant 0 : index
    %c0_13 = arith.constant 0 : index
    %c8 = arith.constant 8 : index
    %19 = vector.load %arg1[%c0_12, %c0_13, %c8] : memref<1x128x32xf32, #tpu.memory_space<vmem>>, vector<1x128x8xf32>
    %20 = vector.shape_cast %19 : vector<1x128x8xf32> to vector<128x8xf32>
    %c0_14 = arith.constant 0 : index
    %c0_15 = arith.constant 0 : index
    %c8_16 = arith.constant 8 : index
    %21 = vector.load %arg2[%c0_14, %c0_15, %c8_16] : memref<1x32x32xf32, #tpu.memory_space<vmem>>, vector<1x32x8xf32>
    %22 = vector.shape_cast %21 : vector<1x32x8xf32> to vector<32x8xf32>
    %c0_17 = arith.constant 0 : index
    %c0_18 = arith.constant 0 : index
    %c8_19 = arith.constant 8 : index
    %23 = vector.load %arg3[%c0_17, %c0_18, %c8_19] : memref<1x32x32xf32, #tpu.memory_space<vmem>>, vector<1x32x8xf32>
    %24 = vector.shape_cast %23 : vector<1x32x8xf32> to vector<32x8xf32>
    %cst_20 = arith.constant dense<0.000000e+00> : vector<128x32xf32>
    %25 = tpu.matmul %20, %22, %cst_20 {dimension_numbers = #tpu.dot_dimension_numbers<[1], [1], [0], [0], [0, 0, 1, 0], [], []>} : vector<128x8xf32>, vector<32x8xf32>, vector<128x32xf32> -> vector<128x32xf32>
    %cst_21 = arith.constant 0.353553385 : f32
    %26 = vector.broadcast %cst_21 : f32 to vector<128x32xf32>
    %27 = arith.mulf %26, %25 : vector<128x32xf32>
    %cst_22 = arith.constant dense<0xFF800000> : vector<128xf32>
    %28 = vector.multi_reduction <maximumf>, %27, %cst_22 [1] : vector<128x32xf32> to vector<128xf32>
    %29 = vector.shape_cast %28 : vector<128xf32> to vector<128x1xf32>
    %30 = vector.broadcast %29 : vector<128x1xf32> to vector<128x32xf32>
    %31 = arith.subf %27, %30 : vector<128x32xf32>
    %32 = math.exp %31 : vector<128x32xf32>
    %cst_23 = arith.constant dense<0.000000e+00> : vector<128xf32>
    %33 = vector.multi_reduction <add>, %32, %cst_23 [1] : vector<128x32xf32> to vector<128xf32>
    %34 = vector.shape_cast %33 : vector<128xf32> to vector<128x1xf32>
    %35 = vector.broadcast %34 : vector<128x1xf32> to vector<128x32xf32>
    %36 = arith.divf %32, %35 : vector<128x32xf32>
    %cst_24 = arith.constant dense<0.000000e+00> : vector<128x8xf32>
    %37 = tpu.matmul %36, %24, %cst_24 {dimension_numbers = #tpu.dot_dimension_numbers<[1], [0], [0], [1], [0, 0, 1, 1], [], []>} : vector<128x32xf32>, vector<32x8xf32>, vector<128x8xf32> -> vector<128x8xf32>
    %c0_25 = arith.constant 0 : index
    %c0_26 = arith.constant 0 : index
    %c16 = arith.constant 16 : index
    %38 = vector.load %arg1[%c0_25, %c0_26, %c16] : memref<1x128x32xf32, #tpu.memory_space<vmem>>, vector<1x128x8xf32>
    %39 = vector.shape_cast %38 : vector<1x128x8xf32> to vector<128x8xf32>
    %c0_27 = arith.constant 0 : index
    %c0_28 = arith.constant 0 : index
    %c16_29 = arith.constant 16 : index
    %40 = vector.load %arg2[%c0_27, %c0_28, %c16_29] : memref<1x32x32xf32, #tpu.memory_space<vmem>>, vector<1x32x8xf32>
    %41 = vector.shape_cast %40 : vector<1x32x8xf32> to vector<32x8xf32>
    %c0_30 = arith.constant 0 : index
    %c0_31 = arith.constant 0 : index
    %c16_32 = arith.constant 16 : index
    %42 = vector.load %arg3[%c0_30, %c0_31, %c16_32] : memref<1x32x32xf32, #tpu.memory_space<vmem>>, vector<1x32x8xf32>
    %43 = vector.shape_cast %42 : vector<1x32x8xf32> to vector<32x8xf32>
    %cst_33 = arith.constant dense<0.000000e+00> : vector<128x32xf32>
    %44 = tpu.matmul %39, %41, %cst_33 {dimension_numbers = #tpu.dot_dimension_numbers<[1], [1], [0], [0], [0, 0, 1, 0], [], []>} : vector<128x8xf32>, vector<32x8xf32>, vector<128x32xf32> -> vector<128x32xf32>
    %cst_34 = arith.constant 0.353553385 : f32
    %45 = vector.broadcast %cst_34 : f32 to vector<128x32xf32>
    %46 = arith.mulf %45, %44 : vector<128x32xf32>
    %cst_35 = arith.constant dense<0xFF800000> : vector<128xf32>
    %47 = vector.multi_reduction <maximumf>, %46, %cst_35 [1] : vector<128x32xf32> to vector<128xf32>
    %48 = vector.shape_cast %47 : vector<128xf32> to vector<128x1xf32>
    %49 = vector.broadcast %48 : vector<128x1xf32> to vector<128x32xf32>
    %50 = arith.subf %46, %49 : vector<128x32xf32>
    %51 = math.exp %50 : vector<128x32xf32>
    %cst_36 = arith.constant dense<0.000000e+00> : vector<128xf32>
    %52 = vector.multi_reduction <add>, %51, %cst_36 [1] : vector<128x32xf32> to vector<128xf32>
    %53 = vector.shape_cast %52 : vector<128xf32> to vector<128x1xf32>
    %54 = vector.broadcast %53 : vector<128x1xf32> to vector<128x32xf32>
    %55 = arith.divf %51, %54 : vector<128x32xf32>
    %cst_37 = arith.constant dense<0.000000e+00> : vector<128x8xf32>
    %56 = tpu.matmul %55, %43, %cst_37 {dimension_numbers = #tpu.dot_dimension_numbers<[1], [0], [0], [1], [0, 0, 1, 1], [], []>} : vector<128x32xf32>, vector<32x8xf32>, vector<128x8xf32> -> vector<128x8xf32>
    %c0_38 = arith.constant 0 : index
    %c0_39 = arith.constant 0 : index
    %c24 = arith.constant 24 : index
    %57 = vector.load %arg1[%c0_38, %c0_39, %c24] : memref<1x128x32xf32, #tpu.memory_space<vmem>>, vector<1x128x8xf32>
    %58 = vector.shape_cast %57 : vector<1x128x8xf32> to vector<128x8xf32>
    %c0_40 = arith.constant 0 : index
    %c0_41 = arith.constant 0 : index
    %c24_42 = arith.constant 24 : index
    %59 = vector.load %arg2[%c0_40, %c0_41, %c24_42] : memref<1x32x32xf32, #tpu.memory_space<vmem>>, vector<1x32x8xf32>
    %60 = vector.shape_cast %59 : vector<1x32x8xf32> to vector<32x8xf32>
    %c0_43 = arith.constant 0 : index
    %c0_44 = arith.constant 0 : index
    %c24_45 = arith.constant 24 : index
    %61 = vector.load %arg3[%c0_43, %c0_44, %c24_45] : memref<1x32x32xf32, #tpu.memory_space<vmem>>, vector<1x32x8xf32>
    %62 = vector.shape_cast %61 : vector<1x32x8xf32> to vector<32x8xf32>
    %cst_46 = arith.constant dense<0.000000e+00> : vector<128x32xf32>
    %63 = tpu.matmul %58, %60, %cst_46 {dimension_numbers = #tpu.dot_dimension_numbers<[1], [1], [0], [0], [0, 0, 1, 0], [], []>} : vector<128x8xf32>, vector<32x8xf32>, vector<128x32xf32> -> vector<128x32xf32>
    %cst_47 = arith.constant 0.353553385 : f32
    %64 = vector.broadcast %cst_47 : f32 to vector<128x32xf32>
    %65 = arith.mulf %64, %63 : vector<128x32xf32>
    %cst_48 = arith.constant dense<0xFF800000> : vector<128xf32>
    %66 = vector.multi_reduction <maximumf>, %65, %cst_48 [1] : vector<128x32xf32> to vector<128xf32>
    %67 = vector.shape_cast %66 : vector<128xf32> to vector<128x1xf32>
    %68 = vector.broadcast %67 : vector<128x1xf32> to vector<128x32xf32>
    %69 = arith.subf %65, %68 : vector<128x32xf32>
    %70 = math.exp %69 : vector<128x32xf32>
    %cst_49 = arith.constant dense<0.000000e+00> : vector<128xf32>
    %71 = vector.multi_reduction <add>, %70, %cst_49 [1] : vector<128x32xf32> to vector<128xf32>
    %72 = vector.shape_cast %71 : vector<128xf32> to vector<128x1xf32>
    %73 = vector.broadcast %72 : vector<128x1xf32> to vector<128x32xf32>
    %74 = arith.divf %70, %73 : vector<128x32xf32>
    %cst_50 = arith.constant dense<0.000000e+00> : vector<128x8xf32>
    %75 = tpu.matmul %74, %62, %cst_50 {dimension_numbers = #tpu.dot_dimension_numbers<[1], [0], [0], [1], [0, 0, 1, 1], [], []>} : vector<128x32xf32>, vector<32x8xf32>, vector<128x8xf32> -> vector<128x8xf32>
    %76 = tpu.concatenate %18, %37, %56, %75 in 1 : vector<128x8xf32>, vector<128x8xf32>, vector<128x8xf32>, vector<128x8xf32> -> vector<128x32xf32>
    %c0_51 = arith.constant 0 : index
    %c0_52 = arith.constant 0 : index
    %c0_53 = arith.constant 0 : index
    %77 = vector.load %arg4[%c0_51, %c0_52, %c0_53] : memref<1x128x32xf32, #tpu.memory_space<vmem>>, vector<1x128x32xf32>
    %78 = vector.shape_cast %77 : vector<1x128x32xf32> to vector<128x32xf32>
    %79 = vector.shape_cast %76 : vector<128x32xf32> to vector<1x128x32xf32>
    tpu.vector_store %arg4[%c0_51, %c0_52, %c0_53], %79 {strides = array<i32>} : memref<1x128x32xf32, #tpu.memory_space<vmem>>, vector<1x128x32xf32>,
    return
  }
  func.func @transform_0(%arg0: i32) -> (i32, i32, i32) {
    %c0_i32 = arith.constant 0 : i32
    %c0_i32_0 = arith.constant 0 : i32
    %c0_i32_1 = arith.constant 0 : i32
    return %arg0, %c0_i32, %c0_i32_0 : i32, i32, i32
  }
  func.func @transform_1(%arg0: i32) -> (i32, i32, i32) {
    %c0_i32 = arith.constant 0 : i32
    %c0_i32_0 = arith.constant 0 : i32
    %c0_i32_1 = arith.constant 0 : i32
    return %arg0, %c0_i32, %c0_i32_0 : i32, i32, i32
  }
  func.func @transform_2(%arg0: i32) -> (i32, i32, i32) {
    %c0_i32 = arith.constant 0 : i32
    %c0_i32_0 = arith.constant 0 : i32
    %c0_i32_1 = arith.constant 0 : i32
    return %arg0, %c0_i32, %c0_i32_0 : i32, i32, i32
  }
  func.func @transform_3(%arg0: i32) -> (i32, i32, i32) {
    %c0_i32 = arith.constant 0 : i32
    %c0_i32_0 = arith.constant 0 : i32
    %c0_i32_1 = arith.constant 0 : i32
    return %arg0, %c0_i32, %c0_i32_0 : i32, i32, i32
  }
}

module attributes {stable_mosaic.version = 11 : i64} {
  func.func @_linear_kernel(%arg0: i32, %arg1: memref<512x32xf32, #tpu.memory_space<vmem>>, %arg2: memref<32x32xf32, #tpu.memory_space<vmem>>, %arg3: memref<1x32xf32, #tpu.memory_space<vmem>>, %arg4: memref<512x32xf32, #tpu.memory_space<vmem>>) attributes {dimension_semantics = [#tpu.dimension_semantics<parallel>], iteration_bounds = array<i64: 1>, scalar_prefetch = 0 : i64, scratch_operands = 0 : i64, tpu.core_type = #tpu.core_type<tc>, window_params = [{transform_indices = @transform_0, window_bounds = array<i64: 512, 32>}, {pipeline_mode = #tpu.pipeline_mode<synchronous>, transform_indices = @transform_1, window_bounds = array<i64: 32, 32>}, {pipeline_mode = #tpu.pipeline_mode<synchronous>, transform_indices = @transform_2, window_bounds = array<i64: 1, 32>}, {transform_indices = @transform_3, window_bounds = array<i64: 512, 32>}]} {
    %c0 = arith.constant 0 : index
    %c0_0 = arith.constant 0 : index
    %0 = vector.load %arg1[%c0, %c0_0] : memref<512x32xf32, #tpu.memory_space<vmem>>, vector<512x32xf32>
    %c0_1 = arith.constant 0 : index
    %c0_2 = arith.constant 0 : index
    %1 = vector.load %arg2[%c0_1, %c0_2] : memref<32x32xf32, #tpu.memory_space<vmem>>, vector<32x32xf32>
    %cst = arith.constant dense<0.000000e+00> : vector<512x32xf32>
    %2 = tpu.matmul %0, %1, %cst {dimension_numbers = #tpu.dot_dimension_numbers<[1], [0], [0], [1], [0, 0, 1, 1], [], []>} : vector<512x32xf32>, vector<32x32xf32>, vector<512x32xf32> -> vector<512x32xf32>
    %c0_3 = arith.constant 0 : index
    %c0_4 = arith.constant 0 : index
    %3 = vector.load %arg3[%c0_3, %c0_4] : memref<1x32xf32, #tpu.memory_space<vmem>>, vector<1x32xf32>
    %4 = vector.broadcast %3 : vector<1x32xf32> to vector<512x32xf32>
    %5 = arith.addf %2, %4 : vector<512x32xf32>
    %c0_5 = arith.constant 0 : index
    %c0_6 = arith.constant 0 : index
    %6 = vector.load %arg4[%c0_5, %c0_6] : memref<512x32xf32, #tpu.memory_space<vmem>>, vector<512x32xf32>
    tpu.vector_store %arg4[%c0_5, %c0_6], %5 {strides = array<i32>} : memref<512x32xf32, #tpu.memory_space<vmem>>, vector<512x32xf32>,
    return
  }
  func.func @transform_0(%arg0: i32) -> (i32, i32) {
    %c0_i32 = arith.constant 0 : i32
    %c0_i32_0 = arith.constant 0 : i32
    return %arg0, %c0_i32 : i32, i32
  }
  func.func @transform_1(%arg0: i32) -> (i32, i32) {
    %c0_i32 = arith.constant 0 : i32
    %c0_i32_0 = arith.constant 0 : i32
    %c0_i32_1 = arith.constant 0 : i32
    return %c0_i32, %c0_i32_0 : i32, i32
  }
  func.func @transform_2(%arg0: i32) -> (i32, i32) {
    %c0_i32 = arith.constant 0 : i32
    %c0_i32_0 = arith.constant 0 : i32
    %c0_i32_1 = arith.constant 0 : i32
    return %c0_i32, %c0_i32_0 : i32, i32
  }
  func.func @transform_3(%arg0: i32) -> (i32, i32) {
    %c0_i32 = arith.constant 0 : i32
    %c0_i32_0 = arith.constant 0 : i32
    return %arg0, %c0_i32 : i32, i32
  }
}

module attributes {stable_mosaic.version = 11 : i64} {
  func.func @_ln_linear_kernel(%arg0: i32, %arg1: memref<256x32xf32, #tpu.memory_space<vmem>>, %arg2: memref<1x32xf32, #tpu.memory_space<vmem>>, %arg3: memref<1x32xf32, #tpu.memory_space<vmem>>, %arg4: memref<32x64xf32, #tpu.memory_space<vmem>>, %arg5: memref<1x64xf32, #tpu.memory_space<vmem>>, %arg6: memref<256x64xf32, #tpu.memory_space<vmem>>) attributes {dimension_semantics = [#tpu.dimension_semantics<parallel>], iteration_bounds = array<i64: 1>, scalar_prefetch = 0 : i64, scratch_operands = 0 : i64, tpu.core_type = #tpu.core_type<tc>, window_params = [{transform_indices = @transform_0, window_bounds = array<i64: 256, 32>}, {pipeline_mode = #tpu.pipeline_mode<synchronous>, transform_indices = @transform_1, window_bounds = array<i64: 1, 32>}, {pipeline_mode = #tpu.pipeline_mode<synchronous>, transform_indices = @transform_2, window_bounds = array<i64: 1, 32>}, {pipeline_mode = #tpu.pipeline_mode<synchronous>, transform_indices = @transform_3, window_bounds = array<i64: 32, 64>}, {pipeline_mode = #tpu.pipeline_mode<synchronous>, transform_indices = @transform_4, window_bounds = array<i64: 1, 64>}, {transform_indices = @transform_5, window_bounds = array<i64: 256, 64>}]} {
    %c0 = arith.constant 0 : index
    %c0_0 = arith.constant 0 : index
    %0 = vector.load %arg1[%c0, %c0_0] : memref<256x32xf32, #tpu.memory_space<vmem>>, vector<256x32xf32>
    %c0_1 = arith.constant 0 : index
    %c0_2 = arith.constant 0 : index
    %1 = vector.load %arg2[%c0_1, %c0_2] : memref<1x32xf32, #tpu.memory_space<vmem>>, vector<1x32xf32>
    %c0_3 = arith.constant 0 : index
    %c0_4 = arith.constant 0 : index
    %2 = vector.load %arg3[%c0_3, %c0_4] : memref<1x32xf32, #tpu.memory_space<vmem>>, vector<1x32xf32>
    %cst = arith.constant dense<0.000000e+00> : vector<256xf32>
    %3 = vector.multi_reduction <add>, %0, %cst [1] : vector<256x32xf32> to vector<256xf32>
    %4 = vector.shape_cast %3 : vector<256xf32> to vector<256x1xf32>
    %cst_5 = arith.constant 3.200000e+01 : f32
    %5 = vector.broadcast %cst_5 : f32 to vector<256x1xf32>
    %6 = arith.divf %4, %5 : vector<256x1xf32>
    %7 = vector.broadcast %6 : vector<256x1xf32> to vector<256x32xf32>
    %8 = arith.subf %0, %7 : vector<256x32xf32>
    %9 = arith.mulf %8, %8 : vector<256x32xf32>
    %cst_6 = arith.constant dense<0.000000e+00> : vector<256xf32>
    %10 = vector.multi_reduction <add>, %9, %cst_6 [1] : vector<256x32xf32> to vector<256xf32>
    %11 = vector.shape_cast %10 : vector<256xf32> to vector<256x1xf32>
    %cst_7 = arith.constant 3.200000e+01 : f32
    %12 = vector.broadcast %cst_7 : f32 to vector<256x1xf32>
    %13 = arith.divf %11, %12 : vector<256x1xf32>
    %cst_8 = arith.constant 9.99999974E-6 : f32
    %14 = vector.broadcast %cst_8 : f32 to vector<256x1xf32>
    %15 = arith.addf %13, %14 : vector<256x1xf32>
    %16 = math.rsqrt %15 : vector<256x1xf32>
    %17 = vector.broadcast %16 : vector<256x1xf32> to vector<256x32xf32>
    %18 = arith.mulf %8, %17 : vector<256x32xf32>
    %19 = vector.broadcast %1 : vector<1x32xf32> to vector<256x32xf32>
    %20 = arith.mulf %18, %19 : vector<256x32xf32>
    %21 = vector.broadcast %2 : vector<1x32xf32> to vector<256x32xf32>
    %22 = arith.addf %20, %21 : vector<256x32xf32>
    %c0_9 = arith.constant 0 : index
    %c0_10 = arith.constant 0 : index
    %23 = vector.load %arg4[%c0_9, %c0_10] : memref<32x64xf32, #tpu.memory_space<vmem>>, vector<32x64xf32>
    %cst_11 = arith.constant dense<0.000000e+00> : vector<256x64xf32>
    %24 = tpu.matmul %22, %23, %cst_11 {dimension_numbers = #tpu.dot_dimension_numbers<[1], [0], [0], [1], [0, 0, 1, 1], [], []>} : vector<256x32xf32>, vector<32x64xf32>, vector<256x64xf32> -> vector<256x64xf32>
    %c0_12 = arith.constant 0 : index
    %c0_13 = arith.constant 0 : index
    %25 = vector.load %arg5[%c0_12, %c0_13] : memref<1x64xf32, #tpu.memory_space<vmem>>, vector<1x64xf32>
    %26 = vector.broadcast %25 : vector<1x64xf32> to vector<256x64xf32>
    %27 = arith.addf %24, %26 : vector<256x64xf32>
    %c0_14 = arith.constant 0 : index
    %c0_15 = arith.constant 0 : index
    %28 = vector.load %arg6[%c0_14, %c0_15] : memref<256x64xf32, #tpu.memory_space<vmem>>, vector<256x64xf32>
    tpu.vector_store %arg6[%c0_14, %c0_15], %27 {strides = array<i32>} : memref<256x64xf32, #tpu.memory_space<vmem>>, vector<256x64xf32>,
    return
  }
  func.func @transform_0(%arg0: i32) -> (i32, i32) {
    %c0_i32 = arith.constant 0 : i32
    %c0_i32_0 = arith.constant 0 : i32
    return %arg0, %c0_i32 : i32, i32
  }
  func.func @transform_1(%arg0: i32) -> (i32, i32) {
    %c0_i32 = arith.constant 0 : i32
    %c0_i32_0 = arith.constant 0 : i32
    %c0_i32_1 = arith.constant 0 : i32
    return %c0_i32, %c0_i32_0 : i32, i32
  }
  func.func @transform_2(%arg0: i32) -> (i32, i32) {
    %c0_i32 = arith.constant 0 : i32
    %c0_i32_0 = arith.constant 0 : i32
    %c0_i32_1 = arith.constant 0 : i32
    return %c0_i32, %c0_i32_0 : i32, i32
  }
  func.func @transform_3(%arg0: i32) -> (i32, i32) {
    %c0_i32 = arith.constant 0 : i32
    %c0_i32_0 = arith.constant 0 : i32
    %c0_i32_1 = arith.constant 0 : i32
    return %c0_i32, %c0_i32_0 : i32, i32
  }
  func.func @transform_4(%arg0: i32) -> (i32, i32) {
    %c0_i32 = arith.constant 0 : i32
    %c0_i32_0 = arith.constant 0 : i32
    %c0_i32_1 = arith.constant 0 : i32
    return %c0_i32, %c0_i32_0 : i32, i32
  }
  func.func @transform_5(%arg0: i32) -> (i32, i32) {
    %c0_i32 = arith.constant 0 : i32
    %c0_i32_0 = arith.constant 0 : i32
    return %arg0, %c0_i32 : i32, i32
  }
}

module attributes {stable_mosaic.version = 11 : i64} {
  func.func @_linear_kernel(%arg0: i32, %arg1: memref<256x64xf32, #tpu.memory_space<vmem>>, %arg2: memref<64x32xf32, #tpu.memory_space<vmem>>, %arg3: memref<1x32xf32, #tpu.memory_space<vmem>>, %arg4: memref<256x32xf32, #tpu.memory_space<vmem>>) attributes {dimension_semantics = [#tpu.dimension_semantics<parallel>], iteration_bounds = array<i64: 1>, scalar_prefetch = 0 : i64, scratch_operands = 0 : i64, tpu.core_type = #tpu.core_type<tc>, window_params = [{transform_indices = @transform_0, window_bounds = array<i64: 256, 64>}, {pipeline_mode = #tpu.pipeline_mode<synchronous>, transform_indices = @transform_1, window_bounds = array<i64: 64, 32>}, {pipeline_mode = #tpu.pipeline_mode<synchronous>, transform_indices = @transform_2, window_bounds = array<i64: 1, 32>}, {transform_indices = @transform_3, window_bounds = array<i64: 256, 32>}]} {
    %c0 = arith.constant 0 : index
    %c0_0 = arith.constant 0 : index
    %0 = vector.load %arg1[%c0, %c0_0] : memref<256x64xf32, #tpu.memory_space<vmem>>, vector<256x64xf32>
    %c0_1 = arith.constant 0 : index
    %c0_2 = arith.constant 0 : index
    %1 = vector.load %arg2[%c0_1, %c0_2] : memref<64x32xf32, #tpu.memory_space<vmem>>, vector<64x32xf32>
    %cst = arith.constant dense<0.000000e+00> : vector<256x32xf32>
    %2 = tpu.matmul %0, %1, %cst {dimension_numbers = #tpu.dot_dimension_numbers<[1], [0], [0], [1], [0, 0, 1, 1], [], []>} : vector<256x64xf32>, vector<64x32xf32>, vector<256x32xf32> -> vector<256x32xf32>
    %c0_3 = arith.constant 0 : index
    %c0_4 = arith.constant 0 : index
    %3 = vector.load %arg3[%c0_3, %c0_4] : memref<1x32xf32, #tpu.memory_space<vmem>>, vector<1x32xf32>
    %4 = vector.broadcast %3 : vector<1x32xf32> to vector<256x32xf32>
    %5 = arith.addf %2, %4 : vector<256x32xf32>
    %c0_5 = arith.constant 0 : index
    %c0_6 = arith.constant 0 : index
    %6 = vector.load %arg4[%c0_5, %c0_6] : memref<256x32xf32, #tpu.memory_space<vmem>>, vector<256x32xf32>
    tpu.vector_store %arg4[%c0_5, %c0_6], %5 {strides = array<i32>} : memref<256x32xf32, #tpu.memory_space<vmem>>, vector<256x32xf32>,
    return
  }
  func.func @transform_0(%arg0: i32) -> (i32, i32) {
    %c0_i32 = arith.constant 0 : i32
    %c0_i32_0 = arith.constant 0 : i32
    return %arg0, %c0_i32 : i32, i32
  }
  func.func @transform_1(%arg0: i32) -> (i32, i32) {
    %c0_i32 = arith.constant 0 : i32
    %c0_i32_0 = arith.constant 0 : i32
    %c0_i32_1 = arith.constant 0 : i32
    return %c0_i32, %c0_i32_0 : i32, i32
  }
  func.func @transform_2(%arg0: i32) -> (i32, i32) {
    %c0_i32 = arith.constant 0 : i32
    %c0_i32_0 = arith.constant 0 : i32
    %c0_i32_1 = arith.constant 0 : i32
    return %c0_i32, %c0_i32_0 : i32, i32
  }
  func.func @transform_3(%arg0: i32) -> (i32, i32) {
    %c0_i32 = arith.constant 0 : i32
    %c0_i32_0 = arith.constant 0 : i32
    return %arg0, %c0_i32 : i32, i32
  }
}

module attributes {stable_mosaic.version = 11 : i64} {
  func.func @_layernorm_kernel(%arg0: i32, %arg1: memref<256x32xf32, #tpu.memory_space<vmem>>, %arg2: memref<1x32xf32, #tpu.memory_space<vmem>>, %arg3: memref<1x32xf32, #tpu.memory_space<vmem>>, %arg4: memref<256x32xf32, #tpu.memory_space<vmem>>) attributes {dimension_semantics = [#tpu.dimension_semantics<parallel>], iteration_bounds = array<i64: 1>, scalar_prefetch = 0 : i64, scratch_operands = 0 : i64, tpu.core_type = #tpu.core_type<tc>, window_params = [{transform_indices = @transform_0, window_bounds = array<i64: 256, 32>}, {pipeline_mode = #tpu.pipeline_mode<synchronous>, transform_indices = @transform_1, window_bounds = array<i64: 1, 32>}, {pipeline_mode = #tpu.pipeline_mode<synchronous>, transform_indices = @transform_2, window_bounds = array<i64: 1, 32>}, {transform_indices = @transform_3, window_bounds = array<i64: 256, 32>}]} {
    %c0 = arith.constant 0 : index
    %c0_0 = arith.constant 0 : index
    %0 = vector.load %arg1[%c0, %c0_0] : memref<256x32xf32, #tpu.memory_space<vmem>>, vector<256x32xf32>
    %c0_1 = arith.constant 0 : index
    %c0_2 = arith.constant 0 : index
    %1 = vector.load %arg2[%c0_1, %c0_2] : memref<1x32xf32, #tpu.memory_space<vmem>>, vector<1x32xf32>
    %c0_3 = arith.constant 0 : index
    %c0_4 = arith.constant 0 : index
    %2 = vector.load %arg3[%c0_3, %c0_4] : memref<1x32xf32, #tpu.memory_space<vmem>>, vector<1x32xf32>
    %cst = arith.constant dense<0.000000e+00> : vector<256xf32>
    %3 = vector.multi_reduction <add>, %0, %cst [1] : vector<256x32xf32> to vector<256xf32>
    %4 = vector.shape_cast %3 : vector<256xf32> to vector<256x1xf32>
    %cst_5 = arith.constant 3.200000e+01 : f32
    %5 = vector.broadcast %cst_5 : f32 to vector<256x1xf32>
    %6 = arith.divf %4, %5 : vector<256x1xf32>
    %7 = vector.broadcast %6 : vector<256x1xf32> to vector<256x32xf32>
    %8 = arith.subf %0, %7 : vector<256x32xf32>
    %9 = arith.mulf %8, %8 : vector<256x32xf32>
    %cst_6 = arith.constant dense<0.000000e+00> : vector<256xf32>
    %10 = vector.multi_reduction <add>, %9, %cst_6 [1] : vector<256x32xf32> to vector<256xf32>
    %11 = vector.shape_cast %10 : vector<256xf32> to vector<256x1xf32>
    %cst_7 = arith.constant 3.200000e+01 : f32
    %12 = vector.broadcast %cst_7 : f32 to vector<256x1xf32>
    %13 = arith.divf %11, %12 : vector<256x1xf32>
    %cst_8 = arith.constant 9.99999974E-6 : f32
    %14 = vector.broadcast %cst_8 : f32 to vector<256x1xf32>
    %15 = arith.addf %13, %14 : vector<256x1xf32>
    %16 = math.rsqrt %15 : vector<256x1xf32>
    %17 = vector.broadcast %16 : vector<256x1xf32> to vector<256x32xf32>
    %18 = arith.mulf %8, %17 : vector<256x32xf32>
    %19 = vector.broadcast %1 : vector<1x32xf32> to vector<256x32xf32>
    %20 = arith.mulf %18, %19 : vector<256x32xf32>
    %21 = vector.broadcast %2 : vector<1x32xf32> to vector<256x32xf32>
    %22 = arith.addf %20, %21 : vector<256x32xf32>
    %c0_9 = arith.constant 0 : index
    %c0_10 = arith.constant 0 : index
    %23 = vector.load %arg4[%c0_9, %c0_10] : memref<256x32xf32, #tpu.memory_space<vmem>>, vector<256x32xf32>
    tpu.vector_store %arg4[%c0_9, %c0_10], %22 {strides = array<i32>} : memref<256x32xf32, #tpu.memory_space<vmem>>, vector<256x32xf32>,
    return
  }
  func.func @transform_0(%arg0: i32) -> (i32, i32) {
    %c0_i32 = arith.constant 0 : i32
    %c0_i32_0 = arith.constant 0 : i32
    return %arg0, %c0_i32 : i32, i32
  }
  func.func @transform_1(%arg0: i32) -> (i32, i32) {
    %c0_i32 = arith.constant 0 : i32
    %c0_i32_0 = arith.constant 0 : i32
    %c0_i32_1 = arith.constant 0 : i32
    return %c0_i32, %c0_i32_0 : i32, i32
  }
  func.func @transform_2(%arg0: i32) -> (i32, i32) {
    %c0_i32 = arith.constant 0 : i32
    %c0_i32_0 = arith.constant 0 : i32
    %c0_i32_1 = arith.constant 0 : i32
    return %c0_i32, %c0_i32_0 : i32, i32
  }
  func.func @transform_3(%arg0: i32) -> (i32, i32) {
    %c0_i32 = arith.constant 0 : i32
    %c0_i32_0 = arith.constant 0 : i32
    return %arg0, %c0_i32 : i32, i32
  }
}

</mosaic_0001>

<llo_original>
// kernel: cross_view_swap_attention.22
$region0: #{cross_view_swap_attention.22}
  #allocation0 [shape = 'u32[]', space=smem, size = 0x4, offset = 0x4, fixed_abs, tag = 'smem constant byte address 0x4 - core index']
  #allocation1 [shape = 'u32[144,128]{1,0:T(1,128)}', space=vmem, size = 0x12000, scoped, tag = 'internal scratch']
  %s0 = inlined_call_operand.vmem [shape: f32[2,4], index: 0, kind: input, shape index: {}]
  %s1 = inlined_call_operand.vmem [shape: f32[4,32], index: 1, kind: input, shape index: {}]
  %s2 = inlined_call_operand.vmem [shape: f32[1,32], index: 2, kind: input, shape index: {}]
  %s3 = inlined_call_operand.vmem [shape: f32[2,32], index: 3, kind: output, shape index: {}]
  %s4 = sld [smem:[#allocation0]]
  $region22: #{cross_view_swap_attention.22} parent=0
    _
  %s6 = ssub.s32 1, %s4
  %s7 = scalar_select 0, %s6, %s4
  // Predicated region
  $region2: #{cross_view_swap_attention.22} parent=0 // pred_check
    _
  $region3: #{cross_view_swap_attention.22} parent=0 // pred_check_branch
    %9 = sbr.rel (0) target = $region5
  $region4: #{cross_view_swap_attention.22} parent=0 // pred_region
    _
  $region5: #{cross_view_swap_attention.22} parent=0 // pred_fallthru
    _
  // Predicated region
  $region6: #{cross_view_swap_attention.22} parent=0 // pred_check
    _
  $region7: #{cross_view_swap_attention.22} parent=0 // pred_check_branch
    %11 = sbr.rel (0) target = $region9
  $region8: #{cross_view_swap_attention.22} parent=0 // pred_region
    _
  $region9: #{cross_view_swap_attention.22} parent=0 // pred_fallthru
    _
  // Predicated region
  $region10: #{cross_view_swap_attention.22} parent=0 // pred_check
    _
  $region11: #{cross_view_swap_attention.22} parent=0 // pred_check_branch
    %13 = sbr.rel (0) target = $region13
  $region12: #{cross_view_swap_attention.22} parent=0 // pred_region
    _
  $region13: #{cross_view_swap_attention.22} parent=0 // pred_fallthru
    _
  %v14 = vld [vmem:[%s0] sm:$0x3]
  %v15 = vld [vmem:[%s1] sm:$0xf]
  %v16 = vld [vmem:[%s2] sm:$0x1]
  %v18 = vlaneseq
  %v19 = vshrl.u32 %v18, 7
  %v20 = vsub.s32 0, %v19
  %v21 = vrot.slane %v16, %v20
  %vm23 = vcmask 31744
  %v25 = vsel %vm23, %v14, 0
  %vm27 = vcmask 1043456
  %v29 = vsel %vm27, %v15, 0
  %31 = vmatprep.subr.mxu0 0.0
  %32 = vmatpush1.msra.mxu0 %v29
  %33 = vmatprep.subr.mxu0 0.0
  %34 = vmatpush1.msra.mxu0 0.0
  %35 = vmatprep.subr.mxu0 0.0
  %36 = vmatpush1.msra.mxu0 0.0
  %37 = vmatprep.subr.mxu0 0.0
  %38 = vmatpush1.msra.mxu0 0.0
  %39 = vmatprep.subr.mxu0 0.0
  %40 = vmatpush1.msra.mxu0 0.0
  %41 = vmatprep.subr.mxu0 0.0
  %42 = vmatpush1.msra.mxu0 0.0
  %43 = vmatprep.subr.mxu0 0.0
  %44 = vmatpush1.msra.mxu0 0.0
  %45 = vmatprep.subr.mxu0 0.0
  %46 = vmatpush1.msra.mxu0 0.0
  %47 = vmatprep.subr.mxu0 0.0
  %48 = vmatpush1.msra.mxu0 0.0
  %49 = vmatprep.subr.mxu0 0.0
  %50 = vmatpush1.msra.mxu0 0.0
  %51 = vmatprep.subr.mxu0 0.0
  %52 = vmatpush1.msra.mxu0 0.0
  %53 = vmatprep.subr.mxu0 0.0
  %54 = vmatpush1.msra.mxu0 0.0
  %55 = vmatprep.subr.mxu0 0.0
  %56 = vmatpush1.msra.mxu0 0.0
  %57 = vmatprep.subr.mxu0 0.0
  %58 = vmatpush1.msra.mxu0 0.0
  %59 = vmatprep.subr.mxu0 0.0
  %60 = vmatpush1.msra.mxu0 0.0
  %61 = vmatprep.subr.mxu0 0.0
  %62 = vmatpush1.msra.mxu0 0.0
  %63 = vmatprep.subr.mxu0 0.0
  %64 = vmatpush1.msra.mxu0 0.0
  %65 = vmatprep.subr.mxu0 0.0
  %66 = vmatpush1.msra.mxu0 0.0
  %67 = vmatprep.subr.mxu0 0.0
  %68 = vmatpush1.msra.mxu0 0.0
  %69 = vmatprep.subr.mxu0 0.0
  %70 = vmatpush1.msra.mxu0 0.0
  %71 = vmatprep.subr.mxu0 0.0
  %72 = vmatpush1.msra.mxu0 0.0
  %73 = vmatprep.subr.mxu0 0.0
  %74 = vmatpush1.msra.mxu0 0.0
  %75 = vmatprep.subr.mxu0 0.0
  %76 = vmatpush1.msra.mxu0 0.0
  %77 = vmatprep.subr.mxu0 0.0
  %78 = vmatpush1.msra.mxu0 0.0
  %79 = vmatprep.subr.mxu0 0.0
  %80 = vmatpush1.msra.mxu0 0.0
  %81 = vmatprep.subr.mxu0 0.0
  %82 = vmatpush1.msra.mxu0 0.0
  %83 = vmatprep.subr.mxu0 0.0
  %84 = vmatpush1.msra.mxu0 0.0
  %85 = vmatprep.subr.mxu0 0.0
  %86 = vmatpush1.msra.mxu0 0.0
  %87 = vmatprep.subr.mxu0 0.0
  %88 = vmatpush1.msra.mxu0 0.0
  %89 = vmatprep.subr.mxu0 0.0
  %90 = vmatpush1.msra.mxu0 0.0
  %91 = vmatprep.subr.mxu0 0.0
  %92 = vmatpush1.msra.mxu0 0.0
  %93 = vmatprep.subr.mxu0 0.0
  %94 = vmatpush1.msra.mxu0 0.0
  %95 = vmatprep.mubr.f32.mxu0 0.0
  %96 = vmatmul.mubr.f32.gmra.mrb[0].mxu0 %v25
  %v97 = vpop.f32.mrb[0].mxu0
  %v98 = vadd.f32 %v21, %v97
  %v99 = vpop.f32.mrb[0].mxu0
  %100 = vdwg.mxu0
  %vm101 = vcmask 254976
  %102 = vst.msk [vmem:[%s3] sm:$0x3] %vm101, %v98
  // Predicated region
  $region14: #{cross_view_swap_attention.22} parent=0 // pred_check
    _
  $region15: #{cross_view_swap_attention.22} parent=0 // pred_check_branch
    %104 = sbr.rel (0) target = $region17
  $region16: #{cross_view_swap_attention.22} parent=0 // pred_region
    _
  $region17: #{cross_view_swap_attention.22} parent=0 // pred_fallthru
    _
  // Predicated region
  $region18: #{cross_view_swap_attention.22} parent=0 // pred_check
    _
  $region19: #{cross_view_swap_attention.22} parent=0 // pred_check_branch
    %106 = sbr.rel (0) target = $region21
  $region20: #{cross_view_swap_attention.22} parent=0 // pred_region
    _
  $region21: #{cross_view_swap_attention.22} parent=0 // pred_fallthru
    _

// kernel: cross_view_swap_attention.23
$region0: #{cross_view_swap_attention.23}
  #allocation0 [shape = 'u32[]', space=smem, size = 0x4, offset = 0x4, fixed_abs, tag = 'smem constant byte address 0x4 - core index']
  #allocation1 [shape = 'u32[144,128]{1,0:T(1,128)}', space=vmem, size = 0x12000, scoped, tag = 'internal scratch']
  %s0 = inlined_call_operand.vmem [shape: f32[128,4], index: 0, kind: input, shape index: {}]
  %s1 = inlined_call_operand.vmem [shape: f32[4,32], index: 1, kind: input, shape index: {}]
  %s2 = inlined_call_operand.vmem [shape: f32[1,32], index: 2, kind: input, shape index: {}]
  %s3 = inlined_call_operand.vmem [shape: f32[128,32], index: 3, kind: output, shape index: {}]
  %s4 = sld [smem:[#allocation0]]
  $region22: #{cross_view_swap_attention.23} parent=0
    _
  %s6 = ssub.s32 1, %s4
  %s7 = scalar_select 0, %s6, %s4
  // Predicated region
  $region2: #{cross_view_swap_attention.23} parent=0 // pred_check
    _
  $region3: #{cross_view_swap_attention.23} parent=0 // pred_check_branch
    %9 = sbr.rel (0) target = $region5
  $region4: #{cross_view_swap_attention.23} parent=0 // pred_region
    _
  $region5: #{cross_view_swap_attention.23} parent=0 // pred_fallthru
    _
  // Predicated region
  $region6: #{cross_view_swap_attention.23} parent=0 // pred_check
    _
  $region7: #{cross_view_swap_attention.23} parent=0 // pred_check_branch
    %11 = sbr.rel (0) target = $region9
  $region8: #{cross_view_swap_attention.23} parent=0 // pred_region
    _
  $region9: #{cross_view_swap_attention.23} parent=0 // pred_fallthru
    _
  // Predicated region
  $region10: #{cross_view_swap_attention.23} parent=0 // pred_check
    _
  $region11: #{cross_view_swap_attention.23} parent=0 // pred_check_branch
    %13 = sbr.rel (0) target = $region13
  $region12: #{cross_view_swap_attention.23} parent=0 // pred_region
    _
  $region13: #{cross_view_swap_attention.23} parent=0 // pred_fallthru
    _
  %v14 = vld [vmem:[%s0] sm:$0xff]
  %v15 = vld [vmem:[%s0 + $0x8] sm:$0xff]
  %v16 = vld [vmem:[%s0 + $0x10] sm:$0xff]
  %v17 = vld [vmem:[%s0 + $0x18] sm:$0xff]
  %v18 = vld [vmem:[%s0 + $0x20] sm:$0xff]
  %v19 = vld [vmem:[%s0 + $0x28] sm:$0xff]
  %v20 = vld [vmem:[%s0 + $0x30] sm:$0xff]
  %v21 = vld [vmem:[%s0 + $0x38] sm:$0xff]
  %v22 = vld [vmem:[%s0 + $0x40] sm:$0xff]
  %v23 = vld [vmem:[%s0 + $0x48] sm:$0xff]
  %v24 = vld [vmem:[%s0 + $0x50] sm:$0xff]
  %v25 = vld [vmem:[%s0 + $0x58] sm:$0xff]
  %v26 = vld [vmem:[%s0 + $0x60] sm:$0xff]
  %v27 = vld [vmem:[%s0 + $0x68] sm:$0xff]
  %v28 = vld [vmem:[%s0 + $0x70] sm:$0xff]
  %v29 = vld [vmem:[%s0 + $0x78] sm:$0xff]
  %v30 = vld [vmem:[%s1] sm:$0xf]
  %v31 = vld [vmem:[%s2] sm:$0x1]
  %v33 = vlaneseq
  %v34 = vshrl.u32 %v33, 7
  %v35 = vsub.s32 0, %v34
  %v36 = vrot.slane %v31, %v35
  %vm38 = vcmask 31744
  %v40 = vsel %vm38, %v14, 0
  %v43 = vsel %vm38, %v15, 0
  %v46 = vsel %vm38, %v16, 0
  %v49 = vsel %vm38, %v17, 0
  %v52 = vsel %vm38, %v18, 0
  %v55 = vsel %vm38, %v19, 0
  %v58 = vsel %vm38, %v20, 0
  %v61 = vsel %vm38, %v21, 0
  %v64 = vsel %vm38, %v22, 0
  %v67 = vsel %vm38, %v23, 0
  %v70 = vsel %vm38, %v24, 0
  %v73 = vsel %vm38, %v25, 0
  %v76 = vsel %vm38, %v26, 0
  %v79 = vsel %vm38, %v27, 0
  %v82 = vsel %vm38, %v28, 0
  %v85 = vsel %vm38, %v29, 0
  %vm87 = vcmask 1043456
  %v89 = vsel %vm87, %v30, 0
  %91 = vmatprep.subr.mxu0 0.0
  %92 = vmatpush1.msra.mxu0 %v89
  %93 = vmatprep.subr.mxu0 0.0
  %94 = vmatpush1.msra.mxu0 0.0
  %95 = vmatprep.subr.mxu0 0.0
  %96 = vmatpush1.msra.mxu0 0.0
  %97 = vmatprep.subr.mxu0 0.0
  %98 = vmatpush1.msra.mxu0 0.0
  %99 = vmatprep.subr.mxu0 0.0
  %100 = vmatpush1.msra.mxu0 0.0
  %101 = vmatprep.subr.mxu0 0.0
  %102 = vmatpush1.msra.mxu0 0.0
  %103 = vmatprep.subr.mxu0 0.0
  %104 = vmatpush1.msra.mxu0 0.0
  %105 = vmatprep.subr.mxu0 0.0
  %106 = vmatpush1.msra.mxu0 0.0
  %107 = vmatprep.subr.mxu0 0.0
  %108 = vmatpush1.msra.mxu0 0.0
  %109 = vmatprep.subr.mxu0 0.0
  %110 = vmatpush1.msra.mxu0 0.0
  %111 = vmatprep.subr.mxu0 0.0
  %112 = vmatpush1.msra.mxu0 0.0
  %113 = vmatprep.subr.mxu0 0.0
  %114 = vmatpush1.msra.mxu0 0.0
  %115 = vmatprep.subr.mxu0 0.0
  %116 = vmatpush1.msra.mxu0 0.0
  %117 = vmatprep.subr.mxu0 0.0
  %118 = vmatpush1.msra.mxu0 0.0
  %119 = vmatprep.subr.mxu0 0.0
  %120 = vmatpush1.msra.mxu0 0.0
  %121 = vmatprep.subr.mxu0 0.0
  %122 = vmatpush1.msra.mxu0 0.0
  %123 = vmatprep.subr.mxu0 0.0
  %124 = vmatpush1.msra.mxu0 0.0
  %125 = vmatprep.subr.mxu0 0.0
  %126 = vmatpush1.msra.mxu0 0.0
  %127 = vmatprep.subr.mxu0 0.0
  %128 = vmatpush1.msra.mxu0 0.0
  %129 = vmatprep.subr.mxu0 0.0
  %130 = vmatpush1.msra.mxu0 0.0
  %131 = vmatprep.subr.mxu0 0.0
  %132 = vmatpush1.msra.mxu0 0.0
  %133 = vmatprep.subr.mxu0 0.0
  %134 = vmatpush1.msra.mxu0 0.0
  %135 = vmatprep.subr.mxu0 0.0
  %136 = vmatpush1.msra.mxu0 0.0
  %137 = vmatprep.subr.mxu0 0.0
  %138 = vmatpush1.msra.mxu0 0.0
  %139 = vmatprep.subr.mxu0 0.0
  %140 = vmatpush1.msra.mxu0 0.0
  %141 = vmatprep.subr.mxu0 0.0
  %142 = vmatpush1.msra.mxu0 0.0
  %143 = vmatprep.subr.mxu0 0.0
  %144 = vmatpush1.msra.mxu0 0.0
  %145 = vmatprep.subr.mxu0 0.0
  %146 = vmatpush1.msra.mxu0 0.0
  %147 = vmatprep.subr.mxu0 0.0
  %148 = vmatpush1.msra.mxu0 0.0
  %149 = vmatprep.subr.mxu0 0.0
  %150 = vmatpush1.msra.mxu0 0.0
  %151 = vmatprep.subr.mxu0 0.0
  %152 = vmatpush1.msra.mxu0 0.0
  %153 = vmatprep.subr.mxu0 0.0
  %154 = vmatpush1.msra.mxu0 0.0
  %155 = vmatprep.mubr.f32.mxu0 0.0
  %156 = vmatmul.mubr.f32.gmra.mrb[0].mxu0 %v40
  %v157 = vpop.f32.mrb[0].mxu0
  %v158 = vadd.f32 %v36, %v157
  %v159 = vpop.f32.mrb[0].mxu0
  %160 = vmatprep.mubr.f32.mxu0 0.0
  %161 = vmatmul.mubr.f32.gmra.mrb[0].mxu0 %v43
  %v162 = vpop.f32.mrb[0].mxu0
  %v163 = vadd.f32 %v36, %v162
  %v164 = vpop.f32.mrb[0].mxu0
  %165 = vmatprep.mubr.f32.mxu0 0.0
  %166 = vmatmul.mubr.f32.gmra.mrb[0].mxu0 %v46
  %v167 = vpop.f32.mrb[0].mxu0
  %v168 = vadd.f32 %v36, %v167
  %v169 = vpop.f32.mrb[0].mxu0
  %170 = vmatprep.mubr.f32.mxu0 0.0
  %171 = vmatmul.mubr.f32.gmra.mrb[0].mxu0 %v49
  %v172 = vpop.f32.mrb[0].mxu0
  %v173 = vadd.f32 %v36, %v172
  %v174 = vpop.f32.mrb[0].mxu0
  %175 = vmatprep.mubr.f32.mxu0 0.0
  %176 = vmatmul.mubr.f32.gmra.mrb[0].mxu0 %v52
  %v177 = vpop.f32.mrb[0].mxu0
  %v178 = vadd.f32 %v36, %v177
  %v179 = vpop.f32.mrb[0].mxu0
  %180 = vmatprep.mubr.f32.mxu0 0.0
  %181 = vmatmul.mubr.f32.gmra.mrb[0].mxu0 %v55
  %v182 = vpop.f32.mrb[0].mxu0
  %v183 = vadd.f32 %v36, %v182
  %v184 = vpop.f32.mrb[0].mxu0
  %185 = vmatprep.mubr.f32.mxu0 0.0
  %186 = vmatmul.mubr.f32.gmra.mrb[0].mxu0 %v58
  %v187 = vpop.f32.mrb[0].mxu0
  %v188 = vadd.f32 %v36, %v187
  %v189 = vpop.f32.mrb[0].mxu0
  %190 = vmatprep.mubr.f32.mxu0 0.0
  %191 = vmatmul.mubr.f32.gmra.mrb[0].mxu0 %v61
  %v192 = vpop.f32.mrb[0].mxu0
  %v193 = vadd.f32 %v36, %v192
  %v194 = vpop.f32.mrb[0].mxu0
  %195 = vmatprep.mubr.f32.mxu0 0.0
  %196 = vmatmul.mubr.f32.gmra.mrb[0].mxu0 %v64
  %v197 = vpop.f32.mrb[0].mxu0
  %v198 = vadd.f32 %v36, %v197
  %v199 = vpop.f32.mrb[0].mxu0
  %200 = vmatprep.mubr.f32.mxu0 0.0
  %201 = vmatmul.mubr.f32.gmra.mrb[0].mxu0 %v67
  %v202 = vpop.f32.mrb[0].mxu0
  %v203 = vadd.f32 %v36, %v202
  %v204 = vpop.f32.mrb[0].mxu0
  %205 = vmatprep.mubr.f32.mxu0 0.0
  %206 = vmatmul.mubr.f32.gmra.mrb[0].mxu0 %v70
  %v207 = vpop.f32.mrb[0].mxu0
  %v208 = vadd.f32 %v36, %v207
  %v209 = vpop.f32.mrb[0].mxu0
  %210 = vmatprep.mubr.f32.mxu0 0.0
  %211 = vmatmul.mubr.f32.gmra.mrb[0].mxu0 %v73
  %v212 = vpop.f32.mrb[0].mxu0
  %v213 = vadd.f32 %v36, %v212
  %v214 = vpop.f32.mrb[0].mxu0
  %215 = vmatprep.mubr.f32.mxu0 0.0
  %216 = vmatmul.mubr.f32.gmra.mrb[0].mxu0 %v76
  %v217 = vpop.f32.mrb[0].mxu0
  %v218 = vadd.f32 %v36, %v217
  %v219 = vpop.f32.mrb[0].mxu0
  %220 = vmatprep.mubr.f32.mxu0 0.0
  %221 = vmatmul.mubr.f32.gmra.mrb[0].mxu0 %v79
  %v222 = vpop.f32.mrb[0].mxu0
  %v223 = vadd.f32 %v36, %v222
  %v224 = vpop.f32.mrb[0].mxu0
  %225 = vmatprep.mubr.f32.mxu0 0.0
  %226 = vmatmul.mubr.f32.gmra.mrb[0].mxu0 %v82
  %v227 = vpop.f32.mrb[0].mxu0
  %v228 = vadd.f32 %v36, %v227
  %v229 = vpop.f32.mrb[0].mxu0
  %230 = vmatprep.mubr.f32.mxu0 0.0
  %231 = vmatmul.mubr.f32.gmra.mrb[0].mxu0 %v85
  %v232 = vpop.f32.mrb[0].mxu0
  %v233 = vadd.f32 %v36, %v232
  %v234 = vpop.f32.mrb[0].mxu0
  %235 = vdwg.mxu0
  %vm236 = vcmask 261120
  %237 = vst.msk [vmem:[%s3] sm:$0xff] %vm236, %v158
  %238 = vst.msk [vmem:[%s3 + $0x8] sm:$0xff] %vm236, %v163
  %239 = vst.msk [vmem:[%s3 + $0x10] sm:$0xff] %vm236, %v168
  %240 = vst.msk [vmem:[%s3 + $0x18] sm:$0xff] %vm236, %v173
  %241 = vst.msk [vmem:[%s3 + $0x20] sm:$0xff] %vm236, %v178
  %242 = vst.msk [vmem:[%s3 + $0x28] sm:$0xff] %vm236, %v183
  %243 = vst.msk [vmem:[%s3 + $0x30] sm:$0xff] %vm236, %v188
  %244 = vst.msk [vmem:[%s3 + $0x38] sm:$0xff] %vm236, %v193
  %245 = vst.msk [vmem:[%s3 + $0x40] sm:$0xff] %vm236, %v198
  %246 = vst.msk [vmem:[%s3 + $0x48] sm:$0xff] %vm236, %v203
  %247 = vst.msk [vmem:[%s3 + $0x50] sm:$0xff] %vm236, %v208
  %248 = vst.msk [vmem:[%s3 + $0x58] sm:$0xff] %vm236, %v213
  %249 = vst.msk [vmem:[%s3 + $0x60] sm:$0xff] %vm236, %v218
  %250 = vst.msk [vmem:[%s3 + $0x68] sm:$0xff] %vm236, %v223
  %251 = vst.msk [vmem:[%s3 + $0x70] sm:$0xff] %vm236, %v228
  %252 = vst.msk [vmem:[%s3 + $0x78] sm:$0xff] %vm236, %v233
  // Predicated region
  $region14: #{cross_view_swap_attention.23} parent=0 // pred_check
    _
  $region15: #{cross_view_swap_attention.23} parent=0 // pred_check_branch
    %254 = sbr.rel (0) target = $region17
  $region16: #{cross_view_swap_attention.23} parent=0 // pred_region
    _
  $region17: #{cross_view_swap_attention.23} parent=0 // pred_fallthru
    _
  // Predicated region
  $region18: #{cross_view_swap_attention.23} parent=0 // pred_check
    _
  $region19: #{cross_view_swap_attention.23} parent=0 // pred_check_branch
    %256 = sbr.rel (0) target = $region21
  $region20: #{cross_view_swap_attention.23} parent=0 // pred_region
    _
  $region21: #{cross_view_swap_attention.23} parent=0 // pred_fallthru
    _

// kernel: cross_view_swap_attention.24
$region0: #{cross_view_swap_attention.24}
  #allocation0 [shape = 'u32[]', space=smem, size = 0x4, offset = 0x4, fixed_abs, tag = 'smem constant byte address 0x4 - core index']
  #allocation1 [shape = 'u32[144,128]{1,0:T(1,128)}', space=vmem, size = 0x12000, scoped, tag = 'internal scratch']
  %s0 = inlined_call_operand.vmem [shape: f32[2,64,32], index: 0, kind: input, shape index: {}]
  %s1 = inlined_call_operand.vmem [shape: f32[2,1,32], index: 1, kind: input, shape index: {}]
  %s2 = inlined_call_operand.vmem [shape: f32[2,64,32], index: 2, kind: output, shape index: {}]
  %s3 = sld [smem:[#allocation0]]
  $region41: #{cross_view_swap_attention.24} parent=0
    _
  %s5 = ssub.s32 1, %s3
  %s6 = scalar_select 0, %s5, %s3
  loop: start=0, step=1, limit=4
  $region2: #{cross_view_swap_attention.24} parent=0 // loop_pre_header
    _
  $region3: #{cross_view_swap_attention.24} parent=0 // loop_header
    %s8 = sphi 0, %s12
    %p9 = scmp.ge.s32.totalorder %s8, 4
    %s18 = sphi 0, %s20
    %s21 = sphi 0, %s18
    %s22 = sphi 0, %s21
    %s38 = sphi 0, %s22
    %s44 = sphi 0, %s46
    %s47 = sphi 0, %s44
    %s48 = sphi 0, %s47
    %s64 = sphi 0, %s48
    %s70 = sphi 0, %s72
    %s73 = sphi 0, %s70
    %s74 = sphi 0, %s73
    %s90 = sphi 0, %s74
  $region4: #{cross_view_swap_attention.24} parent=0 // loop_header_branch
    %11 = sbr.rel (%p9) target = $region8
  $region5: #{cross_view_swap_attention.24} parent=0 // loop_body
    %s13 = ssub.s32 %s8, 1
    %s14 = ssub.s32 %s8, 2
    %s15 = sadd.s32 %s8, 1
    %s16 = ssub.s32 %s8, %s15
    %p17 = scmp.eq.s32.totalorder %s16, 0
    %s19 = sadd.s32 %s18, 1
    %s20 = scalar_select %p17, %s18, %s19
    %p23 = pneg %p17
    %p24 = scmp.eq.s32.totalorder %s8, 1
    %p25 = por %p23, %p24
    %p26 = scmp.ne.s32.totalorder %s18, %s21
    %p27 = scmp.eq.s32.totalorder %s8, 0
    %p28 = por %p26, %p27
    %p29 = scmp.ne.s32.totalorder %s18, %s21
    %p30 = scmp.eq.s32.totalorder %s13, 1
    %p31 = por %p29, %p30
    %p32 = scmp.ne.s32.totalorder %s21, %s22
    %p33 = scmp.eq.s32.totalorder %s13, 0
    %p34 = por %p32, %p33
    %p35 = scmp.ne.s32.totalorder %s21, %s22
    %p36 = scmp.eq.s32.totalorder %s14, 1
    %p37 = por %p35, %p36
    %p39 = scmp.ne.s32.totalorder %s22, %s38
    %p40 = scmp.eq.s32.totalorder %s14, 0
    %p41 = por %p39, %p40
    %s42 = ssub.s32 %s8, %s15
    %p43 = scmp.eq.s32.totalorder %s42, 0
    %s45 = sadd.s32 %s44, 1
    %s46 = scalar_select %p43, %s44, %s45
    %p49 = pneg %p43
    %p50 = scmp.eq.s32.totalorder %s8, 1
    %p51 = por %p49, %p50
    %p52 = scmp.ne.s32.totalorder %s44, %s47
    %p53 = scmp.eq.s32.totalorder %s8, 0
    %p54 = por %p52, %p53
    %p55 = scmp.ne.s32.totalorder %s44, %s47
    %p56 = scmp.eq.s32.totalorder %s13, 1
    %p57 = por %p55, %p56
    %p58 = scmp.ne.s32.totalorder %s47, %s48
    %p59 = scmp.eq.s32.totalorder %s13, 0
    %p60 = por %p58, %p59
    %p61 = scmp.ne.s32.totalorder %s47, %s48
    %p62 = scmp.eq.s32.totalorder %s14, 1
    %p63 = por %p61, %p62
    %p65 = scmp.ne.s32.totalorder %s48, %s64
    %p66 = scmp.eq.s32.totalorder %s14, 0
    %p67 = por %p65, %p66
    %s68 = ssub.s32 %s8, %s15
    %p69 = scmp.eq.s32.totalorder %s68, 0
    %s71 = sadd.s32 %s70, 1
    %s72 = scalar_select %p69, %s70, %s71
    %p75 = pneg %p69
    %p76 = scmp.eq.s32.totalorder %s8, 1
    %p77 = por %p75, %p76
    %p78 = scmp.ne.s32.totalorder %s70, %s73
    %p79 = scmp.eq.s32.totalorder %s8, 0
    %p80 = por %p78, %p79
    %p81 = scmp.ne.s32.totalorder %s70, %s73
    %p82 = scmp.eq.s32.totalorder %s13, 1
    %p83 = por %p81, %p82
    %p84 = scmp.ne.s32.totalorder %s73, %s74
    %p85 = scmp.eq.s32.totalorder %s13, 0
    %p86 = por %p84, %p85
    %p87 = scmp.ne.s32.totalorder %s73, %s74
    %p88 = scmp.eq.s32.totalorder %s14, 1
    %p89 = por %p87, %p88
    %p91 = scmp.ne.s32.totalorder %s74, %s90
    %p92 = scmp.eq.s32.totalorder %s14, 0
    %p93 = por %p91, %p92
    %p94 = scmp.le.s32.totalorder 1, %s8
    %p95 = scmp.lt.s32.totalorder %s8, 3
    %p96 = pnand %p94, %p95
    %p97 = pneg %p96
    // Predicated region
    $region9: #{cross_view_swap_attention.24} parent=5 // pred_check
      _
    $region10: #{cross_view_swap_attention.24} parent=5 // pred_check_branch
      %99 = sbr.rel (%p96) target = $region12
    $region11: #{cross_view_swap_attention.24} parent=5 // pred_region
      %s100 = ssub.s32 %s8, 1
    $region12: #{cross_view_swap_attention.24} parent=5 // pred_fallthru
      _
    %p101 = scmp.lt.s32.totalorder %s8, 2
    // Predicated region
    $region13: #{cross_view_swap_attention.24} parent=5 // pred_check
      %p102 = pneg %p101
    $region14: #{cross_view_swap_attention.24} parent=5 // pred_check_branch
      %104 = sbr.rel (%p102) target = $region16
    $region15: #{cross_view_swap_attention.24} parent=5 // pred_region
      // Predicated region
      $region17: #{cross_view_swap_attention.24} parent=15 // pred_check
        %p105 = pneg %p28
      $region18: #{cross_view_swap_attention.24} parent=15 // pred_check_branch
        %107 = sbr.rel (%p105) target = $region20
      $region19: #{cross_view_swap_attention.24} parent=15 // pred_region
        %p108 = scmp.lt.s32.totalorder %s8, 1
        %s109 = scalar_select %p108, %s8, 1
        %s110 = smul.addr %s109, 8
        %s111 = smul.addr %s110, 8
        %s112 = scalar_lea.vmem %s0, %s111
      $region20: #{cross_view_swap_attention.24} parent=15 // pred_fallthru
        _
      // Predicated region
      $region21: #{cross_view_swap_attention.24} parent=15 // pred_check
        %p113 = pneg %p54
      $region22: #{cross_view_swap_attention.24} parent=15 // pred_check_branch
        %115 = sbr.rel (%p113) target = $region24
      $region23: #{cross_view_swap_attention.24} parent=15 // pred_region
        %p116 = scmp.lt.s32.totalorder %s8, 1
        %s117 = scalar_select %p116, %s8, 1
        %s118 = scalar_lea.vmem %s1, %s117
      $region24: #{cross_view_swap_attention.24} parent=15 // pred_fallthru
        _
    $region16: #{cross_view_swap_attention.24} parent=5 // pred_fallthru
      _
    %p119 = scmp.le.s32.totalorder 1, %s8
    %p120 = scmp.lt.s32.totalorder %s8, 3
    %p121 = pnand %p119, %p120
    %p122 = pneg %p121
    // Predicated region
    $region25: #{cross_view_swap_attention.24} parent=5 // pred_check
      _
    $region26: #{cross_view_swap_attention.24} parent=5 // pred_check_branch
      %124 = sbr.rel (%p121) target = $region28
    $region27: #{cross_view_swap_attention.24} parent=5 // pred_region
      %s125 = ssub.s32 %s8, 1
      %p126 = scmp.lt.s32.totalorder %s13, 1
      %s127 = scalar_select %p126, %s13, 1
      %s128 = smul.addr %s127, 8
      %s129 = smul.addr %s128, 8
      %s130 = scalar_lea.vmem %s0, %s129
      %p131 = pneg %p34
      %p132 = pneg %p31
      %p133 = scmp.lt.s32.totalorder %s13, 1
      %s134 = scalar_select %p133, %s13, 1
      %s135 = scalar_lea.vmem %s1, %s134
      %p136 = pneg %p60
      %p137 = pneg %p57
      %p138 = pneg %p86
      %p139 = pneg %p83
      %p140 = scmp.lt.s32.totalorder %s13, 1
      %s141 = scalar_select %p140, %s13, 1
      %s142 = smul.addr %s141, 8
      %s143 = smul.addr %s142, 8
      %s144 = scalar_lea.vmem %s2, %s143
      %p145 = scmp.lt.s32.totalorder %s13, 1
      %s146 = scalar_select %p145, %s13, 1
      %s147 = smul.addr %s146, 8
      %s148 = smul.addr %s147, 8
      %s149 = scalar_lea.vmem %s0, %s148
      %p150 = scmp.lt.s32.totalorder %s13, 1
      %s151 = scalar_select %p150, %s13, 1
      %s152 = scalar_lea.vmem %s1, %s151
      %p153 = scmp.lt.s32.totalorder %s13, 1
      %s154 = scalar_select %p153, %s13, 1
      %s155 = smul.addr %s154, 8
      %s156 = smul.addr %s155, 8
      %s157 = scalar_lea.vmem %s2, %s156
      %v158 = vld [vmem:[%s149] sm:$0xff]
      %v159 = vld [vmem:[%s149 + $0x8] sm:$0xff]
      %v160 = vld [vmem:[%s149 + $0x10] sm:$0xff]
      %v161 = vld [vmem:[%s149 + $0x18] sm:$0xff]
      %v162 = vld [vmem:[%s149 + $0x20] sm:$0xff]
      %v163 = vld [vmem:[%s149 + $0x28] sm:$0xff]
      %v164 = vld [vmem:[%s149 + $0x30] sm:$0xff]
      %v165 = vld [vmem:[%s149 + $0x38] sm:$0xff]
      %v166 = vld [vmem:[%s152] sm:$0x1]
      %v168 = vlaneseq
      %v169 = vshrl.u32 %v168, 7
      %v170 = vsub.s32 0, %v169
      %v171 = vrot.slane %v166, %v170
      %v173 = vsub.f32 %v158, %v171
      %v174 = vsub.f32 %v159, %v171
      %v175 = vsub.f32 %v160, %v171
      %v176 = vsub.f32 %v161, %v171
      %v177 = vsub.f32 %v162, %v171
      %v178 = vsub.f32 %v163, %v171
      %v179 = vsub.f32 %v164, %v171
      %v180 = vsub.f32 %v165, %v171
      %v181 = vmul.f32 %v173, %v173
      %v182 = vmul.f32 %v174, %v174
      %v183 = vmul.f32 %v175, %v175
      %v184 = vmul.f32 %v176, %v176
      %v185 = vmul.f32 %v177, %v177
      %v186 = vmul.f32 %v178, %v178
      %v187 = vmul.f32 %v179, %v179
      %v188 = vmul.f32 %v180, %v180
      %vm189 = vcmask 261120
      %v190 = vsel %vm189, %v181, 0.0
      %191 = vadd.xlane.f32.xlu0 %v190
      %v192 = vpop.xlane.xlu0 %191
      %v193 = vsel %vm189, %v182, 0.0
      %194 = vadd.xlane.f32.xlu0 %v193
      %v195 = vpop.xlane.xlu0 %194
      %v196 = vsel %vm189, %v183, 0.0
      %197 = vadd.xlane.f32.xlu0 %v196
      %v198 = vpop.xlane.xlu0 %197
      %v199 = vsel %vm189, %v184, 0.0
      %200 = vadd.xlane.f32.xlu0 %v199
      %v201 = vpop.xlane.xlu0 %200
      %v202 = vsel %vm189, %v185, 0.0
      %203 = vadd.xlane.f32.xlu0 %v202
      %v204 = vpop.xlane.xlu0 %203
      %v205 = vsel %vm189, %v186, 0.0
      %206 = vadd.xlane.f32.xlu0 %v205
      %v207 = vpop.xlane.xlu0 %206
      %v208 = vsel %vm189, %v187, 0.0
      %209 = vadd.xlane.f32.xlu0 %v208
      %v210 = vpop.xlane.xlu0 %209
      %v211 = vsel %vm189, %v188, 0.0
      %212 = vadd.xlane.f32.xlu0 %v211
      %v213 = vpop.xlane.xlu0 %212
      %v214 = vrsqrt.pop %v192
      %v215 = vmul.f32 %v192, %v214
      %vm216 = vcmp.eq.f32.partialorder %v192, inf
      %v217 = vsel %vm216, %v192, %v215
      %vm218 = vcmp.eq.f32.partialorder %v192, 0.0
      %v219 = vand.u32 %v192, 2147483648
      %v220 = vsel %vm218, %v219, %v217
      %v221 = vrsqrt.pop %v195
      %v222 = vmul.f32 %v195, %v221
      %vm223 = vcmp.eq.f32.partialorder %v195, inf
      %v224 = vsel %vm223, %v195, %v222
      %vm225 = vcmp.eq.f32.partialorder %v195, 0.0
      %v226 = vand.u32 %v195, 2147483648
      %v227 = vsel %vm225, %v226, %v224
      %v228 = vrsqrt.pop %v198
      %v229 = vmul.f32 %v198, %v228
      %vm230 = vcmp.eq.f32.partialorder %v198, inf
      %v231 = vsel %vm230, %v198, %v229
      %vm232 = vcmp.eq.f32.partialorder %v198, 0.0
      %v233 = vand.u32 %v198, 2147483648
      %v234 = vsel %vm232, %v233, %v231
      %v235 = vrsqrt.pop %v201
      %v236 = vmul.f32 %v201, %v235
      %vm237 = vcmp.eq.f32.partialorder %v201, inf
      %v238 = vsel %vm237, %v201, %v236
      %vm239 = vcmp.eq.f32.partialorder %v201, 0.0
      %v240 = vand.u32 %v201, 2147483648
      %v241 = vsel %vm239, %v240, %v238
      %v242 = vrsqrt.pop %v204
      %v243 = vmul.f32 %v204, %v242
      %vm244 = vcmp.eq.f32.partialorder %v204, inf
      %v245 = vsel %vm244, %v204, %v243
      %vm246 = vcmp.eq.f32.partialorder %v204, 0.0
      %v247 = vand.u32 %v204, 2147483648
      %v248 = vsel %vm246, %v247, %v245
      %v249 = vrsqrt.pop %v207
      %v250 = vmul.f32 %v207, %v249
      %vm251 = vcmp.eq.f32.partialorder %v207, inf
      %v252 = vsel %vm251, %v207, %v250
      %vm253 = vcmp.eq.f32.partialorder %v207, 0.0
      %v254 = vand.u32 %v207, 2147483648
      %v255 = vsel %vm253, %v254, %v252
      %v256 = vrsqrt.pop %v210
      %v257 = vmul.f32 %v210, %v256
      %vm258 = vcmp.eq.f32.partialorder %v210, inf
      %v259 = vsel %vm258, %v210, %v257
      %vm260 = vcmp.eq.f32.partialorder %v210, 0.0
      %v261 = vand.u32 %v210, 2147483648
      %v262 = vsel %vm260, %v261, %v259
      %v263 = vrsqrt.pop %v213
      %v264 = vmul.f32 %v213, %v263
      %vm265 = vcmp.eq.f32.partialorder %v213, inf
      %v266 = vsel %vm265, %v213, %v264
      %vm267 = vcmp.eq.f32.partialorder %v213, 0.0
      %v268 = vand.u32 %v213, 2147483648
      %v269 = vsel %vm267, %v268, %v266
      %v270 = vadd.f32 %v220, 1e-07
      %v271 = vadd.f32 %v227, 1e-07
      %v272 = vadd.f32 %v234, 1e-07
      %v273 = vadd.f32 %v241, 1e-07
      %v274 = vadd.f32 %v248, 1e-07
      %v275 = vadd.f32 %v255, 1e-07
      %v276 = vadd.f32 %v262, 1e-07
      %v277 = vadd.f32 %v269, 1e-07
      %v278 = vrcp.pop %v270
      %v279 = vmul.f32 %v173, %v278
      %v280 = vrcp.pop %v271
      %v281 = vmul.f32 %v174, %v280
      %v282 = vrcp.pop %v272
      %v283 = vmul.f32 %v175, %v282
      %v284 = vrcp.pop %v273
      %v285 = vmul.f32 %v176, %v284
      %v286 = vrcp.pop %v274
      %v287 = vmul.f32 %v177, %v286
      %v288 = vrcp.pop %v275
      %v289 = vmul.f32 %v178, %v288
      %v290 = vrcp.pop %v276
      %v291 = vmul.f32 %v179, %v290
      %v292 = vrcp.pop %v277
      %v293 = vmul.f32 %v180, %v292
      %294 = vst.msk [vmem:[%s157] sm:$0xff] %vm189, %v279
      %295 = vst.msk [vmem:[%s157 + $0x8] sm:$0xff] %vm189, %v281
      %296 = vst.msk [vmem:[%s157 + $0x10] sm:$0xff] %vm189, %v283
      %297 = vst.msk [vmem:[%s157 + $0x18] sm:$0xff] %vm189, %v285
      %298 = vst.msk [vmem:[%s157 + $0x20] sm:$0xff] %vm189, %v287
      %299 = vst.msk [vmem:[%s157 + $0x28] sm:$0xff] %vm189, %v289
      %300 = vst.msk [vmem:[%s157 + $0x30] sm:$0xff] %vm189, %v291
      %301 = vst.msk [vmem:[%s157 + $0x38] sm:$0xff] %vm189, %v293
      %p302 = scmp.lt.s32.totalorder %s13, 1
      %s303 = scalar_select %p302, %s13, 1
      %s304 = smul.addr %s303, 8
      %s305 = smul.addr %s304, 8
      %s306 = scalar_lea.vmem %s2, %s305
      // Predicated region
      $region29: #{cross_view_swap_attention.24} parent=27 // pred_check
        %p307 = pneg %p83
      $region30: #{cross_view_swap_attention.24} parent=27 // pred_check_branch
        %309 = sbr.rel (%p307) target = $region32
      $region31: #{cross_view_swap_attention.24} parent=27 // pred_region
        _
      $region32: #{cross_view_swap_attention.24} parent=27 // pred_fallthru
        _
    $region28: #{cross_view_swap_attention.24} parent=5 // pred_fallthru
      _
    %p310 = scmp.le.s32.totalorder 2, %s8
    // Predicated region
    $region33: #{cross_view_swap_attention.24} parent=5 // pred_check
      %p311 = pneg %p310
    $region34: #{cross_view_swap_attention.24} parent=5 // pred_check_branch
      %313 = sbr.rel (%p311) target = $region36
    $region35: #{cross_view_swap_attention.24} parent=5 // pred_region
      %s314 = ssub.s32 %s8, 2
      // Predicated region
      $region37: #{cross_view_swap_attention.24} parent=35 // pred_check
        %p315 = pneg %p89
      $region38: #{cross_view_swap_attention.24} parent=35 // pred_check_branch
        %317 = sbr.rel (%p315) target = $region40
      $region39: #{cross_view_swap_attention.24} parent=35 // pred_region
        %p318 = scmp.lt.s32.totalorder %s14, 1
        %s319 = scalar_select %p318, %s14, 1
        %s320 = smul.addr %s319, 8
        %s321 = smul.addr %s320, 8
        %s322 = scalar_lea.vmem %s2, %s321
      $region40: #{cross_view_swap_attention.24} parent=35 // pred_fallthru
        _
    $region36: #{cross_view_swap_attention.24} parent=5 // pred_fallthru
      _
  $region6: #{cross_view_swap_attention.24} parent=0 // loop_footer
    %s12 = sadd.s32 1, %s8
  $region7: #{cross_view_swap_attention.24} parent=0 // loop_footer_branch
    %7 = sbr.rel target = $region3
  $region8: #{cross_view_swap_attention.24} parent=0 // loop_exit
    _

// kernel: cross_view_swap_attention.27
$region0: #{cross_view_swap_attention.27}
  #allocation0 [shape = 'u32[]', space=smem, size = 0x4, offset = 0x4, fixed_abs, tag = 'smem constant byte address 0x4 - core index']
  #allocation1 [shape = 'u32[144,128]{1,0:T(1,128)}', space=vmem, size = 0x12000, scoped, tag = 'internal scratch']
  %s0 = inlined_call_operand.vmem [shape: f32[128,16], index: 0, kind: input, shape index: {}]
  %s1 = inlined_call_operand.vmem [shape: f32[1,16], index: 1, kind: input, shape index: {}]
  %s2 = inlined_call_operand.vmem [shape: f32[1,16], index: 2, kind: input, shape index: {}]
  %s3 = inlined_call_operand.vmem [shape: f32[16,32], index: 3, kind: input, shape index: {}]
  %s4 = inlined_call_operand.vmem [shape: f32[128,32], index: 4, kind: output, shape index: {}]
  %s5 = sld [smem:[#allocation0]]
  $region26: #{cross_view_swap_attention.27} parent=0
    _
  %s7 = ssub.s32 1, %s5
  %s8 = scalar_select 0, %s7, %s5
  // Predicated region
  $region2: #{cross_view_swap_attention.27} parent=0 // pred_check
    _
  $region3: #{cross_view_swap_attention.27} parent=0 // pred_check_branch
    %10 = sbr.rel (0) target = $region5
  $region4: #{cross_view_swap_attention.27} parent=0 // pred_region
    _
  $region5: #{cross_view_swap_attention.27} parent=0 // pred_fallthru
    _
  // Predicated region
  $region6: #{cross_view_swap_attention.27} parent=0 // pred_check
    _
  $region7: #{cross_view_swap_attention.27} parent=0 // pred_check_branch
    %12 = sbr.rel (0) target = $region9
  $region8: #{cross_view_swap_attention.27} parent=0 // pred_region
    _
  $region9: #{cross_view_swap_attention.27} parent=0 // pred_fallthru
    _
  // Predicated region
  $region10: #{cross_view_swap_attention.27} parent=0 // pred_check
    _
  $region11: #{cross_view_swap_attention.27} parent=0 // pred_check_branch
    %14 = sbr.rel (0) target = $region13
  $region12: #{cross_view_swap_attention.27} parent=0 // pred_region
    _
  $region13: #{cross_view_swap_attention.27} parent=0 // pred_fallthru
    _
  // Predicated region
  $region14: #{cross_view_swap_attention.27} parent=0 // pred_check
    _
  $region15: #{cross_view_swap_attention.27} parent=0 // pred_check_branch
    %16 = sbr.rel (0) target = $region17
  $region16: #{cross_view_swap_attention.27} parent=0 // pred_region
    _
  $region17: #{cross_view_swap_attention.27} parent=0 // pred_fallthru
    _
  %v17 = vld [vmem:[%s0] sm:$0xff]
  %v18 = vld [vmem:[%s0 + $0x8] sm:$0xff]
  %v19 = vld [vmem:[%s0 + $0x10] sm:$0xff]
  %v20 = vld [vmem:[%s0 + $0x18] sm:$0xff]
  %v21 = vld [vmem:[%s0 + $0x20] sm:$0xff]
  %v22 = vld [vmem:[%s0 + $0x28] sm:$0xff]
  %v23 = vld [vmem:[%s0 + $0x30] sm:$0xff]
  %v24 = vld [vmem:[%s0 + $0x38] sm:$0xff]
  %v25 = vld [vmem:[%s0 + $0x40] sm:$0xff]
  %v26 = vld [vmem:[%s0 + $0x48] sm:$0xff]
  %v27 = vld [vmem:[%s0 + $0x50] sm:$0xff]
  %v28 = vld [vmem:[%s0 + $0x58] sm:$0xff]
  %v29 = vld [vmem:[%s0 + $0x60] sm:$0xff]
  %v30 = vld [vmem:[%s0 + $0x68] sm:$0xff]
  %v31 = vld [vmem:[%s0 + $0x70] sm:$0xff]
  %v32 = vld [vmem:[%s0 + $0x78] sm:$0xff]
  %v33 = vld [vmem:[%s1] sm:$0x1]
  %v35 = vlaneseq
  %v36 = vshrl.u32 %v35, 7
  %v37 = vsub.s32 0, %v36
  %v38 = vrot.slane %v33, %v37
  %v40 = vmul.f32 %v17, %v38
  %v41 = vmul.f32 %v18, %v38
  %v42 = vmul.f32 %v19, %v38
  %v43 = vmul.f32 %v20, %v38
  %v44 = vmul.f32 %v21, %v38
  %v45 = vmul.f32 %v22, %v38
  %v46 = vmul.f32 %v23, %v38
  %v47 = vmul.f32 %v24, %v38
  %v48 = vmul.f32 %v25, %v38
  %v49 = vmul.f32 %v26, %v38
  %v50 = vmul.f32 %v27, %v38
  %v51 = vmul.f32 %v28, %v38
  %v52 = vmul.f32 %v29, %v38
  %v53 = vmul.f32 %v30, %v38
  %v54 = vmul.f32 %v31, %v38
  %v55 = vmul.f32 %v32, %v38
  %v56 = vld [vmem:[%s2] sm:$0x1]
  %v58 = vlaneseq
  %v59 = vshrl.u32 %v58, 7
  %v60 = vsub.s32 0, %v59
  %v61 = vrot.slane %v56, %v60
  %v63 = vadd.f32 %v40, %v61
  %v64 = vadd.f32 %v41, %v61
  %v65 = vadd.f32 %v42, %v61
  %v66 = vadd.f32 %v43, %v61
  %v67 = vadd.f32 %v44, %v61
  %v68 = vadd.f32 %v45, %v61
  %v69 = vadd.f32 %v46, %v61
  %v70 = vadd.f32 %v47, %v61
  %v71 = vadd.f32 %v48, %v61
  %v72 = vadd.f32 %v49, %v61
  %v73 = vadd.f32 %v50, %v61
  %v74 = vadd.f32 %v51, %v61
  %v75 = vadd.f32 %v52, %v61
  %v76 = vadd.f32 %v53, %v61
  %v77 = vadd.f32 %v54, %v61
  %v78 = vadd.f32 %v55, %v61
  %v79 = vmax.f32 %v63, 0.0
  %v80 = vmax.f32 %v64, 0.0
  %v81 = vmax.f32 %v65, 0.0
  %v82 = vmax.f32 %v66, 0.0
  %v83 = vmax.f32 %v67, 0.0
  %v84 = vmax.f32 %v68, 0.0
  %v85 = vmax.f32 %v69, 0.0
  %v86 = vmax.f32 %v70, 0.0
  %v87 = vmax.f32 %v71, 0.0
  %v88 = vmax.f32 %v72, 0.0
  %v89 = vmax.f32 %v73, 0.0
  %v90 = vmax.f32 %v74, 0.0
  %v91 = vmax.f32 %v75, 0.0
  %v92 = vmax.f32 %v76, 0.0
  %v93 = vmax.f32 %v77, 0.0
  %v94 = vmax.f32 %v78, 0.0
  %v95 = vld [vmem:[%s3] sm:$0xff]
  %v96 = vld [vmem:[%s3 + $0x8] sm:$0xff]
  %vm97 = vcmask 130048
  %v99 = vsel %vm97, %v79, 0
  %v102 = vsel %vm97, %v80, 0
  %v105 = vsel %vm97, %v81, 0
  %v108 = vsel %vm97, %v82, 0
  %v111 = vsel %vm97, %v83, 0
  %v114 = vsel %vm97, %v84, 0
  %v117 = vsel %vm97, %v85, 0
  %v120 = vsel %vm97, %v86, 0
  %v123 = vsel %vm97, %v87, 0
  %v126 = vsel %vm97, %v88, 0
  %v129 = vsel %vm97, %v89, 0
  %v132 = vsel %vm97, %v90, 0
  %v135 = vsel %vm97, %v91, 0
  %v138 = vsel %vm97, %v92, 0
  %v141 = vsel %vm97, %v93, 0
  %v144 = vsel %vm97, %v94, 0
  %146 = vmatprep.subr.mxu0 0.0
  %147 = vmatpush1.msra.mxu0 %v95
  %148 = vmatprep.subr.mxu0 0.0
  %149 = vmatpush1.msra.mxu0 %v96
  %150 = vmatprep.subr.mxu0 0.0
  %151 = vmatpush1.msra.mxu0 0.0
  %152 = vmatprep.subr.mxu0 0.0
  %153 = vmatpush1.msra.mxu0 0.0
  %154 = vmatprep.subr.mxu0 0.0
  %155 = vmatpush1.msra.mxu0 0.0
  %156 = vmatprep.subr.mxu0 0.0
  %157 = vmatpush1.msra.mxu0 0.0
  %158 = vmatprep.subr.mxu0 0.0
  %159 = vmatpush1.msra.mxu0 0.0
  %160 = vmatprep.subr.mxu0 0.0
  %161 = vmatpush1.msra.mxu0 0.0
  %162 = vmatprep.subr.mxu0 0.0
  %163 = vmatpush1.msra.mxu0 0.0
  %164 = vmatprep.subr.mxu0 0.0
  %165 = vmatpush1.msra.mxu0 0.0
  %166 = vmatprep.subr.mxu0 0.0
  %167 = vmatpush1.msra.mxu0 0.0
  %168 = vmatprep.subr.mxu0 0.0
  %169 = vmatpush1.msra.mxu0 0.0
  %170 = vmatprep.subr.mxu0 0.0
  %171 = vmatpush1.msra.mxu0 0.0
  %172 = vmatprep.subr.mxu0 0.0
  %173 = vmatpush1.msra.mxu0 0.0
  %174 = vmatprep.subr.mxu0 0.0
  %175 = vmatpush1.msra.mxu0 0.0
  %176 = vmatprep.subr.mxu0 0.0
  %177 = vmatpush1.msra.mxu0 0.0
  %178 = vmatprep.subr.mxu0 0.0
  %179 = vmatpush1.msra.mxu0 0.0
  %180 = vmatprep.subr.mxu0 0.0
  %181 = vmatpush1.msra.mxu0 0.0
  %182 = vmatprep.subr.mxu0 0.0
  %183 = vmatpush1.msra.mxu0 0.0
  %184 = vmatprep.subr.mxu0 0.0
  %185 = vmatpush1.msra.mxu0 0.0
  %186 = vmatprep.subr.mxu0 0.0
  %187 = vmatpush1.msra.mxu0 0.0
  %188 = vmatprep.subr.mxu0 0.0
  %189 = vmatpush1.msra.mxu0 0.0
  %190 = vmatprep.subr.mxu0 0.0
  %191 = vmatpush1.msra.mxu0 0.0
  %192 = vmatprep.subr.mxu0 0.0
  %193 = vmatpush1.msra.mxu0 0.0
  %194 = vmatprep.subr.mxu0 0.0
  %195 = vmatpush1.msra.mxu0 0.0
  %196 = vmatprep.subr.mxu0 0.0
  %197 = vmatpush1.msra.mxu0 0.0
  %198 = vmatprep.subr.mxu0 0.0
  %199 = vmatpush1.msra.mxu0 0.0
  %200 = vmatprep.subr.mxu0 0.0
  %201 = vmatpush1.msra.mxu0 0.0
  %202 = vmatprep.subr.mxu0 0.0
  %203 = vmatpush1.msra.mxu0 0.0
  %204 = vmatprep.subr.mxu0 0.0
  %205 = vmatpush1.msra.mxu0 0.0
  %206 = vmatprep.subr.mxu0 0.0
  %207 = vmatpush1.msra.mxu0 0.0
  %208 = vmatprep.subr.mxu0 0.0
  %209 = vmatpush1.msra.mxu0 0.0
  %210 = vmatprep.mubr.f32.mxu0 0.0
  %211 = vmatmul.mubr.f32.gmra.mrb[0].mxu0 %v99
  %v212 = vpop.f32.mrb[0].mxu0
  %v213 = vadd.f32 0.0, %v212
  %v214 = vpop.f32.mrb[0].mxu0
  %215 = vmatprep.mubr.f32.mxu0 0.0
  %216 = vmatmul.mubr.f32.gmra.mrb[0].mxu0 %v102
  %v217 = vpop.f32.mrb[0].mxu0
  %v218 = vadd.f32 0.0, %v217
  %v219 = vpop.f32.mrb[0].mxu0
  %220 = vmatprep.mubr.f32.mxu0 0.0
  %221 = vmatmul.mubr.f32.gmra.mrb[0].mxu0 %v105
  %v222 = vpop.f32.mrb[0].mxu0
  %v223 = vadd.f32 0.0, %v222
  %v224 = vpop.f32.mrb[0].mxu0
  %225 = vmatprep.mubr.f32.mxu0 0.0
  %226 = vmatmul.mubr.f32.gmra.mrb[0].mxu0 %v108
  %v227 = vpop.f32.mrb[0].mxu0
  %v228 = vadd.f32 0.0, %v227
  %v229 = vpop.f32.mrb[0].mxu0
  %230 = vmatprep.mubr.f32.mxu0 0.0
  %231 = vmatmul.mubr.f32.gmra.mrb[0].mxu0 %v111
  %v232 = vpop.f32.mrb[0].mxu0
  %v233 = vadd.f32 0.0, %v232
  %v234 = vpop.f32.mrb[0].mxu0
  %235 = vmatprep.mubr.f32.mxu0 0.0
  %236 = vmatmul.mubr.f32.gmra.mrb[0].mxu0 %v114
  %v237 = vpop.f32.mrb[0].mxu0
  %v238 = vadd.f32 0.0, %v237
  %v239 = vpop.f32.mrb[0].mxu0
  %240 = vmatprep.mubr.f32.mxu0 0.0
  %241 = vmatmul.mubr.f32.gmra.mrb[0].mxu0 %v117
  %v242 = vpop.f32.mrb[0].mxu0
  %v243 = vadd.f32 0.0, %v242
  %v244 = vpop.f32.mrb[0].mxu0
  %245 = vmatprep.mubr.f32.mxu0 0.0
  %246 = vmatmul.mubr.f32.gmra.mrb[0].mxu0 %v120
  %v247 = vpop.f32.mrb[0].mxu0
  %v248 = vadd.f32 0.0, %v247
  %v249 = vpop.f32.mrb[0].mxu0
  %250 = vmatprep.mubr.f32.mxu0 0.0
  %251 = vmatmul.mubr.f32.gmra.mrb[0].mxu0 %v123
  %v252 = vpop.f32.mrb[0].mxu0
  %v253 = vadd.f32 0.0, %v252
  %v254 = vpop.f32.mrb[0].mxu0
  %255 = vmatprep.mubr.f32.mxu0 0.0
  %256 = vmatmul.mubr.f32.gmra.mrb[0].mxu0 %v126
  %v257 = vpop.f32.mrb[0].mxu0
  %v258 = vadd.f32 0.0, %v257
  %v259 = vpop.f32.mrb[0].mxu0
  %260 = vmatprep.mubr.f32.mxu0 0.0
  %261 = vmatmul.mubr.f32.gmra.mrb[0].mxu0 %v129
  %v262 = vpop.f32.mrb[0].mxu0
  %v263 = vadd.f32 0.0, %v262
  %v264 = vpop.f32.mrb[0].mxu0
  %265 = vmatprep.mubr.f32.mxu0 0.0
  %266 = vmatmul.mubr.f32.gmra.mrb[0].mxu0 %v132
  %v267 = vpop.f32.mrb[0].mxu0
  %v268 = vadd.f32 0.0, %v267
  %v269 = vpop.f32.mrb[0].mxu0
  %270 = vmatprep.mubr.f32.mxu0 0.0
  %271 = vmatmul.mubr.f32.gmra.mrb[0].mxu0 %v135
  %v272 = vpop.f32.mrb[0].mxu0
  %v273 = vadd.f32 0.0, %v272
  %v274 = vpop.f32.mrb[0].mxu0
  %275 = vmatprep.mubr.f32.mxu0 0.0
  %276 = vmatmul.mubr.f32.gmra.mrb[0].mxu0 %v138
  %v277 = vpop.f32.mrb[0].mxu0
  %v278 = vadd.f32 0.0, %v277
  %v279 = vpop.f32.mrb[0].mxu0
  %280 = vmatprep.mubr.f32.mxu0 0.0
  %281 = vmatmul.mubr.f32.gmra.mrb[0].mxu0 %v141
  %v282 = vpop.f32.mrb[0].mxu0
  %v283 = vadd.f32 0.0, %v282
  %v284 = vpop.f32.mrb[0].mxu0
  %285 = vmatprep.mubr.f32.mxu0 0.0
  %286 = vmatmul.mubr.f32.gmra.mrb[0].mxu0 %v144
  %v287 = vpop.f32.mrb[0].mxu0
  %v288 = vadd.f32 0.0, %v287
  %v289 = vpop.f32.mrb[0].mxu0
  %290 = vdwg.mxu0
  %vm291 = vcmask 261120
  %292 = vst.msk [vmem:[%s4] sm:$0xff] %vm291, %v213
  %293 = vst.msk [vmem:[%s4 + $0x8] sm:$0xff] %vm291, %v218
  %294 = vst.msk [vmem:[%s4 + $0x10] sm:$0xff] %vm291, %v223
  %295 = vst.msk [vmem:[%s4 + $0x18] sm:$0xff] %vm291, %v228
  %296 = vst.msk [vmem:[%s4 + $0x20] sm:$0xff] %vm291, %v233
  %297 = vst.msk [vmem:[%s4 + $0x28] sm:$0xff] %vm291, %v238
  %298 = vst.msk [vmem:[%s4 + $0x30] sm:$0xff] %vm291, %v243
  %299 = vst.msk [vmem:[%s4 + $0x38] sm:$0xff] %vm291, %v248
  %300 = vst.msk [vmem:[%s4 + $0x40] sm:$0xff] %vm291, %v253
  %301 = vst.msk [vmem:[%s4 + $0x48] sm:$0xff] %vm291, %v258
  %302 = vst.msk [vmem:[%s4 + $0x50] sm:$0xff] %vm291, %v263
  %303 = vst.msk [vmem:[%s4 + $0x58] sm:$0xff] %vm291, %v268
  %304 = vst.msk [vmem:[%s4 + $0x60] sm:$0xff] %vm291, %v273
  %305 = vst.msk [vmem:[%s4 + $0x68] sm:$0xff] %vm291, %v278
  %306 = vst.msk [vmem:[%s4 + $0x70] sm:$0xff] %vm291, %v283
  %307 = vst.msk [vmem:[%s4 + $0x78] sm:$0xff] %vm291, %v288
  // Predicated region
  $region18: #{cross_view_swap_attention.27} parent=0 // pred_check
    _
  $region19: #{cross_view_swap_attention.27} parent=0 // pred_check_branch
    %309 = sbr.rel (0) target = $region21
  $region20: #{cross_view_swap_attention.27} parent=0 // pred_region
    _
  $region21: #{cross_view_swap_attention.27} parent=0 // pred_fallthru
    _
  // Predicated region
  $region22: #{cross_view_swap_attention.27} parent=0 // pred_check
    _
  $region23: #{cross_view_swap_attention.27} parent=0 // pred_check_branch
    %311 = sbr.rel (0) target = $region25
  $region24: #{cross_view_swap_attention.27} parent=0 // pred_region
    _
  $region25: #{cross_view_swap_attention.27} parent=0 // pred_fallthru
    _

// kernel: cross_view_swap_attention.30
$region0: #{cross_view_swap_attention.30}
  #allocation0 [shape = 'u32[]', space=smem, size = 0x4, offset = 0x4, fixed_abs, tag = 'smem constant byte address 0x4 - core index']
  #allocation1 [shape = 'u32[144,128]{1,0:T(1,128)}', space=vmem, size = 0x12000, scoped, tag = 'internal scratch']
  %s0 = inlined_call_operand.vmem [shape: f32[128,32], index: 0, kind: input, shape index: {}]
  %s1 = inlined_call_operand.vmem [shape: f32[1,32], index: 1, kind: input, shape index: {}]
  %s2 = inlined_call_operand.vmem [shape: f32[1,32], index: 2, kind: input, shape index: {}]
  %s3 = inlined_call_operand.vmem [shape: f32[32,32], index: 3, kind: input, shape index: {}]
  %s4 = inlined_call_operand.vmem [shape: f32[1,32], index: 4, kind: input, shape index: {}]
  %s5 = inlined_call_operand.vmem [shape: f32[128,32], index: 5, kind: output, shape index: {}]
  %s6 = sld [smem:[#allocation0]]
  $region30: #{cross_view_swap_attention.30} parent=0
    _
  %s8 = ssub.s32 1, %s6
  %s9 = scalar_select 0, %s8, %s6
  // Predicated region
  $region2: #{cross_view_swap_attention.30} parent=0 // pred_check
    _
  $region3: #{cross_view_swap_attention.30} parent=0 // pred_check_branch
    %11 = sbr.rel (0) target = $region5
  $region4: #{cross_view_swap_attention.30} parent=0 // pred_region
    _
  $region5: #{cross_view_swap_attention.30} parent=0 // pred_fallthru
    _
  // Predicated region
  $region6: #{cross_view_swap_attention.30} parent=0 // pred_check
    _
  $region7: #{cross_view_swap_attention.30} parent=0 // pred_check_branch
    %13 = sbr.rel (0) target = $region9
  $region8: #{cross_view_swap_attention.30} parent=0 // pred_region
    _
  $region9: #{cross_view_swap_attention.30} parent=0 // pred_fallthru
    _
  // Predicated region
  $region10: #{cross_view_swap_attention.30} parent=0 // pred_check
    _
  $region11: #{cross_view_swap_attention.30} parent=0 // pred_check_branch
    %15 = sbr.rel (0) target = $region13
  $region12: #{cross_view_swap_attention.30} parent=0 // pred_region
    _
  $region13: #{cross_view_swap_attention.30} parent=0 // pred_fallthru
    _
  // Predicated region
  $region14: #{cross_view_swap_attention.30} parent=0 // pred_check
    _
  $region15: #{cross_view_swap_attention.30} parent=0 // pred_check_branch
    %17 = sbr.rel (0) target = $region17
  $region16: #{cross_view_swap_attention.30} parent=0 // pred_region
    _
  $region17: #{cross_view_swap_attention.30} parent=0 // pred_fallthru
    _
  // Predicated region
  $region18: #{cross_view_swap_attention.30} parent=0 // pred_check
    _
  $region19: #{cross_view_swap_attention.30} parent=0 // pred_check_branch
    %19 = sbr.rel (0) target = $region21
  $region20: #{cross_view_swap_attention.30} parent=0 // pred_region
    _
  $region21: #{cross_view_swap_attention.30} parent=0 // pred_fallthru
    _
  %v20 = vld [vmem:[%s0] sm:$0xff]
  %v21 = vld [vmem:[%s0 + $0x8] sm:$0xff]
  %v22 = vld [vmem:[%s0 + $0x10] sm:$0xff]
  %v23 = vld [vmem:[%s0 + $0x18] sm:$0xff]
  %v24 = vld [vmem:[%s0 + $0x20] sm:$0xff]
  %v25 = vld [vmem:[%s0 + $0x28] sm:$0xff]
  %v26 = vld [vmem:[%s0 + $0x30] sm:$0xff]
  %v27 = vld [vmem:[%s0 + $0x38] sm:$0xff]
  %v28 = vld [vmem:[%s0 + $0x40] sm:$0xff]
  %v29 = vld [vmem:[%s0 + $0x48] sm:$0xff]
  %v30 = vld [vmem:[%s0 + $0x50] sm:$0xff]
  %v31 = vld [vmem:[%s0 + $0x58] sm:$0xff]
  %v32 = vld [vmem:[%s0 + $0x60] sm:$0xff]
  %v33 = vld [vmem:[%s0 + $0x68] sm:$0xff]
  %v34 = vld [vmem:[%s0 + $0x70] sm:$0xff]
  %v35 = vld [vmem:[%s0 + $0x78] sm:$0xff]
  %v36 = vld [vmem:[%s1] sm:$0x1]
  %v37 = vld [vmem:[%s2] sm:$0x1]
  %vm38 = vcmask 261120
  %v39 = vsel %vm38, %v20, 0.0
  %40 = vadd.xlane.f32.xlu0 %v39
  %v41 = vpop.xlane.xlu0 %40
  %v42 = vsel %vm38, %v21, 0.0
  %43 = vadd.xlane.f32.xlu0 %v42
  %v44 = vpop.xlane.xlu0 %43
  %v45 = vsel %vm38, %v22, 0.0
  %46 = vadd.xlane.f32.xlu0 %v45
  %v47 = vpop.xlane.xlu0 %46
  %v48 = vsel %vm38, %v23, 0.0
  %49 = vadd.xlane.f32.xlu0 %v48
  %v50 = vpop.xlane.xlu0 %49
  %v51 = vsel %vm38, %v24, 0.0
  %52 = vadd.xlane.f32.xlu0 %v51
  %v53 = vpop.xlane.xlu0 %52
  %v54 = vsel %vm38, %v25, 0.0
  %55 = vadd.xlane.f32.xlu0 %v54
  %v56 = vpop.xlane.xlu0 %55
  %v57 = vsel %vm38, %v26, 0.0
  %58 = vadd.xlane.f32.xlu0 %v57
  %v59 = vpop.xlane.xlu0 %58
  %v60 = vsel %vm38, %v27, 0.0
  %61 = vadd.xlane.f32.xlu0 %v60
  %v62 = vpop.xlane.xlu0 %61
  %v63 = vsel %vm38, %v28, 0.0
  %64 = vadd.xlane.f32.xlu0 %v63
  %v65 = vpop.xlane.xlu0 %64
  %v66 = vsel %vm38, %v29, 0.0
  %67 = vadd.xlane.f32.xlu0 %v66
  %v68 = vpop.xlane.xlu0 %67
  %v69 = vsel %vm38, %v30, 0.0
  %70 = vadd.xlane.f32.xlu0 %v69
  %v71 = vpop.xlane.xlu0 %70
  %v72 = vsel %vm38, %v31, 0.0
  %73 = vadd.xlane.f32.xlu0 %v72
  %v74 = vpop.xlane.xlu0 %73
  %v75 = vsel %vm38, %v32, 0.0
  %76 = vadd.xlane.f32.xlu0 %v75
  %v77 = vpop.xlane.xlu0 %76
  %v78 = vsel %vm38, %v33, 0.0
  %79 = vadd.xlane.f32.xlu0 %v78
  %v80 = vpop.xlane.xlu0 %79
  %v81 = vsel %vm38, %v34, 0.0
  %82 = vadd.xlane.f32.xlu0 %v81
  %v83 = vpop.xlane.xlu0 %82
  %v84 = vsel %vm38, %v35, 0.0
  %85 = vadd.xlane.f32.xlu0 %v84
  %v86 = vpop.xlane.xlu0 %85
  %v87 = vrcp.pop 32.0
  %v88 = vmul.f32 %v41, %v87
  %v89 = vmul.f32 %v44, %v87
  %v90 = vmul.f32 %v47, %v87
  %v91 = vmul.f32 %v50, %v87
  %v92 = vmul.f32 %v53, %v87
  %v93 = vmul.f32 %v56, %v87
  %v94 = vmul.f32 %v59, %v87
  %v95 = vmul.f32 %v62, %v87
  %v96 = vmul.f32 %v65, %v87
  %v97 = vmul.f32 %v68, %v87
  %v98 = vmul.f32 %v71, %v87
  %v99 = vmul.f32 %v74, %v87
  %v100 = vmul.f32 %v77, %v87
  %v101 = vmul.f32 %v80, %v87
  %v102 = vmul.f32 %v83, %v87
  %v103 = vmul.f32 %v86, %v87
  %v104 = vsub.f32 %v20, %v88
  %v105 = vsub.f32 %v21, %v89
  %v106 = vsub.f32 %v22, %v90
  %v107 = vsub.f32 %v23, %v91
  %v108 = vsub.f32 %v24, %v92
  %v109 = vsub.f32 %v25, %v93
  %v110 = vsub.f32 %v26, %v94
  %v111 = vsub.f32 %v27, %v95
  %v112 = vsub.f32 %v28, %v96
  %v113 = vsub.f32 %v29, %v97
  %v114 = vsub.f32 %v30, %v98
  %v115 = vsub.f32 %v31, %v99
  %v116 = vsub.f32 %v32, %v100
  %v117 = vsub.f32 %v33, %v101
  %v118 = vsub.f32 %v34, %v102
  %v119 = vsub.f32 %v35, %v103
  %v120 = vmul.f32 %v104, %v104
  %v121 = vmul.f32 %v105, %v105
  %v122 = vmul.f32 %v106, %v106
  %v123 = vmul.f32 %v107, %v107
  %v124 = vmul.f32 %v108, %v108
  %v125 = vmul.f32 %v109, %v109
  %v126 = vmul.f32 %v110, %v110
  %v127 = vmul.f32 %v111, %v111
  %v128 = vmul.f32 %v112, %v112
  %v129 = vmul.f32 %v113, %v113
  %v130 = vmul.f32 %v114, %v114
  %v131 = vmul.f32 %v115, %v115
  %v132 = vmul.f32 %v116, %v116
  %v133 = vmul.f32 %v117, %v117
  %v134 = vmul.f32 %v118, %v118
  %v135 = vmul.f32 %v119, %v119
  %v136 = vsel %vm38, %v120, 0.0
  %137 = vadd.xlane.f32.xlu0 %v136
  %v138 = vpop.xlane.xlu0 %137
  %v139 = vsel %vm38, %v121, 0.0
  %140 = vadd.xlane.f32.xlu0 %v139
  %v141 = vpop.xlane.xlu0 %140
  %v142 = vsel %vm38, %v122, 0.0
  %143 = vadd.xlane.f32.xlu0 %v142
  %v144 = vpop.xlane.xlu0 %143
  %v145 = vsel %vm38, %v123, 0.0
  %146 = vadd.xlane.f32.xlu0 %v145
  %v147 = vpop.xlane.xlu0 %146
  %v148 = vsel %vm38, %v124, 0.0
  %149 = vadd.xlane.f32.xlu0 %v148
  %v150 = vpop.xlane.xlu0 %149
  %v151 = vsel %vm38, %v125, 0.0
  %152 = vadd.xlane.f32.xlu0 %v151
  %v153 = vpop.xlane.xlu0 %152
  %v154 = vsel %vm38, %v126, 0.0
  %155 = vadd.xlane.f32.xlu0 %v154
  %v156 = vpop.xlane.xlu0 %155
  %v157 = vsel %vm38, %v127, 0.0
  %158 = vadd.xlane.f32.xlu0 %v157
  %v159 = vpop.xlane.xlu0 %158
  %v160 = vsel %vm38, %v128, 0.0
  %161 = vadd.xlane.f32.xlu0 %v160
  %v162 = vpop.xlane.xlu0 %161
  %v163 = vsel %vm38, %v129, 0.0
  %164 = vadd.xlane.f32.xlu0 %v163
  %v165 = vpop.xlane.xlu0 %164
  %v166 = vsel %vm38, %v130, 0.0
  %167 = vadd.xlane.f32.xlu0 %v166
  %v168 = vpop.xlane.xlu0 %167
  %v169 = vsel %vm38, %v131, 0.0
  %170 = vadd.xlane.f32.xlu0 %v169
  %v171 = vpop.xlane.xlu0 %170
  %v172 = vsel %vm38, %v132, 0.0
  %173 = vadd.xlane.f32.xlu0 %v172
  %v174 = vpop.xlane.xlu0 %173
  %v175 = vsel %vm38, %v133, 0.0
  %176 = vadd.xlane.f32.xlu0 %v175
  %v177 = vpop.xlane.xlu0 %176
  %v178 = vsel %vm38, %v134, 0.0
  %179 = vadd.xlane.f32.xlu0 %v178
  %v180 = vpop.xlane.xlu0 %179
  %v181 = vsel %vm38, %v135, 0.0
  %182 = vadd.xlane.f32.xlu0 %v181
  %v183 = vpop.xlane.xlu0 %182
  %v184 = vmul.f32 %v138, %v87
  %v185 = vmul.f32 %v141, %v87
  %v186 = vmul.f32 %v144, %v87
  %v187 = vmul.f32 %v147, %v87
  %v188 = vmul.f32 %v150, %v87
  %v189 = vmul.f32 %v153, %v87
  %v190 = vmul.f32 %v156, %v87
  %v191 = vmul.f32 %v159, %v87
  %v192 = vmul.f32 %v162, %v87
  %v193 = vmul.f32 %v165, %v87
  %v194 = vmul.f32 %v168, %v87
  %v195 = vmul.f32 %v171, %v87
  %v196 = vmul.f32 %v174, %v87
  %v197 = vmul.f32 %v177, %v87
  %v198 = vmul.f32 %v180, %v87
  %v199 = vmul.f32 %v183, %v87
  %v200 = vadd.f32 %v184, 1e-05
  %v201 = vadd.f32 %v185, 1e-05
  %v202 = vadd.f32 %v186, 1e-05
  %v203 = vadd.f32 %v187, 1e-05
  %v204 = vadd.f32 %v188, 1e-05
  %v205 = vadd.f32 %v189, 1e-05
  %v206 = vadd.f32 %v190, 1e-05
  %v207 = vadd.f32 %v191, 1e-05
  %v208 = vadd.f32 %v192, 1e-05
  %v209 = vadd.f32 %v193, 1e-05
  %v210 = vadd.f32 %v194, 1e-05
  %v211 = vadd.f32 %v195, 1e-05
  %v212 = vadd.f32 %v196, 1e-05
  %v213 = vadd.f32 %v197, 1e-05
  %v214 = vadd.f32 %v198, 1e-05
  %v215 = vadd.f32 %v199, 1e-05
  %v216 = vrsqrt.pop %v200
  %v217 = vrsqrt.pop %v201
  %v218 = vrsqrt.pop %v202
  %v219 = vrsqrt.pop %v203
  %v220 = vrsqrt.pop %v204
  %v221 = vrsqrt.pop %v205
  %v222 = vrsqrt.pop %v206
  %v223 = vrsqrt.pop %v207
  %v224 = vrsqrt.pop %v208
  %v225 = vrsqrt.pop %v209
  %v226 = vrsqrt.pop %v210
  %v227 = vrsqrt.pop %v211
  %v228 = vrsqrt.pop %v212
  %v229 = vrsqrt.pop %v213
  %v230 = vrsqrt.pop %v214
  %v231 = vrsqrt.pop %v215
  %v232 = vmul.f32 %v104, %v216
  %v233 = vmul.f32 %v105, %v217
  %v234 = vmul.f32 %v106, %v218
  %v235 = vmul.f32 %v107, %v219
  %v236 = vmul.f32 %v108, %v220
  %v237 = vmul.f32 %v109, %v221
  %v238 = vmul.f32 %v110, %v222
  %v239 = vmul.f32 %v111, %v223
  %v240 = vmul.f32 %v112, %v224
  %v241 = vmul.f32 %v113, %v225
  %v242 = vmul.f32 %v114, %v226
  %v243 = vmul.f32 %v115, %v227
  %v244 = vmul.f32 %v116, %v228
  %v245 = vmul.f32 %v117, %v229
  %v246 = vmul.f32 %v118, %v230
  %v247 = vmul.f32 %v119, %v231
  %v249 = vlaneseq
  %v250 = vshrl.u32 %v249, 7
  %v251 = vsub.s32 0, %v250
  %v252 = vrot.slane %v36, %v251
  %v254 = vmul.f32 %v232, %v252
  %v255 = vmul.f32 %v233, %v252
  %v256 = vmul.f32 %v234, %v252
  %v257 = vmul.f32 %v235, %v252
  %v258 = vmul.f32 %v236, %v252
  %v259 = vmul.f32 %v237, %v252
  %v260 = vmul.f32 %v238, %v252
  %v261 = vmul.f32 %v239, %v252
  %v262 = vmul.f32 %v240, %v252
  %v263 = vmul.f32 %v241, %v252
  %v264 = vmul.f32 %v242, %v252
  %v265 = vmul.f32 %v243, %v252
  %v266 = vmul.f32 %v244, %v252
  %v267 = vmul.f32 %v245, %v252
  %v268 = vmul.f32 %v246, %v252
  %v269 = vmul.f32 %v247, %v252
  %v271 = vlaneseq
  %v272 = vshrl.u32 %v271, 7
  %v273 = vsub.s32 0, %v272
  %v274 = vrot.slane %v37, %v273
  %v276 = vadd.f32 %v254, %v274
  %v277 = vadd.f32 %v255, %v274
  %v278 = vadd.f32 %v256, %v274
  %v279 = vadd.f32 %v257, %v274
  %v280 = vadd.f32 %v258, %v274
  %v281 = vadd.f32 %v259, %v274
  %v282 = vadd.f32 %v260, %v274
  %v283 = vadd.f32 %v261, %v274
  %v284 = vadd.f32 %v262, %v274
  %v285 = vadd.f32 %v263, %v274
  %v286 = vadd.f32 %v264, %v274
  %v287 = vadd.f32 %v265, %v274
  %v288 = vadd.f32 %v266, %v274
  %v289 = vadd.f32 %v267, %v274
  %v290 = vadd.f32 %v268, %v274
  %v291 = vadd.f32 %v269, %v274
  %v292 = vld [vmem:[%s3] sm:$0xff]
  %v293 = vld [vmem:[%s3 + $0x8] sm:$0xff]
  %v294 = vld [vmem:[%s3 + $0x10] sm:$0xff]
  %v295 = vld [vmem:[%s3 + $0x18] sm:$0xff]
  %v296 = vld [vmem:[%s4] sm:$0x1]
  %v298 = vlaneseq
  %v299 = vshrl.u32 %v298, 7
  %v300 = vsub.s32 0, %v299
  %v301 = vrot.slane %v296, %v300
  %v304 = vsel %vm38, %v276, 0
  %v307 = vsel %vm38, %v277, 0
  %v310 = vsel %vm38, %v278, 0
  %v313 = vsel %vm38, %v279, 0
  %v316 = vsel %vm38, %v280, 0
  %v319 = vsel %vm38, %v281, 0
  %v322 = vsel %vm38, %v282, 0
  %v325 = vsel %vm38, %v283, 0
  %v328 = vsel %vm38, %v284, 0
  %v331 = vsel %vm38, %v285, 0
  %v334 = vsel %vm38, %v286, 0
  %v337 = vsel %vm38, %v287, 0
  %v340 = vsel %vm38, %v288, 0
  %v343 = vsel %vm38, %v289, 0
  %v346 = vsel %vm38, %v290, 0
  %v349 = vsel %vm38, %v291, 0
  %351 = vmatprep.subr.mxu0 0.0
  %352 = vmatpush1.msra.mxu0 %v292
  %353 = vmatprep.subr.mxu0 0.0
  %354 = vmatpush1.msra.mxu0 %v293
  %355 = vmatprep.subr.mxu0 0.0
  %356 = vmatpush1.msra.mxu0 %v294
  %357 = vmatprep.subr.mxu0 0.0
  %358 = vmatpush1.msra.mxu0 %v295
  %359 = vmatprep.subr.mxu0 0.0
  %360 = vmatpush1.msra.mxu0 0.0
  %361 = vmatprep.subr.mxu0 0.0
  %362 = vmatpush1.msra.mxu0 0.0
  %363 = vmatprep.subr.mxu0 0.0
  %364 = vmatpush1.msra.mxu0 0.0
  %365 = vmatprep.subr.mxu0 0.0
  %366 = vmatpush1.msra.mxu0 0.0
  %367 = vmatprep.subr.mxu0 0.0
  %368 = vmatpush1.msra.mxu0 0.0
  %369 = vmatprep.subr.mxu0 0.0
  %370 = vmatpush1.msra.mxu0 0.0
  %371 = vmatprep.subr.mxu0 0.0
  %372 = vmatpush1.msra.mxu0 0.0
  %373 = vmatprep.subr.mxu0 0.0
  %374 = vmatpush1.msra.mxu0 0.0
  %375 = vmatprep.subr.mxu0 0.0
  %376 = vmatpush1.msra.mxu0 0.0
  %377 = vmatprep.subr.mxu0 0.0
  %378 = vmatpush1.msra.mxu0 0.0
  %379 = vmatprep.subr.mxu0 0.0
  %380 = vmatpush1.msra.mxu0 0.0
  %381 = vmatprep.subr.mxu0 0.0
  %382 = vmatpush1.msra.mxu0 0.0
  %383 = vmatprep.subr.mxu0 0.0
  %384 = vmatpush1.msra.mxu0 0.0
  %385 = vmatprep.subr.mxu0 0.0
  %386 = vmatpush1.msra.mxu0 0.0
  %387 = vmatprep.subr.mxu0 0.0
  %388 = vmatpush1.msra.mxu0 0.0
  %389 = vmatprep.subr.mxu0 0.0
  %390 = vmatpush1.msra.mxu0 0.0
  %391 = vmatprep.subr.mxu0 0.0
  %392 = vmatpush1.msra.mxu0 0.0
  %393 = vmatprep.subr.mxu0 0.0
  %394 = vmatpush1.msra.mxu0 0.0
  %395 = vmatprep.subr.mxu0 0.0
  %396 = vmatpush1.msra.mxu0 0.0
  %397 = vmatprep.subr.mxu0 0.0
  %398 = vmatpush1.msra.mxu0 0.0
  %399 = vmatprep.subr.mxu0 0.0
  %400 = vmatpush1.msra.mxu0 0.0
  %401 = vmatprep.subr.mxu0 0.0
  %402 = vmatpush1.msra.mxu0 0.0
  %403 = vmatprep.subr.mxu0 0.0
  %404 = vmatpush1.msra.mxu0 0.0
  %405 = vmatprep.subr.mxu0 0.0
  %406 = vmatpush1.msra.mxu0 0.0
  %407 = vmatprep.subr.mxu0 0.0
  %408 = vmatpush1.msra.mxu0 0.0
  %409 = vmatprep.subr.mxu0 0.0
  %410 = vmatpush1.msra.mxu0 0.0
  %411 = vmatprep.subr.mxu0 0.0
  %412 = vmatpush1.msra.mxu0 0.0
  %413 = vmatprep.subr.mxu0 0.0
  %414 = vmatpush1.msra.mxu0 0.0
  %415 = vmatprep.mubr.f32.mxu0 0.0
  %416 = vmatmul.mubr.f32.gmra.mrb[0].mxu0 %v304
  %v417 = vpop.f32.mrb[0].mxu0
  %v418 = vadd.f32 %v301, %v417
  %v419 = vpop.f32.mrb[0].mxu0
  %420 = vmatprep.mubr.f32.mxu0 0.0
  %421 = vmatmul.mubr.f32.gmra.mrb[0].mxu0 %v307
  %v422 = vpop.f32.mrb[0].mxu0
  %v423 = vadd.f32 %v301, %v422
  %v424 = vpop.f32.mrb[0].mxu0
  %425 = vmatprep.mubr.f32.mxu0 0.0
  %426 = vmatmul.mubr.f32.gmra.mrb[0].mxu0 %v310
  %v427 = vpop.f32.mrb[0].mxu0
  %v428 = vadd.f32 %v301, %v427
  %v429 = vpop.f32.mrb[0].mxu0
  %430 = vmatprep.mubr.f32.mxu0 0.0
  %431 = vmatmul.mubr.f32.gmra.mrb[0].mxu0 %v313
  %v432 = vpop.f32.mrb[0].mxu0
  %v433 = vadd.f32 %v301, %v432
  %v434 = vpop.f32.mrb[0].mxu0
  %435 = vmatprep.mubr.f32.mxu0 0.0
  %436 = vmatmul.mubr.f32.gmra.mrb[0].mxu0 %v316
  %v437 = vpop.f32.mrb[0].mxu0
  %v438 = vadd.f32 %v301, %v437
  %v439 = vpop.f32.mrb[0].mxu0
  %440 = vmatprep.mubr.f32.mxu0 0.0
  %441 = vmatmul.mubr.f32.gmra.mrb[0].mxu0 %v319
  %v442 = vpop.f32.mrb[0].mxu0
  %v443 = vadd.f32 %v301, %v442
  %v444 = vpop.f32.mrb[0].mxu0
  %445 = vmatprep.mubr.f32.mxu0 0.0
  %446 = vmatmul.mubr.f32.gmra.mrb[0].mxu0 %v322
  %v447 = vpop.f32.mrb[0].mxu0
  %v448 = vadd.f32 %v301, %v447
  %v449 = vpop.f32.mrb[0].mxu0
  %450 = vmatprep.mubr.f32.mxu0 0.0
  %451 = vmatmul.mubr.f32.gmra.mrb[0].mxu0 %v325
  %v452 = vpop.f32.mrb[0].mxu0
  %v453 = vadd.f32 %v301, %v452
  %v454 = vpop.f32.mrb[0].mxu0
  %455 = vmatprep.mubr.f32.mxu0 0.0
  %456 = vmatmul.mubr.f32.gmra.mrb[0].mxu0 %v328
  %v457 = vpop.f32.mrb[0].mxu0
  %v458 = vadd.f32 %v301, %v457
  %v459 = vpop.f32.mrb[0].mxu0
  %460 = vmatprep.mubr.f32.mxu0 0.0
  %461 = vmatmul.mubr.f32.gmra.mrb[0].mxu0 %v331
  %v462 = vpop.f32.mrb[0].mxu0
  %v463 = vadd.f32 %v301, %v462
  %v464 = vpop.f32.mrb[0].mxu0
  %465 = vmatprep.mubr.f32.mxu0 0.0
  %466 = vmatmul.mubr.f32.gmra.mrb[0].mxu0 %v334
  %v467 = vpop.f32.mrb[0].mxu0
  %v468 = vadd.f32 %v301, %v467
  %v469 = vpop.f32.mrb[0].mxu0
  %470 = vmatprep.mubr.f32.mxu0 0.0
  %471 = vmatmul.mubr.f32.gmra.mrb[0].mxu0 %v337
  %v472 = vpop.f32.mrb[0].mxu0
  %v473 = vadd.f32 %v301, %v472
  %v474 = vpop.f32.mrb[0].mxu0
  %475 = vmatprep.mubr.f32.mxu0 0.0
  %476 = vmatmul.mubr.f32.gmra.mrb[0].mxu0 %v340
  %v477 = vpop.f32.mrb[0].mxu0
  %v478 = vadd.f32 %v301, %v477
  %v479 = vpop.f32.mrb[0].mxu0
  %480 = vmatprep.mubr.f32.mxu0 0.0
  %481 = vmatmul.mubr.f32.gmra.mrb[0].mxu0 %v343
  %v482 = vpop.f32.mrb[0].mxu0
  %v483 = vadd.f32 %v301, %v482
  %v484 = vpop.f32.mrb[0].mxu0
  %485 = vmatprep.mubr.f32.mxu0 0.0
  %486 = vmatmul.mubr.f32.gmra.mrb[0].mxu0 %v346
  %v487 = vpop.f32.mrb[0].mxu0
  %v488 = vadd.f32 %v301, %v487
  %v489 = vpop.f32.mrb[0].mxu0
  %490 = vmatprep.mubr.f32.mxu0 0.0
  %491 = vmatmul.mubr.f32.gmra.mrb[0].mxu0 %v349
  %v492 = vpop.f32.mrb[0].mxu0
  %v493 = vadd.f32 %v301, %v492
  %v494 = vpop.f32.mrb[0].mxu0
  %495 = vdwg.mxu0
  %496 = vst.msk [vmem:[%s5] sm:$0xff] %vm38, %v418
  %497 = vst.msk [vmem:[%s5 + $0x8] sm:$0xff] %vm38, %v423
  %498 = vst.msk [vmem:[%s5 + $0x10] sm:$0xff] %vm38, %v428
  %499 = vst.msk [vmem:[%s5 + $0x18] sm:$0xff] %vm38, %v433
  %500 = vst.msk [vmem:[%s5 + $0x20] sm:$0xff] %vm38, %v438
  %501 = vst.msk [vmem:[%s5 + $0x28] sm:$0xff] %vm38, %v443
  %502 = vst.msk [vmem:[%s5 + $0x30] sm:$0xff] %vm38, %v448
  %503 = vst.msk [vmem:[%s5 + $0x38] sm:$0xff] %vm38, %v453
  %504 = vst.msk [vmem:[%s5 + $0x40] sm:$0xff] %vm38, %v458
  %505 = vst.msk [vmem:[%s5 + $0x48] sm:$0xff] %vm38, %v463
  %506 = vst.msk [vmem:[%s5 + $0x50] sm:$0xff] %vm38, %v468
  %507 = vst.msk [vmem:[%s5 + $0x58] sm:$0xff] %vm38, %v473
  %508 = vst.msk [vmem:[%s5 + $0x60] sm:$0xff] %vm38, %v478
  %509 = vst.msk [vmem:[%s5 + $0x68] sm:$0xff] %vm38, %v483
  %510 = vst.msk [vmem:[%s5 + $0x70] sm:$0xff] %vm38, %v488
  %511 = vst.msk [vmem:[%s5 + $0x78] sm:$0xff] %vm38, %v493
  // Predicated region
  $region22: #{cross_view_swap_attention.30} parent=0 // pred_check
    _
  $region23: #{cross_view_swap_attention.30} parent=0 // pred_check_branch
    %513 = sbr.rel (0) target = $region25
  $region24: #{cross_view_swap_attention.30} parent=0 // pred_region
    _
  $region25: #{cross_view_swap_attention.30} parent=0 // pred_fallthru
    _
  // Predicated region
  $region26: #{cross_view_swap_attention.30} parent=0 // pred_check
    _
  $region27: #{cross_view_swap_attention.30} parent=0 // pred_check_branch
    %515 = sbr.rel (0) target = $region29
  $region28: #{cross_view_swap_attention.30} parent=0 // pred_region
    _
  $region29: #{cross_view_swap_attention.30} parent=0 // pred_fallthru
    _

// kernel: cross_view_swap_attention.25
$region0: #{cross_view_swap_attention.25}
  #allocation0 [shape = 'u32[]', space=smem, size = 0x4, offset = 0x4, fixed_abs, tag = 'smem constant byte address 0x4 - core index']
  #allocation1 [shape = 'u32[144,128]{1,0:T(1,128)}', space=vmem, size = 0x12000, scoped, tag = 'internal scratch']
  %s0 = inlined_call_operand.vmem [shape: f32[256,2], index: 0, kind: input, shape index: {}]
  %s1 = inlined_call_operand.vmem [shape: f32[2,32], index: 1, kind: input, shape index: {}]
  %s2 = inlined_call_operand.vmem [shape: f32[1,32], index: 2, kind: input, shape index: {}]
  %s3 = inlined_call_operand.vmem [shape: f32[256,32], index: 3, kind: output, shape index: {}]
  %s4 = sld [smem:[#allocation0]]
  $region22: #{cross_view_swap_attention.25} parent=0
    _
  %s6 = ssub.s32 1, %s4
  %s7 = scalar_select 0, %s6, %s4
  // Predicated region
  $region2: #{cross_view_swap_attention.25} parent=0 // pred_check
    _
  $region3: #{cross_view_swap_attention.25} parent=0 // pred_check_branch
    %9 = sbr.rel (0) target = $region5
  $region4: #{cross_view_swap_attention.25} parent=0 // pred_region
    _
  $region5: #{cross_view_swap_attention.25} parent=0 // pred_fallthru
    _
  // Predicated region
  $region6: #{cross_view_swap_attention.25} parent=0 // pred_check
    _
  $region7: #{cross_view_swap_attention.25} parent=0 // pred_check_branch
    %11 = sbr.rel (0) target = $region9
  $region8: #{cross_view_swap_attention.25} parent=0 // pred_region
    _
  $region9: #{cross_view_swap_attention.25} parent=0 // pred_fallthru
    _
  // Predicated region
  $region10: #{cross_view_swap_attention.25} parent=0 // pred_check
    _
  $region11: #{cross_view_swap_attention.25} parent=0 // pred_check_branch
    %13 = sbr.rel (0) target = $region13
  $region12: #{cross_view_swap_attention.25} parent=0 // pred_region
    _
  $region13: #{cross_view_swap_attention.25} parent=0 // pred_fallthru
    _
  %v14 = vld [vmem:[%s0] sm:$0xff]
  %v15 = vld [vmem:[%s0 + $0x8] sm:$0xff]
  %v16 = vld [vmem:[%s0 + $0x10] sm:$0xff]
  %v17 = vld [vmem:[%s0 + $0x18] sm:$0xff]
  %v18 = vld [vmem:[%s0 + $0x20] sm:$0xff]
  %v19 = vld [vmem:[%s0 + $0x28] sm:$0xff]
  %v20 = vld [vmem:[%s0 + $0x30] sm:$0xff]
  %v21 = vld [vmem:[%s0 + $0x38] sm:$0xff]
  %v22 = vld [vmem:[%s0 + $0x40] sm:$0xff]
  %v23 = vld [vmem:[%s0 + $0x48] sm:$0xff]
  %v24 = vld [vmem:[%s0 + $0x50] sm:$0xff]
  %v25 = vld [vmem:[%s0 + $0x58] sm:$0xff]
  %v26 = vld [vmem:[%s0 + $0x60] sm:$0xff]
  %v27 = vld [vmem:[%s0 + $0x68] sm:$0xff]
  %v28 = vld [vmem:[%s0 + $0x70] sm:$0xff]
  %v29 = vld [vmem:[%s0 + $0x78] sm:$0xff]
  %v30 = vld [vmem:[%s0 + $0x80] sm:$0xff]
  %v31 = vld [vmem:[%s0 + $0x88] sm:$0xff]
  %v32 = vld [vmem:[%s0 + $0x90] sm:$0xff]
  %v33 = vld [vmem:[%s0 + $0x98] sm:$0xff]
  %v34 = vld [vmem:[%s0 + $0xa0] sm:$0xff]
  %v35 = vld [vmem:[%s0 + $0xa8] sm:$0xff]
  %v36 = vld [vmem:[%s0 + $0xb0] sm:$0xff]
  %v37 = vld [vmem:[%s0 + $0xb8] sm:$0xff]
  %v38 = vld [vmem:[%s0 + $0xc0] sm:$0xff]
  %v39 = vld [vmem:[%s0 + $0xc8] sm:$0xff]
  %v40 = vld [vmem:[%s0 + $0xd0] sm:$0xff]
  %v41 = vld [vmem:[%s0 + $0xd8] sm:$0xff]
  %v42 = vld [vmem:[%s0 + $0xe0] sm:$0xff]
  %v43 = vld [vmem:[%s0 + $0xe8] sm:$0xff]
  %v44 = vld [vmem:[%s0 + $0xf0] sm:$0xff]
  %v45 = vld [vmem:[%s0 + $0xf8] sm:$0xff]
  %v46 = vld [vmem:[%s1] sm:$0x3]
  %v47 = vld [vmem:[%s2] sm:$0x1]
  %v49 = vlaneseq
  %v50 = vshrl.u32 %v49, 7
  %v51 = vsub.s32 0, %v50
  %v52 = vrot.slane %v47, %v51
  %vm54 = vcmask 15360
  %v56 = vsel %vm54, %v14, 0
  %v59 = vsel %vm54, %v15, 0
  %v62 = vsel %vm54, %v16, 0
  %v65 = vsel %vm54, %v17, 0
  %v68 = vsel %vm54, %v18, 0
  %v71 = vsel %vm54, %v19, 0
  %v74 = vsel %vm54, %v20, 0
  %v77 = vsel %vm54, %v21, 0
  %v80 = vsel %vm54, %v22, 0
  %v83 = vsel %vm54, %v23, 0
  %v86 = vsel %vm54, %v24, 0
  %v89 = vsel %vm54, %v25, 0
  %v92 = vsel %vm54, %v26, 0
  %v95 = vsel %vm54, %v27, 0
  %v98 = vsel %vm54, %v28, 0
  %v101 = vsel %vm54, %v29, 0
  %v104 = vsel %vm54, %v30, 0
  %v107 = vsel %vm54, %v31, 0
  %v110 = vsel %vm54, %v32, 0
  %v113 = vsel %vm54, %v33, 0
  %v116 = vsel %vm54, %v34, 0
  %v119 = vsel %vm54, %v35, 0
  %v122 = vsel %vm54, %v36, 0
  %v125 = vsel %vm54, %v37, 0
  %v128 = vsel %vm54, %v38, 0
  %v131 = vsel %vm54, %v39, 0
  %v134 = vsel %vm54, %v40, 0
  %v137 = vsel %vm54, %v41, 0
  %v140 = vsel %vm54, %v42, 0
  %v143 = vsel %vm54, %v43, 0
  %v146 = vsel %vm54, %v44, 0
  %v149 = vsel %vm54, %v45, 0
  %vm151 = vcmask 1041408
  %v153 = vsel %vm151, %v46, 0
  %155 = vmatprep.subr.mxu0 0.0
  %156 = vmatpush1.msra.mxu0 %v153
  %157 = vmatprep.subr.mxu0 0.0
  %158 = vmatpush1.msra.mxu0 0.0
  %159 = vmatprep.subr.mxu0 0.0
  %160 = vmatpush1.msra.mxu0 0.0
  %161 = vmatprep.subr.mxu0 0.0
  %162 = vmatpush1.msra.mxu0 0.0
  %163 = vmatprep.subr.mxu0 0.0
  %164 = vmatpush1.msra.mxu0 0.0
  %165 = vmatprep.subr.mxu0 0.0
  %166 = vmatpush1.msra.mxu0 0.0
  %167 = vmatprep.subr.mxu0 0.0
  %168 = vmatpush1.msra.mxu0 0.0
  %169 = vmatprep.subr.mxu0 0.0
  %170 = vmatpush1.msra.mxu0 0.0
  %171 = vmatprep.subr.mxu0 0.0
  %172 = vmatpush1.msra.mxu0 0.0
  %173 = vmatprep.subr.mxu0 0.0
  %174 = vmatpush1.msra.mxu0 0.0
  %175 = vmatprep.subr.mxu0 0.0
  %176 = vmatpush1.msra.mxu0 0.0
  %177 = vmatprep.subr.mxu0 0.0
  %178 = vmatpush1.msra.mxu0 0.0
  %179 = vmatprep.subr.mxu0 0.0
  %180 = vmatpush1.msra.mxu0 0.0
  %181 = vmatprep.subr.mxu0 0.0
  %182 = vmatpush1.msra.mxu0 0.0
  %183 = vmatprep.subr.mxu0 0.0
  %184 = vmatpush1.msra.mxu0 0.0
  %185 = vmatprep.subr.mxu0 0.0
  %186 = vmatpush1.msra.mxu0 0.0
  %187 = vmatprep.subr.mxu0 0.0
  %188 = vmatpush1.msra.mxu0 0.0
  %189 = vmatprep.subr.mxu0 0.0
  %190 = vmatpush1.msra.mxu0 0.0
  %191 = vmatprep.subr.mxu0 0.0
  %192 = vmatpush1.msra.mxu0 0.0
  %193 = vmatprep.subr.mxu0 0.0
  %194 = vmatpush1.msra.mxu0 0.0
  %195 = vmatprep.subr.mxu0 0.0
  %196 = vmatpush1.msra.mxu0 0.0
  %197 = vmatprep.subr.mxu0 0.0
  %198 = vmatpush1.msra.mxu0 0.0
  %199 = vmatprep.subr.mxu0 0.0
  %200 = vmatpush1.msra.mxu0 0.0
  %201 = vmatprep.subr.mxu0 0.0
  %202 = vmatpush1.msra.mxu0 0.0
  %203 = vmatprep.subr.mxu0 0.0
  %204 = vmatpush1.msra.mxu0 0.0
  %205 = vmatprep.subr.mxu0 0.0
  %206 = vmatpush1.msra.mxu0 0.0
  %207 = vmatprep.subr.mxu0 0.0
  %208 = vmatpush1.msra.mxu0 0.0
  %209 = vmatprep.subr.mxu0 0.0
  %210 = vmatpush1.msra.mxu0 0.0
  %211 = vmatprep.subr.mxu0 0.0
  %212 = vmatpush1.msra.mxu0 0.0
  %213 = vmatprep.subr.mxu0 0.0
  %214 = vmatpush1.msra.mxu0 0.0
  %215 = vmatprep.subr.mxu0 0.0
  %216 = vmatpush1.msra.mxu0 0.0
  %217 = vmatprep.subr.mxu0 0.0
  %218 = vmatpush1.msra.mxu0 0.0
  %219 = vmatprep.mubr.f32.mxu0 0.0
  %220 = vmatmul.mubr.f32.gmra.mrb[0].mxu0 %v56
  %v221 = vpop.f32.mrb[0].mxu0
  %v222 = vadd.f32 %v52, %v221
  %v223 = vpop.f32.mrb[0].mxu0
  %224 = vmatprep.mubr.f32.mxu0 0.0
  %225 = vmatmul.mubr.f32.gmra.mrb[0].mxu0 %v59
  %v226 = vpop.f32.mrb[0].mxu0
  %v227 = vadd.f32 %v52, %v226
  %v228 = vpop.f32.mrb[0].mxu0
  %229 = vmatprep.mubr.f32.mxu0 0.0
  %230 = vmatmul.mubr.f32.gmra.mrb[0].mxu0 %v62
  %v231 = vpop.f32.mrb[0].mxu0
  %v232 = vadd.f32 %v52, %v231
  %v233 = vpop.f32.mrb[0].mxu0
  %234 = vmatprep.mubr.f32.mxu0 0.0
  %235 = vmatmul.mubr.f32.gmra.mrb[0].mxu0 %v65
  %v236 = vpop.f32.mrb[0].mxu0
  %v237 = vadd.f32 %v52, %v236
  %v238 = vpop.f32.mrb[0].mxu0
  %239 = vmatprep.mubr.f32.mxu0 0.0
  %240 = vmatmul.mubr.f32.gmra.mrb[0].mxu0 %v68
  %v241 = vpop.f32.mrb[0].mxu0
  %v242 = vadd.f32 %v52, %v241
  %v243 = vpop.f32.mrb[0].mxu0
  %244 = vmatprep.mubr.f32.mxu0 0.0
  %245 = vmatmul.mubr.f32.gmra.mrb[0].mxu0 %v71
  %v246 = vpop.f32.mrb[0].mxu0
  %v247 = vadd.f32 %v52, %v246
  %v248 = vpop.f32.mrb[0].mxu0
  %249 = vmatprep.mubr.f32.mxu0 0.0
  %250 = vmatmul.mubr.f32.gmra.mrb[0].mxu0 %v74
  %v251 = vpop.f32.mrb[0].mxu0
  %v252 = vadd.f32 %v52, %v251
  %v253 = vpop.f32.mrb[0].mxu0
  %254 = vmatprep.mubr.f32.mxu0 0.0
  %255 = vmatmul.mubr.f32.gmra.mrb[0].mxu0 %v77
  %v256 = vpop.f32.mrb[0].mxu0
  %v257 = vadd.f32 %v52, %v256
  %v258 = vpop.f32.mrb[0].mxu0
  %259 = vmatprep.mubr.f32.mxu0 0.0
  %260 = vmatmul.mubr.f32.gmra.mrb[0].mxu0 %v80
  %v261 = vpop.f32.mrb[0].mxu0
  %v262 = vadd.f32 %v52, %v261
  %v263 = vpop.f32.mrb[0].mxu0
  %264 = vmatprep.mubr.f32.mxu0 0.0
  %265 = vmatmul.mubr.f32.gmra.mrb[0].mxu0 %v83
  %v266 = vpop.f32.mrb[0].mxu0
  %v267 = vadd.f32 %v52, %v266
  %v268 = vpop.f32.mrb[0].mxu0
  %269 = vmatprep.mubr.f32.mxu0 0.0
  %270 = vmatmul.mubr.f32.gmra.mrb[0].mxu0 %v86
  %v271 = vpop.f32.mrb[0].mxu0
  %v272 = vadd.f32 %v52, %v271
  %v273 = vpop.f32.mrb[0].mxu0
  %274 = vmatprep.mubr.f32.mxu0 0.0
  %275 = vmatmul.mubr.f32.gmra.mrb[0].mxu0 %v89
  %v276 = vpop.f32.mrb[0].mxu0
  %v277 = vadd.f32 %v52, %v276
  %v278 = vpop.f32.mrb[0].mxu0
  %279 = vmatprep.mubr.f32.mxu0 0.0
  %280 = vmatmul.mubr.f32.gmra.mrb[0].mxu0 %v92
  %v281 = vpop.f32.mrb[0].mxu0
  %v282 = vadd.f32 %v52, %v281
  %v283 = vpop.f32.mrb[0].mxu0
  %284 = vmatprep.mubr.f32.mxu0 0.0
  %285 = vmatmul.mubr.f32.gmra.mrb[0].mxu0 %v95
  %v286 = vpop.f32.mrb[0].mxu0
  %v287 = vadd.f32 %v52, %v286
  %v288 = vpop.f32.mrb[0].mxu0
  %289 = vmatprep.mubr.f32.mxu0 0.0
  %290 = vmatmul.mubr.f32.gmra.mrb[0].mxu0 %v98
  %v291 = vpop.f32.mrb[0].mxu0
  %v292 = vadd.f32 %v52, %v291
  %v293 = vpop.f32.mrb[0].mxu0
  %294 = vmatprep.mubr.f32.mxu0 0.0
  %295 = vmatmul.mubr.f32.gmra.mrb[0].mxu0 %v101
  %v296 = vpop.f32.mrb[0].mxu0
  %v297 = vadd.f32 %v52, %v296
  %v298 = vpop.f32.mrb[0].mxu0
  %299 = vmatprep.mubr.f32.mxu0 0.0
  %300 = vmatmul.mubr.f32.gmra.mrb[0].mxu0 %v104
  %v301 = vpop.f32.mrb[0].mxu0
  %v302 = vadd.f32 %v52, %v301
  %v303 = vpop.f32.mrb[0].mxu0
  %304 = vmatprep.mubr.f32.mxu0 0.0
  %305 = vmatmul.mubr.f32.gmra.mrb[0].mxu0 %v107
  %v306 = vpop.f32.mrb[0].mxu0
  %v307 = vadd.f32 %v52, %v306
  %v308 = vpop.f32.mrb[0].mxu0
  %309 = vmatprep.mubr.f32.mxu0 0.0
  %310 = vmatmul.mubr.f32.gmra.mrb[0].mxu0 %v110
  %v311 = vpop.f32.mrb[0].mxu0
  %v312 = vadd.f32 %v52, %v311
  %v313 = vpop.f32.mrb[0].mxu0
  %314 = vmatprep.mubr.f32.mxu0 0.0
  %315 = vmatmul.mubr.f32.gmra.mrb[0].mxu0 %v113
  %v316 = vpop.f32.mrb[0].mxu0
  %v317 = vadd.f32 %v52, %v316
  %v318 = vpop.f32.mrb[0].mxu0
  %319 = vmatprep.mubr.f32.mxu0 0.0
  %320 = vmatmul.mubr.f32.gmra.mrb[0].mxu0 %v116
  %v321 = vpop.f32.mrb[0].mxu0
  %v322 = vadd.f32 %v52, %v321
  %v323 = vpop.f32.mrb[0].mxu0
  %324 = vmatprep.mubr.f32.mxu0 0.0
  %325 = vmatmul.mubr.f32.gmra.mrb[0].mxu0 %v119
  %v326 = vpop.f32.mrb[0].mxu0
  %v327 = vadd.f32 %v52, %v326
  %v328 = vpop.f32.mrb[0].mxu0
  %329 = vmatprep.mubr.f32.mxu0 0.0
  %330 = vmatmul.mubr.f32.gmra.mrb[0].mxu0 %v122
  %v331 = vpop.f32.mrb[0].mxu0
  %v332 = vadd.f32 %v52, %v331
  %v333 = vpop.f32.mrb[0].mxu0
  %334 = vmatprep.mubr.f32.mxu0 0.0
  %335 = vmatmul.mubr.f32.gmra.mrb[0].mxu0 %v125
  %v336 = vpop.f32.mrb[0].mxu0
  %v337 = vadd.f32 %v52, %v336
  %v338 = vpop.f32.mrb[0].mxu0
  %339 = vmatprep.mubr.f32.mxu0 0.0
  %340 = vmatmul.mubr.f32.gmra.mrb[0].mxu0 %v128
  %v341 = vpop.f32.mrb[0].mxu0
  %v342 = vadd.f32 %v52, %v341
  %v343 = vpop.f32.mrb[0].mxu0
  %344 = vmatprep.mubr.f32.mxu0 0.0
  %345 = vmatmul.mubr.f32.gmra.mrb[0].mxu0 %v131
  %v346 = vpop.f32.mrb[0].mxu0
  %v347 = vadd.f32 %v52, %v346
  %v348 = vpop.f32.mrb[0].mxu0
  %349 = vmatprep.mubr.f32.mxu0 0.0
  %350 = vmatmul.mubr.f32.gmra.mrb[0].mxu0 %v134
  %v351 = vpop.f32.mrb[0].mxu0
  %v352 = vadd.f32 %v52, %v351
  %v353 = vpop.f32.mrb[0].mxu0
  %354 = vmatprep.mubr.f32.mxu0 0.0
  %355 = vmatmul.mubr.f32.gmra.mrb[0].mxu0 %v137
  %v356 = vpop.f32.mrb[0].mxu0
  %v357 = vadd.f32 %v52, %v356
  %v358 = vpop.f32.mrb[0].mxu0
  %359 = vmatprep.mubr.f32.mxu0 0.0
  %360 = vmatmul.mubr.f32.gmra.mrb[0].mxu0 %v140
  %v361 = vpop.f32.mrb[0].mxu0
  %v362 = vadd.f32 %v52, %v361
  %v363 = vpop.f32.mrb[0].mxu0
  %364 = vmatprep.mubr.f32.mxu0 0.0
  %365 = vmatmul.mubr.f32.gmra.mrb[0].mxu0 %v143
  %v366 = vpop.f32.mrb[0].mxu0
  %v367 = vadd.f32 %v52, %v366
  %v368 = vpop.f32.mrb[0].mxu0
  %369 = vmatprep.mubr.f32.mxu0 0.0
  %370 = vmatmul.mubr.f32.gmra.mrb[0].mxu0 %v146
  %v371 = vpop.f32.mrb[0].mxu0
  %v372 = vadd.f32 %v52, %v371
  %v373 = vpop.f32.mrb[0].mxu0
  %374 = vmatprep.mubr.f32.mxu0 0.0
  %375 = vmatmul.mubr.f32.gmra.mrb[0].mxu0 %v149
  %v376 = vpop.f32.mrb[0].mxu0
  %v377 = vadd.f32 %v52, %v376
  %v378 = vpop.f32.mrb[0].mxu0
  %379 = vdwg.mxu0
  %vm380 = vcmask 261120
  %381 = vst.msk [vmem:[%s3] sm:$0xff] %vm380, %v222
  %382 = vst.msk [vmem:[%s3 + $0x8] sm:$0xff] %vm380, %v227
  %383 = vst.msk [vmem:[%s3 + $0x10] sm:$0xff] %vm380, %v232
  %384 = vst.msk [vmem:[%s3 + $0x18] sm:$0xff] %vm380, %v237
  %385 = vst.msk [vmem:[%s3 + $0x20] sm:$0xff] %vm380, %v242
  %386 = vst.msk [vmem:[%s3 + $0x28] sm:$0xff] %vm380, %v247
  %387 = vst.msk [vmem:[%s3 + $0x30] sm:$0xff] %vm380, %v252
  %388 = vst.msk [vmem:[%s3 + $0x38] sm:$0xff] %vm380, %v257
  %389 = vst.msk [vmem:[%s3 + $0x40] sm:$0xff] %vm380, %v262
  %390 = vst.msk [vmem:[%s3 + $0x48] sm:$0xff] %vm380, %v267
  %391 = vst.msk [vmem:[%s3 + $0x50] sm:$0xff] %vm380, %v272
  %392 = vst.msk [vmem:[%s3 + $0x58] sm:$0xff] %vm380, %v277
  %393 = vst.msk [vmem:[%s3 + $0x60] sm:$0xff] %vm380, %v282
  %394 = vst.msk [vmem:[%s3 + $0x68] sm:$0xff] %vm380, %v287
  %395 = vst.msk [vmem:[%s3 + $0x70] sm:$0xff] %vm380, %v292
  %396 = vst.msk [vmem:[%s3 + $0x78] sm:$0xff] %vm380, %v297
  %397 = vst.msk [vmem:[%s3 + $0x80] sm:$0xff] %vm380, %v302
  %398 = vst.msk [vmem:[%s3 + $0x88] sm:$0xff] %vm380, %v307
  %399 = vst.msk [vmem:[%s3 + $0x90] sm:$0xff] %vm380, %v312
  %400 = vst.msk [vmem:[%s3 + $0x98] sm:$0xff] %vm380, %v317
  %401 = vst.msk [vmem:[%s3 + $0xa0] sm:$0xff] %vm380, %v322
  %402 = vst.msk [vmem:[%s3 + $0xa8] sm:$0xff] %vm380, %v327
  %403 = vst.msk [vmem:[%s3 + $0xb0] sm:$0xff] %vm380, %v332
  %404 = vst.msk [vmem:[%s3 + $0xb8] sm:$0xff] %vm380, %v337
  %405 = vst.msk [vmem:[%s3 + $0xc0] sm:$0xff] %vm380, %v342
  %406 = vst.msk [vmem:[%s3 + $0xc8] sm:$0xff] %vm380, %v347
  %407 = vst.msk [vmem:[%s3 + $0xd0] sm:$0xff] %vm380, %v352
  %408 = vst.msk [vmem:[%s3 + $0xd8] sm:$0xff] %vm380, %v357
  %409 = vst.msk [vmem:[%s3 + $0xe0] sm:$0xff] %vm380, %v362
  %410 = vst.msk [vmem:[%s3 + $0xe8] sm:$0xff] %vm380, %v367
  %411 = vst.msk [vmem:[%s3 + $0xf0] sm:$0xff] %vm380, %v372
  %412 = vst.msk [vmem:[%s3 + $0xf8] sm:$0xff] %vm380, %v377
  // Predicated region
  $region14: #{cross_view_swap_attention.25} parent=0 // pred_check
    _
  $region15: #{cross_view_swap_attention.25} parent=0 // pred_check_branch
    %414 = sbr.rel (0) target = $region17
  $region16: #{cross_view_swap_attention.25} parent=0 // pred_region
    _
  $region17: #{cross_view_swap_attention.25} parent=0 // pred_fallthru
    _
  // Predicated region
  $region18: #{cross_view_swap_attention.25} parent=0 // pred_check
    _
  $region19: #{cross_view_swap_attention.25} parent=0 // pred_check_branch
    %416 = sbr.rel (0) target = $region21
  $region20: #{cross_view_swap_attention.25} parent=0 // pred_region
    _
  $region21: #{cross_view_swap_attention.25} parent=0 // pred_fallthru
    _

// kernel: cross_view_swap_attention.26
$region0: #{cross_view_swap_attention.26}
  #allocation0 [shape = 'u32[]', space=smem, size = 0x4, offset = 0x4, fixed_abs, tag = 'smem constant byte address 0x4 - core index']
  #allocation1 [shape = 'u32[144,128]{1,0:T(1,128)}', space=vmem, size = 0x12000, scoped, tag = 'internal scratch']
  %s0 = inlined_call_operand.vmem [shape: f32[1,256,32], index: 0, kind: input, shape index: {}]
  %s1 = inlined_call_operand.vmem [shape: f32[2,1,32], index: 1, kind: input, shape index: {}]
  %s2 = inlined_call_operand.vmem [shape: f32[2,256,32], index: 2, kind: output, shape index: {}]
  %s3 = sld [smem:[#allocation0]]
  $region41: #{cross_view_swap_attention.26} parent=0
    _
  %s5 = ssub.s32 1, %s3
  %s6 = scalar_select 0, %s5, %s3
  loop: start=0, step=1, limit=4
  $region2: #{cross_view_swap_attention.26} parent=0 // loop_pre_header
    _
  $region3: #{cross_view_swap_attention.26} parent=0 // loop_header
    %s8 = sphi 0, %s12
    %p9 = scmp.ge.s32.totalorder %s8, 4
    %s16 = sphi 0, %s16
    %s18 = sphi 0, %s16
    %s19 = sphi 0, %s18
    %s33 = sphi 0, %s19
    %s39 = sphi 0, %s41
    %s42 = sphi 0, %s39
    %s43 = sphi 0, %s42
    %s59 = sphi 0, %s43
    %s65 = sphi 0, %s67
    %s68 = sphi 0, %s65
    %s69 = sphi 0, %s68
    %s85 = sphi 0, %s69
  $region4: #{cross_view_swap_attention.26} parent=0 // loop_header_branch
    %11 = sbr.rel (%p9) target = $region8
  $region5: #{cross_view_swap_attention.26} parent=0 // loop_body
    %s13 = ssub.s32 %s8, 1
    %s14 = ssub.s32 %s8, 2
    %s15 = sadd.s32 %s8, 1
    %s17 = sadd.s32 %s16, 1
    %p20 = scmp.eq.s32.totalorder %s8, 1
    %p21 = scmp.ne.s32.totalorder %s16, %s18
    %p22 = scmp.eq.s32.totalorder %s8, 0
    %p23 = por %p21, %p22
    %p24 = scmp.ne.s32.totalorder %s16, %s18
    %p25 = scmp.eq.s32.totalorder %s13, 1
    %p26 = por %p24, %p25
    %p27 = scmp.ne.s32.totalorder %s18, %s19
    %p28 = scmp.eq.s32.totalorder %s13, 0
    %p29 = por %p27, %p28
    %p30 = scmp.ne.s32.totalorder %s18, %s19
    %p31 = scmp.eq.s32.totalorder %s14, 1
    %p32 = por %p30, %p31
    %p34 = scmp.ne.s32.totalorder %s19, %s33
    %p35 = scmp.eq.s32.totalorder %s14, 0
    %p36 = por %p34, %p35
    %s37 = ssub.s32 %s8, %s15
    %p38 = scmp.eq.s32.totalorder %s37, 0
    %s40 = sadd.s32 %s39, 1
    %s41 = scalar_select %p38, %s39, %s40
    %p44 = pneg %p38
    %p45 = scmp.eq.s32.totalorder %s8, 1
    %p46 = por %p44, %p45
    %p47 = scmp.ne.s32.totalorder %s39, %s42
    %p48 = scmp.eq.s32.totalorder %s8, 0
    %p49 = por %p47, %p48
    %p50 = scmp.ne.s32.totalorder %s39, %s42
    %p51 = scmp.eq.s32.totalorder %s13, 1
    %p52 = por %p50, %p51
    %p53 = scmp.ne.s32.totalorder %s42, %s43
    %p54 = scmp.eq.s32.totalorder %s13, 0
    %p55 = por %p53, %p54
    %p56 = scmp.ne.s32.totalorder %s42, %s43
    %p57 = scmp.eq.s32.totalorder %s14, 1
    %p58 = por %p56, %p57
    %p60 = scmp.ne.s32.totalorder %s43, %s59
    %p61 = scmp.eq.s32.totalorder %s14, 0
    %p62 = por %p60, %p61
    %s63 = ssub.s32 %s8, %s15
    %p64 = scmp.eq.s32.totalorder %s63, 0
    %s66 = sadd.s32 %s65, 1
    %s67 = scalar_select %p64, %s65, %s66
    %p70 = pneg %p64
    %p71 = scmp.eq.s32.totalorder %s8, 1
    %p72 = por %p70, %p71
    %p73 = scmp.ne.s32.totalorder %s65, %s68
    %p74 = scmp.eq.s32.totalorder %s8, 0
    %p75 = por %p73, %p74
    %p76 = scmp.ne.s32.totalorder %s65, %s68
    %p77 = scmp.eq.s32.totalorder %s13, 1
    %p78 = por %p76, %p77
    %p79 = scmp.ne.s32.totalorder %s68, %s69
    %p80 = scmp.eq.s32.totalorder %s13, 0
    %p81 = por %p79, %p80
    %p82 = scmp.ne.s32.totalorder %s68, %s69
    %p83 = scmp.eq.s32.totalorder %s14, 1
    %p84 = por %p82, %p83
    %p86 = scmp.ne.s32.totalorder %s69, %s85
    %p87 = scmp.eq.s32.totalorder %s14, 0
    %p88 = por %p86, %p87
    %p89 = scmp.le.s32.totalorder 1, %s8
    %p90 = scmp.lt.s32.totalorder %s8, 3
    %p91 = pnand %p89, %p90
    %p92 = pneg %p91
    // Predicated region
    $region9: #{cross_view_swap_attention.26} parent=5 // pred_check
      _
    $region10: #{cross_view_swap_attention.26} parent=5 // pred_check_branch
      %94 = sbr.rel (%p91) target = $region12
    $region11: #{cross_view_swap_attention.26} parent=5 // pred_region
      %s95 = ssub.s32 %s8, 1
      // Predicated region
      $region13: #{cross_view_swap_attention.26} parent=11 // pred_check
        %p96 = pneg %p29
      $region14: #{cross_view_swap_attention.26} parent=11 // pred_check_branch
        %98 = sbr.rel (%p96) target = $region16
      $region15: #{cross_view_swap_attention.26} parent=11 // pred_region
        _
      $region16: #{cross_view_swap_attention.26} parent=11 // pred_fallthru
        _
    $region12: #{cross_view_swap_attention.26} parent=5 // pred_fallthru
      _
    %p99 = scmp.lt.s32.totalorder %s8, 2
    // Predicated region
    $region17: #{cross_view_swap_attention.26} parent=5 // pred_check
      %p100 = pneg %p99
    $region18: #{cross_view_swap_attention.26} parent=5 // pred_check_branch
      %102 = sbr.rel (%p100) target = $region20
    $region19: #{cross_view_swap_attention.26} parent=5 // pred_region
      // Predicated region
      $region21: #{cross_view_swap_attention.26} parent=19 // pred_check
        %p103 = pneg %p49
      $region22: #{cross_view_swap_attention.26} parent=19 // pred_check_branch
        %105 = sbr.rel (%p103) target = $region24
      $region23: #{cross_view_swap_attention.26} parent=19 // pred_region
        %p106 = scmp.lt.s32.totalorder %s8, 1
        %s107 = scalar_select %p106, %s8, 1
        %s108 = scalar_lea.vmem %s1, %s107
      $region24: #{cross_view_swap_attention.26} parent=19 // pred_fallthru
        _
    $region20: #{cross_view_swap_attention.26} parent=5 // pred_fallthru
      _
    %p109 = scmp.le.s32.totalorder 1, %s8
    %p110 = scmp.lt.s32.totalorder %s8, 3
    %p111 = pnand %p109, %p110
    %p112 = pneg %p111
    // Predicated region
    $region25: #{cross_view_swap_attention.26} parent=5 // pred_check
      _
    $region26: #{cross_view_swap_attention.26} parent=5 // pred_check_branch
      %114 = sbr.rel (%p111) target = $region28
    $region27: #{cross_view_swap_attention.26} parent=5 // pred_region
      %s115 = ssub.s32 %s8, 1
      %p116 = pneg %p29
      %p117 = pneg %p26
      %p118 = scmp.lt.s32.totalorder %s13, 1
      %s119 = scalar_select %p118, %s13, 1
      %s120 = scalar_lea.vmem %s1, %s119
      %p121 = pneg %p55
      %p122 = pneg %p52
      %p123 = pneg %p81
      %p124 = pneg %p78
      %p125 = scmp.lt.s32.totalorder %s13, 1
      %s126 = scalar_select %p125, %s13, 1
      %s127 = smul.addr %s126, 32
      %s128 = smul.addr %s127, 8
      %s129 = scalar_lea.vmem %s2, %s128
      %p130 = scmp.lt.s32.totalorder %s13, 1
      %s131 = scalar_select %p130, %s13, 1
      %s132 = scalar_lea.vmem %s1, %s131
      %p133 = scmp.lt.s32.totalorder %s13, 1
      %s134 = scalar_select %p133, %s13, 1
      %s135 = smul.addr %s134, 32
      %s136 = smul.addr %s135, 8
      %s137 = scalar_lea.vmem %s2, %s136
      %v138 = vld [vmem:[%s0] sm:$0xff]
      %v139 = vld [vmem:[%s0 + $0x8] sm:$0xff]
      %v140 = vld [vmem:[%s0 + $0x10] sm:$0xff]
      %v141 = vld [vmem:[%s0 + $0x18] sm:$0xff]
      %v142 = vld [vmem:[%s0 + $0x20] sm:$0xff]
      %v143 = vld [vmem:[%s0 + $0x28] sm:$0xff]
      %v144 = vld [vmem:[%s0 + $0x30] sm:$0xff]
      %v145 = vld [vmem:[%s0 + $0x38] sm:$0xff]
      %v146 = vld [vmem:[%s0 + $0x40] sm:$0xff]
      %v147 = vld [vmem:[%s0 + $0x48] sm:$0xff]
      %v148 = vld [vmem:[%s0 + $0x50] sm:$0xff]
      %v149 = vld [vmem:[%s0 + $0x58] sm:$0xff]
      %v150 = vld [vmem:[%s0 + $0x60] sm:$0xff]
      %v151 = vld [vmem:[%s0 + $0x68] sm:$0xff]
      %v152 = vld [vmem:[%s0 + $0x70] sm:$0xff]
      %v153 = vld [vmem:[%s0 + $0x78] sm:$0xff]
      %v154 = vld [vmem:[%s0 + $0x80] sm:$0xff]
      %v155 = vld [vmem:[%s0 + $0x88] sm:$0xff]
      %v156 = vld [vmem:[%s0 + $0x90] sm:$0xff]
      %v157 = vld [vmem:[%s0 + $0x98] sm:$0xff]
      %v158 = vld [vmem:[%s0 + $0xa0] sm:$0xff]
      %v159 = vld [vmem:[%s0 + $0xa8] sm:$0xff]
      %v160 = vld [vmem:[%s0 + $0xb0] sm:$0xff]
      %v161 = vld [vmem:[%s0 + $0xb8] sm:$0xff]
      %v162 = vld [vmem:[%s0 + $0xc0] sm:$0xff]
      %v163 = vld [vmem:[%s0 + $0xc8] sm:$0xff]
      %v164 = vld [vmem:[%s0 + $0xd0] sm:$0xff]
      %v165 = vld [vmem:[%s0 + $0xd8] sm:$0xff]
      %v166 = vld [vmem:[%s0 + $0xe0] sm:$0xff]
      %v167 = vld [vmem:[%s0 + $0xe8] sm:$0xff]
      %v168 = vld [vmem:[%s0 + $0xf0] sm:$0xff]
      %v169 = vld [vmem:[%s0 + $0xf8] sm:$0xff]
      %v170 = vld [vmem:[%s132] sm:$0x1]
      %v172 = vlaneseq
      %v173 = vshrl.u32 %v172, 7
      %v174 = vsub.s32 0, %v173
      %v175 = vrot.slane %v170, %v174
      %v177 = vsub.f32 %v138, %v175
      %v178 = vsub.f32 %v139, %v175
      %v179 = vsub.f32 %v140, %v175
      %v180 = vsub.f32 %v141, %v175
      %v181 = vsub.f32 %v142, %v175
      %v182 = vsub.f32 %v143, %v175
      %v183 = vsub.f32 %v144, %v175
      %v184 = vsub.f32 %v145, %v175
      %v185 = vsub.f32 %v146, %v175
      %v186 = vsub.f32 %v147, %v175
      %v187 = vsub.f32 %v148, %v175
      %v188 = vsub.f32 %v149, %v175
      %v189 = vsub.f32 %v150, %v175
      %v190 = vsub.f32 %v151, %v175
      %v191 = vsub.f32 %v152, %v175
      %v192 = vsub.f32 %v153, %v175
      %v193 = vsub.f32 %v154, %v175
      %v194 = vsub.f32 %v155, %v175
      %v195 = vsub.f32 %v156, %v175
      %v196 = vsub.f32 %v157, %v175
      %v197 = vsub.f32 %v158, %v175
      %v198 = vsub.f32 %v159, %v175
      %v199 = vsub.f32 %v160, %v175
      %v200 = vsub.f32 %v161, %v175
      %v201 = vsub.f32 %v162, %v175
      %v202 = vsub.f32 %v163, %v175
      %v203 = vsub.f32 %v164, %v175
      %v204 = vsub.f32 %v165, %v175
      %v205 = vsub.f32 %v166, %v175
      %v206 = vsub.f32 %v167, %v175
      %v207 = vsub.f32 %v168, %v175
      %v208 = vsub.f32 %v169, %v175
      %v209 = vmul.f32 %v177, %v177
      %v210 = vmul.f32 %v178, %v178
      %v211 = vmul.f32 %v179, %v179
      %v212 = vmul.f32 %v180, %v180
      %v213 = vmul.f32 %v181, %v181
      %v214 = vmul.f32 %v182, %v182
      %v215 = vmul.f32 %v183, %v183
      %v216 = vmul.f32 %v184, %v184
      %v217 = vmul.f32 %v185, %v185
      %v218 = vmul.f32 %v186, %v186
      %v219 = vmul.f32 %v187, %v187
      %v220 = vmul.f32 %v188, %v188
      %v221 = vmul.f32 %v189, %v189
      %v222 = vmul.f32 %v190, %v190
      %v223 = vmul.f32 %v191, %v191
      %v224 = vmul.f32 %v192, %v192
      %v225 = vmul.f32 %v193, %v193
      %v226 = vmul.f32 %v194, %v194
      %v227 = vmul.f32 %v195, %v195
      %v228 = vmul.f32 %v196, %v196
      %v229 = vmul.f32 %v197, %v197
      %v230 = vmul.f32 %v198, %v198
      %v231 = vmul.f32 %v199, %v199
      %v232 = vmul.f32 %v200, %v200
      %v233 = vmul.f32 %v201, %v201
      %v234 = vmul.f32 %v202, %v202
      %v235 = vmul.f32 %v203, %v203
      %v236 = vmul.f32 %v204, %v204
      %v237 = vmul.f32 %v205, %v205
      %v238 = vmul.f32 %v206, %v206
      %v239 = vmul.f32 %v207, %v207
      %v240 = vmul.f32 %v208, %v208
      %vm241 = vcmask 261120
      %v242 = vsel %vm241, %v209, 0.0
      %243 = vadd.xlane.f32.xlu0 %v242
      %v244 = vpop.xlane.xlu0 %243
      %v245 = vsel %vm241, %v210, 0.0
      %246 = vadd.xlane.f32.xlu0 %v245
      %v247 = vpop.xlane.xlu0 %246
      %v248 = vsel %vm241, %v211, 0.0
      %249 = vadd.xlane.f32.xlu0 %v248
      %v250 = vpop.xlane.xlu0 %249
      %v251 = vsel %vm241, %v212, 0.0
      %252 = vadd.xlane.f32.xlu0 %v251
      %v253 = vpop.xlane.xlu0 %252
      %v254 = vsel %vm241, %v213, 0.0
      %255 = vadd.xlane.f32.xlu0 %v254
      %v256 = vpop.xlane.xlu0 %255
      %v257 = vsel %vm241, %v214, 0.0
      %258 = vadd.xlane.f32.xlu0 %v257
      %v259 = vpop.xlane.xlu0 %258
      %v260 = vsel %vm241, %v215, 0.0
      %261 = vadd.xlane.f32.xlu0 %v260
      %v262 = vpop.xlane.xlu0 %261
      %v263 = vsel %vm241, %v216, 0.0
      %264 = vadd.xlane.f32.xlu0 %v263
      %v265 = vpop.xlane.xlu0 %264
      %v266 = vsel %vm241, %v217, 0.0
      %267 = vadd.xlane.f32.xlu0 %v266
      %v268 = vpop.xlane.xlu0 %267
      %v269 = vsel %vm241, %v218, 0.0
      %270 = vadd.xlane.f32.xlu0 %v269
      %v271 = vpop.xlane.xlu0 %270
      %v272 = vsel %vm241, %v219, 0.0
      %273 = vadd.xlane.f32.xlu0 %v272
      %v274 = vpop.xlane.xlu0 %273
      %v275 = vsel %vm241, %v220, 0.0
      %276 = vadd.xlane.f32.xlu0 %v275
      %v277 = vpop.xlane.xlu0 %276
      %v278 = vsel %vm241, %v221, 0.0
      %279 = vadd.xlane.f32.xlu0 %v278
      %v280 = vpop.xlane.xlu0 %279
      %v281 = vsel %vm241, %v222, 0.0
      %282 = vadd.xlane.f32.xlu0 %v281
      %v283 = vpop.xlane.xlu0 %282
      %v284 = vsel %vm241, %v223, 0.0
      %285 = vadd.xlane.f32.xlu0 %v284
      %v286 = vpop.xlane.xlu0 %285
      %v287 = vsel %vm241, %v224, 0.0
      %288 = vadd.xlane.f32.xlu0 %v287
      %v289 = vpop.xlane.xlu0 %288
      %v290 = vsel %vm241, %v225, 0.0
      %291 = vadd.xlane.f32.xlu0 %v290
      %v292 = vpop.xlane.xlu0 %291
      %v293 = vsel %vm241, %v226, 0.0
      %294 = vadd.xlane.f32.xlu0 %v293
      %v295 = vpop.xlane.xlu0 %294
      %v296 = vsel %vm241, %v227, 0.0
      %297 = vadd.xlane.f32.xlu0 %v296
      %v298 = vpop.xlane.xlu0 %297
      %v299 = vsel %vm241, %v228, 0.0
      %300 = vadd.xlane.f32.xlu0 %v299
      %v301 = vpop.xlane.xlu0 %300
      %v302 = vsel %vm241, %v229, 0.0
      %303 = vadd.xlane.f32.xlu0 %v302
      %v304 = vpop.xlane.xlu0 %303
      %v305 = vsel %vm241, %v230, 0.0
      %306 = vadd.xlane.f32.xlu0 %v305
      %v307 = vpop.xlane.xlu0 %306
      %v308 = vsel %vm241, %v231, 0.0
      %309 = vadd.xlane.f32.xlu0 %v308
      %v310 = vpop.xlane.xlu0 %309
      %v311 = vsel %vm241, %v232, 0.0
      %312 = vadd.xlane.f32.xlu0 %v311
      %v313 = vpop.xlane.xlu0 %312
      %v314 = vsel %vm241, %v233, 0.0
      %315 = vadd.xlane.f32.xlu0 %v314
      %v316 = vpop.xlane.xlu0 %315
      %v317 = vsel %vm241, %v234, 0.0
      %318 = vadd.xlane.f32.xlu0 %v317
      %v319 = vpop.xlane.xlu0 %318
      %v320 = vsel %vm241, %v235, 0.0
      %321 = vadd.xlane.f32.xlu0 %v320
      %v322 = vpop.xlane.xlu0 %321
      %v323 = vsel %vm241, %v236, 0.0
      %324 = vadd.xlane.f32.xlu0 %v323
      %v325 = vpop.xlane.xlu0 %324
      %v326 = vsel %vm241, %v237, 0.0
      %327 = vadd.xlane.f32.xlu0 %v326
      %v328 = vpop.xlane.xlu0 %327
      %v329 = vsel %vm241, %v238, 0.0
      %330 = vadd.xlane.f32.xlu0 %v329
      %v331 = vpop.xlane.xlu0 %330
      %v332 = vsel %vm241, %v239, 0.0
      %333 = vadd.xlane.f32.xlu0 %v332
      %v334 = vpop.xlane.xlu0 %333
      %v335 = vsel %vm241, %v240, 0.0
      %336 = vadd.xlane.f32.xlu0 %v335
      %v337 = vpop.xlane.xlu0 %336
      %v338 = vrsqrt.pop %v244
      %v339 = vmul.f32 %v244, %v338
      %vm340 = vcmp.eq.f32.partialorder %v244, inf
      %v341 = vsel %vm340, %v244, %v339
      %vm342 = vcmp.eq.f32.partialorder %v244, 0.0
      %v343 = vand.u32 %v244, 2147483648
      %v344 = vsel %vm342, %v343, %v341
      %v345 = vrsqrt.pop %v247
      %v346 = vmul.f32 %v247, %v345
      %vm347 = vcmp.eq.f32.partialorder %v247, inf
      %v348 = vsel %vm347, %v247, %v346
      %vm349 = vcmp.eq.f32.partialorder %v247, 0.0
      %v350 = vand.u32 %v247, 2147483648
      %v351 = vsel %vm349, %v350, %v348
      %v352 = vrsqrt.pop %v250
      %v353 = vmul.f32 %v250, %v352
      %vm354 = vcmp.eq.f32.partialorder %v250, inf
      %v355 = vsel %vm354, %v250, %v353
      %vm356 = vcmp.eq.f32.partialorder %v250, 0.0
      %v357 = vand.u32 %v250, 2147483648
      %v358 = vsel %vm356, %v357, %v355
      %v359 = vrsqrt.pop %v253
      %v360 = vmul.f32 %v253, %v359
      %vm361 = vcmp.eq.f32.partialorder %v253, inf
      %v362 = vsel %vm361, %v253, %v360
      %vm363 = vcmp.eq.f32.partialorder %v253, 0.0
      %v364 = vand.u32 %v253, 2147483648
      %v365 = vsel %vm363, %v364, %v362
      %v366 = vrsqrt.pop %v256
      %v367 = vmul.f32 %v256, %v366
      %vm368 = vcmp.eq.f32.partialorder %v256, inf
      %v369 = vsel %vm368, %v256, %v367
      %vm370 = vcmp.eq.f32.partialorder %v256, 0.0
      %v371 = vand.u32 %v256, 2147483648
      %v372 = vsel %vm370, %v371, %v369
      %v373 = vrsqrt.pop %v259
      %v374 = vmul.f32 %v259, %v373
      %vm375 = vcmp.eq.f32.partialorder %v259, inf
      %v376 = vsel %vm375, %v259, %v374
      %vm377 = vcmp.eq.f32.partialorder %v259, 0.0
      %v378 = vand.u32 %v259, 2147483648
      %v379 = vsel %vm377, %v378, %v376
      %v380 = vrsqrt.pop %v262
      %v381 = vmul.f32 %v262, %v380
      %vm382 = vcmp.eq.f32.partialorder %v262, inf
      %v383 = vsel %vm382, %v262, %v381
      %vm384 = vcmp.eq.f32.partialorder %v262, 0.0
      %v385 = vand.u32 %v262, 2147483648
      %v386 = vsel %vm384, %v385, %v383
      %v387 = vrsqrt.pop %v265
      %v388 = vmul.f32 %v265, %v387
      %vm389 = vcmp.eq.f32.partialorder %v265, inf
      %v390 = vsel %vm389, %v265, %v388
      %vm391 = vcmp.eq.f32.partialorder %v265, 0.0
      %v392 = vand.u32 %v265, 2147483648
      %v393 = vsel %vm391, %v392, %v390
      %v394 = vrsqrt.pop %v268
      %v395 = vmul.f32 %v268, %v394
      %vm396 = vcmp.eq.f32.partialorder %v268, inf
      %v397 = vsel %vm396, %v268, %v395
      %vm398 = vcmp.eq.f32.partialorder %v268, 0.0
      %v399 = vand.u32 %v268, 2147483648
      %v400 = vsel %vm398, %v399, %v397
      %v401 = vrsqrt.pop %v271
      %v402 = vmul.f32 %v271, %v401
      %vm403 = vcmp.eq.f32.partialorder %v271, inf
      %v404 = vsel %vm403, %v271, %v402
      %vm405 = vcmp.eq.f32.partialorder %v271, 0.0
      %v406 = vand.u32 %v271, 2147483648
      %v407 = vsel %vm405, %v406, %v404
      %v408 = vrsqrt.pop %v274
      %v409 = vmul.f32 %v274, %v408
      %vm410 = vcmp.eq.f32.partialorder %v274, inf
      %v411 = vsel %vm410, %v274, %v409
      %vm412 = vcmp.eq.f32.partialorder %v274, 0.0
      %v413 = vand.u32 %v274, 2147483648
      %v414 = vsel %vm412, %v413, %v411
      %v415 = vrsqrt.pop %v277
      %v416 = vmul.f32 %v277, %v415
      %vm417 = vcmp.eq.f32.partialorder %v277, inf
      %v418 = vsel %vm417, %v277, %v416
      %vm419 = vcmp.eq.f32.partialorder %v277, 0.0
      %v420 = vand.u32 %v277, 2147483648
      %v421 = vsel %vm419, %v420, %v418
      %v422 = vrsqrt.pop %v280
      %v423 = vmul.f32 %v280, %v422
      %vm424 = vcmp.eq.f32.partialorder %v280, inf
      %v425 = vsel %vm424, %v280, %v423
      %vm426 = vcmp.eq.f32.partialorder %v280, 0.0
      %v427 = vand.u32 %v280, 2147483648
      %v428 = vsel %vm426, %v427, %v425
      %v429 = vrsqrt.pop %v283
      %v430 = vmul.f32 %v283, %v429
      %vm431 = vcmp.eq.f32.partialorder %v283, inf
      %v432 = vsel %vm431, %v283, %v430
      %vm433 = vcmp.eq.f32.partialorder %v283, 0.0
      %v434 = vand.u32 %v283, 2147483648
      %v435 = vsel %vm433, %v434, %v432
      %v436 = vrsqrt.pop %v286
      %v437 = vmul.f32 %v286, %v436
      %vm438 = vcmp.eq.f32.partialorder %v286, inf
      %v439 = vsel %vm438, %v286, %v437
      %vm440 = vcmp.eq.f32.partialorder %v286, 0.0
      %v441 = vand.u32 %v286, 2147483648
      %v442 = vsel %vm440, %v441, %v439
      %v443 = vrsqrt.pop %v289
      %v444 = vmul.f32 %v289, %v443
      %vm445 = vcmp.eq.f32.partialorder %v289, inf
      %v446 = vsel %vm445, %v289, %v444
      %vm447 = vcmp.eq.f32.partialorder %v289, 0.0
      %v448 = vand.u32 %v289, 2147483648
      %v449 = vsel %vm447, %v448, %v446
      %v450 = vrsqrt.pop %v292
      %v451 = vmul.f32 %v292, %v450
      %vm452 = vcmp.eq.f32.partialorder %v292, inf
      %v453 = vsel %vm452, %v292, %v451
      %vm454 = vcmp.eq.f32.partialorder %v292, 0.0
      %v455 = vand.u32 %v292, 2147483648
      %v456 = vsel %vm454, %v455, %v453
      %v457 = vrsqrt.pop %v295
      %v458 = vmul.f32 %v295, %v457
      %vm459 = vcmp.eq.f32.partialorder %v295, inf
      %v460 = vsel %vm459, %v295, %v458
      %vm461 = vcmp.eq.f32.partialorder %v295, 0.0
      %v462 = vand.u32 %v295, 2147483648
      %v463 = vsel %vm461, %v462, %v460
      %v464 = vrsqrt.pop %v298
      %v465 = vmul.f32 %v298, %v464
      %vm466 = vcmp.eq.f32.partialorder %v298, inf
      %v467 = vsel %vm466, %v298, %v465
      %vm468 = vcmp.eq.f32.partialorder %v298, 0.0
      %v469 = vand.u32 %v298, 2147483648
      %v470 = vsel %vm468, %v469, %v467
      %v471 = vrsqrt.pop %v301
      %v472 = vmul.f32 %v301, %v471
      %vm473 = vcmp.eq.f32.partialorder %v301, inf
      %v474 = vsel %vm473, %v301, %v472
      %vm475 = vcmp.eq.f32.partialorder %v301, 0.0
      %v476 = vand.u32 %v301, 2147483648
      %v477 = vsel %vm475, %v476, %v474
      %v478 = vrsqrt.pop %v304
      %v479 = vmul.f32 %v304, %v478
      %vm480 = vcmp.eq.f32.partialorder %v304, inf
      %v481 = vsel %vm480, %v304, %v479
      %vm482 = vcmp.eq.f32.partialorder %v304, 0.0
      %v483 = vand.u32 %v304, 2147483648
      %v484 = vsel %vm482, %v483, %v481
      %v485 = vrsqrt.pop %v307
      %v486 = vmul.f32 %v307, %v485
      %vm487 = vcmp.eq.f32.partialorder %v307, inf
      %v488 = vsel %vm487, %v307, %v486
      %vm489 = vcmp.eq.f32.partialorder %v307, 0.0
      %v490 = vand.u32 %v307, 2147483648
      %v491 = vsel %vm489, %v490, %v488
      %v492 = vrsqrt.pop %v310
      %v493 = vmul.f32 %v310, %v492
      %vm494 = vcmp.eq.f32.partialorder %v310, inf
      %v495 = vsel %vm494, %v310, %v493
      %vm496 = vcmp.eq.f32.partialorder %v310, 0.0
      %v497 = vand.u32 %v310, 2147483648
      %v498 = vsel %vm496, %v497, %v495
      %v499 = vrsqrt.pop %v313
      %v500 = vmul.f32 %v313, %v499
      %vm501 = vcmp.eq.f32.partialorder %v313, inf
      %v502 = vsel %vm501, %v313, %v500
      %vm503 = vcmp.eq.f32.partialorder %v313, 0.0
      %v504 = vand.u32 %v313, 2147483648
      %v505 = vsel %vm503, %v504, %v502
      %v506 = vrsqrt.pop %v316
      %v507 = vmul.f32 %v316, %v506
      %vm508 = vcmp.eq.f32.partialorder %v316, inf
      %v509 = vsel %vm508, %v316, %v507
      %vm510 = vcmp.eq.f32.partialorder %v316, 0.0
      %v511 = vand.u32 %v316, 2147483648
      %v512 = vsel %vm510, %v511, %v509
      %v513 = vrsqrt.pop %v319
      %v514 = vmul.f32 %v319, %v513
      %vm515 = vcmp.eq.f32.partialorder %v319, inf
      %v516 = vsel %vm515, %v319, %v514
      %vm517 = vcmp.eq.f32.partialorder %v319, 0.0
      %v518 = vand.u32 %v319, 2147483648
      %v519 = vsel %vm517, %v518, %v516
      %v520 = vrsqrt.pop %v322
      %v521 = vmul.f32 %v322, %v520
      %vm522 = vcmp.eq.f32.partialorder %v322, inf
      %v523 = vsel %vm522, %v322, %v521
      %vm524 = vcmp.eq.f32.partialorder %v322, 0.0
      %v525 = vand.u32 %v322, 2147483648
      %v526 = vsel %vm524, %v525, %v523
      %v527 = vrsqrt.pop %v325
      %v528 = vmul.f32 %v325, %v527
      %vm529 = vcmp.eq.f32.partialorder %v325, inf
      %v530 = vsel %vm529, %v325, %v528
      %vm531 = vcmp.eq.f32.partialorder %v325, 0.0
      %v532 = vand.u32 %v325, 2147483648
      %v533 = vsel %vm531, %v532, %v530
      %v534 = vrsqrt.pop %v328
      %v535 = vmul.f32 %v328, %v534
      %vm536 = vcmp.eq.f32.partialorder %v328, inf
      %v537 = vsel %vm536, %v328, %v535
      %vm538 = vcmp.eq.f32.partialorder %v328, 0.0
      %v539 = vand.u32 %v328, 2147483648
      %v540 = vsel %vm538, %v539, %v537
      %v541 = vrsqrt.pop %v331
      %v542 = vmul.f32 %v331, %v541
      %vm543 = vcmp.eq.f32.partialorder %v331, inf
      %v544 = vsel %vm543, %v331, %v542
      %vm545 = vcmp.eq.f32.partialorder %v331, 0.0
      %v546 = vand.u32 %v331, 2147483648
      %v547 = vsel %vm545, %v546, %v544
      %v548 = vrsqrt.pop %v334
      %v549 = vmul.f32 %v334, %v548
      %vm550 = vcmp.eq.f32.partialorder %v334, inf
      %v551 = vsel %vm550, %v334, %v549
      %vm552 = vcmp.eq.f32.partialorder %v334, 0.0
      %v553 = vand.u32 %v334, 2147483648
      %v554 = vsel %vm552, %v553, %v551
      %v555 = vrsqrt.pop %v337
      %v556 = vmul.f32 %v337, %v555
      %vm557 = vcmp.eq.f32.partialorder %v337, inf
      %v558 = vsel %vm557, %v337, %v556
      %vm559 = vcmp.eq.f32.partialorder %v337, 0.0
      %v560 = vand.u32 %v337, 2147483648
      %v561 = vsel %vm559, %v560, %v558
      %v562 = vadd.f32 %v344, 1e-07
      %v563 = vadd.f32 %v351, 1e-07
      %v564 = vadd.f32 %v358, 1e-07
      %v565 = vadd.f32 %v365, 1e-07
      %v566 = vadd.f32 %v372, 1e-07
      %v567 = vadd.f32 %v379, 1e-07
      %v568 = vadd.f32 %v386, 1e-07
      %v569 = vadd.f32 %v393, 1e-07
      %v570 = vadd.f32 %v400, 1e-07
      %v571 = vadd.f32 %v407, 1e-07
      %v572 = vadd.f32 %v414, 1e-07
      %v573 = vadd.f32 %v421, 1e-07
      %v574 = vadd.f32 %v428, 1e-07
      %v575 = vadd.f32 %v435, 1e-07
      %v576 = vadd.f32 %v442, 1e-07
      %v577 = vadd.f32 %v449, 1e-07
      %v578 = vadd.f32 %v456, 1e-07
      %v579 = vadd.f32 %v463, 1e-07
      %v580 = vadd.f32 %v470, 1e-07
      %v581 = vadd.f32 %v477, 1e-07
      %v582 = vadd.f32 %v484, 1e-07
      %v583 = vadd.f32 %v491, 1e-07
      %v584 = vadd.f32 %v498, 1e-07
      %v585 = vadd.f32 %v505, 1e-07
      %v586 = vadd.f32 %v512, 1e-07
      %v587 = vadd.f32 %v519, 1e-07
      %v588 = vadd.f32 %v526, 1e-07
      %v589 = vadd.f32 %v533, 1e-07
      %v590 = vadd.f32 %v540, 1e-07
      %v591 = vadd.f32 %v547, 1e-07
      %v592 = vadd.f32 %v554, 1e-07
      %v593 = vadd.f32 %v561, 1e-07
      %v594 = vrcp.pop %v562
      %v595 = vmul.f32 %v177, %v594
      %v596 = vrcp.pop %v563
      %v597 = vmul.f32 %v178, %v596
      %v598 = vrcp.pop %v564
      %v599 = vmul.f32 %v179, %v598
      %v600 = vrcp.pop %v565
      %v601 = vmul.f32 %v180, %v600
      %v602 = vrcp.pop %v566
      %v603 = vmul.f32 %v181, %v602
      %v604 = vrcp.pop %v567
      %v605 = vmul.f32 %v182, %v604
      %v606 = vrcp.pop %v568
      %v607 = vmul.f32 %v183, %v606
      %v608 = vrcp.pop %v569
      %v609 = vmul.f32 %v184, %v608
      %v610 = vrcp.pop %v570
      %v611 = vmul.f32 %v185, %v610
      %v612 = vrcp.pop %v571
      %v613 = vmul.f32 %v186, %v612
      %v614 = vrcp.pop %v572
      %v615 = vmul.f32 %v187, %v614
      %v616 = vrcp.pop %v573
      %v617 = vmul.f32 %v188, %v616
      %v618 = vrcp.pop %v574
      %v619 = vmul.f32 %v189, %v618
      %v620 = vrcp.pop %v575
      %v621 = vmul.f32 %v190, %v620
      %v622 = vrcp.pop %v576
      %v623 = vmul.f32 %v191, %v622
      %v624 = vrcp.pop %v577
      %v625 = vmul.f32 %v192, %v624
      %v626 = vrcp.pop %v578
      %v627 = vmul.f32 %v193, %v626
      %v628 = vrcp.pop %v579
      %v629 = vmul.f32 %v194, %v628
      %v630 = vrcp.pop %v580
      %v631 = vmul.f32 %v195, %v630
      %v632 = vrcp.pop %v581
      %v633 = vmul.f32 %v196, %v632
      %v634 = vrcp.pop %v582
      %v635 = vmul.f32 %v197, %v634
      %v636 = vrcp.pop %v583
      %v637 = vmul.f32 %v198, %v636
      %v638 = vrcp.pop %v584
      %v639 = vmul.f32 %v199, %v638
      %v640 = vrcp.pop %v585
      %v641 = vmul.f32 %v200, %v640
      %v642 = vrcp.pop %v586
      %v643 = vmul.f32 %v201, %v642
      %v644 = vrcp.pop %v587
      %v645 = vmul.f32 %v202, %v644
      %v646 = vrcp.pop %v588
      %v647 = vmul.f32 %v203, %v646
      %v648 = vrcp.pop %v589
      %v649 = vmul.f32 %v204, %v648
      %v650 = vrcp.pop %v590
      %v651 = vmul.f32 %v205, %v650
      %v652 = vrcp.pop %v591
      %v653 = vmul.f32 %v206, %v652
      %v654 = vrcp.pop %v592
      %v655 = vmul.f32 %v207, %v654
      %v656 = vrcp.pop %v593
      %v657 = vmul.f32 %v208, %v656
      %658 = vst.msk [vmem:[%s137] sm:$0xff] %vm241, %v595
      %659 = vst.msk [vmem:[%s137 + $0x8] sm:$0xff] %vm241, %v597
      %660 = vst.msk [vmem:[%s137 + $0x10] sm:$0xff] %vm241, %v599
      %661 = vst.msk [vmem:[%s137 + $0x18] sm:$0xff] %vm241, %v601
      %662 = vst.msk [vmem:[%s137 + $0x20] sm:$0xff] %vm241, %v603
      %663 = vst.msk [vmem:[%s137 + $0x28] sm:$0xff] %vm241, %v605
      %664 = vst.msk [vmem:[%s137 + $0x30] sm:$0xff] %vm241, %v607
      %665 = vst.msk [vmem:[%s137 + $0x38] sm:$0xff] %vm241, %v609
      %666 = vst.msk [vmem:[%s137 + $0x40] sm:$0xff] %vm241, %v611
      %667 = vst.msk [vmem:[%s137 + $0x48] sm:$0xff] %vm241, %v613
      %668 = vst.msk [vmem:[%s137 + $0x50] sm:$0xff] %vm241, %v615
      %669 = vst.msk [vmem:[%s137 + $0x58] sm:$0xff] %vm241, %v617
      %670 = vst.msk [vmem:[%s137 + $0x60] sm:$0xff] %vm241, %v619
      %671 = vst.msk [vmem:[%s137 + $0x68] sm:$0xff] %vm241, %v621
      %672 = vst.msk [vmem:[%s137 + $0x70] sm:$0xff] %vm241, %v623
      %673 = vst.msk [vmem:[%s137 + $0x78] sm:$0xff] %vm241, %v625
      %674 = vst.msk [vmem:[%s137 + $0x80] sm:$0xff] %vm241, %v627
      %675 = vst.msk [vmem:[%s137 + $0x88] sm:$0xff] %vm241, %v629
      %676 = vst.msk [vmem:[%s137 + $0x90] sm:$0xff] %vm241, %v631
      %677 = vst.msk [vmem:[%s137 + $0x98] sm:$0xff] %vm241, %v633
      %678 = vst.msk [vmem:[%s137 + $0xa0] sm:$0xff] %vm241, %v635
      %679 = vst.msk [vmem:[%s137 + $0xa8] sm:$0xff] %vm241, %v637
      %680 = vst.msk [vmem:[%s137 + $0xb0] sm:$0xff] %vm241, %v639
      %681 = vst.msk [vmem:[%s137 + $0xb8] sm:$0xff] %vm241, %v641
      %682 = vst.msk [vmem:[%s137 + $0xc0] sm:$0xff] %vm241, %v643
      %683 = vst.msk [vmem:[%s137 + $0xc8] sm:$0xff] %vm241, %v645
      %684 = vst.msk [vmem:[%s137 + $0xd0] sm:$0xff] %vm241, %v647
      %685 = vst.msk [vmem:[%s137 + $0xd8] sm:$0xff] %vm241, %v649
      %686 = vst.msk [vmem:[%s137 + $0xe0] sm:$0xff] %vm241, %v651
      %687 = vst.msk [vmem:[%s137 + $0xe8] sm:$0xff] %vm241, %v653
      %688 = vst.msk [vmem:[%s137 + $0xf0] sm:$0xff] %vm241, %v655
      %689 = vst.msk [vmem:[%s137 + $0xf8] sm:$0xff] %vm241, %v657
      %p690 = scmp.lt.s32.totalorder %s13, 1
      %s691 = scalar_select %p690, %s13, 1
      %s692 = smul.addr %s691, 32
      %s693 = smul.addr %s692, 8
      %s694 = scalar_lea.vmem %s2, %s693
      // Predicated region
      $region29: #{cross_view_swap_attention.26} parent=27 // pred_check
        %p695 = pneg %p78
      $region30: #{cross_view_swap_attention.26} parent=27 // pred_check_branch
        %697 = sbr.rel (%p695) target = $region32
      $region31: #{cross_view_swap_attention.26} parent=27 // pred_region
        _
      $region32: #{cross_view_swap_attention.26} parent=27 // pred_fallthru
        _
    $region28: #{cross_view_swap_attention.26} parent=5 // pred_fallthru
      _
    %p698 = scmp.le.s32.totalorder 2, %s8
    // Predicated region
    $region33: #{cross_view_swap_attention.26} parent=5 // pred_check
      %p699 = pneg %p698
    $region34: #{cross_view_swap_attention.26} parent=5 // pred_check_branch
      %701 = sbr.rel (%p699) target = $region36
    $region35: #{cross_view_swap_attention.26} parent=5 // pred_region
      %s702 = ssub.s32 %s8, 2
      // Predicated region
      $region37: #{cross_view_swap_attention.26} parent=35 // pred_check
        %p703 = pneg %p84
      $region38: #{cross_view_swap_attention.26} parent=35 // pred_check_branch
        %705 = sbr.rel (%p703) target = $region40
      $region39: #{cross_view_swap_attention.26} parent=35 // pred_region
        %p706 = scmp.lt.s32.totalorder %s14, 1
        %s707 = scalar_select %p706, %s14, 1
        %s708 = smul.addr %s707, 32
        %s709 = smul.addr %s708, 8
        %s710 = scalar_lea.vmem %s2, %s709
      $region40: #{cross_view_swap_attention.26} parent=35 // pred_fallthru
        _
    $region36: #{cross_view_swap_attention.26} parent=5 // pred_fallthru
      _
  $region6: #{cross_view_swap_attention.26} parent=0 // loop_footer
    %s12 = sadd.s32 1, %s8
  $region7: #{cross_view_swap_attention.26} parent=0 // loop_footer_branch
    %7 = sbr.rel target = $region3
  $region8: #{cross_view_swap_attention.26} parent=0 // loop_exit
    _

// kernel: cross_view_swap_attention.29
$region0: #{cross_view_swap_attention.29}
  #allocation0 [shape = 'u32[]', space=smem, size = 0x4, offset = 0x4, fixed_abs, tag = 'smem constant byte address 0x4 - core index']
  #allocation1 [shape = 'u32[144,128]{1,0:T(1,128)}', space=vmem, size = 0x12000, scoped, tag = 'internal scratch']
  %s0 = inlined_call_operand.vmem [shape: f32[512,32], index: 0, kind: input, shape index: {}]
  %s1 = inlined_call_operand.vmem [shape: f32[1,32], index: 1, kind: input, shape index: {}]
  %s2 = inlined_call_operand.vmem [shape: f32[1,32], index: 2, kind: input, shape index: {}]
  %s3 = inlined_call_operand.vmem [shape: f32[32,32], index: 3, kind: input, shape index: {}]
  %s4 = inlined_call_operand.vmem [shape: f32[1,32], index: 4, kind: input, shape index: {}]
  %s5 = inlined_call_operand.vmem [shape: f32[512,32], index: 5, kind: output, shape index: {}]
  %s6 = sld [smem:[#allocation0]]
  $region30: #{cross_view_swap_attention.29} parent=0
    _
  %s8 = ssub.s32 1, %s6
  %s9 = scalar_select 0, %s8, %s6
  // Predicated region
  $region2: #{cross_view_swap_attention.29} parent=0 // pred_check
    _
  $region3: #{cross_view_swap_attention.29} parent=0 // pred_check_branch
    %11 = sbr.rel (0) target = $region5
  $region4: #{cross_view_swap_attention.29} parent=0 // pred_region
    _
  $region5: #{cross_view_swap_attention.29} parent=0 // pred_fallthru
    _
  // Predicated region
  $region6: #{cross_view_swap_attention.29} parent=0 // pred_check
    _
  $region7: #{cross_view_swap_attention.29} parent=0 // pred_check_branch
    %13 = sbr.rel (0) target = $region9
  $region8: #{cross_view_swap_attention.29} parent=0 // pred_region
    _
  $region9: #{cross_view_swap_attention.29} parent=0 // pred_fallthru
    _
  // Predicated region
  $region10: #{cross_view_swap_attention.29} parent=0 // pred_check
    _
  $region11: #{cross_view_swap_attention.29} parent=0 // pred_check_branch
    %15 = sbr.rel (0) target = $region13
  $region12: #{cross_view_swap_attention.29} parent=0 // pred_region
    _
  $region13: #{cross_view_swap_attention.29} parent=0 // pred_fallthru
    _
  // Predicated region
  $region14: #{cross_view_swap_attention.29} parent=0 // pred_check
    _
  $region15: #{cross_view_swap_attention.29} parent=0 // pred_check_branch
    %17 = sbr.rel (0) target = $region17
  $region16: #{cross_view_swap_attention.29} parent=0 // pred_region
    _
  $region17: #{cross_view_swap_attention.29} parent=0 // pred_fallthru
    _
  // Predicated region
  $region18: #{cross_view_swap_attention.29} parent=0 // pred_check
    _
  $region19: #{cross_view_swap_attention.29} parent=0 // pred_check_branch
    %19 = sbr.rel (0) target = $region21
  $region20: #{cross_view_swap_attention.29} parent=0 // pred_region
    _
  $region21: #{cross_view_swap_attention.29} parent=0 // pred_fallthru
    _
  %v20 = vld [vmem:[%s0] sm:$0xff]
  %v21 = vld [vmem:[%s0 + $0x8] sm:$0xff]
  %v22 = vld [vmem:[%s0 + $0x10] sm:$0xff]
  %v23 = vld [vmem:[%s0 + $0x18] sm:$0xff]
  %v24 = vld [vmem:[%s0 + $0x20] sm:$0xff]
  %v25 = vld [vmem:[%s0 + $0x28] sm:$0xff]
  %v26 = vld [vmem:[%s0 + $0x30] sm:$0xff]
  %v27 = vld [vmem:[%s0 + $0x38] sm:$0xff]
  %v28 = vld [vmem:[%s0 + $0x40] sm:$0xff]
  %v29 = vld [vmem:[%s0 + $0x48] sm:$0xff]
  %v30 = vld [vmem:[%s0 + $0x50] sm:$0xff]
  %v31 = vld [vmem:[%s0 + $0x58] sm:$0xff]
  %v32 = vld [vmem:[%s0 + $0x60] sm:$0xff]
  %v33 = vld [vmem:[%s0 + $0x68] sm:$0xff]
  %v34 = vld [vmem:[%s0 + $0x70] sm:$0xff]
  %v35 = vld [vmem:[%s0 + $0x78] sm:$0xff]
  %v36 = vld [vmem:[%s0 + $0x80] sm:$0xff]
  %v37 = vld [vmem:[%s0 + $0x88] sm:$0xff]
  %v38 = vld [vmem:[%s0 + $0x90] sm:$0xff]
  %v39 = vld [vmem:[%s0 + $0x98] sm:$0xff]
  %v40 = vld [vmem:[%s0 + $0xa0] sm:$0xff]
  %v41 = vld [vmem:[%s0 + $0xa8] sm:$0xff]
  %v42 = vld [vmem:[%s0 + $0xb0] sm:$0xff]
  %v43 = vld [vmem:[%s0 + $0xb8] sm:$0xff]
  %v44 = vld [vmem:[%s0 + $0xc0] sm:$0xff]
  %v45 = vld [vmem:[%s0 + $0xc8] sm:$0xff]
  %v46 = vld [vmem:[%s0 + $0xd0] sm:$0xff]
  %v47 = vld [vmem:[%s0 + $0xd8] sm:$0xff]
  %v48 = vld [vmem:[%s0 + $0xe0] sm:$0xff]
  %v49 = vld [vmem:[%s0 + $0xe8] sm:$0xff]
  %v50 = vld [vmem:[%s0 + $0xf0] sm:$0xff]
  %v51 = vld [vmem:[%s0 + $0xf8] sm:$0xff]
  %v52 = vld [vmem:[%s0 + $0x100] sm:$0xff]
  %v53 = vld [vmem:[%s0 + $0x108] sm:$0xff]
  %v54 = vld [vmem:[%s0 + $0x110] sm:$0xff]
  %v55 = vld [vmem:[%s0 + $0x118] sm:$0xff]
  %v56 = vld [vmem:[%s0 + $0x120] sm:$0xff]
  %v57 = vld [vmem:[%s0 + $0x128] sm:$0xff]
  %v58 = vld [vmem:[%s0 + $0x130] sm:$0xff]
  %v59 = vld [vmem:[%s0 + $0x138] sm:$0xff]
  %v60 = vld [vmem:[%s0 + $0x140] sm:$0xff]
  %v61 = vld [vmem:[%s0 + $0x148] sm:$0xff]
  %v62 = vld [vmem:[%s0 + $0x150] sm:$0xff]
  %v63 = vld [vmem:[%s0 + $0x158] sm:$0xff]
  %v64 = vld [vmem:[%s0 + $0x160] sm:$0xff]
  %v65 = vld [vmem:[%s0 + $0x168] sm:$0xff]
  %v66 = vld [vmem:[%s0 + $0x170] sm:$0xff]
  %v67 = vld [vmem:[%s0 + $0x178] sm:$0xff]
  %v68 = vld [vmem:[%s0 + $0x180] sm:$0xff]
  %v69 = vld [vmem:[%s0 + $0x188] sm:$0xff]
  %v70 = vld [vmem:[%s0 + $0x190] sm:$0xff]
  %v71 = vld [vmem:[%s0 + $0x198] sm:$0xff]
  %v72 = vld [vmem:[%s0 + $0x1a0] sm:$0xff]
  %v73 = vld [vmem:[%s0 + $0x1a8] sm:$0xff]
  %v74 = vld [vmem:[%s0 + $0x1b0] sm:$0xff]
  %v75 = vld [vmem:[%s0 + $0x1b8] sm:$0xff]
  %v76 = vld [vmem:[%s0 + $0x1c0] sm:$0xff]
  %v77 = vld [vmem:[%s0 + $0x1c8] sm:$0xff]
  %v78 = vld [vmem:[%s0 + $0x1d0] sm:$0xff]
  %v79 = vld [vmem:[%s0 + $0x1d8] sm:$0xff]
  %v80 = vld [vmem:[%s0 + $0x1e0] sm:$0xff]
  %v81 = vld [vmem:[%s0 + $0x1e8] sm:$0xff]
  %v82 = vld [vmem:[%s0 + $0x1f0] sm:$0xff]
  %v83 = vld [vmem:[%s0 + $0x1f8] sm:$0xff]
  %v84 = vld [vmem:[%s1] sm:$0x1]
  %v85 = vld [vmem:[%s2] sm:$0x1]
  %vm86 = vcmask 261120
  %v87 = vsel %vm86, %v20, 0.0
  %88 = vadd.xlane.f32.xlu0 %v87
  %v89 = vpop.xlane.xlu0 %88
  %v90 = vsel %vm86, %v21, 0.0
  %91 = vadd.xlane.f32.xlu0 %v90
  %v92 = vpop.xlane.xlu0 %91
  %v93 = vsel %vm86, %v22, 0.0
  %94 = vadd.xlane.f32.xlu0 %v93
  %v95 = vpop.xlane.xlu0 %94
  %v96 = vsel %vm86, %v23, 0.0
  %97 = vadd.xlane.f32.xlu0 %v96
  %v98 = vpop.xlane.xlu0 %97
  %v99 = vsel %vm86, %v24, 0.0
  %100 = vadd.xlane.f32.xlu0 %v99
  %v101 = vpop.xlane.xlu0 %100
  %v102 = vsel %vm86, %v25, 0.0
  %103 = vadd.xlane.f32.xlu0 %v102
  %v104 = vpop.xlane.xlu0 %103
  %v105 = vsel %vm86, %v26, 0.0
  %106 = vadd.xlane.f32.xlu0 %v105
  %v107 = vpop.xlane.xlu0 %106
  %v108 = vsel %vm86, %v27, 0.0
  %109 = vadd.xlane.f32.xlu0 %v108
  %v110 = vpop.xlane.xlu0 %109
  %v111 = vsel %vm86, %v28, 0.0
  %112 = vadd.xlane.f32.xlu0 %v111
  %v113 = vpop.xlane.xlu0 %112
  %v114 = vsel %vm86, %v29, 0.0
  %115 = vadd.xlane.f32.xlu0 %v114
  %v116 = vpop.xlane.xlu0 %115
  %v117 = vsel %vm86, %v30, 0.0
  %118 = vadd.xlane.f32.xlu0 %v117
  %v119 = vpop.xlane.xlu0 %118
  %v120 = vsel %vm86, %v31, 0.0
  %121 = vadd.xlane.f32.xlu0 %v120
  %v122 = vpop.xlane.xlu0 %121
  %v123 = vsel %vm86, %v32, 0.0
  %124 = vadd.xlane.f32.xlu0 %v123
  %v125 = vpop.xlane.xlu0 %124
  %v126 = vsel %vm86, %v33, 0.0
  %127 = vadd.xlane.f32.xlu0 %v126
  %v128 = vpop.xlane.xlu0 %127
  %v129 = vsel %vm86, %v34, 0.0
  %130 = vadd.xlane.f32.xlu0 %v129
  %v131 = vpop.xlane.xlu0 %130
  %v132 = vsel %vm86, %v35, 0.0
  %133 = vadd.xlane.f32.xlu0 %v132
  %v134 = vpop.xlane.xlu0 %133
  %v135 = vsel %vm86, %v36, 0.0
  %136 = vadd.xlane.f32.xlu0 %v135
  %v137 = vpop.xlane.xlu0 %136
  %v138 = vsel %vm86, %v37, 0.0
  %139 = vadd.xlane.f32.xlu0 %v138
  %v140 = vpop.xlane.xlu0 %139
  %v141 = vsel %vm86, %v38, 0.0
  %142 = vadd.xlane.f32.xlu0 %v141
  %v143 = vpop.xlane.xlu0 %142
  %v144 = vsel %vm86, %v39, 0.0
  %145 = vadd.xlane.f32.xlu0 %v144
  %v146 = vpop.xlane.xlu0 %145
  %v147 = vsel %vm86, %v40, 0.0
  %148 = vadd.xlane.f32.xlu0 %v147
  %v149 = vpop.xlane.xlu0 %148
  %v150 = vsel %vm86, %v41, 0.0
  %151 = vadd.xlane.f32.xlu0 %v150
  %v152 = vpop.xlane.xlu0 %151
  %v153 = vsel %vm86, %v42, 0.0
  %154 = vadd.xlane.f32.xlu0 %v153
  %v155 = vpop.xlane.xlu0 %154
  %v156 = vsel %vm86, %v43, 0.0
  %157 = vadd.xlane.f32.xlu0 %v156
  %v158 = vpop.xlane.xlu0 %157
  %v159 = vsel %vm86, %v44, 0.0
  %160 = vadd.xlane.f32.xlu0 %v159
  %v161 = vpop.xlane.xlu0 %160
  %v162 = vsel %vm86, %v45, 0.0
  %163 = vadd.xlane.f32.xlu0 %v162
  %v164 = vpop.xlane.xlu0 %163
  %v165 = vsel %vm86, %v46, 0.0
  %166 = vadd.xlane.f32.xlu0 %v165
  %v167 = vpop.xlane.xlu0 %166
  %v168 = vsel %vm86, %v47, 0.0
  %169 = vadd.xlane.f32.xlu0 %v168
  %v170 = vpop.xlane.xlu0 %169
  %v171 = vsel %vm86, %v48, 0.0
  %172 = vadd.xlane.f32.xlu0 %v171
  %v173 = vpop.xlane.xlu0 %172
  %v174 = vsel %vm86, %v49, 0.0
  %175 = vadd.xlane.f32.xlu0 %v174
  %v176 = vpop.xlane.xlu0 %175
  %v177 = vsel %vm86, %v50, 0.0
  %178 = vadd.xlane.f32.xlu0 %v177
  %v179 = vpop.xlane.xlu0 %178
  %v180 = vsel %vm86, %v51, 0.0
  %181 = vadd.xlane.f32.xlu0 %v180
  %v182 = vpop.xlane.xlu0 %181
  %v183 = vsel %vm86, %v52, 0.0
  %184 = vadd.xlane.f32.xlu0 %v183
  %v185 = vpop.xlane.xlu0 %184
  %v186 = vsel %vm86, %v53, 0.0
  %187 = vadd.xlane.f32.xlu0 %v186
  %v188 = vpop.xlane.xlu0 %187
  %v189 = vsel %vm86, %v54, 0.0
  %190 = vadd.xlane.f32.xlu0 %v189
  %v191 = vpop.xlane.xlu0 %190
  %v192 = vsel %vm86, %v55, 0.0
  %193 = vadd.xlane.f32.xlu0 %v192
  %v194 = vpop.xlane.xlu0 %193
  %v195 = vsel %vm86, %v56, 0.0
  %196 = vadd.xlane.f32.xlu0 %v195
  %v197 = vpop.xlane.xlu0 %196
  %v198 = vsel %vm86, %v57, 0.0
  %199 = vadd.xlane.f32.xlu0 %v198
  %v200 = vpop.xlane.xlu0 %199
  %v201 = vsel %vm86, %v58, 0.0
  %202 = vadd.xlane.f32.xlu0 %v201
  %v203 = vpop.xlane.xlu0 %202
  %v204 = vsel %vm86, %v59, 0.0
  %205 = vadd.xlane.f32.xlu0 %v204
  %v206 = vpop.xlane.xlu0 %205
  %v207 = vsel %vm86, %v60, 0.0
  %208 = vadd.xlane.f32.xlu0 %v207
  %v209 = vpop.xlane.xlu0 %208
  %v210 = vsel %vm86, %v61, 0.0
  %211 = vadd.xlane.f32.xlu0 %v210
  %v212 = vpop.xlane.xlu0 %211
  %v213 = vsel %vm86, %v62, 0.0
  %214 = vadd.xlane.f32.xlu0 %v213
  %v215 = vpop.xlane.xlu0 %214
  %v216 = vsel %vm86, %v63, 0.0
  %217 = vadd.xlane.f32.xlu0 %v216
  %v218 = vpop.xlane.xlu0 %217
  %v219 = vsel %vm86, %v64, 0.0
  %220 = vadd.xlane.f32.xlu0 %v219
  %v221 = vpop.xlane.xlu0 %220
  %v222 = vsel %vm86, %v65, 0.0
  %223 = vadd.xlane.f32.xlu0 %v222
  %v224 = vpop.xlane.xlu0 %223
  %v225 = vsel %vm86, %v66, 0.0
  %226 = vadd.xlane.f32.xlu0 %v225
  %v227 = vpop.xlane.xlu0 %226
  %v228 = vsel %vm86, %v67, 0.0
  %229 = vadd.xlane.f32.xlu0 %v228
  %v230 = vpop.xlane.xlu0 %229
  %v231 = vsel %vm86, %v68, 0.0
  %232 = vadd.xlane.f32.xlu0 %v231
  %v233 = vpop.xlane.xlu0 %232
  %v234 = vsel %vm86, %v69, 0.0
  %235 = vadd.xlane.f32.xlu0 %v234
  %v236 = vpop.xlane.xlu0 %235
  %v237 = vsel %vm86, %v70, 0.0
  %238 = vadd.xlane.f32.xlu0 %v237
  %v239 = vpop.xlane.xlu0 %238
  %v240 = vsel %vm86, %v71, 0.0
  %241 = vadd.xlane.f32.xlu0 %v240
  %v242 = vpop.xlane.xlu0 %241
  %v243 = vsel %vm86, %v72, 0.0
  %244 = vadd.xlane.f32.xlu0 %v243
  %v245 = vpop.xlane.xlu0 %244
  %v246 = vsel %vm86, %v73, 0.0
  %247 = vadd.xlane.f32.xlu0 %v246
  %v248 = vpop.xlane.xlu0 %247
  %v249 = vsel %vm86, %v74, 0.0
  %250 = vadd.xlane.f32.xlu0 %v249
  %v251 = vpop.xlane.xlu0 %250
  %v252 = vsel %vm86, %v75, 0.0
  %253 = vadd.xlane.f32.xlu0 %v252
  %v254 = vpop.xlane.xlu0 %253
  %v255 = vsel %vm86, %v76, 0.0
  %256 = vadd.xlane.f32.xlu0 %v255
  %v257 = vpop.xlane.xlu0 %256
  %v258 = vsel %vm86, %v77, 0.0
  %259 = vadd.xlane.f32.xlu0 %v258
  %v260 = vpop.xlane.xlu0 %259
  %v261 = vsel %vm86, %v78, 0.0
  %262 = vadd.xlane.f32.xlu0 %v261
  %v263 = vpop.xlane.xlu0 %262
  %v264 = vsel %vm86, %v79, 0.0
  %265 = vadd.xlane.f32.xlu0 %v264
  %v266 = vpop.xlane.xlu0 %265
  %v267 = vsel %vm86, %v80, 0.0
  %268 = vadd.xlane.f32.xlu0 %v267
  %v269 = vpop.xlane.xlu0 %268
  %v270 = vsel %vm86, %v81, 0.0
  %271 = vadd.xlane.f32.xlu0 %v270
  %v272 = vpop.xlane.xlu0 %271
  %v273 = vsel %vm86, %v82, 0.0
  %274 = vadd.xlane.f32.xlu0 %v273
  %v275 = vpop.xlane.xlu0 %274
  %v276 = vsel %vm86, %v83, 0.0
  %277 = vadd.xlane.f32.xlu0 %v276
  %v278 = vpop.xlane.xlu0 %277
  %v279 = vrcp.pop 32.0
  %v280 = vmul.f32 %v89, %v279
  %v281 = vmul.f32 %v92, %v279
  %v282 = vmul.f32 %v95, %v279
  %v283 = vmul.f32 %v98, %v279
  %v284 = vmul.f32 %v101, %v279
  %v285 = vmul.f32 %v104, %v279
  %v286 = vmul.f32 %v107, %v279
  %v287 = vmul.f32 %v110, %v279
  %v288 = vmul.f32 %v113, %v279
  %v289 = vmul.f32 %v116, %v279
  %v290 = vmul.f32 %v119, %v279
  %v291 = vmul.f32 %v122, %v279
  %v292 = vmul.f32 %v125, %v279
  %v293 = vmul.f32 %v128, %v279
  %v294 = vmul.f32 %v131, %v279
  %v295 = vmul.f32 %v134, %v279
  %v296 = vmul.f32 %v137, %v279
  %v297 = vmul.f32 %v140, %v279
  %v298 = vmul.f32 %v143, %v279
  %v299 = vmul.f32 %v146, %v279
  %v300 = vmul.f32 %v149, %v279
  %v301 = vmul.f32 %v152, %v279
  %v302 = vmul.f32 %v155, %v279
  %v303 = vmul.f32 %v158, %v279
  %v304 = vmul.f32 %v161, %v279
  %v305 = vmul.f32 %v164, %v279
  %v306 = vmul.f32 %v167, %v279
  %v307 = vmul.f32 %v170, %v279
  %v308 = vmul.f32 %v173, %v279
  %v309 = vmul.f32 %v176, %v279
  %v310 = vmul.f32 %v179, %v279
  %v311 = vmul.f32 %v182, %v279
  %v312 = vmul.f32 %v185, %v279
  %v313 = vmul.f32 %v188, %v279
  %v314 = vmul.f32 %v191, %v279
  %v315 = vmul.f32 %v194, %v279
  %v316 = vmul.f32 %v197, %v279
  %v317 = vmul.f32 %v200, %v279
  %v318 = vmul.f32 %v203, %v279
  %v319 = vmul.f32 %v206, %v279
  %v320 = vmul.f32 %v209, %v279
  %v321 = vmul.f32 %v212, %v279
  %v322 = vmul.f32 %v215, %v279
  %v323 = vmul.f32 %v218, %v279
  %v324 = vmul.f32 %v221, %v279
  %v325 = vmul.f32 %v224, %v279
  %v326 = vmul.f32 %v227, %v279
  %v327 = vmul.f32 %v230, %v279
  %v328 = vmul.f32 %v233, %v279
  %v329 = vmul.f32 %v236, %v279
  %v330 = vmul.f32 %v239, %v279
  %v331 = vmul.f32 %v242, %v279
  %v332 = vmul.f32 %v245, %v279
  %v333 = vmul.f32 %v248, %v279
  %v334 = vmul.f32 %v251, %v279
  %v335 = vmul.f32 %v254, %v279
  %v336 = vmul.f32 %v257, %v279
  %v337 = vmul.f32 %v260, %v279
  %v338 = vmul.f32 %v263, %v279
  %v339 = vmul.f32 %v266, %v279
  %v340 = vmul.f32 %v269, %v279
  %v341 = vmul.f32 %v272, %v279
  %v342 = vmul.f32 %v275, %v279
  %v343 = vmul.f32 %v278, %v279
  %v344 = vsub.f32 %v20, %v280
  %v345 = vsub.f32 %v21, %v281
  %v346 = vsub.f32 %v22, %v282
  %v347 = vsub.f32 %v23, %v283
  %v348 = vsub.f32 %v24, %v284
  %v349 = vsub.f32 %v25, %v285
  %v350 = vsub.f32 %v26, %v286
  %v351 = vsub.f32 %v27, %v287
  %v352 = vsub.f32 %v28, %v288
  %v353 = vsub.f32 %v29, %v289
  %v354 = vsub.f32 %v30, %v290
  %v355 = vsub.f32 %v31, %v291
  %v356 = vsub.f32 %v32, %v292
  %v357 = vsub.f32 %v33, %v293
  %v358 = vsub.f32 %v34, %v294
  %v359 = vsub.f32 %v35, %v295
  %v360 = vsub.f32 %v36, %v296
  %v361 = vsub.f32 %v37, %v297
  %v362 = vsub.f32 %v38, %v298
  %v363 = vsub.f32 %v39, %v299
  %v364 = vsub.f32 %v40, %v300
  %v365 = vsub.f32 %v41, %v301
  %v366 = vsub.f32 %v42, %v302
  %v367 = vsub.f32 %v43, %v303
  %v368 = vsub.f32 %v44, %v304
  %v369 = vsub.f32 %v45, %v305
  %v370 = vsub.f32 %v46, %v306
  %v371 = vsub.f32 %v47, %v307
  %v372 = vsub.f32 %v48, %v308
  %v373 = vsub.f32 %v49, %v309
  %v374 = vsub.f32 %v50, %v310
  %v375 = vsub.f32 %v51, %v311
  %v376 = vsub.f32 %v52, %v312
  %v377 = vsub.f32 %v53, %v313
  %v378 = vsub.f32 %v54, %v314
  %v379 = vsub.f32 %v55, %v315
  %v380 = vsub.f32 %v56, %v316
  %v381 = vsub.f32 %v57, %v317
  %v382 = vsub.f32 %v58, %v318
  %v383 = vsub.f32 %v59, %v319
  %v384 = vsub.f32 %v60, %v320
  %v385 = vsub.f32 %v61, %v321
  %v386 = vsub.f32 %v62, %v322
  %v387 = vsub.f32 %v63, %v323
  %v388 = vsub.f32 %v64, %v324
  %v389 = vsub.f32 %v65, %v325
  %v390 = vsub.f32 %v66, %v326
  %v391 = vsub.f32 %v67, %v327
  %v392 = vsub.f32 %v68, %v328
  %v393 = vsub.f32 %v69, %v329
  %v394 = vsub.f32 %v70, %v330
  %v395 = vsub.f32 %v71, %v331
  %v396 = vsub.f32 %v72, %v332
  %v397 = vsub.f32 %v73, %v333
  %v398 = vsub.f32 %v74, %v334
  %v399 = vsub.f32 %v75, %v335
  %v400 = vsub.f32 %v76, %v336
  %v401 = vsub.f32 %v77, %v337
  %v402 = vsub.f32 %v78, %v338
  %v403 = vsub.f32 %v79, %v339
  %v404 = vsub.f32 %v80, %v340
  %v405 = vsub.f32 %v81, %v341
  %v406 = vsub.f32 %v82, %v342
  %v407 = vsub.f32 %v83, %v343
  %v408 = vmul.f32 %v344, %v344
  %v409 = vmul.f32 %v345, %v345
  %v410 = vmul.f32 %v346, %v346
  %v411 = vmul.f32 %v347, %v347
  %v412 = vmul.f32 %v348, %v348
  %v413 = vmul.f32 %v349, %v349
  %v414 = vmul.f32 %v350, %v350
  %v415 = vmul.f32 %v351, %v351
  %v416 = vmul.f32 %v352, %v352
  %v417 = vmul.f32 %v353, %v353
  %v418 = vmul.f32 %v354, %v354
  %v419 = vmul.f32 %v355, %v355
  %v420 = vmul.f32 %v356, %v356
  %v421 = vmul.f32 %v357, %v357
  %v422 = vmul.f32 %v358, %v358
  %v423 = vmul.f32 %v359, %v359
  %v424 = vmul.f32 %v360, %v360
  %v425 = vmul.f32 %v361, %v361
  %v426 = vmul.f32 %v362, %v362
  %v427 = vmul.f32 %v363, %v363
  %v428 = vmul.f32 %v364, %v364
  %v429 = vmul.f32 %v365, %v365
  %v430 = vmul.f32 %v366, %v366
  %v431 = vmul.f32 %v367, %v367
  %v432 = vmul.f32 %v368, %v368
  %v433 = vmul.f32 %v369, %v369
  %v434 = vmul.f32 %v370, %v370
  %v435 = vmul.f32 %v371, %v371
  %v436 = vmul.f32 %v372, %v372
  %v437 = vmul.f32 %v373, %v373
  %v438 = vmul.f32 %v374, %v374
  %v439 = vmul.f32 %v375, %v375
  %v440 = vmul.f32 %v376, %v376
  %v441 = vmul.f32 %v377, %v377
  %v442 = vmul.f32 %v378, %v378
  %v443 = vmul.f32 %v379, %v379
  %v444 = vmul.f32 %v380, %v380
  %v445 = vmul.f32 %v381, %v381
  %v446 = vmul.f32 %v382, %v382
  %v447 = vmul.f32 %v383, %v383
  %v448 = vmul.f32 %v384, %v384
  %v449 = vmul.f32 %v385, %v385
  %v450 = vmul.f32 %v386, %v386
  %v451 = vmul.f32 %v387, %v387
  %v452 = vmul.f32 %v388, %v388
  %v453 = vmul.f32 %v389, %v389
  %v454 = vmul.f32 %v390, %v390
  %v455 = vmul.f32 %v391, %v391
  %v456 = vmul.f32 %v392, %v392
  %v457 = vmul.f32 %v393, %v393
  %v458 = vmul.f32 %v394, %v394
  %v459 = vmul.f32 %v395, %v395
  %v460 = vmul.f32 %v396, %v396
  %v461 = vmul.f32 %v397, %v397
  %v462 = vmul.f32 %v398, %v398
  %v463 = vmul.f32 %v399, %v399
  %v464 = vmul.f32 %v400, %v400
  %v465 = vmul.f32 %v401, %v401
  %v466 = vmul.f32 %v402, %v402
  %v467 = vmul.f32 %v403, %v403
  %v468 = vmul.f32 %v404, %v404
  %v469 = vmul.f32 %v405, %v405
  %v470 = vmul.f32 %v406, %v406
  %v471 = vmul.f32 %v407, %v407
  %v472 = vsel %vm86, %v408, 0.0
  %473 = vadd.xlane.f32.xlu0 %v472
  %v474 = vpop.xlane.xlu0 %473
  %v475 = vsel %vm86, %v409, 0.0
  %476 = vadd.xlane.f32.xlu0 %v475
  %v477 = vpop.xlane.xlu0 %476
  %v478 = vsel %vm86, %v410, 0.0
  %479 = vadd.xlane.f32.xlu0 %v478
  %v480 = vpop.xlane.xlu0 %479
  %v481 = vsel %vm86, %v411, 0.0
  %482 = vadd.xlane.f32.xlu0 %v481
  %v483 = vpop.xlane.xlu0 %482
  %v484 = vsel %vm86, %v412, 0.0
  %485 = vadd.xlane.f32.xlu0 %v484
  %v486 = vpop.xlane.xlu0 %485
  %v487 = vsel %vm86, %v413, 0.0
  %488 = vadd.xlane.f32.xlu0 %v487
  %v489 = vpop.xlane.xlu0 %488
  %v490 = vsel %vm86, %v414, 0.0
  %491 = vadd.xlane.f32.xlu0 %v490
  %v492 = vpop.xlane.xlu0 %491
  %v493 = vsel %vm86, %v415, 0.0
  %494 = vadd.xlane.f32.xlu0 %v493
  %v495 = vpop.xlane.xlu0 %494
  %v496 = vsel %vm86, %v416, 0.0
  %497 = vadd.xlane.f32.xlu0 %v496
  %v498 = vpop.xlane.xlu0 %497
  %v499 = vsel %vm86, %v417, 0.0
  %500 = vadd.xlane.f32.xlu0 %v499
  %v501 = vpop.xlane.xlu0 %500
  %v502 = vsel %vm86, %v418, 0.0
  %503 = vadd.xlane.f32.xlu0 %v502
  %v504 = vpop.xlane.xlu0 %503
  %v505 = vsel %vm86, %v419, 0.0
  %506 = vadd.xlane.f32.xlu0 %v505
  %v507 = vpop.xlane.xlu0 %506
  %v508 = vsel %vm86, %v420, 0.0
  %509 = vadd.xlane.f32.xlu0 %v508
  %v510 = vpop.xlane.xlu0 %509
  %v511 = vsel %vm86, %v421, 0.0
  %512 = vadd.xlane.f32.xlu0 %v511
  %v513 = vpop.xlane.xlu0 %512
  %v514 = vsel %vm86, %v422, 0.0
  %515 = vadd.xlane.f32.xlu0 %v514
  %v516 = vpop.xlane.xlu0 %515
  %v517 = vsel %vm86, %v423, 0.0
  %518 = vadd.xlane.f32.xlu0 %v517
  %v519 = vpop.xlane.xlu0 %518
  %v520 = vsel %vm86, %v424, 0.0
  %521 = vadd.xlane.f32.xlu0 %v520
  %v522 = vpop.xlane.xlu0 %521
  %v523 = vsel %vm86, %v425, 0.0
  %524 = vadd.xlane.f32.xlu0 %v523
  %v525 = vpop.xlane.xlu0 %524
  %v526 = vsel %vm86, %v426, 0.0
  %527 = vadd.xlane.f32.xlu0 %v526
  %v528 = vpop.xlane.xlu0 %527
  %v529 = vsel %vm86, %v427, 0.0
  %530 = vadd.xlane.f32.xlu0 %v529
  %v531 = vpop.xlane.xlu0 %530
  %v532 = vsel %vm86, %v428, 0.0
  %533 = vadd.xlane.f32.xlu0 %v532
  %v534 = vpop.xlane.xlu0 %533
  %v535 = vsel %vm86, %v429, 0.0
  %536 = vadd.xlane.f32.xlu0 %v535
  %v537 = vpop.xlane.xlu0 %536
  %v538 = vsel %vm86, %v430, 0.0
  %539 = vadd.xlane.f32.xlu0 %v538
  %v540 = vpop.xlane.xlu0 %539
  %v541 = vsel %vm86, %v431, 0.0
  %542 = vadd.xlane.f32.xlu0 %v541
  %v543 = vpop.xlane.xlu0 %542
  %v544 = vsel %vm86, %v432, 0.0
  %545 = vadd.xlane.f32.xlu0 %v544
  %v546 = vpop.xlane.xlu0 %545
  %v547 = vsel %vm86, %v433, 0.0
  %548 = vadd.xlane.f32.xlu0 %v547
  %v549 = vpop.xlane.xlu0 %548
  %v550 = vsel %vm86, %v434, 0.0
  %551 = vadd.xlane.f32.xlu0 %v550
  %v552 = vpop.xlane.xlu0 %551
  %v553 = vsel %vm86, %v435, 0.0
  %554 = vadd.xlane.f32.xlu0 %v553
  %v555 = vpop.xlane.xlu0 %554
  %v556 = vsel %vm86, %v436, 0.0
  %557 = vadd.xlane.f32.xlu0 %v556
  %v558 = vpop.xlane.xlu0 %557
  %v559 = vsel %vm86, %v437, 0.0
  %560 = vadd.xlane.f32.xlu0 %v559
  %v561 = vpop.xlane.xlu0 %560
  %v562 = vsel %vm86, %v438, 0.0
  %563 = vadd.xlane.f32.xlu0 %v562
  %v564 = vpop.xlane.xlu0 %563
  %v565 = vsel %vm86, %v439, 0.0
  %566 = vadd.xlane.f32.xlu0 %v565
  %v567 = vpop.xlane.xlu0 %566
  %v568 = vsel %vm86, %v440, 0.0
  %569 = vadd.xlane.f32.xlu0 %v568
  %v570 = vpop.xlane.xlu0 %569
  %v571 = vsel %vm86, %v441, 0.0
  %572 = vadd.xlane.f32.xlu0 %v571
  %v573 = vpop.xlane.xlu0 %572
  %v574 = vsel %vm86, %v442, 0.0
  %575 = vadd.xlane.f32.xlu0 %v574
  %v576 = vpop.xlane.xlu0 %575
  %v577 = vsel %vm86, %v443, 0.0
  %578 = vadd.xlane.f32.xlu0 %v577
  %v579 = vpop.xlane.xlu0 %578
  %v580 = vsel %vm86, %v444, 0.0
  %581 = vadd.xlane.f32.xlu0 %v580
  %v582 = vpop.xlane.xlu0 %581
  %v583 = vsel %vm86, %v445, 0.0
  %584 = vadd.xlane.f32.xlu0 %v583
  %v585 = vpop.xlane.xlu0 %584
  %v586 = vsel %vm86, %v446, 0.0
  %587 = vadd.xlane.f32.xlu0 %v586
  %v588 = vpop.xlane.xlu0 %587
  %v589 = vsel %vm86, %v447, 0.0
  %590 = vadd.xlane.f32.xlu0 %v589
  %v591 = vpop.xlane.xlu0 %590
  %v592 = vsel %vm86, %v448, 0.0
  %593 = vadd.xlane.f32.xlu0 %v592
  %v594 = vpop.xlane.xlu0 %593
  %v595 = vsel %vm86, %v449, 0.0
  %596 = vadd.xlane.f32.xlu0 %v595
  %v597 = vpop.xlane.xlu0 %596
  %v598 = vsel %vm86, %v450, 0.0
  %599 = vadd.xlane.f32.xlu0 %v598
  %v600 = vpop.xlane.xlu0 %599
  %v601 = vsel %vm86, %v451, 0.0
  %602 = vadd.xlane.f32.xlu0 %v601
  %v603 = vpop.xlane.xlu0 %602
  %v604 = vsel %vm86, %v452, 0.0
  %605 = vadd.xlane.f32.xlu0 %v604
  %v606 = vpop.xlane.xlu0 %605
  %v607 = vsel %vm86, %v453, 0.0
  %608 = vadd.xlane.f32.xlu0 %v607
  %v609 = vpop.xlane.xlu0 %608
  %v610 = vsel %vm86, %v454, 0.0
  %611 = vadd.xlane.f32.xlu0 %v610
  %v612 = vpop.xlane.xlu0 %611
  %v613 = vsel %vm86, %v455, 0.0
  %614 = vadd.xlane.f32.xlu0 %v613
  %v615 = vpop.xlane.xlu0 %614
  %v616 = vsel %vm86, %v456, 0.0
  %617 = vadd.xlane.f32.xlu0 %v616
  %v618 = vpop.xlane.xlu0 %617
  %v619 = vsel %vm86, %v457, 0.0
  %620 = vadd.xlane.f32.xlu0 %v619
  %v621 = vpop.xlane.xlu0 %620
  %v622 = vsel %vm86, %v458, 0.0
  %623 = vadd.xlane.f32.xlu0 %v622
  %v624 = vpop.xlane.xlu0 %623
  %v625 = vsel %vm86, %v459, 0.0
  %626 = vadd.xlane.f32.xlu0 %v625
  %v627 = vpop.xlane.xlu0 %626
  %v628 = vsel %vm86, %v460, 0.0
  %629 = vadd.xlane.f32.xlu0 %v628
  %v630 = vpop.xlane.xlu0 %629
  %v631 = vsel %vm86, %v461, 0.0
  %632 = vadd.xlane.f32.xlu0 %v631
  %v633 = vpop.xlane.xlu0 %632
  %v634 = vsel %vm86, %v462, 0.0
  %635 = vadd.xlane.f32.xlu0 %v634
  %v636 = vpop.xlane.xlu0 %635
  %v637 = vsel %vm86, %v463, 0.0
  %638 = vadd.xlane.f32.xlu0 %v637
  %v639 = vpop.xlane.xlu0 %638
  %v640 = vsel %vm86, %v464, 0.0
  %641 = vadd.xlane.f32.xlu0 %v640
  %v642 = vpop.xlane.xlu0 %641
  %v643 = vsel %vm86, %v465, 0.0
  %644 = vadd.xlane.f32.xlu0 %v643
  %v645 = vpop.xlane.xlu0 %644
  %v646 = vsel %vm86, %v466, 0.0
  %647 = vadd.xlane.f32.xlu0 %v646
  %v648 = vpop.xlane.xlu0 %647
  %v649 = vsel %vm86, %v467, 0.0
  %650 = vadd.xlane.f32.xlu0 %v649
  %v651 = vpop.xlane.xlu0 %650
  %v652 = vsel %vm86, %v468, 0.0
  %653 = vadd.xlane.f32.xlu0 %v652
  %v654 = vpop.xlane.xlu0 %653
  %v655 = vsel %vm86, %v469, 0.0
  %656 = vadd.xlane.f32.xlu0 %v655
  %v657 = vpop.xlane.xlu0 %656
  %v658 = vsel %vm86, %v470, 0.0
  %659 = vadd.xlane.f32.xlu0 %v658
  %v660 = vpop.xlane.xlu0 %659
  %v661 = vsel %vm86, %v471, 0.0
  %662 = vadd.xlane.f32.xlu0 %v661
  %v663 = vpop.xlane.xlu0 %662
  %v664 = vmul.f32 %v474, %v279
  %v665 = vmul.f32 %v477, %v279
  %v666 = vmul.f32 %v480, %v279
  %v667 = vmul.f32 %v483, %v279
  %v668 = vmul.f32 %v486, %v279
  %v669 = vmul.f32 %v489, %v279
  %v670 = vmul.f32 %v492, %v279
  %v671 = vmul.f32 %v495, %v279
  %v672 = vmul.f32 %v498, %v279
  %v673 = vmul.f32 %v501, %v279
  %v674 = vmul.f32 %v504, %v279
  %v675 = vmul.f32 %v507, %v279
  %v676 = vmul.f32 %v510, %v279
  %v677 = vmul.f32 %v513, %v279
  %v678 = vmul.f32 %v516, %v279
  %v679 = vmul.f32 %v519, %v279
  %v680 = vmul.f32 %v522, %v279
  %v681 = vmul.f32 %v525, %v279
  %v682 = vmul.f32 %v528, %v279
  %v683 = vmul.f32 %v531, %v279
  %v684 = vmul.f32 %v534, %v279
  %v685 = vmul.f32 %v537, %v279
  %v686 = vmul.f32 %v540, %v279
  %v687 = vmul.f32 %v543, %v279
  %v688 = vmul.f32 %v546, %v279
  %v689 = vmul.f32 %v549, %v279
  %v690 = vmul.f32 %v552, %v279
  %v691 = vmul.f32 %v555, %v279
  %v692 = vmul.f32 %v558, %v279
  %v693 = vmul.f32 %v561, %v279
  %v694 = vmul.f32 %v564, %v279
  %v695 = vmul.f32 %v567, %v279
  %v696 = vmul.f32 %v570, %v279
  %v697 = vmul.f32 %v573, %v279
  %v698 = vmul.f32 %v576, %v279
  %v699 = vmul.f32 %v579, %v279
  %v700 = vmul.f32 %v582, %v279
  %v701 = vmul.f32 %v585, %v279
  %v702 = vmul.f32 %v588, %v279
  %v703 = vmul.f32 %v591, %v279
  %v704 = vmul.f32 %v594, %v279
  %v705 = vmul.f32 %v597, %v279
  %v706 = vmul.f32 %v600, %v279
  %v707 = vmul.f32 %v603, %v279
  %v708 = vmul.f32 %v606, %v279
  %v709 = vmul.f32 %v609, %v279
  %v710 = vmul.f32 %v612, %v279
  %v711 = vmul.f32 %v615, %v279
  %v712 = vmul.f32 %v618, %v279
  %v713 = vmul.f32 %v621, %v279
  %v714 = vmul.f32 %v624, %v279
  %v715 = vmul.f32 %v627, %v279
  %v716 = vmul.f32 %v630, %v279
  %v717 = vmul.f32 %v633, %v279
  %v718 = vmul.f32 %v636, %v279
  %v719 = vmul.f32 %v639, %v279
  %v720 = vmul.f32 %v642, %v279
  %v721 = vmul.f32 %v645, %v279
  %v722 = vmul.f32 %v648, %v279
  %v723 = vmul.f32 %v651, %v279
  %v724 = vmul.f32 %v654, %v279
  %v725 = vmul.f32 %v657, %v279
  %v726 = vmul.f32 %v660, %v279
  %v727 = vmul.f32 %v663, %v279
  %v728 = vadd.f32 %v664, 1e-05
  %v729 = vadd.f32 %v665, 1e-05
  %v730 = vadd.f32 %v666, 1e-05
  %v731 = vadd.f32 %v667, 1e-05
  %v732 = vadd.f32 %v668, 1e-05
  %v733 = vadd.f32 %v669, 1e-05
  %v734 = vadd.f32 %v670, 1e-05
  %v735 = vadd.f32 %v671, 1e-05
  %v736 = vadd.f32 %v672, 1e-05
  %v737 = vadd.f32 %v673, 1e-05
  %v738 = vadd.f32 %v674, 1e-05
  %v739 = vadd.f32 %v675, 1e-05
  %v740 = vadd.f32 %v676, 1e-05
  %v741 = vadd.f32 %v677, 1e-05
  %v742 = vadd.f32 %v678, 1e-05
  %v743 = vadd.f32 %v679, 1e-05
  %v744 = vadd.f32 %v680, 1e-05
  %v745 = vadd.f32 %v681, 1e-05
  %v746 = vadd.f32 %v682, 1e-05
  %v747 = vadd.f32 %v683, 1e-05
  %v748 = vadd.f32 %v684, 1e-05
  %v749 = vadd.f32 %v685, 1e-05
  %v750 = vadd.f32 %v686, 1e-05
  %v751 = vadd.f32 %v687, 1e-05
  %v752 = vadd.f32 %v688, 1e-05
  %v753 = vadd.f32 %v689, 1e-05
  %v754 = vadd.f32 %v690, 1e-05
  %v755 = vadd.f32 %v691, 1e-05
  %v756 = vadd.f32 %v692, 1e-05
  %v757 = vadd.f32 %v693, 1e-05
  %v758 = vadd.f32 %v694, 1e-05
  %v759 = vadd.f32 %v695, 1e-05
  %v760 = vadd.f32 %v696, 1e-05
  %v761 = vadd.f32 %v697, 1e-05
  %v762 = vadd.f32 %v698, 1e-05
  %v763 = vadd.f32 %v699, 1e-05
  %v764 = vadd.f32 %v700, 1e-05
  %v765 = vadd.f32 %v701, 1e-05
  %v766 = vadd.f32 %v702, 1e-05
  %v767 = vadd.f32 %v703, 1e-05
  %v768 = vadd.f32 %v704, 1e-05
  %v769 = vadd.f32 %v705, 1e-05
  %v770 = vadd.f32 %v706, 1e-05
  %v771 = vadd.f32 %v707, 1e-05
  %v772 = vadd.f32 %v708, 1e-05
  %v773 = vadd.f32 %v709, 1e-05
  %v774 = vadd.f32 %v710, 1e-05
  %v775 = vadd.f32 %v711, 1e-05
  %v776 = vadd.f32 %v712, 1e-05
  %v777 = vadd.f32 %v713, 1e-05
  %v778 = vadd.f32 %v714, 1e-05
  %v779 = vadd.f32 %v715, 1e-05
  %v780 = vadd.f32 %v716, 1e-05
  %v781 = vadd.f32 %v717, 1e-05
  %v782 = vadd.f32 %v718, 1e-05
  %v783 = vadd.f32 %v719, 1e-05
  %v784 = vadd.f32 %v720, 1e-05
  %v785 = vadd.f32 %v721, 1e-05
  %v786 = vadd.f32 %v722, 1e-05
  %v787 = vadd.f32 %v723, 1e-05
  %v788 = vadd.f32 %v724, 1e-05
  %v789 = vadd.f32 %v725, 1e-05
  %v790 = vadd.f32 %v726, 1e-05
  %v791 = vadd.f32 %v727, 1e-05
  %v792 = vrsqrt.pop %v728
  %v793 = vrsqrt.pop %v729
  %v794 = vrsqrt.pop %v730
  %v795 = vrsqrt.pop %v731
  %v796 = vrsqrt.pop %v732
  %v797 = vrsqrt.pop %v733
  %v798 = vrsqrt.pop %v734
  %v799 = vrsqrt.pop %v735
  %v800 = vrsqrt.pop %v736
  %v801 = vrsqrt.pop %v737
  %v802 = vrsqrt.pop %v738
  %v803 = vrsqrt.pop %v739
  %v804 = vrsqrt.pop %v740
  %v805 = vrsqrt.pop %v741
  %v806 = vrsqrt.pop %v742
  %v807 = vrsqrt.pop %v743
  %v808 = vrsqrt.pop %v744
  %v809 = vrsqrt.pop %v745
  %v810 = vrsqrt.pop %v746
  %v811 = vrsqrt.pop %v747
  %v812 = vrsqrt.pop %v748
  %v813 = vrsqrt.pop %v749
  %v814 = vrsqrt.pop %v750
  %v815 = vrsqrt.pop %v751
  %v816 = vrsqrt.pop %v752
  %v817 = vrsqrt.pop %v753
  %v818 = vrsqrt.pop %v754
  %v819 = vrsqrt.pop %v755
  %v820 = vrsqrt.pop %v756
  %v821 = vrsqrt.pop %v757
  %v822 = vrsqrt.pop %v758
  %v823 = vrsqrt.pop %v759
  %v824 = vrsqrt.pop %v760
  %v825 = vrsqrt.pop %v761
  %v826 = vrsqrt.pop %v762
  %v827 = vrsqrt.pop %v763
  %v828 = vrsqrt.pop %v764
  %v829 = vrsqrt.pop %v765
  %v830 = vrsqrt.pop %v766
  %v831 = vrsqrt.pop %v767
  %v832 = vrsqrt.pop %v768
  %v833 = vrsqrt.pop %v769
  %v834 = vrsqrt.pop %v770
  %v835 = vrsqrt.pop %v771
  %v836 = vrsqrt.pop %v772
  %v837 = vrsqrt.pop %v773
  %v838 = vrsqrt.pop %v774
  %v839 = vrsqrt.pop %v775
  %v840 = vrsqrt.pop %v776
  %v841 = vrsqrt.pop %v777
  %v842 = vrsqrt.pop %v778
  %v843 = vrsqrt.pop %v779
  %v844 = vrsqrt.pop %v780
  %v845 = vrsqrt.pop %v781
  %v846 = vrsqrt.pop %v782
  %v847 = vrsqrt.pop %v783
  %v848 = vrsqrt.pop %v784
  %v849 = vrsqrt.pop %v785
  %v850 = vrsqrt.pop %v786
  %v851 = vrsqrt.pop %v787
  %v852 = vrsqrt.pop %v788
  %v853 = vrsqrt.pop %v789
  %v854 = vrsqrt.pop %v790
  %v855 = vrsqrt.pop %v791
  %v856 = vmul.f32 %v344, %v792
  %v857 = vmul.f32 %v345, %v793
  %v858 = vmul.f32 %v346, %v794
  %v859 = vmul.f32 %v347, %v795
  %v860 = vmul.f32 %v348, %v796
  %v861 = vmul.f32 %v349, %v797
  %v862 = vmul.f32 %v350, %v798
  %v863 = vmul.f32 %v351, %v799
  %v864 = vmul.f32 %v352, %v800
  %v865 = vmul.f32 %v353, %v801
  %v866 = vmul.f32 %v354, %v802
  %v867 = vmul.f32 %v355, %v803
  %v868 = vmul.f32 %v356, %v804
  %v869 = vmul.f32 %v357, %v805
  %v870 = vmul.f32 %v358, %v806
  %v871 = vmul.f32 %v359, %v807
  %v872 = vmul.f32 %v360, %v808
  %v873 = vmul.f32 %v361, %v809
  %v874 = vmul.f32 %v362, %v810
  %v875 = vmul.f32 %v363, %v811
  %v876 = vmul.f32 %v364, %v812
  %v877 = vmul.f32 %v365, %v813
  %v878 = vmul.f32 %v366, %v814
  %v879 = vmul.f32 %v367, %v815
  %v880 = vmul.f32 %v368, %v816
  %v881 = vmul.f32 %v369, %v817
  %v882 = vmul.f32 %v370, %v818
  %v883 = vmul.f32 %v371, %v819
  %v884 = vmul.f32 %v372, %v820
  %v885 = vmul.f32 %v373, %v821
  %v886 = vmul.f32 %v374, %v822
  %v887 = vmul.f32 %v375, %v823
  %v888 = vmul.f32 %v376, %v824
  %v889 = vmul.f32 %v377, %v825
  %v890 = vmul.f32 %v378, %v826
  %v891 = vmul.f32 %v379, %v827
  %v892 = vmul.f32 %v380, %v828
  %v893 = vmul.f32 %v381, %v829
  %v894 = vmul.f32 %v382, %v830
  %v895 = vmul.f32 %v383, %v831
  %v896 = vmul.f32 %v384, %v832
  %v897 = vmul.f32 %v385, %v833
  %v898 = vmul.f32 %v386, %v834
  %v899 = vmul.f32 %v387, %v835
  %v900 = vmul.f32 %v388, %v836
  %v901 = vmul.f32 %v389, %v837
  %v902 = vmul.f32 %v390, %v838
  %v903 = vmul.f32 %v391, %v839
  %v904 = vmul.f32 %v392, %v840
  %v905 = vmul.f32 %v393, %v841
  %v906 = vmul.f32 %v394, %v842
  %v907 = vmul.f32 %v395, %v843
  %v908 = vmul.f32 %v396, %v844
  %v909 = vmul.f32 %v397, %v845
  %v910 = vmul.f32 %v398, %v846
  %v911 = vmul.f32 %v399, %v847
  %v912 = vmul.f32 %v400, %v848
  %v913 = vmul.f32 %v401, %v849
  %v914 = vmul.f32 %v402, %v850
  %v915 = vmul.f32 %v403, %v851
  %v916 = vmul.f32 %v404, %v852
  %v917 = vmul.f32 %v405, %v853
  %v918 = vmul.f32 %v406, %v854
  %v919 = vmul.f32 %v407, %v855
  %v921 = vlaneseq
  %v922 = vshrl.u32 %v921, 7
  %v923 = vsub.s32 0, %v922
  %v924 = vrot.slane %v84, %v923
  %v926 = vmul.f32 %v856, %v924
  %v927 = vmul.f32 %v857, %v924
  %v928 = vmul.f32 %v858, %v924
  %v929 = vmul.f32 %v859, %v924
  %v930 = vmul.f32 %v860, %v924
  %v931 = vmul.f32 %v861, %v924
  %v932 = vmul.f32 %v862, %v924
  %v933 = vmul.f32 %v863, %v924
  %v934 = vmul.f32 %v864, %v924
  %v935 = vmul.f32 %v865, %v924
  %v936 = vmul.f32 %v866, %v924
  %v937 = vmul.f32 %v867, %v924
  %v938 = vmul.f32 %v868, %v924
  %v939 = vmul.f32 %v869, %v924
  %v940 = vmul.f32 %v870, %v924
  %v941 = vmul.f32 %v871, %v924
  %v942 = vmul.f32 %v872, %v924
  %v943 = vmul.f32 %v873, %v924
  %v944 = vmul.f32 %v874, %v924
  %v945 = vmul.f32 %v875, %v924
  %v946 = vmul.f32 %v876, %v924
  %v947 = vmul.f32 %v877, %v924
  %v948 = vmul.f32 %v878, %v924
  %v949 = vmul.f32 %v879, %v924
  %v950 = vmul.f32 %v880, %v924
  %v951 = vmul.f32 %v881, %v924
  %v952 = vmul.f32 %v882, %v924
  %v953 = vmul.f32 %v883, %v924
  %v954 = vmul.f32 %v884, %v924
  %v955 = vmul.f32 %v885, %v924
  %v956 = vmul.f32 %v886, %v924
  %v957 = vmul.f32 %v887, %v924
  %v958 = vmul.f32 %v888, %v924
  %v959 = vmul.f32 %v889, %v924
  %v960 = vmul.f32 %v890, %v924
  %v961 = vmul.f32 %v891, %v924
  %v962 = vmul.f32 %v892, %v924
  %v963 = vmul.f32 %v893, %v924
  %v964 = vmul.f32 %v894, %v924
  %v965 = vmul.f32 %v895, %v924
  %v966 = vmul.f32 %v896, %v924
  %v967 = vmul.f32 %v897, %v924
  %v968 = vmul.f32 %v898, %v924
  %v969 = vmul.f32 %v899, %v924
  %v970 = vmul.f32 %v900, %v924
  %v971 = vmul.f32 %v901, %v924
  %v972 = vmul.f32 %v902, %v924
  %v973 = vmul.f32 %v903, %v924
  %v974 = vmul.f32 %v904, %v924
  %v975 = vmul.f32 %v905, %v924
  %v976 = vmul.f32 %v906, %v924
  %v977 = vmul.f32 %v907, %v924
  %v978 = vmul.f32 %v908, %v924
  %v979 = vmul.f32 %v909, %v924
  %v980 = vmul.f32 %v910, %v924
  %v981 = vmul.f32 %v911, %v924
  %v982 = vmul.f32 %v912, %v924
  %v983 = vmul.f32 %v913, %v924
  %v984 = vmul.f32 %v914, %v924
  %v985 = vmul.f32 %v915, %v924
  %v986 = vmul.f32 %v916, %v924
  %v987 = vmul.f32 %v917, %v924
  %v988 = vmul.f32 %v918, %v924
  %v989 = vmul.f32 %v919, %v924
  %v991 = vlaneseq
  %v992 = vshrl.u32 %v991, 7
  %v993 = vsub.s32 0, %v992
  %v994 = vrot.slane %v85, %v993
  %v996 = vadd.f32 %v926, %v994
  %v997 = vadd.f32 %v927, %v994
  %v998 = vadd.f32 %v928, %v994
  %v999 = vadd.f32 %v929, %v994
  %v1000 = vadd.f32 %v930, %v994
  %v1001 = vadd.f32 %v931, %v994
  %v1002 = vadd.f32 %v932, %v994
  %v1003 = vadd.f32 %v933, %v994
  %v1004 = vadd.f32 %v934, %v994
  %v1005 = vadd.f32 %v935, %v994
  %v1006 = vadd.f32 %v936, %v994
  %v1007 = vadd.f32 %v937, %v994
  %v1008 = vadd.f32 %v938, %v994
  %v1009 = vadd.f32 %v939, %v994
  %v1010 = vadd.f32 %v940, %v994
  %v1011 = vadd.f32 %v941, %v994
  %v1012 = vadd.f32 %v942, %v994
  %v1013 = vadd.f32 %v943, %v994
  %v1014 = vadd.f32 %v944, %v994
  %v1015 = vadd.f32 %v945, %v994
  %v1016 = vadd.f32 %v946, %v994
  %v1017 = vadd.f32 %v947, %v994
  %v1018 = vadd.f32 %v948, %v994
  %v1019 = vadd.f32 %v949, %v994
  %v1020 = vadd.f32 %v950, %v994
  %v1021 = vadd.f32 %v951, %v994
  %v1022 = vadd.f32 %v952, %v994
  %v1023 = vadd.f32 %v953, %v994
  %v1024 = vadd.f32 %v954, %v994
  %v1025 = vadd.f32 %v955, %v994
  %v1026 = vadd.f32 %v956, %v994
  %v1027 = vadd.f32 %v957, %v994
  %v1028 = vadd.f32 %v958, %v994
  %v1029 = vadd.f32 %v959, %v994
  %v1030 = vadd.f32 %v960, %v994
  %v1031 = vadd.f32 %v961, %v994
  %v1032 = vadd.f32 %v962, %v994
  %v1033 = vadd.f32 %v963, %v994
  %v1034 = vadd.f32 %v964, %v994
  %v1035 = vadd.f32 %v965, %v994
  %v1036 = vadd.f32 %v966, %v994
  %v1037 = vadd.f32 %v967, %v994
  %v1038 = vadd.f32 %v968, %v994
  %v1039 = vadd.f32 %v969, %v994
  %v1040 = vadd.f32 %v970, %v994
  %v1041 = vadd.f32 %v971, %v994
  %v1042 = vadd.f32 %v972, %v994
  %v1043 = vadd.f32 %v973, %v994
  %v1044 = vadd.f32 %v974, %v994
  %v1045 = vadd.f32 %v975, %v994
  %v1046 = vadd.f32 %v976, %v994
  %v1047 = vadd.f32 %v977, %v994
  %v1048 = vadd.f32 %v978, %v994
  %v1049 = vadd.f32 %v979, %v994
  %v1050 = vadd.f32 %v980, %v994
  %v1051 = vadd.f32 %v981, %v994
  %v1052 = vadd.f32 %v982, %v994
  %v1053 = vadd.f32 %v983, %v994
  %v1054 = vadd.f32 %v984, %v994
  %v1055 = vadd.f32 %v985, %v994
  %v1056 = vadd.f32 %v986, %v994
  %v1057 = vadd.f32 %v987, %v994
  %v1058 = vadd.f32 %v988, %v994
  %v1059 = vadd.f32 %v989, %v994
  %v1060 = vld [vmem:[%s3] sm:$0xff]
  %v1061 = vld [vmem:[%s3 + $0x8] sm:$0xff]
  %v1062 = vld [vmem:[%s3 + $0x10] sm:$0xff]
  %v1063 = vld [vmem:[%s3 + $0x18] sm:$0xff]
  %v1064 = vld [vmem:[%s4] sm:$0x1]
  %v1066 = vlaneseq
  %v1067 = vshrl.u32 %v1066, 7
  %v1068 = vsub.s32 0, %v1067
  %v1069 = vrot.slane %v1064, %v1068
  %v1072 = vsel %vm86, %v996, 0
  %v1075 = vsel %vm86, %v997, 0
  %v1078 = vsel %vm86, %v998, 0
  %v1081 = vsel %vm86, %v999, 0
  %v1084 = vsel %vm86, %v1000, 0
  %v1087 = vsel %vm86, %v1001, 0
  %v1090 = vsel %vm86, %v1002, 0
  %v1093 = vsel %vm86, %v1003, 0
  %v1096 = vsel %vm86, %v1004, 0
  %v1099 = vsel %vm86, %v1005, 0
  %v1102 = vsel %vm86, %v1006, 0
  %v1105 = vsel %vm86, %v1007, 0
  %v1108 = vsel %vm86, %v1008, 0
  %v1111 = vsel %vm86, %v1009, 0
  %v1114 = vsel %vm86, %v1010, 0
  %v1117 = vsel %vm86, %v1011, 0
  %v1120 = vsel %vm86, %v1012, 0
  %v1123 = vsel %vm86, %v1013, 0
  %v1126 = vsel %vm86, %v1014, 0
  %v1129 = vsel %vm86, %v1015, 0
  %v1132 = vsel %vm86, %v1016, 0
  %v1135 = vsel %vm86, %v1017, 0
  %v1138 = vsel %vm86, %v1018, 0
  %v1141 = vsel %vm86, %v1019, 0
  %v1144 = vsel %vm86, %v1020, 0
  %v1147 = vsel %vm86, %v1021, 0
  %v1150 = vsel %vm86, %v1022, 0
  %v1153 = vsel %vm86, %v1023, 0
  %v1156 = vsel %vm86, %v1024, 0
  %v1159 = vsel %vm86, %v1025, 0
  %v1162 = vsel %vm86, %v1026, 0
  %v1165 = vsel %vm86, %v1027, 0
  %v1168 = vsel %vm86, %v1028, 0
  %v1171 = vsel %vm86, %v1029, 0
  %v1174 = vsel %vm86, %v1030, 0
  %v1177 = vsel %vm86, %v1031, 0
  %v1180 = vsel %vm86, %v1032, 0
  %v1183 = vsel %vm86, %v1033, 0
  %v1186 = vsel %vm86, %v1034, 0
  %v1189 = vsel %vm86, %v1035, 0
  %v1192 = vsel %vm86, %v1036, 0
  %v1195 = vsel %vm86, %v1037, 0
  %v1198 = vsel %vm86, %v1038, 0
  %v1201 = vsel %vm86, %v1039, 0
  %v1204 = vsel %vm86, %v1040, 0
  %v1207 = vsel %vm86, %v1041, 0
  %v1210 = vsel %vm86, %v1042, 0
  %v1213 = vsel %vm86, %v1043, 0
  %v1216 = vsel %vm86, %v1044, 0
  %v1219 = vsel %vm86, %v1045, 0
  %v1222 = vsel %vm86, %v1046, 0
  %v1225 = vsel %vm86, %v1047, 0
  %v1228 = vsel %vm86, %v1048, 0
  %v1231 = vsel %vm86, %v1049, 0
  %v1234 = vsel %vm86, %v1050, 0
  %v1237 = vsel %vm86, %v1051, 0
  %v1240 = vsel %vm86, %v1052, 0
  %v1243 = vsel %vm86, %v1053, 0
  %v1246 = vsel %vm86, %v1054, 0
  %v1249 = vsel %vm86, %v1055, 0
  %v1252 = vsel %vm86, %v1056, 0
  %v1255 = vsel %vm86, %v1057, 0
  %v1258 = vsel %vm86, %v1058, 0
  %v1261 = vsel %vm86, %v1059, 0
  %1263 = vmatprep.subr.mxu0 0.0
  %1264 = vmatpush1.msra.mxu0 %v1060
  %1265 = vmatprep.subr.mxu0 0.0
  %1266 = vmatpush1.msra.mxu0 %v1061
  %1267 = vmatprep.subr.mxu0 0.0
  %1268 = vmatpush1.msra.mxu0 %v1062
  %1269 = vmatprep.subr.mxu0 0.0
  %1270 = vmatpush1.msra.mxu0 %v1063
  %1271 = vmatprep.subr.mxu0 0.0
  %1272 = vmatpush1.msra.mxu0 0.0
  %1273 = vmatprep.subr.mxu0 0.0
  %1274 = vmatpush1.msra.mxu0 0.0
  %1275 = vmatprep.subr.mxu0 0.0
  %1276 = vmatpush1.msra.mxu0 0.0
  %1277 = vmatprep.subr.mxu0 0.0
  %1278 = vmatpush1.msra.mxu0 0.0
  %1279 = vmatprep.subr.mxu0 0.0
  %1280 = vmatpush1.msra.mxu0 0.0
  %1281 = vmatprep.subr.mxu0 0.0
  %1282 = vmatpush1.msra.mxu0 0.0
  %1283 = vmatprep.subr.mxu0 0.0
  %1284 = vmatpush1.msra.mxu0 0.0
  %1285 = vmatprep.subr.mxu0 0.0
  %1286 = vmatpush1.msra.mxu0 0.0
  %1287 = vmatprep.subr.mxu0 0.0
  %1288 = vmatpush1.msra.mxu0 0.0
  %1289 = vmatprep.subr.mxu0 0.0
  %1290 = vmatpush1.msra.mxu0 0.0
  %1291 = vmatprep.subr.mxu0 0.0
  %1292 = vmatpush1.msra.mxu0 0.0
  %1293 = vmatprep.subr.mxu0 0.0
  %1294 = vmatpush1.msra.mxu0 0.0
  %1295 = vmatprep.subr.mxu0 0.0
  %1296 = vmatpush1.msra.mxu0 0.0
  %1297 = vmatprep.subr.mxu0 0.0
  %1298 = vmatpush1.msra.mxu0 0.0
  %1299 = vmatprep.subr.mxu0 0.0
  %1300 = vmatpush1.msra.mxu0 0.0
  %1301 = vmatprep.subr.mxu0 0.0
  %1302 = vmatpush1.msra.mxu0 0.0
  %1303 = vmatprep.subr.mxu0 0.0
  %1304 = vmatpush1.msra.mxu0 0.0
  %1305 = vmatprep.subr.mxu0 0.0
  %1306 = vmatpush1.msra.mxu0 0.0
  %1307 = vmatprep.subr.mxu0 0.0
  %1308 = vmatpush1.msra.mxu0 0.0
  %1309 = vmatprep.subr.mxu0 0.0
  %1310 = vmatpush1.msra.mxu0 0.0
  %1311 = vmatprep.subr.mxu0 0.0
  %1312 = vmatpush1.msra.mxu0 0.0
  %1313 = vmatprep.subr.mxu0 0.0
  %1314 = vmatpush1.msra.mxu0 0.0
  %1315 = vmatprep.subr.mxu0 0.0
  %1316 = vmatpush1.msra.mxu0 0.0
  %1317 = vmatprep.subr.mxu0 0.0
  %1318 = vmatpush1.msra.mxu0 0.0
  %1319 = vmatprep.subr.mxu0 0.0
  %1320 = vmatpush1.msra.mxu0 0.0
  %1321 = vmatprep.subr.mxu0 0.0
  %1322 = vmatpush1.msra.mxu0 0.0
  %1323 = vmatprep.subr.mxu0 0.0
  %1324 = vmatpush1.msra.mxu0 0.0
  %1325 = vmatprep.subr.mxu0 0.0
  %1326 = vmatpush1.msra.mxu0 0.0
  %1327 = vmatprep.mubr.f32.mxu0 0.0
  %1328 = vmatmul.mubr.f32.gmra.mrb[0].mxu0 %v1072
  %v1329 = vpop.f32.mrb[0].mxu0
  %v1330 = vadd.f32 %v1069, %v1329
  %v1331 = vpop.f32.mrb[0].mxu0
  %1332 = vmatprep.mubr.f32.mxu0 0.0
  %1333 = vmatmul.mubr.f32.gmra.mrb[0].mxu0 %v1075
  %v1334 = vpop.f32.mrb[0].mxu0
  %v1335 = vadd.f32 %v1069, %v1334
  %v1336 = vpop.f32.mrb[0].mxu0
  %1337 = vmatprep.mubr.f32.mxu0 0.0
  %1338 = vmatmul.mubr.f32.gmra.mrb[0].mxu0 %v1078
  %v1339 = vpop.f32.mrb[0].mxu0
  %v1340 = vadd.f32 %v1069, %v1339
  %v1341 = vpop.f32.mrb[0].mxu0
  %1342 = vmatprep.mubr.f32.mxu0 0.0
  %1343 = vmatmul.mubr.f32.gmra.mrb[0].mxu0 %v1081
  %v1344 = vpop.f32.mrb[0].mxu0
  %v1345 = vadd.f32 %v1069, %v1344
  %v1346 = vpop.f32.mrb[0].mxu0
  %1347 = vmatprep.mubr.f32.mxu0 0.0
  %1348 = vmatmul.mubr.f32.gmra.mrb[0].mxu0 %v1084
  %v1349 = vpop.f32.mrb[0].mxu0
  %v1350 = vadd.f32 %v1069, %v1349
  %v1351 = vpop.f32.mrb[0].mxu0
  %1352 = vmatprep.mubr.f32.mxu0 0.0
  %1353 = vmatmul.mubr.f32.gmra.mrb[0].mxu0 %v1087
  %v1354 = vpop.f32.mrb[0].mxu0
  %v1355 = vadd.f32 %v1069, %v1354
  %v1356 = vpop.f32.mrb[0].mxu0
  %1357 = vmatprep.mubr.f32.mxu0 0.0
  %1358 = vmatmul.mubr.f32.gmra.mrb[0].mxu0 %v1090
  %v1359 = vpop.f32.mrb[0].mxu0
  %v1360 = vadd.f32 %v1069, %v1359
  %v1361 = vpop.f32.mrb[0].mxu0
  %1362 = vmatprep.mubr.f32.mxu0 0.0
  %1363 = vmatmul.mubr.f32.gmra.mrb[0].mxu0 %v1093
  %v1364 = vpop.f32.mrb[0].mxu0
  %v1365 = vadd.f32 %v1069, %v1364
  %v1366 = vpop.f32.mrb[0].mxu0
  %1367 = vmatprep.mubr.f32.mxu0 0.0
  %1368 = vmatmul.mubr.f32.gmra.mrb[0].mxu0 %v1096
  %v1369 = vpop.f32.mrb[0].mxu0
  %v1370 = vadd.f32 %v1069, %v1369
  %v1371 = vpop.f32.mrb[0].mxu0
  %1372 = vmatprep.mubr.f32.mxu0 0.0
  %1373 = vmatmul.mubr.f32.gmra.mrb[0].mxu0 %v1099
  %v1374 = vpop.f32.mrb[0].mxu0
  %v1375 = vadd.f32 %v1069, %v1374
  %v1376 = vpop.f32.mrb[0].mxu0
  %1377 = vmatprep.mubr.f32.mxu0 0.0
  %1378 = vmatmul.mubr.f32.gmra.mrb[0].mxu0 %v1102
  %v1379 = vpop.f32.mrb[0].mxu0
  %v1380 = vadd.f32 %v1069, %v1379
  %v1381 = vpop.f32.mrb[0].mxu0
  %1382 = vmatprep.mubr.f32.mxu0 0.0
  %1383 = vmatmul.mubr.f32.gmra.mrb[0].mxu0 %v1105
  %v1384 = vpop.f32.mrb[0].mxu0
  %v1385 = vadd.f32 %v1069, %v1384
  %v1386 = vpop.f32.mrb[0].mxu0
  %1387 = vmatprep.mubr.f32.mxu0 0.0
  %1388 = vmatmul.mubr.f32.gmra.mrb[0].mxu0 %v1108
  %v1389 = vpop.f32.mrb[0].mxu0
  %v1390 = vadd.f32 %v1069, %v1389
  %v1391 = vpop.f32.mrb[0].mxu0
  %1392 = vmatprep.mubr.f32.mxu0 0.0
  %1393 = vmatmul.mubr.f32.gmra.mrb[0].mxu0 %v1111
  %v1394 = vpop.f32.mrb[0].mxu0
  %v1395 = vadd.f32 %v1069, %v1394
  %v1396 = vpop.f32.mrb[0].mxu0
  %1397 = vmatprep.mubr.f32.mxu0 0.0
  %1398 = vmatmul.mubr.f32.gmra.mrb[0].mxu0 %v1114
  %v1399 = vpop.f32.mrb[0].mxu0
  %v1400 = vadd.f32 %v1069, %v1399
  %v1401 = vpop.f32.mrb[0].mxu0
  %1402 = vmatprep.mubr.f32.mxu0 0.0
  %1403 = vmatmul.mubr.f32.gmra.mrb[0].mxu0 %v1117
  %v1404 = vpop.f32.mrb[0].mxu0
  %v1405 = vadd.f32 %v1069, %v1404
  %v1406 = vpop.f32.mrb[0].mxu0
  %1407 = vmatprep.mubr.f32.mxu0 0.0
  %1408 = vmatmul.mubr.f32.gmra.mrb[0].mxu0 %v1120
  %v1409 = vpop.f32.mrb[0].mxu0
  %v1410 = vadd.f32 %v1069, %v1409
  %v1411 = vpop.f32.mrb[0].mxu0
  %1412 = vmatprep.mubr.f32.mxu0 0.0
  %1413 = vmatmul.mubr.f32.gmra.mrb[0].mxu0 %v1123
  %v1414 = vpop.f32.mrb[0].mxu0
  %v1415 = vadd.f32 %v1069, %v1414
  %v1416 = vpop.f32.mrb[0].mxu0
  %1417 = vmatprep.mubr.f32.mxu0 0.0
  %1418 = vmatmul.mubr.f32.gmra.mrb[0].mxu0 %v1126
  %v1419 = vpop.f32.mrb[0].mxu0
  %v1420 = vadd.f32 %v1069, %v1419
  %v1421 = vpop.f32.mrb[0].mxu0
  %1422 = vmatprep.mubr.f32.mxu0 0.0
  %1423 = vmatmul.mubr.f32.gmra.mrb[0].mxu0 %v1129
  %v1424 = vpop.f32.mrb[0].mxu0
  %v1425 = vadd.f32 %v1069, %v1424
  %v1426 = vpop.f32.mrb[0].mxu0
  %1427 = vmatprep.mubr.f32.mxu0 0.0
  %1428 = vmatmul.mubr.f32.gmra.mrb[0].mxu0 %v1132
  %v1429 = vpop.f32.mrb[0].mxu0
  %v1430 = vadd.f32 %v1069, %v1429
  %v1431 = vpop.f32.mrb[0].mxu0
  %1432 = vmatprep.mubr.f32.mxu0 0.0
  %1433 = vmatmul.mubr.f32.gmra.mrb[0].mxu0 %v1135
  %v1434 = vpop.f32.mrb[0].mxu0
  %v1435 = vadd.f32 %v1069, %v1434
  %v1436 = vpop.f32.mrb[0].mxu0
  %1437 = vmatprep.mubr.f32.mxu0 0.0
  %1438 = vmatmul.mubr.f32.gmra.mrb[0].mxu0 %v1138
  %v1439 = vpop.f32.mrb[0].mxu0
  %v1440 = vadd.f32 %v1069, %v1439
  %v1441 = vpop.f32.mrb[0].mxu0
  %1442 = vmatprep.mubr.f32.mxu0 0.0
  %1443 = vmatmul.mubr.f32.gmra.mrb[0].mxu0 %v1141
  %v1444 = vpop.f32.mrb[0].mxu0
  %v1445 = vadd.f32 %v1069, %v1444
  %v1446 = vpop.f32.mrb[0].mxu0
  %1447 = vmatprep.mubr.f32.mxu0 0.0
  %1448 = vmatmul.mubr.f32.gmra.mrb[0].mxu0 %v1144
  %v1449 = vpop.f32.mrb[0].mxu0
  %v1450 = vadd.f32 %v1069, %v1449
  %v1451 = vpop.f32.mrb[0].mxu0
  %1452 = vmatprep.mubr.f32.mxu0 0.0
  %1453 = vmatmul.mubr.f32.gmra.mrb[0].mxu0 %v1147
  %v1454 = vpop.f32.mrb[0].mxu0
  %v1455 = vadd.f32 %v1069, %v1454
  %v1456 = vpop.f32.mrb[0].mxu0
  %1457 = vmatprep.mubr.f32.mxu0 0.0
  %1458 = vmatmul.mubr.f32.gmra.mrb[0].mxu0 %v1150
  %v1459 = vpop.f32.mrb[0].mxu0
  %v1460 = vadd.f32 %v1069, %v1459
  %v1461 = vpop.f32.mrb[0].mxu0
  %1462 = vmatprep.mubr.f32.mxu0 0.0
  %1463 = vmatmul.mubr.f32.gmra.mrb[0].mxu0 %v1153
  %v1464 = vpop.f32.mrb[0].mxu0
  %v1465 = vadd.f32 %v1069, %v1464
  %v1466 = vpop.f32.mrb[0].mxu0
  %1467 = vmatprep.mubr.f32.mxu0 0.0
  %1468 = vmatmul.mubr.f32.gmra.mrb[0].mxu0 %v1156
  %v1469 = vpop.f32.mrb[0].mxu0
  %v1470 = vadd.f32 %v1069, %v1469
  %v1471 = vpop.f32.mrb[0].mxu0
  %1472 = vmatprep.mubr.f32.mxu0 0.0
  %1473 = vmatmul.mubr.f32.gmra.mrb[0].mxu0 %v1159
  %v1474 = vpop.f32.mrb[0].mxu0
  %v1475 = vadd.f32 %v1069, %v1474
  %v1476 = vpop.f32.mrb[0].mxu0
  %1477 = vmatprep.mubr.f32.mxu0 0.0
  %1478 = vmatmul.mubr.f32.gmra.mrb[0].mxu0 %v1162
  %v1479 = vpop.f32.mrb[0].mxu0
  %v1480 = vadd.f32 %v1069, %v1479
  %v1481 = vpop.f32.mrb[0].mxu0
  %1482 = vmatprep.mubr.f32.mxu0 0.0
  %1483 = vmatmul.mubr.f32.gmra.mrb[0].mxu0 %v1165
  %v1484 = vpop.f32.mrb[0].mxu0
  %v1485 = vadd.f32 %v1069, %v1484
  %v1486 = vpop.f32.mrb[0].mxu0
  %1487 = vmatprep.mubr.f32.mxu0 0.0
  %1488 = vmatmul.mubr.f32.gmra.mrb[0].mxu0 %v1168
  %v1489 = vpop.f32.mrb[0].mxu0
  %v1490 = vadd.f32 %v1069, %v1489
  %v1491 = vpop.f32.mrb[0].mxu0
  %1492 = vmatprep.mubr.f32.mxu0 0.0
  %1493 = vmatmul.mubr.f32.gmra.mrb[0].mxu0 %v1171
  %v1494 = vpop.f32.mrb[0].mxu0
  %v1495 = vadd.f32 %v1069, %v1494
  %v1496 = vpop.f32.mrb[0].mxu0
  %1497 = vmatprep.mubr.f32.mxu0 0.0
  %1498 = vmatmul.mubr.f32.gmra.mrb[0].mxu0 %v1174
  %v1499 = vpop.f32.mrb[0].mxu0
  %v1500 = vadd.f32 %v1069, %v1499
  %v1501 = vpop.f32.mrb[0].mxu0
  %1502 = vmatprep.mubr.f32.mxu0 0.0
  %1503 = vmatmul.mubr.f32.gmra.mrb[0].mxu0 %v1177
  %v1504 = vpop.f32.mrb[0].mxu0
  %v1505 = vadd.f32 %v1069, %v1504
  %v1506 = vpop.f32.mrb[0].mxu0
  %1507 = vmatprep.mubr.f32.mxu0 0.0
  %1508 = vmatmul.mubr.f32.gmra.mrb[0].mxu0 %v1180
  %v1509 = vpop.f32.mrb[0].mxu0
  %v1510 = vadd.f32 %v1069, %v1509
  %v1511 = vpop.f32.mrb[0].mxu0
  %1512 = vmatprep.mubr.f32.mxu0 0.0
  %1513 = vmatmul.mubr.f32.gmra.mrb[0].mxu0 %v1183
  %v1514 = vpop.f32.mrb[0].mxu0
  %v1515 = vadd.f32 %v1069, %v1514
  %v1516 = vpop.f32.mrb[0].mxu0
  %1517 = vmatprep.mubr.f32.mxu0 0.0
  %1518 = vmatmul.mubr.f32.gmra.mrb[0].mxu0 %v1186
  %v1519 = vpop.f32.mrb[0].mxu0
  %v1520 = vadd.f32 %v1069, %v1519
  %v1521 = vpop.f32.mrb[0].mxu0
  %1522 = vmatprep.mubr.f32.mxu0 0.0
  %1523 = vmatmul.mubr.f32.gmra.mrb[0].mxu0 %v1189
  %v1524 = vpop.f32.mrb[0].mxu0
  %v1525 = vadd.f32 %v1069, %v1524
  %v1526 = vpop.f32.mrb[0].mxu0
  %1527 = vmatprep.mubr.f32.mxu0 0.0
  %1528 = vmatmul.mubr.f32.gmra.mrb[0].mxu0 %v1192
  %v1529 = vpop.f32.mrb[0].mxu0
  %v1530 = vadd.f32 %v1069, %v1529
  %v1531 = vpop.f32.mrb[0].mxu0
  %1532 = vmatprep.mubr.f32.mxu0 0.0
  %1533 = vmatmul.mubr.f32.gmra.mrb[0].mxu0 %v1195
  %v1534 = vpop.f32.mrb[0].mxu0
  %v1535 = vadd.f32 %v1069, %v1534
  %v1536 = vpop.f32.mrb[0].mxu0
  %1537 = vmatprep.mubr.f32.mxu0 0.0
  %1538 = vmatmul.mubr.f32.gmra.mrb[0].mxu0 %v1198
  %v1539 = vpop.f32.mrb[0].mxu0
  %v1540 = vadd.f32 %v1069, %v1539
  %v1541 = vpop.f32.mrb[0].mxu0
  %1542 = vmatprep.mubr.f32.mxu0 0.0
  %1543 = vmatmul.mubr.f32.gmra.mrb[0].mxu0 %v1201
  %v1544 = vpop.f32.mrb[0].mxu0
  %v1545 = vadd.f32 %v1069, %v1544
  %v1546 = vpop.f32.mrb[0].mxu0
  %1547 = vmatprep.mubr.f32.mxu0 0.0
  %1548 = vmatmul.mubr.f32.gmra.mrb[0].mxu0 %v1204
  %v1549 = vpop.f32.mrb[0].mxu0
  %v1550 = vadd.f32 %v1069, %v1549
  %v1551 = vpop.f32.mrb[0].mxu0
  %1552 = vmatprep.mubr.f32.mxu0 0.0
  %1553 = vmatmul.mubr.f32.gmra.mrb[0].mxu0 %v1207
  %v1554 = vpop.f32.mrb[0].mxu0
  %v1555 = vadd.f32 %v1069, %v1554
  %v1556 = vpop.f32.mrb[0].mxu0
  %1557 = vmatprep.mubr.f32.mxu0 0.0
  %1558 = vmatmul.mubr.f32.gmra.mrb[0].mxu0 %v1210
  %v1559 = vpop.f32.mrb[0].mxu0
  %v1560 = vadd.f32 %v1069, %v1559
  %v1561 = vpop.f32.mrb[0].mxu0
  %1562 = vmatprep.mubr.f32.mxu0 0.0
  %1563 = vmatmul.mubr.f32.gmra.mrb[0].mxu0 %v1213
  %v1564 = vpop.f32.mrb[0].mxu0
  %v1565 = vadd.f32 %v1069, %v1564
  %v1566 = vpop.f32.mrb[0].mxu0
  %1567 = vmatprep.mubr.f32.mxu0 0.0
  %1568 = vmatmul.mubr.f32.gmra.mrb[0].mxu0 %v1216
  %v1569 = vpop.f32.mrb[0].mxu0
  %v1570 = vadd.f32 %v1069, %v1569
  %v1571 = vpop.f32.mrb[0].mxu0
  %1572 = vmatprep.mubr.f32.mxu0 0.0
  %1573 = vmatmul.mubr.f32.gmra.mrb[0].mxu0 %v1219
  %v1574 = vpop.f32.mrb[0].mxu0
  %v1575 = vadd.f32 %v1069, %v1574
  %v1576 = vpop.f32.mrb[0].mxu0
  %1577 = vmatprep.mubr.f32.mxu0 0.0
  %1578 = vmatmul.mubr.f32.gmra.mrb[0].mxu0 %v1222
  %v1579 = vpop.f32.mrb[0].mxu0
  %v1580 = vadd.f32 %v1069, %v1579
  %v1581 = vpop.f32.mrb[0].mxu0
  %1582 = vmatprep.mubr.f32.mxu0 0.0
  %1583 = vmatmul.mubr.f32.gmra.mrb[0].mxu0 %v1225
  %v1584 = vpop.f32.mrb[0].mxu0
  %v1585 = vadd.f32 %v1069, %v1584
  %v1586 = vpop.f32.mrb[0].mxu0
  %1587 = vmatprep.mubr.f32.mxu0 0.0
  %1588 = vmatmul.mubr.f32.gmra.mrb[0].mxu0 %v1228
  %v1589 = vpop.f32.mrb[0].mxu0
  %v1590 = vadd.f32 %v1069, %v1589
  %v1591 = vpop.f32.mrb[0].mxu0
  %1592 = vmatprep.mubr.f32.mxu0 0.0
  %1593 = vmatmul.mubr.f32.gmra.mrb[0].mxu0 %v1231
  %v1594 = vpop.f32.mrb[0].mxu0
  %v1595 = vadd.f32 %v1069, %v1594
  %v1596 = vpop.f32.mrb[0].mxu0
  %1597 = vmatprep.mubr.f32.mxu0 0.0
  %1598 = vmatmul.mubr.f32.gmra.mrb[0].mxu0 %v1234
  %v1599 = vpop.f32.mrb[0].mxu0
  %v1600 = vadd.f32 %v1069, %v1599
  %v1601 = vpop.f32.mrb[0].mxu0
  %1602 = vmatprep.mubr.f32.mxu0 0.0
  %1603 = vmatmul.mubr.f32.gmra.mrb[0].mxu0 %v1237
  %v1604 = vpop.f32.mrb[0].mxu0
  %v1605 = vadd.f32 %v1069, %v1604
  %v1606 = vpop.f32.mrb[0].mxu0
  %1607 = vmatprep.mubr.f32.mxu0 0.0
  %1608 = vmatmul.mubr.f32.gmra.mrb[0].mxu0 %v1240
  %v1609 = vpop.f32.mrb[0].mxu0
  %v1610 = vadd.f32 %v1069, %v1609
  %v1611 = vpop.f32.mrb[0].mxu0
  %1612 = vmatprep.mubr.f32.mxu0 0.0
  %1613 = vmatmul.mubr.f32.gmra.mrb[0].mxu0 %v1243
  %v1614 = vpop.f32.mrb[0].mxu0
  %v1615 = vadd.f32 %v1069, %v1614
  %v1616 = vpop.f32.mrb[0].mxu0
  %1617 = vmatprep.mubr.f32.mxu0 0.0
  %1618 = vmatmul.mubr.f32.gmra.mrb[0].mxu0 %v1246
  %v1619 = vpop.f32.mrb[0].mxu0
  %v1620 = vadd.f32 %v1069, %v1619
  %v1621 = vpop.f32.mrb[0].mxu0
  %1622 = vmatprep.mubr.f32.mxu0 0.0
  %1623 = vmatmul.mubr.f32.gmra.mrb[0].mxu0 %v1249
  %v1624 = vpop.f32.mrb[0].mxu0
  %v1625 = vadd.f32 %v1069, %v1624
  %v1626 = vpop.f32.mrb[0].mxu0
  %1627 = vmatprep.mubr.f32.mxu0 0.0
  %1628 = vmatmul.mubr.f32.gmra.mrb[0].mxu0 %v1252
  %v1629 = vpop.f32.mrb[0].mxu0
  %v1630 = vadd.f32 %v1069, %v1629
  %v1631 = vpop.f32.mrb[0].mxu0
  %1632 = vmatprep.mubr.f32.mxu0 0.0
  %1633 = vmatmul.mubr.f32.gmra.mrb[0].mxu0 %v1255
  %v1634 = vpop.f32.mrb[0].mxu0
  %v1635 = vadd.f32 %v1069, %v1634
  %v1636 = vpop.f32.mrb[0].mxu0
  %1637 = vmatprep.mubr.f32.mxu0 0.0
  %1638 = vmatmul.mubr.f32.gmra.mrb[0].mxu0 %v1258
  %v1639 = vpop.f32.mrb[0].mxu0
  %v1640 = vadd.f32 %v1069, %v1639
  %v1641 = vpop.f32.mrb[0].mxu0
  %1642 = vmatprep.mubr.f32.mxu0 0.0
  %1643 = vmatmul.mubr.f32.gmra.mrb[0].mxu0 %v1261
  %v1644 = vpop.f32.mrb[0].mxu0
  %v1645 = vadd.f32 %v1069, %v1644
  %v1646 = vpop.f32.mrb[0].mxu0
  %1647 = vdwg.mxu0
  %1648 = vst.msk [vmem:[%s5] sm:$0xff] %vm86, %v1330
  %1649 = vst.msk [vmem:[%s5 + $0x8] sm:$0xff] %vm86, %v1335
  %1650 = vst.msk [vmem:[%s5 + $0x10] sm:$0xff] %vm86, %v1340
  %1651 = vst.msk [vmem:[%s5 + $0x18] sm:$0xff] %vm86, %v1345
  %1652 = vst.msk [vmem:[%s5 + $0x20] sm:$0xff] %vm86, %v1350
  %1653 = vst.msk [vmem:[%s5 + $0x28] sm:$0xff] %vm86, %v1355
  %1654 = vst.msk [vmem:[%s5 + $0x30] sm:$0xff] %vm86, %v1360
  %1655 = vst.msk [vmem:[%s5 + $0x38] sm:$0xff] %vm86, %v1365
  %1656 = vst.msk [vmem:[%s5 + $0x40] sm:$0xff] %vm86, %v1370
  %1657 = vst.msk [vmem:[%s5 + $0x48] sm:$0xff] %vm86, %v1375
  %1658 = vst.msk [vmem:[%s5 + $0x50] sm:$0xff] %vm86, %v1380
  %1659 = vst.msk [vmem:[%s5 + $0x58] sm:$0xff] %vm86, %v1385
  %1660 = vst.msk [vmem:[%s5 + $0x60] sm:$0xff] %vm86, %v1390
  %1661 = vst.msk [vmem:[%s5 + $0x68] sm:$0xff] %vm86, %v1395
  %1662 = vst.msk [vmem:[%s5 + $0x70] sm:$0xff] %vm86, %v1400
  %1663 = vst.msk [vmem:[%s5 + $0x78] sm:$0xff] %vm86, %v1405
  %1664 = vst.msk [vmem:[%s5 + $0x80] sm:$0xff] %vm86, %v1410
  %1665 = vst.msk [vmem:[%s5 + $0x88] sm:$0xff] %vm86, %v1415
  %1666 = vst.msk [vmem:[%s5 + $0x90] sm:$0xff] %vm86, %v1420
  %1667 = vst.msk [vmem:[%s5 + $0x98] sm:$0xff] %vm86, %v1425
  %1668 = vst.msk [vmem:[%s5 + $0xa0] sm:$0xff] %vm86, %v1430
  %1669 = vst.msk [vmem:[%s5 + $0xa8] sm:$0xff] %vm86, %v1435
  %1670 = vst.msk [vmem:[%s5 + $0xb0] sm:$0xff] %vm86, %v1440
  %1671 = vst.msk [vmem:[%s5 + $0xb8] sm:$0xff] %vm86, %v1445
  %1672 = vst.msk [vmem:[%s5 + $0xc0] sm:$0xff] %vm86, %v1450
  %1673 = vst.msk [vmem:[%s5 + $0xc8] sm:$0xff] %vm86, %v1455
  %1674 = vst.msk [vmem:[%s5 + $0xd0] sm:$0xff] %vm86, %v1460
  %1675 = vst.msk [vmem:[%s5 + $0xd8] sm:$0xff] %vm86, %v1465
  %1676 = vst.msk [vmem:[%s5 + $0xe0] sm:$0xff] %vm86, %v1470
  %1677 = vst.msk [vmem:[%s5 + $0xe8] sm:$0xff] %vm86, %v1475
  %1678 = vst.msk [vmem:[%s5 + $0xf0] sm:$0xff] %vm86, %v1480
  %1679 = vst.msk [vmem:[%s5 + $0xf8] sm:$0xff] %vm86, %v1485
  %1680 = vst.msk [vmem:[%s5 + $0x100] sm:$0xff] %vm86, %v1490
  %1681 = vst.msk [vmem:[%s5 + $0x108] sm:$0xff] %vm86, %v1495
  %1682 = vst.msk [vmem:[%s5 + $0x110] sm:$0xff] %vm86, %v1500
  %1683 = vst.msk [vmem:[%s5 + $0x118] sm:$0xff] %vm86, %v1505
  %1684 = vst.msk [vmem:[%s5 + $0x120] sm:$0xff] %vm86, %v1510
  %1685 = vst.msk [vmem:[%s5 + $0x128] sm:$0xff] %vm86, %v1515
  %1686 = vst.msk [vmem:[%s5 + $0x130] sm:$0xff] %vm86, %v1520
  %1687 = vst.msk [vmem:[%s5 + $0x138] sm:$0xff] %vm86, %v1525
  %1688 = vst.msk [vmem:[%s5 + $0x140] sm:$0xff] %vm86, %v1530
  %1689 = vst.msk [vmem:[%s5 + $0x148] sm:$0xff] %vm86, %v1535
  %1690 = vst.msk [vmem:[%s5 + $0x150] sm:$0xff] %vm86, %v1540
  %1691 = vst.msk [vmem:[%s5 + $0x158] sm:$0xff] %vm86, %v1545
  %1692 = vst.msk [vmem:[%s5 + $0x160] sm:$0xff] %vm86, %v1550
  %1693 = vst.msk [vmem:[%s5 + $0x168] sm:$0xff] %vm86, %v1555
  %1694 = vst.msk [vmem:[%s5 + $0x170] sm:$0xff] %vm86, %v1560
  %1695 = vst.msk [vmem:[%s5 + $0x178] sm:$0xff] %vm86, %v1565
  %1696 = vst.msk [vmem:[%s5 + $0x180] sm:$0xff] %vm86, %v1570
  %1697 = vst.msk [vmem:[%s5 + $0x188] sm:$0xff] %vm86, %v1575
  %1698 = vst.msk [vmem:[%s5 + $0x190] sm:$0xff] %vm86, %v1580
  %1699 = vst.msk [vmem:[%s5 + $0x198] sm:$0xff] %vm86, %v1585
  %1700 = vst.msk [vmem:[%s5 + $0x1a0] sm:$0xff] %vm86, %v1590
  %1701 = vst.msk [vmem:[%s5 + $0x1a8] sm:$0xff] %vm86, %v1595
  %1702 = vst.msk [vmem:[%s5 + $0x1b0] sm:$0xff] %vm86, %v1600
  %1703 = vst.msk [vmem:[%s5 + $0x1b8] sm:$0xff] %vm86, %v1605
  %1704 = vst.msk [vmem:[%s5 + $0x1c0] sm:$0xff] %vm86, %v1610
  %1705 = vst.msk [vmem:[%s5 + $0x1c8] sm:$0xff] %vm86, %v1615
  %1706 = vst.msk [vmem:[%s5 + $0x1d0] sm:$0xff] %vm86, %v1620
  %1707 = vst.msk [vmem:[%s5 + $0x1d8] sm:$0xff] %vm86, %v1625
  %1708 = vst.msk [vmem:[%s5 + $0x1e0] sm:$0xff] %vm86, %v1630
  %1709 = vst.msk [vmem:[%s5 + $0x1e8] sm:$0xff] %vm86, %v1635
  %1710 = vst.msk [vmem:[%s5 + $0x1f0] sm:$0xff] %vm86, %v1640
  %1711 = vst.msk [vmem:[%s5 + $0x1f8] sm:$0xff] %vm86, %v1645
  // Predicated region
  $region22: #{cross_view_swap_attention.29} parent=0 // pred_check
    _
  $region23: #{cross_view_swap_attention.29} parent=0 // pred_check_branch
    %1713 = sbr.rel (0) target = $region25
  $region24: #{cross_view_swap_attention.29} parent=0 // pred_region
    _
  $region25: #{cross_view_swap_attention.29} parent=0 // pred_fallthru
    _
  // Predicated region
  $region26: #{cross_view_swap_attention.29} parent=0 // pred_check
    _
  $region27: #{cross_view_swap_attention.29} parent=0 // pred_check_branch
    %1715 = sbr.rel (0) target = $region29
  $region28: #{cross_view_swap_attention.29} parent=0 // pred_region
    _
  $region29: #{cross_view_swap_attention.29} parent=0 // pred_fallthru
    _

// kernel: cross_view_swap_attention.33
$region0: #{cross_view_swap_attention.33}
  #allocation0 [shape = 'u32[]', space=smem, size = 0x4, offset = 0x4, fixed_abs, tag = 'smem constant byte address 0x4 - core index']
  #allocation1 [shape = 'u32[144,128]{1,0:T(1,128)}', space=vmem, size = 0x12000, scoped, tag = 'internal scratch']
  %s0 = inlined_call_operand.vmem [shape: f32[512,32], index: 0, kind: input, shape index: {}]
  %s1 = inlined_call_operand.vmem [shape: f32[32,32], index: 1, kind: input, shape index: {}]
  %s2 = inlined_call_operand.vmem [shape: f32[1,32], index: 2, kind: input, shape index: {}]
  %s3 = inlined_call_operand.vmem [shape: f32[512,32], index: 3, kind: output, shape index: {}]
  %s4 = sld [smem:[#allocation0]]
  $region22: #{cross_view_swap_attention.33} parent=0
    _
  %s6 = ssub.s32 1, %s4
  %s7 = scalar_select 0, %s6, %s4
  // Predicated region
  $region2: #{cross_view_swap_attention.33} parent=0 // pred_check
    _
  $region3: #{cross_view_swap_attention.33} parent=0 // pred_check_branch
    %9 = sbr.rel (0) target = $region5
  $region4: #{cross_view_swap_attention.33} parent=0 // pred_region
    _
  $region5: #{cross_view_swap_attention.33} parent=0 // pred_fallthru
    _
  // Predicated region
  $region6: #{cross_view_swap_attention.33} parent=0 // pred_check
    _
  $region7: #{cross_view_swap_attention.33} parent=0 // pred_check_branch
    %11 = sbr.rel (0) target = $region9
  $region8: #{cross_view_swap_attention.33} parent=0 // pred_region
    _
  $region9: #{cross_view_swap_attention.33} parent=0 // pred_fallthru
    _
  // Predicated region
  $region10: #{cross_view_swap_attention.33} parent=0 // pred_check
    _
  $region11: #{cross_view_swap_attention.33} parent=0 // pred_check_branch
    %13 = sbr.rel (0) target = $region13
  $region12: #{cross_view_swap_attention.33} parent=0 // pred_region
    _
  $region13: #{cross_view_swap_attention.33} parent=0 // pred_fallthru
    _
  %v14 = vld [vmem:[%s0] sm:$0xff]
  %v15 = vld [vmem:[%s0 + $0x8] sm:$0xff]
  %v16 = vld [vmem:[%s0 + $0x10] sm:$0xff]
  %v17 = vld [vmem:[%s0 + $0x18] sm:$0xff]
  %v18 = vld [vmem:[%s0 + $0x20] sm:$0xff]
  %v19 = vld [vmem:[%s0 + $0x28] sm:$0xff]
  %v20 = vld [vmem:[%s0 + $0x30] sm:$0xff]
  %v21 = vld [vmem:[%s0 + $0x38] sm:$0xff]
  %v22 = vld [vmem:[%s0 + $0x40] sm:$0xff]
  %v23 = vld [vmem:[%s0 + $0x48] sm:$0xff]
  %v24 = vld [vmem:[%s0 + $0x50] sm:$0xff]
  %v25 = vld [vmem:[%s0 + $0x58] sm:$0xff]
  %v26 = vld [vmem:[%s0 + $0x60] sm:$0xff]
  %v27 = vld [vmem:[%s0 + $0x68] sm:$0xff]
  %v28 = vld [vmem:[%s0 + $0x70] sm:$0xff]
  %v29 = vld [vmem:[%s0 + $0x78] sm:$0xff]
  %v30 = vld [vmem:[%s0 + $0x80] sm:$0xff]
  %v31 = vld [vmem:[%s0 + $0x88] sm:$0xff]
  %v32 = vld [vmem:[%s0 + $0x90] sm:$0xff]
  %v33 = vld [vmem:[%s0 + $0x98] sm:$0xff]
  %v34 = vld [vmem:[%s0 + $0xa0] sm:$0xff]
  %v35 = vld [vmem:[%s0 + $0xa8] sm:$0xff]
  %v36 = vld [vmem:[%s0 + $0xb0] sm:$0xff]
  %v37 = vld [vmem:[%s0 + $0xb8] sm:$0xff]
  %v38 = vld [vmem:[%s0 + $0xc0] sm:$0xff]
  %v39 = vld [vmem:[%s0 + $0xc8] sm:$0xff]
  %v40 = vld [vmem:[%s0 + $0xd0] sm:$0xff]
  %v41 = vld [vmem:[%s0 + $0xd8] sm:$0xff]
  %v42 = vld [vmem:[%s0 + $0xe0] sm:$0xff]
  %v43 = vld [vmem:[%s0 + $0xe8] sm:$0xff]
  %v44 = vld [vmem:[%s0 + $0xf0] sm:$0xff]
  %v45 = vld [vmem:[%s0 + $0xf8] sm:$0xff]
  %v46 = vld [vmem:[%s0 + $0x100] sm:$0xff]
  %v47 = vld [vmem:[%s0 + $0x108] sm:$0xff]
  %v48 = vld [vmem:[%s0 + $0x110] sm:$0xff]
  %v49 = vld [vmem:[%s0 + $0x118] sm:$0xff]
  %v50 = vld [vmem:[%s0 + $0x120] sm:$0xff]
  %v51 = vld [vmem:[%s0 + $0x128] sm:$0xff]
  %v52 = vld [vmem:[%s0 + $0x130] sm:$0xff]
  %v53 = vld [vmem:[%s0 + $0x138] sm:$0xff]
  %v54 = vld [vmem:[%s0 + $0x140] sm:$0xff]
  %v55 = vld [vmem:[%s0 + $0x148] sm:$0xff]
  %v56 = vld [vmem:[%s0 + $0x150] sm:$0xff]
  %v57 = vld [vmem:[%s0 + $0x158] sm:$0xff]
  %v58 = vld [vmem:[%s0 + $0x160] sm:$0xff]
  %v59 = vld [vmem:[%s0 + $0x168] sm:$0xff]
  %v60 = vld [vmem:[%s0 + $0x170] sm:$0xff]
  %v61 = vld [vmem:[%s0 + $0x178] sm:$0xff]
  %v62 = vld [vmem:[%s0 + $0x180] sm:$0xff]
  %v63 = vld [vmem:[%s0 + $0x188] sm:$0xff]
  %v64 = vld [vmem:[%s0 + $0x190] sm:$0xff]
  %v65 = vld [vmem:[%s0 + $0x198] sm:$0xff]
  %v66 = vld [vmem:[%s0 + $0x1a0] sm:$0xff]
  %v67 = vld [vmem:[%s0 + $0x1a8] sm:$0xff]
  %v68 = vld [vmem:[%s0 + $0x1b0] sm:$0xff]
  %v69 = vld [vmem:[%s0 + $0x1b8] sm:$0xff]
  %v70 = vld [vmem:[%s0 + $0x1c0] sm:$0xff]
  %v71 = vld [vmem:[%s0 + $0x1c8] sm:$0xff]
  %v72 = vld [vmem:[%s0 + $0x1d0] sm:$0xff]
  %v73 = vld [vmem:[%s0 + $0x1d8] sm:$0xff]
  %v74 = vld [vmem:[%s0 + $0x1e0] sm:$0xff]
  %v75 = vld [vmem:[%s0 + $0x1e8] sm:$0xff]
  %v76 = vld [vmem:[%s0 + $0x1f0] sm:$0xff]
  %v77 = vld [vmem:[%s0 + $0x1f8] sm:$0xff]
  %v78 = vld [vmem:[%s1] sm:$0xff]
  %v79 = vld [vmem:[%s1 + $0x8] sm:$0xff]
  %v80 = vld [vmem:[%s1 + $0x10] sm:$0xff]
  %v81 = vld [vmem:[%s1 + $0x18] sm:$0xff]
  %v82 = vld [vmem:[%s2] sm:$0x1]
  %v84 = vlaneseq
  %v85 = vshrl.u32 %v84, 7
  %v86 = vsub.s32 0, %v85
  %v87 = vrot.slane %v82, %v86
  %vm89 = vcmask 261120
  %v91 = vsel %vm89, %v14, 0
  %v94 = vsel %vm89, %v15, 0
  %v97 = vsel %vm89, %v16, 0
  %v100 = vsel %vm89, %v17, 0
  %v103 = vsel %vm89, %v18, 0
  %v106 = vsel %vm89, %v19, 0
  %v109 = vsel %vm89, %v20, 0
  %v112 = vsel %vm89, %v21, 0
  %v115 = vsel %vm89, %v22, 0
  %v118 = vsel %vm89, %v23, 0
  %v121 = vsel %vm89, %v24, 0
  %v124 = vsel %vm89, %v25, 0
  %v127 = vsel %vm89, %v26, 0
  %v130 = vsel %vm89, %v27, 0
  %v133 = vsel %vm89, %v28, 0
  %v136 = vsel %vm89, %v29, 0
  %v139 = vsel %vm89, %v30, 0
  %v142 = vsel %vm89, %v31, 0
  %v145 = vsel %vm89, %v32, 0
  %v148 = vsel %vm89, %v33, 0
  %v151 = vsel %vm89, %v34, 0
  %v154 = vsel %vm89, %v35, 0
  %v157 = vsel %vm89, %v36, 0
  %v160 = vsel %vm89, %v37, 0
  %v163 = vsel %vm89, %v38, 0
  %v166 = vsel %vm89, %v39, 0
  %v169 = vsel %vm89, %v40, 0
  %v172 = vsel %vm89, %v41, 0
  %v175 = vsel %vm89, %v42, 0
  %v178 = vsel %vm89, %v43, 0
  %v181 = vsel %vm89, %v44, 0
  %v184 = vsel %vm89, %v45, 0
  %v187 = vsel %vm89, %v46, 0
  %v190 = vsel %vm89, %v47, 0
  %v193 = vsel %vm89, %v48, 0
  %v196 = vsel %vm89, %v49, 0
  %v199 = vsel %vm89, %v50, 0
  %v202 = vsel %vm89, %v51, 0
  %v205 = vsel %vm89, %v52, 0
  %v208 = vsel %vm89, %v53, 0
  %v211 = vsel %vm89, %v54, 0
  %v214 = vsel %vm89, %v55, 0
  %v217 = vsel %vm89, %v56, 0
  %v220 = vsel %vm89, %v57, 0
  %v223 = vsel %vm89, %v58, 0
  %v226 = vsel %vm89, %v59, 0
  %v229 = vsel %vm89, %v60, 0
  %v232 = vsel %vm89, %v61, 0
  %v235 = vsel %vm89, %v62, 0
  %v238 = vsel %vm89, %v63, 0
  %v241 = vsel %vm89, %v64, 0
  %v244 = vsel %vm89, %v65, 0
  %v247 = vsel %vm89, %v66, 0
  %v250 = vsel %vm89, %v67, 0
  %v253 = vsel %vm89, %v68, 0
  %v256 = vsel %vm89, %v69, 0
  %v259 = vsel %vm89, %v70, 0
  %v262 = vsel %vm89, %v71, 0
  %v265 = vsel %vm89, %v72, 0
  %v268 = vsel %vm89, %v73, 0
  %v271 = vsel %vm89, %v74, 0
  %v274 = vsel %vm89, %v75, 0
  %v277 = vsel %vm89, %v76, 0
  %v280 = vsel %vm89, %v77, 0
  %282 = vmatprep.subr.mxu0 0.0
  %283 = vmatpush1.msra.mxu0 %v78
  %284 = vmatprep.subr.mxu0 0.0
  %285 = vmatpush1.msra.mxu0 %v79
  %286 = vmatprep.subr.mxu0 0.0
  %287 = vmatpush1.msra.mxu0 %v80
  %288 = vmatprep.subr.mxu0 0.0
  %289 = vmatpush1.msra.mxu0 %v81
  %290 = vmatprep.subr.mxu0 0.0
  %291 = vmatpush1.msra.mxu0 0.0
  %292 = vmatprep.subr.mxu0 0.0
  %293 = vmatpush1.msra.mxu0 0.0
  %294 = vmatprep.subr.mxu0 0.0
  %295 = vmatpush1.msra.mxu0 0.0
  %296 = vmatprep.subr.mxu0 0.0
  %297 = vmatpush1.msra.mxu0 0.0
  %298 = vmatprep.subr.mxu0 0.0
  %299 = vmatpush1.msra.mxu0 0.0
  %300 = vmatprep.subr.mxu0 0.0
  %301 = vmatpush1.msra.mxu0 0.0
  %302 = vmatprep.subr.mxu0 0.0
  %303 = vmatpush1.msra.mxu0 0.0
  %304 = vmatprep.subr.mxu0 0.0
  %305 = vmatpush1.msra.mxu0 0.0
  %306 = vmatprep.subr.mxu0 0.0
  %307 = vmatpush1.msra.mxu0 0.0
  %308 = vmatprep.subr.mxu0 0.0
  %309 = vmatpush1.msra.mxu0 0.0
  %310 = vmatprep.subr.mxu0 0.0
  %311 = vmatpush1.msra.mxu0 0.0
  %312 = vmatprep.subr.mxu0 0.0
  %313 = vmatpush1.msra.mxu0 0.0
  %314 = vmatprep.subr.mxu0 0.0
  %315 = vmatpush1.msra.mxu0 0.0
  %316 = vmatprep.subr.mxu0 0.0
  %317 = vmatpush1.msra.mxu0 0.0
  %318 = vmatprep.subr.mxu0 0.0
  %319 = vmatpush1.msra.mxu0 0.0
  %320 = vmatprep.subr.mxu0 0.0
  %321 = vmatpush1.msra.mxu0 0.0
  %322 = vmatprep.subr.mxu0 0.0
  %323 = vmatpush1.msra.mxu0 0.0
  %324 = vmatprep.subr.mxu0 0.0
  %325 = vmatpush1.msra.mxu0 0.0
  %326 = vmatprep.subr.mxu0 0.0
  %327 = vmatpush1.msra.mxu0 0.0
  %328 = vmatprep.subr.mxu0 0.0
  %329 = vmatpush1.msra.mxu0 0.0
  %330 = vmatprep.subr.mxu0 0.0
  %331 = vmatpush1.msra.mxu0 0.0
  %332 = vmatprep.subr.mxu0 0.0
  %333 = vmatpush1.msra.mxu0 0.0
  %334 = vmatprep.subr.mxu0 0.0
  %335 = vmatpush1.msra.mxu0 0.0
  %336 = vmatprep.subr.mxu0 0.0
  %337 = vmatpush1.msra.mxu0 0.0
  %338 = vmatprep.subr.mxu0 0.0
  %339 = vmatpush1.msra.mxu0 0.0
  %340 = vmatprep.subr.mxu0 0.0
  %341 = vmatpush1.msra.mxu0 0.0
  %342 = vmatprep.subr.mxu0 0.0
  %343 = vmatpush1.msra.mxu0 0.0
  %344 = vmatprep.subr.mxu0 0.0
  %345 = vmatpush1.msra.mxu0 0.0
  %346 = vmatprep.mubr.f32.mxu0 0.0
  %347 = vmatmul.mubr.f32.gmra.mrb[0].mxu0 %v91
  %v348 = vpop.f32.mrb[0].mxu0
  %v349 = vadd.f32 %v87, %v348
  %v350 = vpop.f32.mrb[0].mxu0
  %351 = vmatprep.mubr.f32.mxu0 0.0
  %352 = vmatmul.mubr.f32.gmra.mrb[0].mxu0 %v94
  %v353 = vpop.f32.mrb[0].mxu0
  %v354 = vadd.f32 %v87, %v353
  %v355 = vpop.f32.mrb[0].mxu0
  %356 = vmatprep.mubr.f32.mxu0 0.0
  %357 = vmatmul.mubr.f32.gmra.mrb[0].mxu0 %v97
  %v358 = vpop.f32.mrb[0].mxu0
  %v359 = vadd.f32 %v87, %v358
  %v360 = vpop.f32.mrb[0].mxu0
  %361 = vmatprep.mubr.f32.mxu0 0.0
  %362 = vmatmul.mubr.f32.gmra.mrb[0].mxu0 %v100
  %v363 = vpop.f32.mrb[0].mxu0
  %v364 = vadd.f32 %v87, %v363
  %v365 = vpop.f32.mrb[0].mxu0
  %366 = vmatprep.mubr.f32.mxu0 0.0
  %367 = vmatmul.mubr.f32.gmra.mrb[0].mxu0 %v103
  %v368 = vpop.f32.mrb[0].mxu0
  %v369 = vadd.f32 %v87, %v368
  %v370 = vpop.f32.mrb[0].mxu0
  %371 = vmatprep.mubr.f32.mxu0 0.0
  %372 = vmatmul.mubr.f32.gmra.mrb[0].mxu0 %v106
  %v373 = vpop.f32.mrb[0].mxu0
  %v374 = vadd.f32 %v87, %v373
  %v375 = vpop.f32.mrb[0].mxu0
  %376 = vmatprep.mubr.f32.mxu0 0.0
  %377 = vmatmul.mubr.f32.gmra.mrb[0].mxu0 %v109
  %v378 = vpop.f32.mrb[0].mxu0
  %v379 = vadd.f32 %v87, %v378
  %v380 = vpop.f32.mrb[0].mxu0
  %381 = vmatprep.mubr.f32.mxu0 0.0
  %382 = vmatmul.mubr.f32.gmra.mrb[0].mxu0 %v112
  %v383 = vpop.f32.mrb[0].mxu0
  %v384 = vadd.f32 %v87, %v383
  %v385 = vpop.f32.mrb[0].mxu0
  %386 = vmatprep.mubr.f32.mxu0 0.0
  %387 = vmatmul.mubr.f32.gmra.mrb[0].mxu0 %v115
  %v388 = vpop.f32.mrb[0].mxu0
  %v389 = vadd.f32 %v87, %v388
  %v390 = vpop.f32.mrb[0].mxu0
  %391 = vmatprep.mubr.f32.mxu0 0.0
  %392 = vmatmul.mubr.f32.gmra.mrb[0].mxu0 %v118
  %v393 = vpop.f32.mrb[0].mxu0
  %v394 = vadd.f32 %v87, %v393
  %v395 = vpop.f32.mrb[0].mxu0
  %396 = vmatprep.mubr.f32.mxu0 0.0
  %397 = vmatmul.mubr.f32.gmra.mrb[0].mxu0 %v121
  %v398 = vpop.f32.mrb[0].mxu0
  %v399 = vadd.f32 %v87, %v398
  %v400 = vpop.f32.mrb[0].mxu0
  %401 = vmatprep.mubr.f32.mxu0 0.0
  %402 = vmatmul.mubr.f32.gmra.mrb[0].mxu0 %v124
  %v403 = vpop.f32.mrb[0].mxu0
  %v404 = vadd.f32 %v87, %v403
  %v405 = vpop.f32.mrb[0].mxu0
  %406 = vmatprep.mubr.f32.mxu0 0.0
  %407 = vmatmul.mubr.f32.gmra.mrb[0].mxu0 %v127
  %v408 = vpop.f32.mrb[0].mxu0
  %v409 = vadd.f32 %v87, %v408
  %v410 = vpop.f32.mrb[0].mxu0
  %411 = vmatprep.mubr.f32.mxu0 0.0
  %412 = vmatmul.mubr.f32.gmra.mrb[0].mxu0 %v130
  %v413 = vpop.f32.mrb[0].mxu0
  %v414 = vadd.f32 %v87, %v413
  %v415 = vpop.f32.mrb[0].mxu0
  %416 = vmatprep.mubr.f32.mxu0 0.0
  %417 = vmatmul.mubr.f32.gmra.mrb[0].mxu0 %v133
  %v418 = vpop.f32.mrb[0].mxu0
  %v419 = vadd.f32 %v87, %v418
  %v420 = vpop.f32.mrb[0].mxu0
  %421 = vmatprep.mubr.f32.mxu0 0.0
  %422 = vmatmul.mubr.f32.gmra.mrb[0].mxu0 %v136
  %v423 = vpop.f32.mrb[0].mxu0
  %v424 = vadd.f32 %v87, %v423
  %v425 = vpop.f32.mrb[0].mxu0
  %426 = vmatprep.mubr.f32.mxu0 0.0
  %427 = vmatmul.mubr.f32.gmra.mrb[0].mxu0 %v139
  %v428 = vpop.f32.mrb[0].mxu0
  %v429 = vadd.f32 %v87, %v428
  %v430 = vpop.f32.mrb[0].mxu0
  %431 = vmatprep.mubr.f32.mxu0 0.0
  %432 = vmatmul.mubr.f32.gmra.mrb[0].mxu0 %v142
  %v433 = vpop.f32.mrb[0].mxu0
  %v434 = vadd.f32 %v87, %v433
  %v435 = vpop.f32.mrb[0].mxu0
  %436 = vmatprep.mubr.f32.mxu0 0.0
  %437 = vmatmul.mubr.f32.gmra.mrb[0].mxu0 %v145
  %v438 = vpop.f32.mrb[0].mxu0
  %v439 = vadd.f32 %v87, %v438
  %v440 = vpop.f32.mrb[0].mxu0
  %441 = vmatprep.mubr.f32.mxu0 0.0
  %442 = vmatmul.mubr.f32.gmra.mrb[0].mxu0 %v148
  %v443 = vpop.f32.mrb[0].mxu0
  %v444 = vadd.f32 %v87, %v443
  %v445 = vpop.f32.mrb[0].mxu0
  %446 = vmatprep.mubr.f32.mxu0 0.0
  %447 = vmatmul.mubr.f32.gmra.mrb[0].mxu0 %v151
  %v448 = vpop.f32.mrb[0].mxu0
  %v449 = vadd.f32 %v87, %v448
  %v450 = vpop.f32.mrb[0].mxu0
  %451 = vmatprep.mubr.f32.mxu0 0.0
  %452 = vmatmul.mubr.f32.gmra.mrb[0].mxu0 %v154
  %v453 = vpop.f32.mrb[0].mxu0
  %v454 = vadd.f32 %v87, %v453
  %v455 = vpop.f32.mrb[0].mxu0
  %456 = vmatprep.mubr.f32.mxu0 0.0
  %457 = vmatmul.mubr.f32.gmra.mrb[0].mxu0 %v157
  %v458 = vpop.f32.mrb[0].mxu0
  %v459 = vadd.f32 %v87, %v458
  %v460 = vpop.f32.mrb[0].mxu0
  %461 = vmatprep.mubr.f32.mxu0 0.0
  %462 = vmatmul.mubr.f32.gmra.mrb[0].mxu0 %v160
  %v463 = vpop.f32.mrb[0].mxu0
  %v464 = vadd.f32 %v87, %v463
  %v465 = vpop.f32.mrb[0].mxu0
  %466 = vmatprep.mubr.f32.mxu0 0.0
  %467 = vmatmul.mubr.f32.gmra.mrb[0].mxu0 %v163
  %v468 = vpop.f32.mrb[0].mxu0
  %v469 = vadd.f32 %v87, %v468
  %v470 = vpop.f32.mrb[0].mxu0
  %471 = vmatprep.mubr.f32.mxu0 0.0
  %472 = vmatmul.mubr.f32.gmra.mrb[0].mxu0 %v166
  %v473 = vpop.f32.mrb[0].mxu0
  %v474 = vadd.f32 %v87, %v473
  %v475 = vpop.f32.mrb[0].mxu0
  %476 = vmatprep.mubr.f32.mxu0 0.0
  %477 = vmatmul.mubr.f32.gmra.mrb[0].mxu0 %v169
  %v478 = vpop.f32.mrb[0].mxu0
  %v479 = vadd.f32 %v87, %v478
  %v480 = vpop.f32.mrb[0].mxu0
  %481 = vmatprep.mubr.f32.mxu0 0.0
  %482 = vmatmul.mubr.f32.gmra.mrb[0].mxu0 %v172
  %v483 = vpop.f32.mrb[0].mxu0
  %v484 = vadd.f32 %v87, %v483
  %v485 = vpop.f32.mrb[0].mxu0
  %486 = vmatprep.mubr.f32.mxu0 0.0
  %487 = vmatmul.mubr.f32.gmra.mrb[0].mxu0 %v175
  %v488 = vpop.f32.mrb[0].mxu0
  %v489 = vadd.f32 %v87, %v488
  %v490 = vpop.f32.mrb[0].mxu0
  %491 = vmatprep.mubr.f32.mxu0 0.0
  %492 = vmatmul.mubr.f32.gmra.mrb[0].mxu0 %v178
  %v493 = vpop.f32.mrb[0].mxu0
  %v494 = vadd.f32 %v87, %v493
  %v495 = vpop.f32.mrb[0].mxu0
  %496 = vmatprep.mubr.f32.mxu0 0.0
  %497 = vmatmul.mubr.f32.gmra.mrb[0].mxu0 %v181
  %v498 = vpop.f32.mrb[0].mxu0
  %v499 = vadd.f32 %v87, %v498
  %v500 = vpop.f32.mrb[0].mxu0
  %501 = vmatprep.mubr.f32.mxu0 0.0
  %502 = vmatmul.mubr.f32.gmra.mrb[0].mxu0 %v184
  %v503 = vpop.f32.mrb[0].mxu0
  %v504 = vadd.f32 %v87, %v503
  %v505 = vpop.f32.mrb[0].mxu0
  %506 = vmatprep.mubr.f32.mxu0 0.0
  %507 = vmatmul.mubr.f32.gmra.mrb[0].mxu0 %v187
  %v508 = vpop.f32.mrb[0].mxu0
  %v509 = vadd.f32 %v87, %v508
  %v510 = vpop.f32.mrb[0].mxu0
  %511 = vmatprep.mubr.f32.mxu0 0.0
  %512 = vmatmul.mubr.f32.gmra.mrb[0].mxu0 %v190
  %v513 = vpop.f32.mrb[0].mxu0
  %v514 = vadd.f32 %v87, %v513
  %v515 = vpop.f32.mrb[0].mxu0
  %516 = vmatprep.mubr.f32.mxu0 0.0
  %517 = vmatmul.mubr.f32.gmra.mrb[0].mxu0 %v193
  %v518 = vpop.f32.mrb[0].mxu0
  %v519 = vadd.f32 %v87, %v518
  %v520 = vpop.f32.mrb[0].mxu0
  %521 = vmatprep.mubr.f32.mxu0 0.0
  %522 = vmatmul.mubr.f32.gmra.mrb[0].mxu0 %v196
  %v523 = vpop.f32.mrb[0].mxu0
  %v524 = vadd.f32 %v87, %v523
  %v525 = vpop.f32.mrb[0].mxu0
  %526 = vmatprep.mubr.f32.mxu0 0.0
  %527 = vmatmul.mubr.f32.gmra.mrb[0].mxu0 %v199
  %v528 = vpop.f32.mrb[0].mxu0
  %v529 = vadd.f32 %v87, %v528
  %v530 = vpop.f32.mrb[0].mxu0
  %531 = vmatprep.mubr.f32.mxu0 0.0
  %532 = vmatmul.mubr.f32.gmra.mrb[0].mxu0 %v202
  %v533 = vpop.f32.mrb[0].mxu0
  %v534 = vadd.f32 %v87, %v533
  %v535 = vpop.f32.mrb[0].mxu0
  %536 = vmatprep.mubr.f32.mxu0 0.0
  %537 = vmatmul.mubr.f32.gmra.mrb[0].mxu0 %v205
  %v538 = vpop.f32.mrb[0].mxu0
  %v539 = vadd.f32 %v87, %v538
  %v540 = vpop.f32.mrb[0].mxu0
  %541 = vmatprep.mubr.f32.mxu0 0.0
  %542 = vmatmul.mubr.f32.gmra.mrb[0].mxu0 %v208
  %v543 = vpop.f32.mrb[0].mxu0
  %v544 = vadd.f32 %v87, %v543
  %v545 = vpop.f32.mrb[0].mxu0
  %546 = vmatprep.mubr.f32.mxu0 0.0
  %547 = vmatmul.mubr.f32.gmra.mrb[0].mxu0 %v211
  %v548 = vpop.f32.mrb[0].mxu0
  %v549 = vadd.f32 %v87, %v548
  %v550 = vpop.f32.mrb[0].mxu0
  %551 = vmatprep.mubr.f32.mxu0 0.0
  %552 = vmatmul.mubr.f32.gmra.mrb[0].mxu0 %v214
  %v553 = vpop.f32.mrb[0].mxu0
  %v554 = vadd.f32 %v87, %v553
  %v555 = vpop.f32.mrb[0].mxu0
  %556 = vmatprep.mubr.f32.mxu0 0.0
  %557 = vmatmul.mubr.f32.gmra.mrb[0].mxu0 %v217
  %v558 = vpop.f32.mrb[0].mxu0
  %v559 = vadd.f32 %v87, %v558
  %v560 = vpop.f32.mrb[0].mxu0
  %561 = vmatprep.mubr.f32.mxu0 0.0
  %562 = vmatmul.mubr.f32.gmra.mrb[0].mxu0 %v220
  %v563 = vpop.f32.mrb[0].mxu0
  %v564 = vadd.f32 %v87, %v563
  %v565 = vpop.f32.mrb[0].mxu0
  %566 = vmatprep.mubr.f32.mxu0 0.0
  %567 = vmatmul.mubr.f32.gmra.mrb[0].mxu0 %v223
  %v568 = vpop.f32.mrb[0].mxu0
  %v569 = vadd.f32 %v87, %v568
  %v570 = vpop.f32.mrb[0].mxu0
  %571 = vmatprep.mubr.f32.mxu0 0.0
  %572 = vmatmul.mubr.f32.gmra.mrb[0].mxu0 %v226
  %v573 = vpop.f32.mrb[0].mxu0
  %v574 = vadd.f32 %v87, %v573
  %v575 = vpop.f32.mrb[0].mxu0
  %576 = vmatprep.mubr.f32.mxu0 0.0
  %577 = vmatmul.mubr.f32.gmra.mrb[0].mxu0 %v229
  %v578 = vpop.f32.mrb[0].mxu0
  %v579 = vadd.f32 %v87, %v578
  %v580 = vpop.f32.mrb[0].mxu0
  %581 = vmatprep.mubr.f32.mxu0 0.0
  %582 = vmatmul.mubr.f32.gmra.mrb[0].mxu0 %v232
  %v583 = vpop.f32.mrb[0].mxu0
  %v584 = vadd.f32 %v87, %v583
  %v585 = vpop.f32.mrb[0].mxu0
  %586 = vmatprep.mubr.f32.mxu0 0.0
  %587 = vmatmul.mubr.f32.gmra.mrb[0].mxu0 %v235
  %v588 = vpop.f32.mrb[0].mxu0
  %v589 = vadd.f32 %v87, %v588
  %v590 = vpop.f32.mrb[0].mxu0
  %591 = vmatprep.mubr.f32.mxu0 0.0
  %592 = vmatmul.mubr.f32.gmra.mrb[0].mxu0 %v238
  %v593 = vpop.f32.mrb[0].mxu0
  %v594 = vadd.f32 %v87, %v593
  %v595 = vpop.f32.mrb[0].mxu0
  %596 = vmatprep.mubr.f32.mxu0 0.0
  %597 = vmatmul.mubr.f32.gmra.mrb[0].mxu0 %v241
  %v598 = vpop.f32.mrb[0].mxu0
  %v599 = vadd.f32 %v87, %v598
  %v600 = vpop.f32.mrb[0].mxu0
  %601 = vmatprep.mubr.f32.mxu0 0.0
  %602 = vmatmul.mubr.f32.gmra.mrb[0].mxu0 %v244
  %v603 = vpop.f32.mrb[0].mxu0
  %v604 = vadd.f32 %v87, %v603
  %v605 = vpop.f32.mrb[0].mxu0
  %606 = vmatprep.mubr.f32.mxu0 0.0
  %607 = vmatmul.mubr.f32.gmra.mrb[0].mxu0 %v247
  %v608 = vpop.f32.mrb[0].mxu0
  %v609 = vadd.f32 %v87, %v608
  %v610 = vpop.f32.mrb[0].mxu0
  %611 = vmatprep.mubr.f32.mxu0 0.0
  %612 = vmatmul.mubr.f32.gmra.mrb[0].mxu0 %v250
  %v613 = vpop.f32.mrb[0].mxu0
  %v614 = vadd.f32 %v87, %v613
  %v615 = vpop.f32.mrb[0].mxu0
  %616 = vmatprep.mubr.f32.mxu0 0.0
  %617 = vmatmul.mubr.f32.gmra.mrb[0].mxu0 %v253
  %v618 = vpop.f32.mrb[0].mxu0
  %v619 = vadd.f32 %v87, %v618
  %v620 = vpop.f32.mrb[0].mxu0
  %621 = vmatprep.mubr.f32.mxu0 0.0
  %622 = vmatmul.mubr.f32.gmra.mrb[0].mxu0 %v256
  %v623 = vpop.f32.mrb[0].mxu0
  %v624 = vadd.f32 %v87, %v623
  %v625 = vpop.f32.mrb[0].mxu0
  %626 = vmatprep.mubr.f32.mxu0 0.0
  %627 = vmatmul.mubr.f32.gmra.mrb[0].mxu0 %v259
  %v628 = vpop.f32.mrb[0].mxu0
  %v629 = vadd.f32 %v87, %v628
  %v630 = vpop.f32.mrb[0].mxu0
  %631 = vmatprep.mubr.f32.mxu0 0.0
  %632 = vmatmul.mubr.f32.gmra.mrb[0].mxu0 %v262
  %v633 = vpop.f32.mrb[0].mxu0
  %v634 = vadd.f32 %v87, %v633
  %v635 = vpop.f32.mrb[0].mxu0
  %636 = vmatprep.mubr.f32.mxu0 0.0
  %637 = vmatmul.mubr.f32.gmra.mrb[0].mxu0 %v265
  %v638 = vpop.f32.mrb[0].mxu0
  %v639 = vadd.f32 %v87, %v638
  %v640 = vpop.f32.mrb[0].mxu0
  %641 = vmatprep.mubr.f32.mxu0 0.0
  %642 = vmatmul.mubr.f32.gmra.mrb[0].mxu0 %v268
  %v643 = vpop.f32.mrb[0].mxu0
  %v644 = vadd.f32 %v87, %v643
  %v645 = vpop.f32.mrb[0].mxu0
  %646 = vmatprep.mubr.f32.mxu0 0.0
  %647 = vmatmul.mubr.f32.gmra.mrb[0].mxu0 %v271
  %v648 = vpop.f32.mrb[0].mxu0
  %v649 = vadd.f32 %v87, %v648
  %v650 = vpop.f32.mrb[0].mxu0
  %651 = vmatprep.mubr.f32.mxu0 0.0
  %652 = vmatmul.mubr.f32.gmra.mrb[0].mxu0 %v274
  %v653 = vpop.f32.mrb[0].mxu0
  %v654 = vadd.f32 %v87, %v653
  %v655 = vpop.f32.mrb[0].mxu0
  %656 = vmatprep.mubr.f32.mxu0 0.0
  %657 = vmatmul.mubr.f32.gmra.mrb[0].mxu0 %v277
  %v658 = vpop.f32.mrb[0].mxu0
  %v659 = vadd.f32 %v87, %v658
  %v660 = vpop.f32.mrb[0].mxu0
  %661 = vmatprep.mubr.f32.mxu0 0.0
  %662 = vmatmul.mubr.f32.gmra.mrb[0].mxu0 %v280
  %v663 = vpop.f32.mrb[0].mxu0
  %v664 = vadd.f32 %v87, %v663
  %v665 = vpop.f32.mrb[0].mxu0
  %666 = vdwg.mxu0
  %667 = vst.msk [vmem:[%s3] sm:$0xff] %vm89, %v349
  %668 = vst.msk [vmem:[%s3 + $0x8] sm:$0xff] %vm89, %v354
  %669 = vst.msk [vmem:[%s3 + $0x10] sm:$0xff] %vm89, %v359
  %670 = vst.msk [vmem:[%s3 + $0x18] sm:$0xff] %vm89, %v364
  %671 = vst.msk [vmem:[%s3 + $0x20] sm:$0xff] %vm89, %v369
  %672 = vst.msk [vmem:[%s3 + $0x28] sm:$0xff] %vm89, %v374
  %673 = vst.msk [vmem:[%s3 + $0x30] sm:$0xff] %vm89, %v379
  %674 = vst.msk [vmem:[%s3 + $0x38] sm:$0xff] %vm89, %v384
  %675 = vst.msk [vmem:[%s3 + $0x40] sm:$0xff] %vm89, %v389
  %676 = vst.msk [vmem:[%s3 + $0x48] sm:$0xff] %vm89, %v394
  %677 = vst.msk [vmem:[%s3 + $0x50] sm:$0xff] %vm89, %v399
  %678 = vst.msk [vmem:[%s3 + $0x58] sm:$0xff] %vm89, %v404
  %679 = vst.msk [vmem:[%s3 + $0x60] sm:$0xff] %vm89, %v409
  %680 = vst.msk [vmem:[%s3 + $0x68] sm:$0xff] %vm89, %v414
  %681 = vst.msk [vmem:[%s3 + $0x70] sm:$0xff] %vm89, %v419
  %682 = vst.msk [vmem:[%s3 + $0x78] sm:$0xff] %vm89, %v424
  %683 = vst.msk [vmem:[%s3 + $0x80] sm:$0xff] %vm89, %v429
  %684 = vst.msk [vmem:[%s3 + $0x88] sm:$0xff] %vm89, %v434
  %685 = vst.msk [vmem:[%s3 + $0x90] sm:$0xff] %vm89, %v439
  %686 = vst.msk [vmem:[%s3 + $0x98] sm:$0xff] %vm89, %v444
  %687 = vst.msk [vmem:[%s3 + $0xa0] sm:$0xff] %vm89, %v449
  %688 = vst.msk [vmem:[%s3 + $0xa8] sm:$0xff] %vm89, %v454
  %689 = vst.msk [vmem:[%s3 + $0xb0] sm:$0xff] %vm89, %v459
  %690 = vst.msk [vmem:[%s3 + $0xb8] sm:$0xff] %vm89, %v464
  %691 = vst.msk [vmem:[%s3 + $0xc0] sm:$0xff] %vm89, %v469
  %692 = vst.msk [vmem:[%s3 + $0xc8] sm:$0xff] %vm89, %v474
  %693 = vst.msk [vmem:[%s3 + $0xd0] sm:$0xff] %vm89, %v479
  %694 = vst.msk [vmem:[%s3 + $0xd8] sm:$0xff] %vm89, %v484
  %695 = vst.msk [vmem:[%s3 + $0xe0] sm:$0xff] %vm89, %v489
  %696 = vst.msk [vmem:[%s3 + $0xe8] sm:$0xff] %vm89, %v494
  %697 = vst.msk [vmem:[%s3 + $0xf0] sm:$0xff] %vm89, %v499
  %698 = vst.msk [vmem:[%s3 + $0xf8] sm:$0xff] %vm89, %v504
  %699 = vst.msk [vmem:[%s3 + $0x100] sm:$0xff] %vm89, %v509
  %700 = vst.msk [vmem:[%s3 + $0x108] sm:$0xff] %vm89, %v514
  %701 = vst.msk [vmem:[%s3 + $0x110] sm:$0xff] %vm89, %v519
  %702 = vst.msk [vmem:[%s3 + $0x118] sm:$0xff] %vm89, %v524
  %703 = vst.msk [vmem:[%s3 + $0x120] sm:$0xff] %vm89, %v529
  %704 = vst.msk [vmem:[%s3 + $0x128] sm:$0xff] %vm89, %v534
  %705 = vst.msk [vmem:[%s3 + $0x130] sm:$0xff] %vm89, %v539
  %706 = vst.msk [vmem:[%s3 + $0x138] sm:$0xff] %vm89, %v544
  %707 = vst.msk [vmem:[%s3 + $0x140] sm:$0xff] %vm89, %v549
  %708 = vst.msk [vmem:[%s3 + $0x148] sm:$0xff] %vm89, %v554
  %709 = vst.msk [vmem:[%s3 + $0x150] sm:$0xff] %vm89, %v559
  %710 = vst.msk [vmem:[%s3 + $0x158] sm:$0xff] %vm89, %v564
  %711 = vst.msk [vmem:[%s3 + $0x160] sm:$0xff] %vm89, %v569
  %712 = vst.msk [vmem:[%s3 + $0x168] sm:$0xff] %vm89, %v574
  %713 = vst.msk [vmem:[%s3 + $0x170] sm:$0xff] %vm89, %v579
  %714 = vst.msk [vmem:[%s3 + $0x178] sm:$0xff] %vm89, %v584
  %715 = vst.msk [vmem:[%s3 + $0x180] sm:$0xff] %vm89, %v589
  %716 = vst.msk [vmem:[%s3 + $0x188] sm:$0xff] %vm89, %v594
  %717 = vst.msk [vmem:[%s3 + $0x190] sm:$0xff] %vm89, %v599
  %718 = vst.msk [vmem:[%s3 + $0x198] sm:$0xff] %vm89, %v604
  %719 = vst.msk [vmem:[%s3 + $0x1a0] sm:$0xff] %vm89, %v609
  %720 = vst.msk [vmem:[%s3 + $0x1a8] sm:$0xff] %vm89, %v614
  %721 = vst.msk [vmem:[%s3 + $0x1b0] sm:$0xff] %vm89, %v619
  %722 = vst.msk [vmem:[%s3 + $0x1b8] sm:$0xff] %vm89, %v624
  %723 = vst.msk [vmem:[%s3 + $0x1c0] sm:$0xff] %vm89, %v629
  %724 = vst.msk [vmem:[%s3 + $0x1c8] sm:$0xff] %vm89, %v634
  %725 = vst.msk [vmem:[%s3 + $0x1d0] sm:$0xff] %vm89, %v639
  %726 = vst.msk [vmem:[%s3 + $0x1d8] sm:$0xff] %vm89, %v644
  %727 = vst.msk [vmem:[%s3 + $0x1e0] sm:$0xff] %vm89, %v649
  %728 = vst.msk [vmem:[%s3 + $0x1e8] sm:$0xff] %vm89, %v654
  %729 = vst.msk [vmem:[%s3 + $0x1f0] sm:$0xff] %vm89, %v659
  %730 = vst.msk [vmem:[%s3 + $0x1f8] sm:$0xff] %vm89, %v664
  // Predicated region
  $region14: #{cross_view_swap_attention.33} parent=0 // pred_check
    _
  $region15: #{cross_view_swap_attention.33} parent=0 // pred_check_branch
    %732 = sbr.rel (0) target = $region17
  $region16: #{cross_view_swap_attention.33} parent=0 // pred_region
    _
  $region17: #{cross_view_swap_attention.33} parent=0 // pred_fallthru
    _
  // Predicated region
  $region18: #{cross_view_swap_attention.33} parent=0 // pred_check
    _
  $region19: #{cross_view_swap_attention.33} parent=0 // pred_check_branch
    %734 = sbr.rel (0) target = $region21
  $region20: #{cross_view_swap_attention.33} parent=0 // pred_region
    _
  $region21: #{cross_view_swap_attention.33} parent=0 // pred_fallthru
    _

// kernel: cross_view_swap_attention.32
$region0: #{cross_view_swap_attention.32}
  #allocation0 [shape = 'u32[]', space=smem, size = 0x4, offset = 0x4, fixed_abs, tag = 'smem constant byte address 0x4 - core index']
  #allocation1 [shape = 'u32[144,128]{1,0:T(1,128)}', space=vmem, size = 0x12000, scoped, tag = 'internal scratch']
  %s0 = inlined_call_operand.vmem [shape: f32[4,128,32], index: 0, kind: input, shape index: {}]
  %s1 = inlined_call_operand.vmem [shape: f32[4,32,32], index: 1, kind: input, shape index: {}]
  %s2 = inlined_call_operand.vmem [shape: f32[4,32,32], index: 2, kind: input, shape index: {}]
  %s3 = inlined_call_operand.vmem [shape: f32[4,128,32], index: 3, kind: output, shape index: {}]
  %s4 = sld [smem:[#allocation0]]
  $region45: #{cross_view_swap_attention.32} parent=0
    _
  %s6 = ssub.s32 1, %s4
  %s7 = scalar_select 0, %s6, %s4
  loop: start=0, step=1, limit=6
  $region2: #{cross_view_swap_attention.32} parent=0 // loop_pre_header
    _
  $region3: #{cross_view_swap_attention.32} parent=0 // loop_header
    %s9 = sphi 0, %s13
    %p10 = scmp.ge.s32.totalorder %s9, 6
    %s19 = sphi 0, %s21
    %s22 = sphi 0, %s19
    %s23 = sphi 0, %s22
    %s39 = sphi 0, %s23
    %s45 = sphi 0, %s47
    %s48 = sphi 0, %s45
    %s49 = sphi 0, %s48
    %s65 = sphi 0, %s49
    %s71 = sphi 0, %s73
    %s74 = sphi 0, %s71
    %s75 = sphi 0, %s74
    %s91 = sphi 0, %s75
    %s97 = sphi 0, %s99
    %s100 = sphi 0, %s97
    %s101 = sphi 0, %s100
    %s117 = sphi 0, %s101
  $region4: #{cross_view_swap_attention.32} parent=0 // loop_header_branch
    %12 = sbr.rel (%p10) target = $region8
  $region5: #{cross_view_swap_attention.32} parent=0 // loop_body
    %s14 = ssub.s32 %s9, 1
    %s15 = ssub.s32 %s9, 2
    %s16 = sadd.s32 %s9, 1
    %s17 = ssub.s32 %s9, %s16
    %p18 = scmp.eq.s32.totalorder %s17, 0
    %s20 = sadd.s32 %s19, 1
    %s21 = scalar_select %p18, %s19, %s20
    %p24 = pneg %p18
    %p25 = scmp.eq.s32.totalorder %s9, 3
    %p26 = por %p24, %p25
    %p27 = scmp.ne.s32.totalorder %s19, %s22
    %p28 = scmp.eq.s32.totalorder %s9, 0
    %p29 = por %p27, %p28
    %p30 = scmp.ne.s32.totalorder %s19, %s22
    %p31 = scmp.eq.s32.totalorder %s14, 3
    %p32 = por %p30, %p31
    %p33 = scmp.ne.s32.totalorder %s22, %s23
    %p34 = scmp.eq.s32.totalorder %s14, 0
    %p35 = por %p33, %p34
    %p36 = scmp.ne.s32.totalorder %s22, %s23
    %p37 = scmp.eq.s32.totalorder %s15, 3
    %p38 = por %p36, %p37
    %p40 = scmp.ne.s32.totalorder %s23, %s39
    %p41 = scmp.eq.s32.totalorder %s15, 0
    %p42 = por %p40, %p41
    %s43 = ssub.s32 %s9, %s16
    %p44 = scmp.eq.s32.totalorder %s43, 0
    %s46 = sadd.s32 %s45, 1
    %s47 = scalar_select %p44, %s45, %s46
    %p50 = pneg %p44
    %p51 = scmp.eq.s32.totalorder %s9, 3
    %p52 = por %p50, %p51
    %p53 = scmp.ne.s32.totalorder %s45, %s48
    %p54 = scmp.eq.s32.totalorder %s9, 0
    %p55 = por %p53, %p54
    %p56 = scmp.ne.s32.totalorder %s45, %s48
    %p57 = scmp.eq.s32.totalorder %s14, 3
    %p58 = por %p56, %p57
    %p59 = scmp.ne.s32.totalorder %s48, %s49
    %p60 = scmp.eq.s32.totalorder %s14, 0
    %p61 = por %p59, %p60
    %p62 = scmp.ne.s32.totalorder %s48, %s49
    %p63 = scmp.eq.s32.totalorder %s15, 3
    %p64 = por %p62, %p63
    %p66 = scmp.ne.s32.totalorder %s49, %s65
    %p67 = scmp.eq.s32.totalorder %s15, 0
    %p68 = por %p66, %p67
    %s69 = ssub.s32 %s9, %s16
    %p70 = scmp.eq.s32.totalorder %s69, 0
    %s72 = sadd.s32 %s71, 1
    %s73 = scalar_select %p70, %s71, %s72
    %p76 = pneg %p70
    %p77 = scmp.eq.s32.totalorder %s9, 3
    %p78 = por %p76, %p77
    %p79 = scmp.ne.s32.totalorder %s71, %s74
    %p80 = scmp.eq.s32.totalorder %s9, 0
    %p81 = por %p79, %p80
    %p82 = scmp.ne.s32.totalorder %s71, %s74
    %p83 = scmp.eq.s32.totalorder %s14, 3
    %p84 = por %p82, %p83
    %p85 = scmp.ne.s32.totalorder %s74, %s75
    %p86 = scmp.eq.s32.totalorder %s14, 0
    %p87 = por %p85, %p86
    %p88 = scmp.ne.s32.totalorder %s74, %s75
    %p89 = scmp.eq.s32.totalorder %s15, 3
    %p90 = por %p88, %p89
    %p92 = scmp.ne.s32.totalorder %s75, %s91
    %p93 = scmp.eq.s32.totalorder %s15, 0
    %p94 = por %p92, %p93
    %s95 = ssub.s32 %s9, %s16
    %p96 = scmp.eq.s32.totalorder %s95, 0
    %s98 = sadd.s32 %s97, 1
    %s99 = scalar_select %p96, %s97, %s98
    %p102 = pneg %p96
    %p103 = scmp.eq.s32.totalorder %s9, 3
    %p104 = por %p102, %p103
    %p105 = scmp.ne.s32.totalorder %s97, %s100
    %p106 = scmp.eq.s32.totalorder %s9, 0
    %p107 = por %p105, %p106
    %p108 = scmp.ne.s32.totalorder %s97, %s100
    %p109 = scmp.eq.s32.totalorder %s14, 3
    %p110 = por %p108, %p109
    %p111 = scmp.ne.s32.totalorder %s100, %s101
    %p112 = scmp.eq.s32.totalorder %s14, 0
    %p113 = por %p111, %p112
    %p114 = scmp.ne.s32.totalorder %s100, %s101
    %p115 = scmp.eq.s32.totalorder %s15, 3
    %p116 = por %p114, %p115
    %p118 = scmp.ne.s32.totalorder %s101, %s117
    %p119 = scmp.eq.s32.totalorder %s15, 0
    %p120 = por %p118, %p119
    %p121 = scmp.le.s32.totalorder 1, %s9
    %p122 = scmp.lt.s32.totalorder %s9, 5
    %p123 = pnand %p121, %p122
    %p124 = pneg %p123
    // Predicated region
    $region9: #{cross_view_swap_attention.32} parent=5 // pred_check
      _
    $region10: #{cross_view_swap_attention.32} parent=5 // pred_check_branch
      %126 = sbr.rel (%p123) target = $region12
    $region11: #{cross_view_swap_attention.32} parent=5 // pred_region
      %s127 = ssub.s32 %s9, 1
    $region12: #{cross_view_swap_attention.32} parent=5 // pred_fallthru
      _
    %p128 = scmp.lt.s32.totalorder %s9, 4
    // Predicated region
    $region13: #{cross_view_swap_attention.32} parent=5 // pred_check
      %p129 = pneg %p128
    $region14: #{cross_view_swap_attention.32} parent=5 // pred_check_branch
      %131 = sbr.rel (%p129) target = $region16
    $region15: #{cross_view_swap_attention.32} parent=5 // pred_region
      // Predicated region
      $region17: #{cross_view_swap_attention.32} parent=15 // pred_check
        %p132 = pneg %p29
      $region18: #{cross_view_swap_attention.32} parent=15 // pred_check_branch
        %134 = sbr.rel (%p132) target = $region20
      $region19: #{cross_view_swap_attention.32} parent=15 // pred_region
        %p135 = scmp.lt.s32.totalorder %s9, 3
        %s136 = scalar_select %p135, %s9, 3
        %s137 = smul.addr %s136, 16
        %s138 = smul.addr %s137, 8
        %s139 = scalar_lea.vmem %s0, %s138
      $region20: #{cross_view_swap_attention.32} parent=15 // pred_fallthru
        _
      // Predicated region
      $region21: #{cross_view_swap_attention.32} parent=15 // pred_check
        %p140 = pneg %p55
      $region22: #{cross_view_swap_attention.32} parent=15 // pred_check_branch
        %142 = sbr.rel (%p140) target = $region24
      $region23: #{cross_view_swap_attention.32} parent=15 // pred_region
        %p143 = scmp.lt.s32.totalorder %s9, 3
        %s144 = scalar_select %p143, %s9, 3
        %s145 = smul.addr %s144, 4
        %s146 = smul.addr %s145, 8
        %s147 = scalar_lea.vmem %s1, %s146
      $region24: #{cross_view_swap_attention.32} parent=15 // pred_fallthru
        _
      // Predicated region
      $region25: #{cross_view_swap_attention.32} parent=15 // pred_check
        %p148 = pneg %p81
      $region26: #{cross_view_swap_attention.32} parent=15 // pred_check_branch
        %150 = sbr.rel (%p148) target = $region28
      $region27: #{cross_view_swap_attention.32} parent=15 // pred_region
        %p151 = scmp.lt.s32.totalorder %s9, 3
        %s152 = scalar_select %p151, %s9, 3
        %s153 = smul.addr %s152, 4
        %s154 = smul.addr %s153, 8
        %s155 = scalar_lea.vmem %s2, %s154
      $region28: #{cross_view_swap_attention.32} parent=15 // pred_fallthru
        _
    $region16: #{cross_view_swap_attention.32} parent=5 // pred_fallthru
      _
    %p156 = scmp.le.s32.totalorder 1, %s9
    %p157 = scmp.lt.s32.totalorder %s9, 5
    %p158 = pnand %p156, %p157
    %p159 = pneg %p158
    // Predicated region
    $region29: #{cross_view_swap_attention.32} parent=5 // pred_check
      _
    $region30: #{cross_view_swap_attention.32} parent=5 // pred_check_branch
      %161 = sbr.rel (%p158) target = $region32
    $region31: #{cross_view_swap_attention.32} parent=5 // pred_region
      %s162 = ssub.s32 %s9, 1
      %p163 = scmp.lt.s32.totalorder %s14, 3
      %s164 = scalar_select %p163, %s14, 3
      %s165 = smul.addr %s164, 16
      %s166 = smul.addr %s165, 8
      %s167 = scalar_lea.vmem %s0, %s166
      %p168 = pneg %p35
      %p169 = pneg %p32
      %p170 = scmp.lt.s32.totalorder %s14, 3
      %s171 = scalar_select %p170, %s14, 3
      %s172 = smul.addr %s171, 4
      %s173 = smul.addr %s172, 8
      %s174 = scalar_lea.vmem %s1, %s173
      %p175 = pneg %p61
      %p176 = pneg %p58
      %p177 = scmp.lt.s32.totalorder %s14, 3
      %s178 = scalar_select %p177, %s14, 3
      %s179 = smul.addr %s178, 4
      %s180 = smul.addr %s179, 8
      %s181 = scalar_lea.vmem %s2, %s180
      %p182 = pneg %p87
      %p183 = pneg %p84
      %p184 = pneg %p113
      %p185 = pneg %p110
      %p186 = scmp.lt.s32.totalorder %s14, 3
      %s187 = scalar_select %p186, %s14, 3
      %s188 = smul.addr %s187, 16
      %s189 = smul.addr %s188, 8
      %s190 = scalar_lea.vmem %s3, %s189
      %p191 = scmp.lt.s32.totalorder %s14, 3
      %s192 = scalar_select %p191, %s14, 3
      %s193 = smul.addr %s192, 16
      %s194 = smul.addr %s193, 8
      %s195 = scalar_lea.vmem %s0, %s194
      %p196 = scmp.lt.s32.totalorder %s14, 3
      %s197 = scalar_select %p196, %s14, 3
      %s198 = smul.addr %s197, 4
      %s199 = smul.addr %s198, 8
      %s200 = scalar_lea.vmem %s1, %s199
      %p201 = scmp.lt.s32.totalorder %s14, 3
      %s202 = scalar_select %p201, %s14, 3
      %s203 = smul.addr %s202, 4
      %s204 = smul.addr %s203, 8
      %s205 = scalar_lea.vmem %s2, %s204
      %p206 = scmp.lt.s32.totalorder %s14, 3
      %s207 = scalar_select %p206, %s14, 3
      %s208 = smul.addr %s207, 16
      %s209 = smul.addr %s208, 8
      %s210 = scalar_lea.vmem %s3, %s209
      %v211 = vld [vmem:[%s195] sm:$0xff]
      %v212 = vld [vmem:[%s195 + $0x8] sm:$0xff]
      %v213 = vld [vmem:[%s195 + $0x10] sm:$0xff]
      %v214 = vld [vmem:[%s195 + $0x18] sm:$0xff]
      %v215 = vld [vmem:[%s195 + $0x20] sm:$0xff]
      %v216 = vld [vmem:[%s195 + $0x28] sm:$0xff]
      %v217 = vld [vmem:[%s195 + $0x30] sm:$0xff]
      %v218 = vld [vmem:[%s195 + $0x38] sm:$0xff]
      %v219 = vld [vmem:[%s195 + $0x40] sm:$0xff]
      %v220 = vld [vmem:[%s195 + $0x48] sm:$0xff]
      %v221 = vld [vmem:[%s195 + $0x50] sm:$0xff]
      %v222 = vld [vmem:[%s195 + $0x58] sm:$0xff]
      %v223 = vld [vmem:[%s195 + $0x60] sm:$0xff]
      %v224 = vld [vmem:[%s195 + $0x68] sm:$0xff]
      %v225 = vld [vmem:[%s195 + $0x70] sm:$0xff]
      %v226 = vld [vmem:[%s195 + $0x78] sm:$0xff]
      %v227 = vld [vmem:[%s200] sm:$0xff]
      %v228 = vld [vmem:[%s200 + $0x8] sm:$0xff]
      %v229 = vld [vmem:[%s200 + $0x10] sm:$0xff]
      %v230 = vld [vmem:[%s200 + $0x18] sm:$0xff]
      %v231 = vld [vmem:[%s205] sm:$0xff]
      %v232 = vld [vmem:[%s205 + $0x8] sm:$0xff]
      %v233 = vld [vmem:[%s205 + $0x10] sm:$0xff]
      %v234 = vld [vmem:[%s205 + $0x18] sm:$0xff]
      %vm235 = vcmask 64512
      %v237 = vsel %vm235, %v211, 0
      %v240 = vsel %vm235, %v212, 0
      %v243 = vsel %vm235, %v213, 0
      %v246 = vsel %vm235, %v214, 0
      %v249 = vsel %vm235, %v215, 0
      %v252 = vsel %vm235, %v216, 0
      %v255 = vsel %vm235, %v217, 0
      %v258 = vsel %vm235, %v218, 0
      %v261 = vsel %vm235, %v219, 0
      %v264 = vsel %vm235, %v220, 0
      %v267 = vsel %vm235, %v221, 0
      %v270 = vsel %vm235, %v222, 0
      %v273 = vsel %vm235, %v223, 0
      %v276 = vsel %vm235, %v224, 0
      %v279 = vsel %vm235, %v225, 0
      %v282 = vsel %vm235, %v226, 0
      %v285 = vsel %vm235, %v227, 0
      %v288 = vsel %vm235, %v228, 0
      %v291 = vsel %vm235, %v229, 0
      %v294 = vsel %vm235, %v230, 0
      %296 = vmatprep.subr.mxu0 0.0
      %297 = vmatpush1.xpose.msra.mxu0 %v285
      %298 = vmatprep.subr.mxu0 0.0
      %299 = vmatpush1.xpose.msra.mxu0 %v288
      %300 = vmatprep.subr.mxu0 0.0
      %301 = vmatpush1.xpose.msra.mxu0 %v291
      %302 = vmatprep.subr.mxu0 0.0
      %303 = vmatpush1.xpose.msra.mxu0 %v294
      %304 = vmatprep.subr.mxu0 0.0
      %305 = vmatpush1.xpose.msra.mxu0 0.0
      %306 = vmatprep.subr.mxu0 0.0
      %307 = vmatpush1.xpose.msra.mxu0 0.0
      %308 = vmatprep.subr.mxu0 0.0
      %309 = vmatpush1.xpose.msra.mxu0 0.0
      %310 = vmatprep.subr.mxu0 0.0
      %311 = vmatpush1.xpose.msra.mxu0 0.0
      %312 = vmatprep.subr.mxu0 0.0
      %313 = vmatpush1.xpose.msra.mxu0 0.0
      %314 = vmatprep.subr.mxu0 0.0
      %315 = vmatpush1.xpose.msra.mxu0 0.0
      %316 = vmatprep.subr.mxu0 0.0
      %317 = vmatpush1.xpose.msra.mxu0 0.0
      %318 = vmatprep.subr.mxu0 0.0
      %319 = vmatpush1.xpose.msra.mxu0 0.0
      %320 = vmatprep.subr.mxu0 0.0
      %321 = vmatpush1.xpose.msra.mxu0 0.0
      %322 = vmatprep.subr.mxu0 0.0
      %323 = vmatpush1.xpose.msra.mxu0 0.0
      %324 = vmatprep.subr.mxu0 0.0
      %325 = vmatpush1.xpose.msra.mxu0 0.0
      %326 = vmatprep.subr.mxu0 0.0
      %327 = vmatpush1.xpose.msra.mxu0 0.0
      %328 = vmatprep.subr.mxu0 0.0
      %329 = vmatpush1.xpose.msra.mxu0 0.0
      %330 = vmatprep.subr.mxu0 0.0
      %331 = vmatpush1.xpose.msra.mxu0 0.0
      %332 = vmatprep.subr.mxu0 0.0
      %333 = vmatpush1.xpose.msra.mxu0 0.0
      %334 = vmatprep.subr.mxu0 0.0
      %335 = vmatpush1.xpose.msra.mxu0 0.0
      %336 = vmatprep.subr.mxu0 0.0
      %337 = vmatpush1.xpose.msra.mxu0 0.0
      %338 = vmatprep.subr.mxu0 0.0
      %339 = vmatpush1.xpose.msra.mxu0 0.0
      %340 = vmatprep.subr.mxu0 0.0
      %341 = vmatpush1.xpose.msra.mxu0 0.0
      %342 = vmatprep.subr.mxu0 0.0
      %343 = vmatpush1.xpose.msra.mxu0 0.0
      %344 = vmatprep.subr.mxu0 0.0
      %345 = vmatpush1.xpose.msra.mxu0 0.0
      %346 = vmatprep.subr.mxu0 0.0
      %347 = vmatpush1.xpose.msra.mxu0 0.0
      %348 = vmatprep.subr.mxu0 0.0
      %349 = vmatpush1.xpose.msra.mxu0 0.0
      %350 = vmatprep.subr.mxu0 0.0
      %351 = vmatpush1.xpose.msra.mxu0 0.0
      %352 = vmatprep.subr.mxu0 0.0
      %353 = vmatpush1.xpose.msra.mxu0 0.0
      %354 = vmatprep.subr.mxu0 0.0
      %355 = vmatpush1.xpose.msra.mxu0 0.0
      %356 = vmatprep.subr.mxu0 0.0
      %357 = vmatpush1.xpose.msra.mxu0 0.0
      %358 = vmatprep.subr.mxu0 0.0
      %359 = vmatpush1.xpose.msra.mxu0 0.0
      %360 = vmatprep.mubr.f32.mxu0 0.0
      %361 = vmatmul.mubr.f32.gmra.mrb[0].mxu0 %v237
      %v362 = vpop.f32.mrb[0].mxu0
      %v363 = vadd.f32 0.0, %v362
      %v364 = vpop.f32.mrb[0].mxu0
      %365 = vmatprep.mubr.f32.mxu0 0.0
      %366 = vmatmul.mubr.f32.gmra.mrb[0].mxu0 %v240
      %v367 = vpop.f32.mrb[0].mxu0
      %v368 = vadd.f32 0.0, %v367
      %v369 = vpop.f32.mrb[0].mxu0
      %370 = vmatprep.mubr.f32.mxu0 0.0
      %371 = vmatmul.mubr.f32.gmra.mrb[0].mxu0 %v243
      %v372 = vpop.f32.mrb[0].mxu0
      %v373 = vadd.f32 0.0, %v372
      %v374 = vpop.f32.mrb[0].mxu0
      %375 = vmatprep.mubr.f32.mxu0 0.0
      %376 = vmatmul.mubr.f32.gmra.mrb[0].mxu0 %v246
      %v377 = vpop.f32.mrb[0].mxu0
      %v378 = vadd.f32 0.0, %v377
      %v379 = vpop.f32.mrb[0].mxu0
      %380 = vmatprep.mubr.f32.mxu0 0.0
      %381 = vmatmul.mubr.f32.gmra.mrb[0].mxu0 %v249
      %v382 = vpop.f32.mrb[0].mxu0
      %v383 = vadd.f32 0.0, %v382
      %v384 = vpop.f32.mrb[0].mxu0
      %385 = vmatprep.mubr.f32.mxu0 0.0
      %386 = vmatmul.mubr.f32.gmra.mrb[0].mxu0 %v252
      %v387 = vpop.f32.mrb[0].mxu0
      %v388 = vadd.f32 0.0, %v387
      %v389 = vpop.f32.mrb[0].mxu0
      %390 = vmatprep.mubr.f32.mxu0 0.0
      %391 = vmatmul.mubr.f32.gmra.mrb[0].mxu0 %v255
      %v392 = vpop.f32.mrb[0].mxu0
      %v393 = vadd.f32 0.0, %v392
      %v394 = vpop.f32.mrb[0].mxu0
      %395 = vmatprep.mubr.f32.mxu0 0.0
      %396 = vmatmul.mubr.f32.gmra.mrb[0].mxu0 %v258
      %v397 = vpop.f32.mrb[0].mxu0
      %v398 = vadd.f32 0.0, %v397
      %v399 = vpop.f32.mrb[0].mxu0
      %400 = vmatprep.mubr.f32.mxu0 0.0
      %401 = vmatmul.mubr.f32.gmra.mrb[0].mxu0 %v261
      %v402 = vpop.f32.mrb[0].mxu0
      %v403 = vadd.f32 0.0, %v402
      %v404 = vpop.f32.mrb[0].mxu0
      %405 = vmatprep.mubr.f32.mxu0 0.0
      %406 = vmatmul.mubr.f32.gmra.mrb[0].mxu0 %v264
      %v407 = vpop.f32.mrb[0].mxu0
      %v408 = vadd.f32 0.0, %v407
      %v409 = vpop.f32.mrb[0].mxu0
      %410 = vmatprep.mubr.f32.mxu0 0.0
      %411 = vmatmul.mubr.f32.gmra.mrb[0].mxu0 %v267
      %v412 = vpop.f32.mrb[0].mxu0
      %v413 = vadd.f32 0.0, %v412
      %v414 = vpop.f32.mrb[0].mxu0
      %415 = vmatprep.mubr.f32.mxu0 0.0
      %416 = vmatmul.mubr.f32.gmra.mrb[0].mxu0 %v270
      %v417 = vpop.f32.mrb[0].mxu0
      %v418 = vadd.f32 0.0, %v417
      %v419 = vpop.f32.mrb[0].mxu0
      %420 = vmatprep.mubr.f32.mxu0 0.0
      %421 = vmatmul.mubr.f32.gmra.mrb[0].mxu0 %v273
      %v422 = vpop.f32.mrb[0].mxu0
      %v423 = vadd.f32 0.0, %v422
      %v424 = vpop.f32.mrb[0].mxu0
      %425 = vmatprep.mubr.f32.mxu0 0.0
      %426 = vmatmul.mubr.f32.gmra.mrb[0].mxu0 %v276
      %v427 = vpop.f32.mrb[0].mxu0
      %v428 = vadd.f32 0.0, %v427
      %v429 = vpop.f32.mrb[0].mxu0
      %430 = vmatprep.mubr.f32.mxu0 0.0
      %431 = vmatmul.mubr.f32.gmra.mrb[0].mxu0 %v279
      %v432 = vpop.f32.mrb[0].mxu0
      %v433 = vadd.f32 0.0, %v432
      %v434 = vpop.f32.mrb[0].mxu0
      %435 = vmatprep.mubr.f32.mxu0 0.0
      %436 = vmatmul.mubr.f32.gmra.mrb[0].mxu0 %v282
      %v437 = vpop.f32.mrb[0].mxu0
      %v438 = vadd.f32 0.0, %v437
      %v439 = vpop.f32.mrb[0].mxu0
      %440 = vdwg.mxu0
      %v441 = vmul.f32 %v363, 0.35355338
      %v442 = vmul.f32 %v368, 0.35355338
      %v443 = vmul.f32 %v373, 0.35355338
      %v444 = vmul.f32 %v378, 0.35355338
      %v445 = vmul.f32 %v383, 0.35355338
      %v446 = vmul.f32 %v388, 0.35355338
      %v447 = vmul.f32 %v393, 0.35355338
      %v448 = vmul.f32 %v398, 0.35355338
      %v449 = vmul.f32 %v403, 0.35355338
      %v450 = vmul.f32 %v408, 0.35355338
      %v451 = vmul.f32 %v413, 0.35355338
      %v452 = vmul.f32 %v418, 0.35355338
      %v453 = vmul.f32 %v423, 0.35355338
      %v454 = vmul.f32 %v428, 0.35355338
      %v455 = vmul.f32 %v433, 0.35355338
      %v456 = vmul.f32 %v438, 0.35355338
      %vm457 = vcmask 261120
      %v458 = vsel %vm457, %v441, -inf
      %459 = vmax.xlane.f32.xlu0 %v458
      %v460 = vpop.xlane.xlu0 %459
      %v461 = vsel %vm457, %v442, -inf
      %462 = vmax.xlane.f32.xlu0 %v461
      %v463 = vpop.xlane.xlu0 %462
      %v464 = vsel %vm457, %v443, -inf
      %465 = vmax.xlane.f32.xlu0 %v464
      %v466 = vpop.xlane.xlu0 %465
      %v467 = vsel %vm457, %v444, -inf
      %468 = vmax.xlane.f32.xlu0 %v467
      %v469 = vpop.xlane.xlu0 %468
      %v470 = vsel %vm457, %v445, -inf
      %471 = vmax.xlane.f32.xlu0 %v470
      %v472 = vpop.xlane.xlu0 %471
      %v473 = vsel %vm457, %v446, -inf
      %474 = vmax.xlane.f32.xlu0 %v473
      %v475 = vpop.xlane.xlu0 %474
      %v476 = vsel %vm457, %v447, -inf
      %477 = vmax.xlane.f32.xlu0 %v476
      %v478 = vpop.xlane.xlu0 %477
      %v479 = vsel %vm457, %v448, -inf
      %480 = vmax.xlane.f32.xlu0 %v479
      %v481 = vpop.xlane.xlu0 %480
      %v482 = vsel %vm457, %v449, -inf
      %483 = vmax.xlane.f32.xlu0 %v482
      %v484 = vpop.xlane.xlu0 %483
      %v485 = vsel %vm457, %v450, -inf
      %486 = vmax.xlane.f32.xlu0 %v485
      %v487 = vpop.xlane.xlu0 %486
      %v488 = vsel %vm457, %v451, -inf
      %489 = vmax.xlane.f32.xlu0 %v488
      %v490 = vpop.xlane.xlu0 %489
      %v491 = vsel %vm457, %v452, -inf
      %492 = vmax.xlane.f32.xlu0 %v491
      %v493 = vpop.xlane.xlu0 %492
      %v494 = vsel %vm457, %v453, -inf
      %495 = vmax.xlane.f32.xlu0 %v494
      %v496 = vpop.xlane.xlu0 %495
      %v497 = vsel %vm457, %v454, -inf
      %498 = vmax.xlane.f32.xlu0 %v497
      %v499 = vpop.xlane.xlu0 %498
      %v500 = vsel %vm457, %v455, -inf
      %501 = vmax.xlane.f32.xlu0 %v500
      %v502 = vpop.xlane.xlu0 %501
      %v503 = vsel %vm457, %v456, -inf
      %504 = vmax.xlane.f32.xlu0 %v503
      %v505 = vpop.xlane.xlu0 %504
      %v506 = vsub.f32 %v441, %v460
      %v507 = vsub.f32 %v442, %v463
      %v508 = vsub.f32 %v443, %v466
      %v509 = vsub.f32 %v444, %v469
      %v510 = vsub.f32 %v445, %v472
      %v511 = vsub.f32 %v446, %v475
      %v512 = vsub.f32 %v447, %v478
      %v513 = vsub.f32 %v448, %v481
      %v514 = vsub.f32 %v449, %v484
      %v515 = vsub.f32 %v450, %v487
      %v516 = vsub.f32 %v451, %v490
      %v517 = vsub.f32 %v452, %v493
      %v518 = vsub.f32 %v453, %v496
      %v519 = vsub.f32 %v454, %v499
      %v520 = vsub.f32 %v455, %v502
      %v521 = vsub.f32 %v456, %v505
      %v522 = vmul.f32 %v506, 1.442695
      %v523 = vpow.pop %v522
      %v524 = vmul.f32 %v507, 1.442695
      %v525 = vpow.pop %v524
      %v526 = vmul.f32 %v508, 1.442695
      %v527 = vpow.pop %v526
      %v528 = vmul.f32 %v509, 1.442695
      %v529 = vpow.pop %v528
      %v530 = vmul.f32 %v510, 1.442695
      %v531 = vpow.pop %v530
      %v532 = vmul.f32 %v511, 1.442695
      %v533 = vpow.pop %v532
      %v534 = vmul.f32 %v512, 1.442695
      %v535 = vpow.pop %v534
      %v536 = vmul.f32 %v513, 1.442695
      %v537 = vpow.pop %v536
      %v538 = vmul.f32 %v514, 1.442695
      %v539 = vpow.pop %v538
      %v540 = vmul.f32 %v515, 1.442695
      %v541 = vpow.pop %v540
      %v542 = vmul.f32 %v516, 1.442695
      %v543 = vpow.pop %v542
      %v544 = vmul.f32 %v517, 1.442695
      %v545 = vpow.pop %v544
      %v546 = vmul.f32 %v518, 1.442695
      %v547 = vpow.pop %v546
      %v548 = vmul.f32 %v519, 1.442695
      %v549 = vpow.pop %v548
      %v550 = vmul.f32 %v520, 1.442695
      %v551 = vpow.pop %v550
      %v552 = vmul.f32 %v521, 1.442695
      %v553 = vpow.pop %v552
      %v554 = vsel %vm457, %v523, 0.0
      %555 = vadd.xlane.f32.xlu0 %v554
      %v556 = vpop.xlane.xlu0 %555
      %v557 = vsel %vm457, %v525, 0.0
      %558 = vadd.xlane.f32.xlu0 %v557
      %v559 = vpop.xlane.xlu0 %558
      %v560 = vsel %vm457, %v527, 0.0
      %561 = vadd.xlane.f32.xlu0 %v560
      %v562 = vpop.xlane.xlu0 %561
      %v563 = vsel %vm457, %v529, 0.0
      %564 = vadd.xlane.f32.xlu0 %v563
      %v565 = vpop.xlane.xlu0 %564
      %v566 = vsel %vm457, %v531, 0.0
      %567 = vadd.xlane.f32.xlu0 %v566
      %v568 = vpop.xlane.xlu0 %567
      %v569 = vsel %vm457, %v533, 0.0
      %570 = vadd.xlane.f32.xlu0 %v569
      %v571 = vpop.xlane.xlu0 %570
      %v572 = vsel %vm457, %v535, 0.0
      %573 = vadd.xlane.f32.xlu0 %v572
      %v574 = vpop.xlane.xlu0 %573
      %v575 = vsel %vm457, %v537, 0.0
      %576 = vadd.xlane.f32.xlu0 %v575
      %v577 = vpop.xlane.xlu0 %576
      %v578 = vsel %vm457, %v539, 0.0
      %579 = vadd.xlane.f32.xlu0 %v578
      %v580 = vpop.xlane.xlu0 %579
      %v581 = vsel %vm457, %v541, 0.0
      %582 = vadd.xlane.f32.xlu0 %v581
      %v583 = vpop.xlane.xlu0 %582
      %v584 = vsel %vm457, %v543, 0.0
      %585 = vadd.xlane.f32.xlu0 %v584
      %v586 = vpop.xlane.xlu0 %585
      %v587 = vsel %vm457, %v545, 0.0
      %588 = vadd.xlane.f32.xlu0 %v587
      %v589 = vpop.xlane.xlu0 %588
      %v590 = vsel %vm457, %v547, 0.0
      %591 = vadd.xlane.f32.xlu0 %v590
      %v592 = vpop.xlane.xlu0 %591
      %v593 = vsel %vm457, %v549, 0.0
      %594 = vadd.xlane.f32.xlu0 %v593
      %v595 = vpop.xlane.xlu0 %594
      %v596 = vsel %vm457, %v551, 0.0
      %597 = vadd.xlane.f32.xlu0 %v596
      %v598 = vpop.xlane.xlu0 %597
      %v599 = vsel %vm457, %v553, 0.0
      %600 = vadd.xlane.f32.xlu0 %v599
      %v601 = vpop.xlane.xlu0 %600
      %v602 = vrcp.pop %v556
      %v603 = vmul.f32 %v523, %v602
      %v604 = vrcp.pop %v559
      %v605 = vmul.f32 %v525, %v604
      %v606 = vrcp.pop %v562
      %v607 = vmul.f32 %v527, %v606
      %v608 = vrcp.pop %v565
      %v609 = vmul.f32 %v529, %v608
      %v610 = vrcp.pop %v568
      %v611 = vmul.f32 %v531, %v610
      %v612 = vrcp.pop %v571
      %v613 = vmul.f32 %v533, %v612
      %v614 = vrcp.pop %v574
      %v615 = vmul.f32 %v535, %v614
      %v616 = vrcp.pop %v577
      %v617 = vmul.f32 %v537, %v616
      %v618 = vrcp.pop %v580
      %v619 = vmul.f32 %v539, %v618
      %v620 = vrcp.pop %v583
      %v621 = vmul.f32 %v541, %v620
      %v622 = vrcp.pop %v586
      %v623 = vmul.f32 %v543, %v622
      %v624 = vrcp.pop %v589
      %v625 = vmul.f32 %v545, %v624
      %v626 = vrcp.pop %v592
      %v627 = vmul.f32 %v547, %v626
      %v628 = vrcp.pop %v595
      %v629 = vmul.f32 %v549, %v628
      %v630 = vrcp.pop %v598
      %v631 = vmul.f32 %v551, %v630
      %v632 = vrcp.pop %v601
      %v633 = vmul.f32 %v553, %v632
      %v635 = vsel %vm457, %v603, 0
      %v638 = vsel %vm457, %v605, 0
      %v641 = vsel %vm457, %v607, 0
      %v644 = vsel %vm457, %v609, 0
      %v647 = vsel %vm457, %v611, 0
      %v650 = vsel %vm457, %v613, 0
      %v653 = vsel %vm457, %v615, 0
      %v656 = vsel %vm457, %v617, 0
      %v659 = vsel %vm457, %v619, 0
      %v662 = vsel %vm457, %v621, 0
      %v665 = vsel %vm457, %v623, 0
      %v668 = vsel %vm457, %v625, 0
      %v671 = vsel %vm457, %v627, 0
      %v674 = vsel %vm457, %v629, 0
      %v677 = vsel %vm457, %v631, 0
      %v680 = vsel %vm457, %v633, 0
      %682 = vmatprep.subr.mxu0 0.0
      %683 = vmatpush1.msra.mxu0 %v231
      %684 = vmatprep.subr.mxu0 0.0
      %685 = vmatpush1.msra.mxu0 %v232
      %686 = vmatprep.subr.mxu0 0.0
      %687 = vmatpush1.msra.mxu0 %v233
      %688 = vmatprep.subr.mxu0 0.0
      %689 = vmatpush1.msra.mxu0 %v234
      %690 = vmatprep.subr.mxu0 0.0
      %691 = vmatpush1.msra.mxu0 0.0
      %692 = vmatprep.subr.mxu0 0.0
      %693 = vmatpush1.msra.mxu0 0.0
      %694 = vmatprep.subr.mxu0 0.0
      %695 = vmatpush1.msra.mxu0 0.0
      %696 = vmatprep.subr.mxu0 0.0
      %697 = vmatpush1.msra.mxu0 0.0
      %698 = vmatprep.subr.mxu0 0.0
      %699 = vmatpush1.msra.mxu0 0.0
      %700 = vmatprep.subr.mxu0 0.0
      %701 = vmatpush1.msra.mxu0 0.0
      %702 = vmatprep.subr.mxu0 0.0
      %703 = vmatpush1.msra.mxu0 0.0
      %704 = vmatprep.subr.mxu0 0.0
      %705 = vmatpush1.msra.mxu0 0.0
      %706 = vmatprep.subr.mxu0 0.0
      %707 = vmatpush1.msra.mxu0 0.0
      %708 = vmatprep.subr.mxu0 0.0
      %709 = vmatpush1.msra.mxu0 0.0
      %710 = vmatprep.subr.mxu0 0.0
      %711 = vmatpush1.msra.mxu0 0.0
      %712 = vmatprep.subr.mxu0 0.0
      %713 = vmatpush1.msra.mxu0 0.0
      %714 = vmatprep.subr.mxu0 0.0
      %715 = vmatpush1.msra.mxu0 0.0
      %716 = vmatprep.subr.mxu0 0.0
      %717 = vmatpush1.msra.mxu0 0.0
      %718 = vmatprep.subr.mxu0 0.0
      %719 = vmatpush1.msra.mxu0 0.0
      %720 = vmatprep.subr.mxu0 0.0
      %721 = vmatpush1.msra.mxu0 0.0
      %722 = vmatprep.subr.mxu0 0.0
      %723 = vmatpush1.msra.mxu0 0.0
      %724 = vmatprep.subr.mxu0 0.0
      %725 = vmatpush1.msra.mxu0 0.0
      %726 = vmatprep.subr.mxu0 0.0
      %727 = vmatpush1.msra.mxu0 0.0
      %728 = vmatprep.subr.mxu0 0.0
      %729 = vmatpush1.msra.mxu0 0.0
      %730 = vmatprep.subr.mxu0 0.0
      %731 = vmatpush1.msra.mxu0 0.0
      %732 = vmatprep.subr.mxu0 0.0
      %733 = vmatpush1.msra.mxu0 0.0
      %734 = vmatprep.subr.mxu0 0.0
      %735 = vmatpush1.msra.mxu0 0.0
      %736 = vmatprep.subr.mxu0 0.0
      %737 = vmatpush1.msra.mxu0 0.0
      %738 = vmatprep.subr.mxu0 0.0
      %739 = vmatpush1.msra.mxu0 0.0
      %740 = vmatprep.subr.mxu0 0.0
      %741 = vmatpush1.msra.mxu0 0.0
      %742 = vmatprep.subr.mxu0 0.0
      %743 = vmatpush1.msra.mxu0 0.0
      %744 = vmatprep.subr.mxu0 0.0
      %745 = vmatpush1.msra.mxu0 0.0
      %746 = vmatprep.mubr.f32.mxu0 0.0
      %747 = vmatmul.mubr.f32.gmra.mrb[0].mxu0 %v635
      %v748 = vpop.f32.mrb[0].mxu0
      %v749 = vadd.f32 0.0, %v748
      %v750 = vpop.f32.mrb[0].mxu0
      %751 = vmatprep.mubr.f32.mxu0 0.0
      %752 = vmatmul.mubr.f32.gmra.mrb[0].mxu0 %v638
      %v753 = vpop.f32.mrb[0].mxu0
      %v754 = vadd.f32 0.0, %v753
      %v755 = vpop.f32.mrb[0].mxu0
      %756 = vmatprep.mubr.f32.mxu0 0.0
      %757 = vmatmul.mubr.f32.gmra.mrb[0].mxu0 %v641
      %v758 = vpop.f32.mrb[0].mxu0
      %v759 = vadd.f32 0.0, %v758
      %v760 = vpop.f32.mrb[0].mxu0
      %761 = vmatprep.mubr.f32.mxu0 0.0
      %762 = vmatmul.mubr.f32.gmra.mrb[0].mxu0 %v644
      %v763 = vpop.f32.mrb[0].mxu0
      %v764 = vadd.f32 0.0, %v763
      %v765 = vpop.f32.mrb[0].mxu0
      %766 = vmatprep.mubr.f32.mxu0 0.0
      %767 = vmatmul.mubr.f32.gmra.mrb[0].mxu0 %v647
      %v768 = vpop.f32.mrb[0].mxu0
      %v769 = vadd.f32 0.0, %v768
      %v770 = vpop.f32.mrb[0].mxu0
      %771 = vmatprep.mubr.f32.mxu0 0.0
      %772 = vmatmul.mubr.f32.gmra.mrb[0].mxu0 %v650
      %v773 = vpop.f32.mrb[0].mxu0
      %v774 = vadd.f32 0.0, %v773
      %v775 = vpop.f32.mrb[0].mxu0
      %776 = vmatprep.mubr.f32.mxu0 0.0
      %777 = vmatmul.mubr.f32.gmra.mrb[0].mxu0 %v653
      %v778 = vpop.f32.mrb[0].mxu0
      %v779 = vadd.f32 0.0, %v778
      %v780 = vpop.f32.mrb[0].mxu0
      %781 = vmatprep.mubr.f32.mxu0 0.0
      %782 = vmatmul.mubr.f32.gmra.mrb[0].mxu0 %v656
      %v783 = vpop.f32.mrb[0].mxu0
      %v784 = vadd.f32 0.0, %v783
      %v785 = vpop.f32.mrb[0].mxu0
      %786 = vmatprep.mubr.f32.mxu0 0.0
      %787 = vmatmul.mubr.f32.gmra.mrb[0].mxu0 %v659
      %v788 = vpop.f32.mrb[0].mxu0
      %v789 = vadd.f32 0.0, %v788
      %v790 = vpop.f32.mrb[0].mxu0
      %791 = vmatprep.mubr.f32.mxu0 0.0
      %792 = vmatmul.mubr.f32.gmra.mrb[0].mxu0 %v662
      %v793 = vpop.f32.mrb[0].mxu0
      %v794 = vadd.f32 0.0, %v793
      %v795 = vpop.f32.mrb[0].mxu0
      %796 = vmatprep.mubr.f32.mxu0 0.0
      %797 = vmatmul.mubr.f32.gmra.mrb[0].mxu0 %v665
      %v798 = vpop.f32.mrb[0].mxu0
      %v799 = vadd.f32 0.0, %v798
      %v800 = vpop.f32.mrb[0].mxu0
      %801 = vmatprep.mubr.f32.mxu0 0.0
      %802 = vmatmul.mubr.f32.gmra.mrb[0].mxu0 %v668
      %v803 = vpop.f32.mrb[0].mxu0
      %v804 = vadd.f32 0.0, %v803
      %v805 = vpop.f32.mrb[0].mxu0
      %806 = vmatprep.mubr.f32.mxu0 0.0
      %807 = vmatmul.mubr.f32.gmra.mrb[0].mxu0 %v671
      %v808 = vpop.f32.mrb[0].mxu0
      %v809 = vadd.f32 0.0, %v808
      %v810 = vpop.f32.mrb[0].mxu0
      %811 = vmatprep.mubr.f32.mxu0 0.0
      %812 = vmatmul.mubr.f32.gmra.mrb[0].mxu0 %v674
      %v813 = vpop.f32.mrb[0].mxu0
      %v814 = vadd.f32 0.0, %v813
      %v815 = vpop.f32.mrb[0].mxu0
      %816 = vmatprep.mubr.f32.mxu0 0.0
      %817 = vmatmul.mubr.f32.gmra.mrb[0].mxu0 %v677
      %v818 = vpop.f32.mrb[0].mxu0
      %v819 = vadd.f32 0.0, %v818
      %v820 = vpop.f32.mrb[0].mxu0
      %821 = vmatprep.mubr.f32.mxu0 0.0
      %822 = vmatmul.mubr.f32.gmra.mrb[0].mxu0 %v680
      %v823 = vpop.f32.mrb[0].mxu0
      %v824 = vadd.f32 0.0, %v823
      %v825 = vpop.f32.mrb[0].mxu0
      %826 = vdwg.mxu0
      %827 = vrot.lane.b32.xlu0 %v211, 120
      %v828 = vpop.permute.xlu0 %827
      %829 = vrot.lane.b32.xlu0 %v212, 120
      %v830 = vpop.permute.xlu0 %829
      %831 = vrot.lane.b32.xlu0 %v213, 120
      %v832 = vpop.permute.xlu0 %831
      %833 = vrot.lane.b32.xlu0 %v214, 120
      %v834 = vpop.permute.xlu0 %833
      %835 = vrot.lane.b32.xlu0 %v215, 120
      %v836 = vpop.permute.xlu0 %835
      %837 = vrot.lane.b32.xlu0 %v216, 120
      %v838 = vpop.permute.xlu0 %837
      %839 = vrot.lane.b32.xlu0 %v217, 120
      %v840 = vpop.permute.xlu0 %839
      %841 = vrot.lane.b32.xlu0 %v218, 120
      %v842 = vpop.permute.xlu0 %841
      %843 = vrot.lane.b32.xlu0 %v219, 120
      %v844 = vpop.permute.xlu0 %843
      %845 = vrot.lane.b32.xlu0 %v220, 120
      %v846 = vpop.permute.xlu0 %845
      %847 = vrot.lane.b32.xlu0 %v221, 120
      %v848 = vpop.permute.xlu0 %847
      %849 = vrot.lane.b32.xlu0 %v222, 120
      %v850 = vpop.permute.xlu0 %849
      %851 = vrot.lane.b32.xlu0 %v223, 120
      %v852 = vpop.permute.xlu0 %851
      %853 = vrot.lane.b32.xlu0 %v224, 120
      %v854 = vpop.permute.xlu0 %853
      %855 = vrot.lane.b32.xlu0 %v225, 120
      %v856 = vpop.permute.xlu0 %855
      %857 = vrot.lane.b32.xlu0 %v226, 120
      %v858 = vpop.permute.xlu0 %857
      %859 = vrot.lane.b32.xlu0 %v227, 120
      %v860 = vpop.permute.xlu0 %859
      %861 = vrot.lane.b32.xlu0 %v228, 120
      %v862 = vpop.permute.xlu0 %861
      %863 = vrot.lane.b32.xlu0 %v229, 120
      %v864 = vpop.permute.xlu0 %863
      %865 = vrot.lane.b32.xlu0 %v230, 120
      %v866 = vpop.permute.xlu0 %865
      %v867 = vsel %vm235, %v828, 0
      %v869 = vsel %vm235, %v830, 0
      %v871 = vsel %vm235, %v832, 0
      %v873 = vsel %vm235, %v834, 0
      %v875 = vsel %vm235, %v836, 0
      %v877 = vsel %vm235, %v838, 0
      %v879 = vsel %vm235, %v840, 0
      %v881 = vsel %vm235, %v842, 0
      %v883 = vsel %vm235, %v844, 0
      %v885 = vsel %vm235, %v846, 0
      %v887 = vsel %vm235, %v848, 0
      %v889 = vsel %vm235, %v850, 0
      %v891 = vsel %vm235, %v852, 0
      %v893 = vsel %vm235, %v854, 0
      %v895 = vsel %vm235, %v856, 0
      %v897 = vsel %vm235, %v858, 0
      %v899 = vsel %vm235, %v860, 0
      %v901 = vsel %vm235, %v862, 0
      %v903 = vsel %vm235, %v864, 0
      %v905 = vsel %vm235, %v866, 0
      %907 = vmatprep.subr.mxu0 0.0
      %908 = vmatpush1.xpose.msra.mxu0 %v899
      %909 = vmatprep.subr.mxu0 0.0
      %910 = vmatpush1.xpose.msra.mxu0 %v901
      %911 = vmatprep.subr.mxu0 0.0
      %912 = vmatpush1.xpose.msra.mxu0 %v903
      %913 = vmatprep.subr.mxu0 0.0
      %914 = vmatpush1.xpose.msra.mxu0 %v905
      %915 = vmatprep.subr.mxu0 0.0
      %916 = vmatpush1.xpose.msra.mxu0 0.0
      %917 = vmatprep.subr.mxu0 0.0
      %918 = vmatpush1.xpose.msra.mxu0 0.0
      %919 = vmatprep.subr.mxu0 0.0
      %920 = vmatpush1.xpose.msra.mxu0 0.0
      %921 = vmatprep.subr.mxu0 0.0
      %922 = vmatpush1.xpose.msra.mxu0 0.0
      %923 = vmatprep.subr.mxu0 0.0
      %924 = vmatpush1.xpose.msra.mxu0 0.0
      %925 = vmatprep.subr.mxu0 0.0
      %926 = vmatpush1.xpose.msra.mxu0 0.0
      %927 = vmatprep.subr.mxu0 0.0
      %928 = vmatpush1.xpose.msra.mxu0 0.0
      %929 = vmatprep.subr.mxu0 0.0
      %930 = vmatpush1.xpose.msra.mxu0 0.0
      %931 = vmatprep.subr.mxu0 0.0
      %932 = vmatpush1.xpose.msra.mxu0 0.0
      %933 = vmatprep.subr.mxu0 0.0
      %934 = vmatpush1.xpose.msra.mxu0 0.0
      %935 = vmatprep.subr.mxu0 0.0
      %936 = vmatpush1.xpose.msra.mxu0 0.0
      %937 = vmatprep.subr.mxu0 0.0
      %938 = vmatpush1.xpose.msra.mxu0 0.0
      %939 = vmatprep.subr.mxu0 0.0
      %940 = vmatpush1.xpose.msra.mxu0 0.0
      %941 = vmatprep.subr.mxu0 0.0
      %942 = vmatpush1.xpose.msra.mxu0 0.0
      %943 = vmatprep.subr.mxu0 0.0
      %944 = vmatpush1.xpose.msra.mxu0 0.0
      %945 = vmatprep.subr.mxu0 0.0
      %946 = vmatpush1.xpose.msra.mxu0 0.0
      %947 = vmatprep.subr.mxu0 0.0
      %948 = vmatpush1.xpose.msra.mxu0 0.0
      %949 = vmatprep.subr.mxu0 0.0
      %950 = vmatpush1.xpose.msra.mxu0 0.0
      %951 = vmatprep.subr.mxu0 0.0
      %952 = vmatpush1.xpose.msra.mxu0 0.0
      %953 = vmatprep.subr.mxu0 0.0
      %954 = vmatpush1.xpose.msra.mxu0 0.0
      %955 = vmatprep.subr.mxu0 0.0
      %956 = vmatpush1.xpose.msra.mxu0 0.0
      %957 = vmatprep.subr.mxu0 0.0
      %958 = vmatpush1.xpose.msra.mxu0 0.0
      %959 = vmatprep.subr.mxu0 0.0
      %960 = vmatpush1.xpose.msra.mxu0 0.0
      %961 = vmatprep.subr.mxu0 0.0
      %962 = vmatpush1.xpose.msra.mxu0 0.0
      %963 = vmatprep.subr.mxu0 0.0
      %964 = vmatpush1.xpose.msra.mxu0 0.0
      %965 = vmatprep.subr.mxu0 0.0
      %966 = vmatpush1.xpose.msra.mxu0 0.0
      %967 = vmatprep.subr.mxu0 0.0
      %968 = vmatpush1.xpose.msra.mxu0 0.0
      %969 = vmatprep.subr.mxu0 0.0
      %970 = vmatpush1.xpose.msra.mxu0 0.0
      %971 = vmatprep.mubr.f32.mxu0 0.0
      %972 = vmatmul.mubr.f32.gmra.mrb[0].mxu0 %v867
      %v973 = vpop.f32.mrb[0].mxu0
      %v974 = vadd.f32 0.0, %v973
      %v975 = vpop.f32.mrb[0].mxu0
      %976 = vmatprep.mubr.f32.mxu0 0.0
      %977 = vmatmul.mubr.f32.gmra.mrb[0].mxu0 %v869
      %v978 = vpop.f32.mrb[0].mxu0
      %v979 = vadd.f32 0.0, %v978
      %v980 = vpop.f32.mrb[0].mxu0
      %981 = vmatprep.mubr.f32.mxu0 0.0
      %982 = vmatmul.mubr.f32.gmra.mrb[0].mxu0 %v871
      %v983 = vpop.f32.mrb[0].mxu0
      %v984 = vadd.f32 0.0, %v983
      %v985 = vpop.f32.mrb[0].mxu0
      %986 = vmatprep.mubr.f32.mxu0 0.0
      %987 = vmatmul.mubr.f32.gmra.mrb[0].mxu0 %v873
      %v988 = vpop.f32.mrb[0].mxu0
      %v989 = vadd.f32 0.0, %v988
      %v990 = vpop.f32.mrb[0].mxu0
      %991 = vmatprep.mubr.f32.mxu0 0.0
      %992 = vmatmul.mubr.f32.gmra.mrb[0].mxu0 %v875
      %v993 = vpop.f32.mrb[0].mxu0
      %v994 = vadd.f32 0.0, %v993
      %v995 = vpop.f32.mrb[0].mxu0
      %996 = vmatprep.mubr.f32.mxu0 0.0
      %997 = vmatmul.mubr.f32.gmra.mrb[0].mxu0 %v877
      %v998 = vpop.f32.mrb[0].mxu0
      %v999 = vadd.f32 0.0, %v998
      %v1000 = vpop.f32.mrb[0].mxu0
      %1001 = vmatprep.mubr.f32.mxu0 0.0
      %1002 = vmatmul.mubr.f32.gmra.mrb[0].mxu0 %v879
      %v1003 = vpop.f32.mrb[0].mxu0
      %v1004 = vadd.f32 0.0, %v1003
      %v1005 = vpop.f32.mrb[0].mxu0
      %1006 = vmatprep.mubr.f32.mxu0 0.0
      %1007 = vmatmul.mubr.f32.gmra.mrb[0].mxu0 %v881
      %v1008 = vpop.f32.mrb[0].mxu0
      %v1009 = vadd.f32 0.0, %v1008
      %v1010 = vpop.f32.mrb[0].mxu0
      %1011 = vmatprep.mubr.f32.mxu0 0.0
      %1012 = vmatmul.mubr.f32.gmra.mrb[0].mxu0 %v883
      %v1013 = vpop.f32.mrb[0].mxu0
      %v1014 = vadd.f32 0.0, %v1013
      %v1015 = vpop.f32.mrb[0].mxu0
      %1016 = vmatprep.mubr.f32.mxu0 0.0
      %1017 = vmatmul.mubr.f32.gmra.mrb[0].mxu0 %v885
      %v1018 = vpop.f32.mrb[0].mxu0
      %v1019 = vadd.f32 0.0, %v1018
      %v1020 = vpop.f32.mrb[0].mxu0
      %1021 = vmatprep.mubr.f32.mxu0 0.0
      %1022 = vmatmul.mubr.f32.gmra.mrb[0].mxu0 %v887
      %v1023 = vpop.f32.mrb[0].mxu0
      %v1024 = vadd.f32 0.0, %v1023
      %v1025 = vpop.f32.mrb[0].mxu0
      %1026 = vmatprep.mubr.f32.mxu0 0.0
      %1027 = vmatmul.mubr.f32.gmra.mrb[0].mxu0 %v889
      %v1028 = vpop.f32.mrb[0].mxu0
      %v1029 = vadd.f32 0.0, %v1028
      %v1030 = vpop.f32.mrb[0].mxu0
      %1031 = vmatprep.mubr.f32.mxu0 0.0
      %1032 = vmatmul.mubr.f32.gmra.mrb[0].mxu0 %v891
      %v1033 = vpop.f32.mrb[0].mxu0
      %v1034 = vadd.f32 0.0, %v1033
      %v1035 = vpop.f32.mrb[0].mxu0
      %1036 = vmatprep.mubr.f32.mxu0 0.0
      %1037 = vmatmul.mubr.f32.gmra.mrb[0].mxu0 %v893
      %v1038 = vpop.f32.mrb[0].mxu0
      %v1039 = vadd.f32 0.0, %v1038
      %v1040 = vpop.f32.mrb[0].mxu0
      %1041 = vmatprep.mubr.f32.mxu0 0.0
      %1042 = vmatmul.mubr.f32.gmra.mrb[0].mxu0 %v895
      %v1043 = vpop.f32.mrb[0].mxu0
      %v1044 = vadd.f32 0.0, %v1043
      %v1045 = vpop.f32.mrb[0].mxu0
      %1046 = vmatprep.mubr.f32.mxu0 0.0
      %1047 = vmatmul.mubr.f32.gmra.mrb[0].mxu0 %v897
      %v1048 = vpop.f32.mrb[0].mxu0
      %v1049 = vadd.f32 0.0, %v1048
      %v1050 = vpop.f32.mrb[0].mxu0
      %1051 = vdwg.mxu0
      %v1052 = vmul.f32 %v974, 0.35355338
      %v1053 = vmul.f32 %v979, 0.35355338
      %v1054 = vmul.f32 %v984, 0.35355338
      %v1055 = vmul.f32 %v989, 0.35355338
      %v1056 = vmul.f32 %v994, 0.35355338
      %v1057 = vmul.f32 %v999, 0.35355338
      %v1058 = vmul.f32 %v1004, 0.35355338
      %v1059 = vmul.f32 %v1009, 0.35355338
      %v1060 = vmul.f32 %v1014, 0.35355338
      %v1061 = vmul.f32 %v1019, 0.35355338
      %v1062 = vmul.f32 %v1024, 0.35355338
      %v1063 = vmul.f32 %v1029, 0.35355338
      %v1064 = vmul.f32 %v1034, 0.35355338
      %v1065 = vmul.f32 %v1039, 0.35355338
      %v1066 = vmul.f32 %v1044, 0.35355338
      %v1067 = vmul.f32 %v1049, 0.35355338
      %v1068 = vsel %vm457, %v1052, -inf
      %1069 = vmax.xlane.f32.xlu0 %v1068
      %v1070 = vpop.xlane.xlu0 %1069
      %v1071 = vsel %vm457, %v1053, -inf
      %1072 = vmax.xlane.f32.xlu0 %v1071
      %v1073 = vpop.xlane.xlu0 %1072
      %v1074 = vsel %vm457, %v1054, -inf
      %1075 = vmax.xlane.f32.xlu0 %v1074
      %v1076 = vpop.xlane.xlu0 %1075
      %v1077 = vsel %vm457, %v1055, -inf
      %1078 = vmax.xlane.f32.xlu0 %v1077
      %v1079 = vpop.xlane.xlu0 %1078
      %v1080 = vsel %vm457, %v1056, -inf
      %1081 = vmax.xlane.f32.xlu0 %v1080
      %v1082 = vpop.xlane.xlu0 %1081
      %v1083 = vsel %vm457, %v1057, -inf
      %1084 = vmax.xlane.f32.xlu0 %v1083
      %v1085 = vpop.xlane.xlu0 %1084
      %v1086 = vsel %vm457, %v1058, -inf
      %1087 = vmax.xlane.f32.xlu0 %v1086
      %v1088 = vpop.xlane.xlu0 %1087
      %v1089 = vsel %vm457, %v1059, -inf
      %1090 = vmax.xlane.f32.xlu0 %v1089
      %v1091 = vpop.xlane.xlu0 %1090
      %v1092 = vsel %vm457, %v1060, -inf
      %1093 = vmax.xlane.f32.xlu0 %v1092
      %v1094 = vpop.xlane.xlu0 %1093
      %v1095 = vsel %vm457, %v1061, -inf
      %1096 = vmax.xlane.f32.xlu0 %v1095
      %v1097 = vpop.xlane.xlu0 %1096
      %v1098 = vsel %vm457, %v1062, -inf
      %1099 = vmax.xlane.f32.xlu0 %v1098
      %v1100 = vpop.xlane.xlu0 %1099
      %v1101 = vsel %vm457, %v1063, -inf
      %1102 = vmax.xlane.f32.xlu0 %v1101
      %v1103 = vpop.xlane.xlu0 %1102
      %v1104 = vsel %vm457, %v1064, -inf
      %1105 = vmax.xlane.f32.xlu0 %v1104
      %v1106 = vpop.xlane.xlu0 %1105
      %v1107 = vsel %vm457, %v1065, -inf
      %1108 = vmax.xlane.f32.xlu0 %v1107
      %v1109 = vpop.xlane.xlu0 %1108
      %v1110 = vsel %vm457, %v1066, -inf
      %1111 = vmax.xlane.f32.xlu0 %v1110
      %v1112 = vpop.xlane.xlu0 %1111
      %v1113 = vsel %vm457, %v1067, -inf
      %1114 = vmax.xlane.f32.xlu0 %v1113
      %v1115 = vpop.xlane.xlu0 %1114
      %v1116 = vsub.f32 %v1052, %v1070
      %v1117 = vsub.f32 %v1053, %v1073
      %v1118 = vsub.f32 %v1054, %v1076
      %v1119 = vsub.f32 %v1055, %v1079
      %v1120 = vsub.f32 %v1056, %v1082
      %v1121 = vsub.f32 %v1057, %v1085
      %v1122 = vsub.f32 %v1058, %v1088
      %v1123 = vsub.f32 %v1059, %v1091
      %v1124 = vsub.f32 %v1060, %v1094
      %v1125 = vsub.f32 %v1061, %v1097
      %v1126 = vsub.f32 %v1062, %v1100
      %v1127 = vsub.f32 %v1063, %v1103
      %v1128 = vsub.f32 %v1064, %v1106
      %v1129 = vsub.f32 %v1065, %v1109
      %v1130 = vsub.f32 %v1066, %v1112
      %v1131 = vsub.f32 %v1067, %v1115
      %v1132 = vmul.f32 %v1116, 1.442695
      %v1133 = vpow.pop %v1132
      %v1134 = vmul.f32 %v1117, 1.442695
      %v1135 = vpow.pop %v1134
      %v1136 = vmul.f32 %v1118, 1.442695
      %v1137 = vpow.pop %v1136
      %v1138 = vmul.f32 %v1119, 1.442695
      %v1139 = vpow.pop %v1138
      %v1140 = vmul.f32 %v1120, 1.442695
      %v1141 = vpow.pop %v1140
      %v1142 = vmul.f32 %v1121, 1.442695
      %v1143 = vpow.pop %v1142
      %v1144 = vmul.f32 %v1122, 1.442695
      %v1145 = vpow.pop %v1144
      %v1146 = vmul.f32 %v1123, 1.442695
      %v1147 = vpow.pop %v1146
      %v1148 = vmul.f32 %v1124, 1.442695
      %v1149 = vpow.pop %v1148
      %v1150 = vmul.f32 %v1125, 1.442695
      %v1151 = vpow.pop %v1150
      %v1152 = vmul.f32 %v1126, 1.442695
      %v1153 = vpow.pop %v1152
      %v1154 = vmul.f32 %v1127, 1.442695
      %v1155 = vpow.pop %v1154
      %v1156 = vmul.f32 %v1128, 1.442695
      %v1157 = vpow.pop %v1156
      %v1158 = vmul.f32 %v1129, 1.442695
      %v1159 = vpow.pop %v1158
      %v1160 = vmul.f32 %v1130, 1.442695
      %v1161 = vpow.pop %v1160
      %v1162 = vmul.f32 %v1131, 1.442695
      %v1163 = vpow.pop %v1162
      %v1164 = vsel %vm457, %v1133, 0.0
      %1165 = vadd.xlane.f32.xlu0 %v1164
      %v1166 = vpop.xlane.xlu0 %1165
      %v1167 = vsel %vm457, %v1135, 0.0
      %1168 = vadd.xlane.f32.xlu0 %v1167
      %v1169 = vpop.xlane.xlu0 %1168
      %v1170 = vsel %vm457, %v1137, 0.0
      %1171 = vadd.xlane.f32.xlu0 %v1170
      %v1172 = vpop.xlane.xlu0 %1171
      %v1173 = vsel %vm457, %v1139, 0.0
      %1174 = vadd.xlane.f32.xlu0 %v1173
      %v1175 = vpop.xlane.xlu0 %1174
      %v1176 = vsel %vm457, %v1141, 0.0
      %1177 = vadd.xlane.f32.xlu0 %v1176
      %v1178 = vpop.xlane.xlu0 %1177
      %v1179 = vsel %vm457, %v1143, 0.0
      %1180 = vadd.xlane.f32.xlu0 %v1179
      %v1181 = vpop.xlane.xlu0 %1180
      %v1182 = vsel %vm457, %v1145, 0.0
      %1183 = vadd.xlane.f32.xlu0 %v1182
      %v1184 = vpop.xlane.xlu0 %1183
      %v1185 = vsel %vm457, %v1147, 0.0
      %1186 = vadd.xlane.f32.xlu0 %v1185
      %v1187 = vpop.xlane.xlu0 %1186
      %v1188 = vsel %vm457, %v1149, 0.0
      %1189 = vadd.xlane.f32.xlu0 %v1188
      %v1190 = vpop.xlane.xlu0 %1189
      %v1191 = vsel %vm457, %v1151, 0.0
      %1192 = vadd.xlane.f32.xlu0 %v1191
      %v1193 = vpop.xlane.xlu0 %1192
      %v1194 = vsel %vm457, %v1153, 0.0
      %1195 = vadd.xlane.f32.xlu0 %v1194
      %v1196 = vpop.xlane.xlu0 %1195
      %v1197 = vsel %vm457, %v1155, 0.0
      %1198 = vadd.xlane.f32.xlu0 %v1197
      %v1199 = vpop.xlane.xlu0 %1198
      %v1200 = vsel %vm457, %v1157, 0.0
      %1201 = vadd.xlane.f32.xlu0 %v1200
      %v1202 = vpop.xlane.xlu0 %1201
      %v1203 = vsel %vm457, %v1159, 0.0
      %1204 = vadd.xlane.f32.xlu0 %v1203
      %v1205 = vpop.xlane.xlu0 %1204
      %v1206 = vsel %vm457, %v1161, 0.0
      %1207 = vadd.xlane.f32.xlu0 %v1206
      %v1208 = vpop.xlane.xlu0 %1207
      %v1209 = vsel %vm457, %v1163, 0.0
      %1210 = vadd.xlane.f32.xlu0 %v1209
      %v1211 = vpop.xlane.xlu0 %1210
      %v1212 = vrcp.pop %v1166
      %v1213 = vmul.f32 %v1133, %v1212
      %v1214 = vrcp.pop %v1169
      %v1215 = vmul.f32 %v1135, %v1214
      %v1216 = vrcp.pop %v1172
      %v1217 = vmul.f32 %v1137, %v1216
      %v1218 = vrcp.pop %v1175
      %v1219 = vmul.f32 %v1139, %v1218
      %v1220 = vrcp.pop %v1178
      %v1221 = vmul.f32 %v1141, %v1220
      %v1222 = vrcp.pop %v1181
      %v1223 = vmul.f32 %v1143, %v1222
      %v1224 = vrcp.pop %v1184
      %v1225 = vmul.f32 %v1145, %v1224
      %v1226 = vrcp.pop %v1187
      %v1227 = vmul.f32 %v1147, %v1226
      %v1228 = vrcp.pop %v1190
      %v1229 = vmul.f32 %v1149, %v1228
      %v1230 = vrcp.pop %v1193
      %v1231 = vmul.f32 %v1151, %v1230
      %v1232 = vrcp.pop %v1196
      %v1233 = vmul.f32 %v1153, %v1232
      %v1234 = vrcp.pop %v1199
      %v1235 = vmul.f32 %v1155, %v1234
      %v1236 = vrcp.pop %v1202
      %v1237 = vmul.f32 %v1157, %v1236
      %v1238 = vrcp.pop %v1205
      %v1239 = vmul.f32 %v1159, %v1238
      %v1240 = vrcp.pop %v1208
      %v1241 = vmul.f32 %v1161, %v1240
      %v1242 = vrcp.pop %v1211
      %v1243 = vmul.f32 %v1163, %v1242
      %1248 = vrot.lane.b32.xlu0 %v231, 120
      %v1249 = vpop.permute.xlu0 %1248
      %1250 = vrot.lane.b32.xlu0 %v232, 120
      %v1251 = vpop.permute.xlu0 %1250
      %1252 = vrot.lane.b32.xlu0 %v233, 120
      %v1253 = vpop.permute.xlu0 %1252
      %1254 = vrot.lane.b32.xlu0 %v234, 120
      %v1255 = vpop.permute.xlu0 %1254
      %v1261 = vsel %vm457, %v1213, 0
      %v1264 = vsel %vm457, %v1215, 0
      %v1267 = vsel %vm457, %v1217, 0
      %v1270 = vsel %vm457, %v1219, 0
      %v1273 = vsel %vm457, %v1221, 0
      %v1276 = vsel %vm457, %v1223, 0
      %v1279 = vsel %vm457, %v1225, 0
      %v1282 = vsel %vm457, %v1227, 0
      %v1285 = vsel %vm457, %v1229, 0
      %v1288 = vsel %vm457, %v1231, 0
      %v1291 = vsel %vm457, %v1233, 0
      %v1294 = vsel %vm457, %v1235, 0
      %v1297 = vsel %vm457, %v1237, 0
      %v1300 = vsel %vm457, %v1239, 0
      %v1303 = vsel %vm457, %v1241, 0
      %v1306 = vsel %vm457, %v1243, 0
      %1308 = vmatprep.subr.mxu0 0.0
      %1309 = vmatpush1.msra.mxu0 %v1249
      %1310 = vmatprep.subr.mxu0 0.0
      %1311 = vmatpush1.msra.mxu0 %v1251
      %1312 = vmatprep.subr.mxu0 0.0
      %1313 = vmatpush1.msra.mxu0 %v1253
      %1314 = vmatprep.subr.mxu0 0.0
      %1315 = vmatpush1.msra.mxu0 %v1255
      %1316 = vmatprep.subr.mxu0 0.0
      %1317 = vmatpush1.msra.mxu0 0.0
      %1318 = vmatprep.subr.mxu0 0.0
      %1319 = vmatpush1.msra.mxu0 0.0
      %1320 = vmatprep.subr.mxu0 0.0
      %1321 = vmatpush1.msra.mxu0 0.0
      %1322 = vmatprep.subr.mxu0 0.0
      %1323 = vmatpush1.msra.mxu0 0.0
      %1324 = vmatprep.subr.mxu0 0.0
      %1325 = vmatpush1.msra.mxu0 0.0
      %1326 = vmatprep.subr.mxu0 0.0
      %1327 = vmatpush1.msra.mxu0 0.0
      %1328 = vmatprep.subr.mxu0 0.0
      %1329 = vmatpush1.msra.mxu0 0.0
      %1330 = vmatprep.subr.mxu0 0.0
      %1331 = vmatpush1.msra.mxu0 0.0
      %1332 = vmatprep.subr.mxu0 0.0
      %1333 = vmatpush1.msra.mxu0 0.0
      %1334 = vmatprep.subr.mxu0 0.0
      %1335 = vmatpush1.msra.mxu0 0.0
      %1336 = vmatprep.subr.mxu0 0.0
      %1337 = vmatpush1.msra.mxu0 0.0
      %1338 = vmatprep.subr.mxu0 0.0
      %1339 = vmatpush1.msra.mxu0 0.0
      %1340 = vmatprep.subr.mxu0 0.0
      %1341 = vmatpush1.msra.mxu0 0.0
      %1342 = vmatprep.subr.mxu0 0.0
      %1343 = vmatpush1.msra.mxu0 0.0
      %1344 = vmatprep.subr.mxu0 0.0
      %1345 = vmatpush1.msra.mxu0 0.0
      %1346 = vmatprep.subr.mxu0 0.0
      %1347 = vmatpush1.msra.mxu0 0.0
      %1348 = vmatprep.subr.mxu0 0.0
      %1349 = vmatpush1.msra.mxu0 0.0
      %1350 = vmatprep.subr.mxu0 0.0
      %1351 = vmatpush1.msra.mxu0 0.0
      %1352 = vmatprep.subr.mxu0 0.0
      %1353 = vmatpush1.msra.mxu0 0.0
      %1354 = vmatprep.subr.mxu0 0.0
      %1355 = vmatpush1.msra.mxu0 0.0
      %1356 = vmatprep.subr.mxu0 0.0
      %1357 = vmatpush1.msra.mxu0 0.0
      %1358 = vmatprep.subr.mxu0 0.0
      %1359 = vmatpush1.msra.mxu0 0.0
      %1360 = vmatprep.subr.mxu0 0.0
      %1361 = vmatpush1.msra.mxu0 0.0
      %1362 = vmatprep.subr.mxu0 0.0
      %1363 = vmatpush1.msra.mxu0 0.0
      %1364 = vmatprep.subr.mxu0 0.0
      %1365 = vmatpush1.msra.mxu0 0.0
      %1366 = vmatprep.subr.mxu0 0.0
      %1367 = vmatpush1.msra.mxu0 0.0
      %1368 = vmatprep.subr.mxu0 0.0
      %1369 = vmatpush1.msra.mxu0 0.0
      %1370 = vmatprep.subr.mxu0 0.0
      %1371 = vmatpush1.msra.mxu0 0.0
      %1372 = vmatprep.mubr.f32.mxu0 0.0
      %1373 = vmatmul.mubr.f32.gmra.mrb[0].mxu0 %v1261
      %v1374 = vpop.f32.mrb[0].mxu0
      %v1375 = vadd.f32 0.0, %v1374
      %v1376 = vpop.f32.mrb[0].mxu0
      %1377 = vmatprep.mubr.f32.mxu0 0.0
      %1378 = vmatmul.mubr.f32.gmra.mrb[0].mxu0 %v1264
      %v1379 = vpop.f32.mrb[0].mxu0
      %v1380 = vadd.f32 0.0, %v1379
      %v1381 = vpop.f32.mrb[0].mxu0
      %1382 = vmatprep.mubr.f32.mxu0 0.0
      %1383 = vmatmul.mubr.f32.gmra.mrb[0].mxu0 %v1267
      %v1384 = vpop.f32.mrb[0].mxu0
      %v1385 = vadd.f32 0.0, %v1384
      %v1386 = vpop.f32.mrb[0].mxu0
      %1387 = vmatprep.mubr.f32.mxu0 0.0
      %1388 = vmatmul.mubr.f32.gmra.mrb[0].mxu0 %v1270
      %v1389 = vpop.f32.mrb[0].mxu0
      %v1390 = vadd.f32 0.0, %v1389
      %v1391 = vpop.f32.mrb[0].mxu0
      %1392 = vmatprep.mubr.f32.mxu0 0.0
      %1393 = vmatmul.mubr.f32.gmra.mrb[0].mxu0 %v1273
      %v1394 = vpop.f32.mrb[0].mxu0
      %v1395 = vadd.f32 0.0, %v1394
      %v1396 = vpop.f32.mrb[0].mxu0
      %1397 = vmatprep.mubr.f32.mxu0 0.0
      %1398 = vmatmul.mubr.f32.gmra.mrb[0].mxu0 %v1276
      %v1399 = vpop.f32.mrb[0].mxu0
      %v1400 = vadd.f32 0.0, %v1399
      %v1401 = vpop.f32.mrb[0].mxu0
      %1402 = vmatprep.mubr.f32.mxu0 0.0
      %1403 = vmatmul.mubr.f32.gmra.mrb[0].mxu0 %v1279
      %v1404 = vpop.f32.mrb[0].mxu0
      %v1405 = vadd.f32 0.0, %v1404
      %v1406 = vpop.f32.mrb[0].mxu0
      %1407 = vmatprep.mubr.f32.mxu0 0.0
      %1408 = vmatmul.mubr.f32.gmra.mrb[0].mxu0 %v1282
      %v1409 = vpop.f32.mrb[0].mxu0
      %v1410 = vadd.f32 0.0, %v1409
      %v1411 = vpop.f32.mrb[0].mxu0
      %1412 = vmatprep.mubr.f32.mxu0 0.0
      %1413 = vmatmul.mubr.f32.gmra.mrb[0].mxu0 %v1285
      %v1414 = vpop.f32.mrb[0].mxu0
      %v1415 = vadd.f32 0.0, %v1414
      %v1416 = vpop.f32.mrb[0].mxu0
      %1417 = vmatprep.mubr.f32.mxu0 0.0
      %1418 = vmatmul.mubr.f32.gmra.mrb[0].mxu0 %v1288
      %v1419 = vpop.f32.mrb[0].mxu0
      %v1420 = vadd.f32 0.0, %v1419
      %v1421 = vpop.f32.mrb[0].mxu0
      %1422 = vmatprep.mubr.f32.mxu0 0.0
      %1423 = vmatmul.mubr.f32.gmra.mrb[0].mxu0 %v1291
      %v1424 = vpop.f32.mrb[0].mxu0
      %v1425 = vadd.f32 0.0, %v1424
      %v1426 = vpop.f32.mrb[0].mxu0
      %1427 = vmatprep.mubr.f32.mxu0 0.0
      %1428 = vmatmul.mubr.f32.gmra.mrb[0].mxu0 %v1294
      %v1429 = vpop.f32.mrb[0].mxu0
      %v1430 = vadd.f32 0.0, %v1429
      %v1431 = vpop.f32.mrb[0].mxu0
      %1432 = vmatprep.mubr.f32.mxu0 0.0
      %1433 = vmatmul.mubr.f32.gmra.mrb[0].mxu0 %v1297
      %v1434 = vpop.f32.mrb[0].mxu0
      %v1435 = vadd.f32 0.0, %v1434
      %v1436 = vpop.f32.mrb[0].mxu0
      %1437 = vmatprep.mubr.f32.mxu0 0.0
      %1438 = vmatmul.mubr.f32.gmra.mrb[0].mxu0 %v1300
      %v1439 = vpop.f32.mrb[0].mxu0
      %v1440 = vadd.f32 0.0, %v1439
      %v1441 = vpop.f32.mrb[0].mxu0
      %1442 = vmatprep.mubr.f32.mxu0 0.0
      %1443 = vmatmul.mubr.f32.gmra.mrb[0].mxu0 %v1303
      %v1444 = vpop.f32.mrb[0].mxu0
      %v1445 = vadd.f32 0.0, %v1444
      %v1446 = vpop.f32.mrb[0].mxu0
      %1447 = vmatprep.mubr.f32.mxu0 0.0
      %1448 = vmatmul.mubr.f32.gmra.mrb[0].mxu0 %v1306
      %v1449 = vpop.f32.mrb[0].mxu0
      %v1450 = vadd.f32 0.0, %v1449
      %v1451 = vpop.f32.mrb[0].mxu0
      %1452 = vdwg.mxu0
      %1453 = vrot.lane.b32.xlu0 %v211, 112
      %v1454 = vpop.permute.xlu0 %1453
      %1455 = vrot.lane.b32.xlu0 %v212, 112
      %v1456 = vpop.permute.xlu0 %1455
      %1457 = vrot.lane.b32.xlu0 %v213, 112
      %v1458 = vpop.permute.xlu0 %1457
      %1459 = vrot.lane.b32.xlu0 %v214, 112
      %v1460 = vpop.permute.xlu0 %1459
      %1461 = vrot.lane.b32.xlu0 %v215, 112
      %v1462 = vpop.permute.xlu0 %1461
      %1463 = vrot.lane.b32.xlu0 %v216, 112
      %v1464 = vpop.permute.xlu0 %1463
      %1465 = vrot.lane.b32.xlu0 %v217, 112
      %v1466 = vpop.permute.xlu0 %1465
      %1467 = vrot.lane.b32.xlu0 %v218, 112
      %v1468 = vpop.permute.xlu0 %1467
      %1469 = vrot.lane.b32.xlu0 %v219, 112
      %v1470 = vpop.permute.xlu0 %1469
      %1471 = vrot.lane.b32.xlu0 %v220, 112
      %v1472 = vpop.permute.xlu0 %1471
      %1473 = vrot.lane.b32.xlu0 %v221, 112
      %v1474 = vpop.permute.xlu0 %1473
      %1475 = vrot.lane.b32.xlu0 %v222, 112
      %v1476 = vpop.permute.xlu0 %1475
      %1477 = vrot.lane.b32.xlu0 %v223, 112
      %v1478 = vpop.permute.xlu0 %1477
      %1479 = vrot.lane.b32.xlu0 %v224, 112
      %v1480 = vpop.permute.xlu0 %1479
      %1481 = vrot.lane.b32.xlu0 %v225, 112
      %v1482 = vpop.permute.xlu0 %1481
      %1483 = vrot.lane.b32.xlu0 %v226, 112
      %v1484 = vpop.permute.xlu0 %1483
      %1485 = vrot.lane.b32.xlu0 %v227, 112
      %v1486 = vpop.permute.xlu0 %1485
      %1487 = vrot.lane.b32.xlu0 %v228, 112
      %v1488 = vpop.permute.xlu0 %1487
      %1489 = vrot.lane.b32.xlu0 %v229, 112
      %v1490 = vpop.permute.xlu0 %1489
      %1491 = vrot.lane.b32.xlu0 %v230, 112
      %v1492 = vpop.permute.xlu0 %1491
      %v1493 = vsel %vm235, %v1454, 0
      %v1495 = vsel %vm235, %v1456, 0
      %v1497 = vsel %vm235, %v1458, 0
      %v1499 = vsel %vm235, %v1460, 0
      %v1501 = vsel %vm235, %v1462, 0
      %v1503 = vsel %vm235, %v1464, 0
      %v1505 = vsel %vm235, %v1466, 0
      %v1507 = vsel %vm235, %v1468, 0
      %v1509 = vsel %vm235, %v1470, 0
      %v1511 = vsel %vm235, %v1472, 0
      %v1513 = vsel %vm235, %v1474, 0
      %v1515 = vsel %vm235, %v1476, 0
      %v1517 = vsel %vm235, %v1478, 0
      %v1519 = vsel %vm235, %v1480, 0
      %v1521 = vsel %vm235, %v1482, 0
      %v1523 = vsel %vm235, %v1484, 0
      %v1525 = vsel %vm235, %v1486, 0
      %v1527 = vsel %vm235, %v1488, 0
      %v1529 = vsel %vm235, %v1490, 0
      %v1531 = vsel %vm235, %v1492, 0
      %1533 = vmatprep.subr.mxu0 0.0
      %1534 = vmatpush1.xpose.msra.mxu0 %v1525
      %1535 = vmatprep.subr.mxu0 0.0
      %1536 = vmatpush1.xpose.msra.mxu0 %v1527
      %1537 = vmatprep.subr.mxu0 0.0
      %1538 = vmatpush1.xpose.msra.mxu0 %v1529
      %1539 = vmatprep.subr.mxu0 0.0
      %1540 = vmatpush1.xpose.msra.mxu0 %v1531
      %1541 = vmatprep.subr.mxu0 0.0
      %1542 = vmatpush1.xpose.msra.mxu0 0.0
      %1543 = vmatprep.subr.mxu0 0.0
      %1544 = vmatpush1.xpose.msra.mxu0 0.0
      %1545 = vmatprep.subr.mxu0 0.0
      %1546 = vmatpush1.xpose.msra.mxu0 0.0
      %1547 = vmatprep.subr.mxu0 0.0
      %1548 = vmatpush1.xpose.msra.mxu0 0.0
      %1549 = vmatprep.subr.mxu0 0.0
      %1550 = vmatpush1.xpose.msra.mxu0 0.0
      %1551 = vmatprep.subr.mxu0 0.0
      %1552 = vmatpush1.xpose.msra.mxu0 0.0
      %1553 = vmatprep.subr.mxu0 0.0
      %1554 = vmatpush1.xpose.msra.mxu0 0.0
      %1555 = vmatprep.subr.mxu0 0.0
      %1556 = vmatpush1.xpose.msra.mxu0 0.0
      %1557 = vmatprep.subr.mxu0 0.0
      %1558 = vmatpush1.xpose.msra.mxu0 0.0
      %1559 = vmatprep.subr.mxu0 0.0
      %1560 = vmatpush1.xpose.msra.mxu0 0.0
      %1561 = vmatprep.subr.mxu0 0.0
      %1562 = vmatpush1.xpose.msra.mxu0 0.0
      %1563 = vmatprep.subr.mxu0 0.0
      %1564 = vmatpush1.xpose.msra.mxu0 0.0
      %1565 = vmatprep.subr.mxu0 0.0
      %1566 = vmatpush1.xpose.msra.mxu0 0.0
      %1567 = vmatprep.subr.mxu0 0.0
      %1568 = vmatpush1.xpose.msra.mxu0 0.0
      %1569 = vmatprep.subr.mxu0 0.0
      %1570 = vmatpush1.xpose.msra.mxu0 0.0
      %1571 = vmatprep.subr.mxu0 0.0
      %1572 = vmatpush1.xpose.msra.mxu0 0.0
      %1573 = vmatprep.subr.mxu0 0.0
      %1574 = vmatpush1.xpose.msra.mxu0 0.0
      %1575 = vmatprep.subr.mxu0 0.0
      %1576 = vmatpush1.xpose.msra.mxu0 0.0
      %1577 = vmatprep.subr.mxu0 0.0
      %1578 = vmatpush1.xpose.msra.mxu0 0.0
      %1579 = vmatprep.subr.mxu0 0.0
      %1580 = vmatpush1.xpose.msra.mxu0 0.0
      %1581 = vmatprep.subr.mxu0 0.0
      %1582 = vmatpush1.xpose.msra.mxu0 0.0
      %1583 = vmatprep.subr.mxu0 0.0
      %1584 = vmatpush1.xpose.msra.mxu0 0.0
      %1585 = vmatprep.subr.mxu0 0.0
      %1586 = vmatpush1.xpose.msra.mxu0 0.0
      %1587 = vmatprep.subr.mxu0 0.0
      %1588 = vmatpush1.xpose.msra.mxu0 0.0
      %1589 = vmatprep.subr.mxu0 0.0
      %1590 = vmatpush1.xpose.msra.mxu0 0.0
      %1591 = vmatprep.subr.mxu0 0.0
      %1592 = vmatpush1.xpose.msra.mxu0 0.0
      %1593 = vmatprep.subr.mxu0 0.0
      %1594 = vmatpush1.xpose.msra.mxu0 0.0
      %1595 = vmatprep.subr.mxu0 0.0
      %1596 = vmatpush1.xpose.msra.mxu0 0.0
      %1597 = vmatprep.mubr.f32.mxu0 0.0
      %1598 = vmatmul.mubr.f32.gmra.mrb[0].mxu0 %v1493
      %v1599 = vpop.f32.mrb[0].mxu0
      %v1600 = vadd.f32 0.0, %v1599
      %v1601 = vpop.f32.mrb[0].mxu0
      %1602 = vmatprep.mubr.f32.mxu0 0.0
      %1603 = vmatmul.mubr.f32.gmra.mrb[0].mxu0 %v1495
      %v1604 = vpop.f32.mrb[0].mxu0
      %v1605 = vadd.f32 0.0, %v1604
      %v1606 = vpop.f32.mrb[0].mxu0
      %1607 = vmatprep.mubr.f32.mxu0 0.0
      %1608 = vmatmul.mubr.f32.gmra.mrb[0].mxu0 %v1497
      %v1609 = vpop.f32.mrb[0].mxu0
      %v1610 = vadd.f32 0.0, %v1609
      %v1611 = vpop.f32.mrb[0].mxu0
      %1612 = vmatprep.mubr.f32.mxu0 0.0
      %1613 = vmatmul.mubr.f32.gmra.mrb[0].mxu0 %v1499
      %v1614 = vpop.f32.mrb[0].mxu0
      %v1615 = vadd.f32 0.0, %v1614
      %v1616 = vpop.f32.mrb[0].mxu0
      %1617 = vmatprep.mubr.f32.mxu0 0.0
      %1618 = vmatmul.mubr.f32.gmra.mrb[0].mxu0 %v1501
      %v1619 = vpop.f32.mrb[0].mxu0
      %v1620 = vadd.f32 0.0, %v1619
      %v1621 = vpop.f32.mrb[0].mxu0
      %1622 = vmatprep.mubr.f32.mxu0 0.0
      %1623 = vmatmul.mubr.f32.gmra.mrb[0].mxu0 %v1503
      %v1624 = vpop.f32.mrb[0].mxu0
      %v1625 = vadd.f32 0.0, %v1624
      %v1626 = vpop.f32.mrb[0].mxu0
      %1627 = vmatprep.mubr.f32.mxu0 0.0
      %1628 = vmatmul.mubr.f32.gmra.mrb[0].mxu0 %v1505
      %v1629 = vpop.f32.mrb[0].mxu0
      %v1630 = vadd.f32 0.0, %v1629
      %v1631 = vpop.f32.mrb[0].mxu0
      %1632 = vmatprep.mubr.f32.mxu0 0.0
      %1633 = vmatmul.mubr.f32.gmra.mrb[0].mxu0 %v1507
      %v1634 = vpop.f32.mrb[0].mxu0
      %v1635 = vadd.f32 0.0, %v1634
      %v1636 = vpop.f32.mrb[0].mxu0
      %1637 = vmatprep.mubr.f32.mxu0 0.0
      %1638 = vmatmul.mubr.f32.gmra.mrb[0].mxu0 %v1509
      %v1639 = vpop.f32.mrb[0].mxu0
      %v1640 = vadd.f32 0.0, %v1639
      %v1641 = vpop.f32.mrb[0].mxu0
      %1642 = vmatprep.mubr.f32.mxu0 0.0
      %1643 = vmatmul.mubr.f32.gmra.mrb[0].mxu0 %v1511
      %v1644 = vpop.f32.mrb[0].mxu0
      %v1645 = vadd.f32 0.0, %v1644
      %v1646 = vpop.f32.mrb[0].mxu0
      %1647 = vmatprep.mubr.f32.mxu0 0.0
      %1648 = vmatmul.mubr.f32.gmra.mrb[0].mxu0 %v1513
      %v1649 = vpop.f32.mrb[0].mxu0
      %v1650 = vadd.f32 0.0, %v1649
      %v1651 = vpop.f32.mrb[0].mxu0
      %1652 = vmatprep.mubr.f32.mxu0 0.0
      %1653 = vmatmul.mubr.f32.gmra.mrb[0].mxu0 %v1515
      %v1654 = vpop.f32.mrb[0].mxu0
      %v1655 = vadd.f32 0.0, %v1654
      %v1656 = vpop.f32.mrb[0].mxu0
      %1657 = vmatprep.mubr.f32.mxu0 0.0
      %1658 = vmatmul.mubr.f32.gmra.mrb[0].mxu0 %v1517
      %v1659 = vpop.f32.mrb[0].mxu0
      %v1660 = vadd.f32 0.0, %v1659
      %v1661 = vpop.f32.mrb[0].mxu0
      %1662 = vmatprep.mubr.f32.mxu0 0.0
      %1663 = vmatmul.mubr.f32.gmra.mrb[0].mxu0 %v1519
      %v1664 = vpop.f32.mrb[0].mxu0
      %v1665 = vadd.f32 0.0, %v1664
      %v1666 = vpop.f32.mrb[0].mxu0
      %1667 = vmatprep.mubr.f32.mxu0 0.0
      %1668 = vmatmul.mubr.f32.gmra.mrb[0].mxu0 %v1521
      %v1669 = vpop.f32.mrb[0].mxu0
      %v1670 = vadd.f32 0.0, %v1669
      %v1671 = vpop.f32.mrb[0].mxu0
      %1672 = vmatprep.mubr.f32.mxu0 0.0
      %1673 = vmatmul.mubr.f32.gmra.mrb[0].mxu0 %v1523
      %v1674 = vpop.f32.mrb[0].mxu0
      %v1675 = vadd.f32 0.0, %v1674
      %v1676 = vpop.f32.mrb[0].mxu0
      %1677 = vdwg.mxu0
      %v1678 = vmul.f32 %v1600, 0.35355338
      %v1679 = vmul.f32 %v1605, 0.35355338
      %v1680 = vmul.f32 %v1610, 0.35355338
      %v1681 = vmul.f32 %v1615, 0.35355338
      %v1682 = vmul.f32 %v1620, 0.35355338
      %v1683 = vmul.f32 %v1625, 0.35355338
      %v1684 = vmul.f32 %v1630, 0.35355338
      %v1685 = vmul.f32 %v1635, 0.35355338
      %v1686 = vmul.f32 %v1640, 0.35355338
      %v1687 = vmul.f32 %v1645, 0.35355338
      %v1688 = vmul.f32 %v1650, 0.35355338
      %v1689 = vmul.f32 %v1655, 0.35355338
      %v1690 = vmul.f32 %v1660, 0.35355338
      %v1691 = vmul.f32 %v1665, 0.35355338
      %v1692 = vmul.f32 %v1670, 0.35355338
      %v1693 = vmul.f32 %v1675, 0.35355338
      %v1694 = vsel %vm457, %v1678, -inf
      %1695 = vmax.xlane.f32.xlu0 %v1694
      %v1696 = vpop.xlane.xlu0 %1695
      %v1697 = vsel %vm457, %v1679, -inf
      %1698 = vmax.xlane.f32.xlu0 %v1697
      %v1699 = vpop.xlane.xlu0 %1698
      %v1700 = vsel %vm457, %v1680, -inf
      %1701 = vmax.xlane.f32.xlu0 %v1700
      %v1702 = vpop.xlane.xlu0 %1701
      %v1703 = vsel %vm457, %v1681, -inf
      %1704 = vmax.xlane.f32.xlu0 %v1703
      %v1705 = vpop.xlane.xlu0 %1704
      %v1706 = vsel %vm457, %v1682, -inf
      %1707 = vmax.xlane.f32.xlu0 %v1706
      %v1708 = vpop.xlane.xlu0 %1707
      %v1709 = vsel %vm457, %v1683, -inf
      %1710 = vmax.xlane.f32.xlu0 %v1709
      %v1711 = vpop.xlane.xlu0 %1710
      %v1712 = vsel %vm457, %v1684, -inf
      %1713 = vmax.xlane.f32.xlu0 %v1712
      %v1714 = vpop.xlane.xlu0 %1713
      %v1715 = vsel %vm457, %v1685, -inf
      %1716 = vmax.xlane.f32.xlu0 %v1715
      %v1717 = vpop.xlane.xlu0 %1716
      %v1718 = vsel %vm457, %v1686, -inf
      %1719 = vmax.xlane.f32.xlu0 %v1718
      %v1720 = vpop.xlane.xlu0 %1719
      %v1721 = vsel %vm457, %v1687, -inf
      %1722 = vmax.xlane.f32.xlu0 %v1721
      %v1723 = vpop.xlane.xlu0 %1722
      %v1724 = vsel %vm457, %v1688, -inf
      %1725 = vmax.xlane.f32.xlu0 %v1724
      %v1726 = vpop.xlane.xlu0 %1725
      %v1727 = vsel %vm457, %v1689, -inf
      %1728 = vmax.xlane.f32.xlu0 %v1727
      %v1729 = vpop.xlane.xlu0 %1728
      %v1730 = vsel %vm457, %v1690, -inf
      %1731 = vmax.xlane.f32.xlu0 %v1730
      %v1732 = vpop.xlane.xlu0 %1731
      %v1733 = vsel %vm457, %v1691, -inf
      %1734 = vmax.xlane.f32.xlu0 %v1733
      %v1735 = vpop.xlane.xlu0 %1734
      %v1736 = vsel %vm457, %v1692, -inf
      %1737 = vmax.xlane.f32.xlu0 %v1736
      %v1738 = vpop.xlane.xlu0 %1737
      %v1739 = vsel %vm457, %v1693, -inf
      %1740 = vmax.xlane.f32.xlu0 %v1739
      %v1741 = vpop.xlane.xlu0 %1740
      %v1742 = vsub.f32 %v1678, %v1696
      %v1743 = vsub.f32 %v1679, %v1699
      %v1744 = vsub.f32 %v1680, %v1702
      %v1745 = vsub.f32 %v1681, %v1705
      %v1746 = vsub.f32 %v1682, %v1708
      %v1747 = vsub.f32 %v1683, %v1711
      %v1748 = vsub.f32 %v1684, %v1714
      %v1749 = vsub.f32 %v1685, %v1717
      %v1750 = vsub.f32 %v1686, %v1720
      %v1751 = vsub.f32 %v1687, %v1723
      %v1752 = vsub.f32 %v1688, %v1726
      %v1753 = vsub.f32 %v1689, %v1729
      %v1754 = vsub.f32 %v1690, %v1732
      %v1755 = vsub.f32 %v1691, %v1735
      %v1756 = vsub.f32 %v1692, %v1738
      %v1757 = vsub.f32 %v1693, %v1741
      %v1758 = vmul.f32 %v1742, 1.442695
      %v1759 = vpow.pop %v1758
      %v1760 = vmul.f32 %v1743, 1.442695
      %v1761 = vpow.pop %v1760
      %v1762 = vmul.f32 %v1744, 1.442695
      %v1763 = vpow.pop %v1762
      %v1764 = vmul.f32 %v1745, 1.442695
      %v1765 = vpow.pop %v1764
      %v1766 = vmul.f32 %v1746, 1.442695
      %v1767 = vpow.pop %v1766
      %v1768 = vmul.f32 %v1747, 1.442695
      %v1769 = vpow.pop %v1768
      %v1770 = vmul.f32 %v1748, 1.442695
      %v1771 = vpow.pop %v1770
      %v1772 = vmul.f32 %v1749, 1.442695
      %v1773 = vpow.pop %v1772
      %v1774 = vmul.f32 %v1750, 1.442695
      %v1775 = vpow.pop %v1774
      %v1776 = vmul.f32 %v1751, 1.442695
      %v1777 = vpow.pop %v1776
      %v1778 = vmul.f32 %v1752, 1.442695
      %v1779 = vpow.pop %v1778
      %v1780 = vmul.f32 %v1753, 1.442695
      %v1781 = vpow.pop %v1780
      %v1782 = vmul.f32 %v1754, 1.442695
      %v1783 = vpow.pop %v1782
      %v1784 = vmul.f32 %v1755, 1.442695
      %v1785 = vpow.pop %v1784
      %v1786 = vmul.f32 %v1756, 1.442695
      %v1787 = vpow.pop %v1786
      %v1788 = vmul.f32 %v1757, 1.442695
      %v1789 = vpow.pop %v1788
      %v1790 = vsel %vm457, %v1759, 0.0
      %1791 = vadd.xlane.f32.xlu0 %v1790
      %v1792 = vpop.xlane.xlu0 %1791
      %v1793 = vsel %vm457, %v1761, 0.0
      %1794 = vadd.xlane.f32.xlu0 %v1793
      %v1795 = vpop.xlane.xlu0 %1794
      %v1796 = vsel %vm457, %v1763, 0.0
      %1797 = vadd.xlane.f32.xlu0 %v1796
      %v1798 = vpop.xlane.xlu0 %1797
      %v1799 = vsel %vm457, %v1765, 0.0
      %1800 = vadd.xlane.f32.xlu0 %v1799
      %v1801 = vpop.xlane.xlu0 %1800
      %v1802 = vsel %vm457, %v1767, 0.0
      %1803 = vadd.xlane.f32.xlu0 %v1802
      %v1804 = vpop.xlane.xlu0 %1803
      %v1805 = vsel %vm457, %v1769, 0.0
      %1806 = vadd.xlane.f32.xlu0 %v1805
      %v1807 = vpop.xlane.xlu0 %1806
      %v1808 = vsel %vm457, %v1771, 0.0
      %1809 = vadd.xlane.f32.xlu0 %v1808
      %v1810 = vpop.xlane.xlu0 %1809
      %v1811 = vsel %vm457, %v1773, 0.0
      %1812 = vadd.xlane.f32.xlu0 %v1811
      %v1813 = vpop.xlane.xlu0 %1812
      %v1814 = vsel %vm457, %v1775, 0.0
      %1815 = vadd.xlane.f32.xlu0 %v1814
      %v1816 = vpop.xlane.xlu0 %1815
      %v1817 = vsel %vm457, %v1777, 0.0
      %1818 = vadd.xlane.f32.xlu0 %v1817
      %v1819 = vpop.xlane.xlu0 %1818
      %v1820 = vsel %vm457, %v1779, 0.0
      %1821 = vadd.xlane.f32.xlu0 %v1820
      %v1822 = vpop.xlane.xlu0 %1821
      %v1823 = vsel %vm457, %v1781, 0.0
      %1824 = vadd.xlane.f32.xlu0 %v1823
      %v1825 = vpop.xlane.xlu0 %1824
      %v1826 = vsel %vm457, %v1783, 0.0
      %1827 = vadd.xlane.f32.xlu0 %v1826
      %v1828 = vpop.xlane.xlu0 %1827
      %v1829 = vsel %vm457, %v1785, 0.0
      %1830 = vadd.xlane.f32.xlu0 %v1829
      %v1831 = vpop.xlane.xlu0 %1830
      %v1832 = vsel %vm457, %v1787, 0.0
      %1833 = vadd.xlane.f32.xlu0 %v1832
      %v1834 = vpop.xlane.xlu0 %1833
      %v1835 = vsel %vm457, %v1789, 0.0
      %1836 = vadd.xlane.f32.xlu0 %v1835
      %v1837 = vpop.xlane.xlu0 %1836
      %v1838 = vrcp.pop %v1792
      %v1839 = vmul.f32 %v1759, %v1838
      %v1840 = vrcp.pop %v1795
      %v1841 = vmul.f32 %v1761, %v1840
      %v1842 = vrcp.pop %v1798
      %v1843 = vmul.f32 %v1763, %v1842
      %v1844 = vrcp.pop %v1801
      %v1845 = vmul.f32 %v1765, %v1844
      %v1846 = vrcp.pop %v1804
      %v1847 = vmul.f32 %v1767, %v1846
      %v1848 = vrcp.pop %v1807
      %v1849 = vmul.f32 %v1769, %v1848
      %v1850 = vrcp.pop %v1810
      %v1851 = vmul.f32 %v1771, %v1850
      %v1852 = vrcp.pop %v1813
      %v1853 = vmul.f32 %v1773, %v1852
      %v1854 = vrcp.pop %v1816
      %v1855 = vmul.f32 %v1775, %v1854
      %v1856 = vrcp.pop %v1819
      %v1857 = vmul.f32 %v1777, %v1856
      %v1858 = vrcp.pop %v1822
      %v1859 = vmul.f32 %v1779, %v1858
      %v1860 = vrcp.pop %v1825
      %v1861 = vmul.f32 %v1781, %v1860
      %v1862 = vrcp.pop %v1828
      %v1863 = vmul.f32 %v1783, %v1862
      %v1864 = vrcp.pop %v1831
      %v1865 = vmul.f32 %v1785, %v1864
      %v1866 = vrcp.pop %v1834
      %v1867 = vmul.f32 %v1787, %v1866
      %v1868 = vrcp.pop %v1837
      %v1869 = vmul.f32 %v1789, %v1868
      %1870 = vrot.lane.b32.xlu0 %v231, 112
      %v1871 = vpop.permute.xlu0 %1870
      %1872 = vrot.lane.b32.xlu0 %v232, 112
      %v1873 = vpop.permute.xlu0 %1872
      %1874 = vrot.lane.b32.xlu0 %v233, 112
      %v1875 = vpop.permute.xlu0 %1874
      %1876 = vrot.lane.b32.xlu0 %v234, 112
      %v1877 = vpop.permute.xlu0 %1876
      %v1883 = vsel %vm457, %v1839, 0
      %v1886 = vsel %vm457, %v1841, 0
      %v1889 = vsel %vm457, %v1843, 0
      %v1892 = vsel %vm457, %v1845, 0
      %v1895 = vsel %vm457, %v1847, 0
      %v1898 = vsel %vm457, %v1849, 0
      %v1901 = vsel %vm457, %v1851, 0
      %v1904 = vsel %vm457, %v1853, 0
      %v1907 = vsel %vm457, %v1855, 0
      %v1910 = vsel %vm457, %v1857, 0
      %v1913 = vsel %vm457, %v1859, 0
      %v1916 = vsel %vm457, %v1861, 0
      %v1919 = vsel %vm457, %v1863, 0
      %v1922 = vsel %vm457, %v1865, 0
      %v1925 = vsel %vm457, %v1867, 0
      %v1928 = vsel %vm457, %v1869, 0
      %1930 = vmatprep.subr.mxu0 0.0
      %1931 = vmatpush1.msra.mxu0 %v1871
      %1932 = vmatprep.subr.mxu0 0.0
      %1933 = vmatpush1.msra.mxu0 %v1873
      %1934 = vmatprep.subr.mxu0 0.0
      %1935 = vmatpush1.msra.mxu0 %v1875
      %1936 = vmatprep.subr.mxu0 0.0
      %1937 = vmatpush1.msra.mxu0 %v1877
      %1938 = vmatprep.subr.mxu0 0.0
      %1939 = vmatpush1.msra.mxu0 0.0
      %1940 = vmatprep.subr.mxu0 0.0
      %1941 = vmatpush1.msra.mxu0 0.0
      %1942 = vmatprep.subr.mxu0 0.0
      %1943 = vmatpush1.msra.mxu0 0.0
      %1944 = vmatprep.subr.mxu0 0.0
      %1945 = vmatpush1.msra.mxu0 0.0
      %1946 = vmatprep.subr.mxu0 0.0
      %1947 = vmatpush1.msra.mxu0 0.0
      %1948 = vmatprep.subr.mxu0 0.0
      %1949 = vmatpush1.msra.mxu0 0.0
      %1950 = vmatprep.subr.mxu0 0.0
      %1951 = vmatpush1.msra.mxu0 0.0
      %1952 = vmatprep.subr.mxu0 0.0
      %1953 = vmatpush1.msra.mxu0 0.0
      %1954 = vmatprep.subr.mxu0 0.0
      %1955 = vmatpush1.msra.mxu0 0.0
      %1956 = vmatprep.subr.mxu0 0.0
      %1957 = vmatpush1.msra.mxu0 0.0
      %1958 = vmatprep.subr.mxu0 0.0
      %1959 = vmatpush1.msra.mxu0 0.0
      %1960 = vmatprep.subr.mxu0 0.0
      %1961 = vmatpush1.msra.mxu0 0.0
      %1962 = vmatprep.subr.mxu0 0.0
      %1963 = vmatpush1.msra.mxu0 0.0
      %1964 = vmatprep.subr.mxu0 0.0
      %1965 = vmatpush1.msra.mxu0 0.0
      %1966 = vmatprep.subr.mxu0 0.0
      %1967 = vmatpush1.msra.mxu0 0.0
      %1968 = vmatprep.subr.mxu0 0.0
      %1969 = vmatpush1.msra.mxu0 0.0
      %1970 = vmatprep.subr.mxu0 0.0
      %1971 = vmatpush1.msra.mxu0 0.0
      %1972 = vmatprep.subr.mxu0 0.0
      %1973 = vmatpush1.msra.mxu0 0.0
      %1974 = vmatprep.subr.mxu0 0.0
      %1975 = vmatpush1.msra.mxu0 0.0
      %1976 = vmatprep.subr.mxu0 0.0
      %1977 = vmatpush1.msra.mxu0 0.0
      %1978 = vmatprep.subr.mxu0 0.0
      %1979 = vmatpush1.msra.mxu0 0.0
      %1980 = vmatprep.subr.mxu0 0.0
      %1981 = vmatpush1.msra.mxu0 0.0
      %1982 = vmatprep.subr.mxu0 0.0
      %1983 = vmatpush1.msra.mxu0 0.0
      %1984 = vmatprep.subr.mxu0 0.0
      %1985 = vmatpush1.msra.mxu0 0.0
      %1986 = vmatprep.subr.mxu0 0.0
      %1987 = vmatpush1.msra.mxu0 0.0
      %1988 = vmatprep.subr.mxu0 0.0
      %1989 = vmatpush1.msra.mxu0 0.0
      %1990 = vmatprep.subr.mxu0 0.0
      %1991 = vmatpush1.msra.mxu0 0.0
      %1992 = vmatprep.subr.mxu0 0.0
      %1993 = vmatpush1.msra.mxu0 0.0
      %1994 = vmatprep.mubr.f32.mxu0 0.0
      %1995 = vmatmul.mubr.f32.gmra.mrb[0].mxu0 %v1883
      %v1996 = vpop.f32.mrb[0].mxu0
      %v1997 = vadd.f32 0.0, %v1996
      %v1998 = vpop.f32.mrb[0].mxu0
      %1999 = vmatprep.mubr.f32.mxu0 0.0
      %2000 = vmatmul.mubr.f32.gmra.mrb[0].mxu0 %v1886
      %v2001 = vpop.f32.mrb[0].mxu0
      %v2002 = vadd.f32 0.0, %v2001
      %v2003 = vpop.f32.mrb[0].mxu0
      %2004 = vmatprep.mubr.f32.mxu0 0.0
      %2005 = vmatmul.mubr.f32.gmra.mrb[0].mxu0 %v1889
      %v2006 = vpop.f32.mrb[0].mxu0
      %v2007 = vadd.f32 0.0, %v2006
      %v2008 = vpop.f32.mrb[0].mxu0
      %2009 = vmatprep.mubr.f32.mxu0 0.0
      %2010 = vmatmul.mubr.f32.gmra.mrb[0].mxu0 %v1892
      %v2011 = vpop.f32.mrb[0].mxu0
      %v2012 = vadd.f32 0.0, %v2011
      %v2013 = vpop.f32.mrb[0].mxu0
      %2014 = vmatprep.mubr.f32.mxu0 0.0
      %2015 = vmatmul.mubr.f32.gmra.mrb[0].mxu0 %v1895
      %v2016 = vpop.f32.mrb[0].mxu0
      %v2017 = vadd.f32 0.0, %v2016
      %v2018 = vpop.f32.mrb[0].mxu0
      %2019 = vmatprep.mubr.f32.mxu0 0.0
      %2020 = vmatmul.mubr.f32.gmra.mrb[0].mxu0 %v1898
      %v2021 = vpop.f32.mrb[0].mxu0
      %v2022 = vadd.f32 0.0, %v2021
      %v2023 = vpop.f32.mrb[0].mxu0
      %2024 = vmatprep.mubr.f32.mxu0 0.0
      %2025 = vmatmul.mubr.f32.gmra.mrb[0].mxu0 %v1901
      %v2026 = vpop.f32.mrb[0].mxu0
      %v2027 = vadd.f32 0.0, %v2026
      %v2028 = vpop.f32.mrb[0].mxu0
      %2029 = vmatprep.mubr.f32.mxu0 0.0
      %2030 = vmatmul.mubr.f32.gmra.mrb[0].mxu0 %v1904
      %v2031 = vpop.f32.mrb[0].mxu0
      %v2032 = vadd.f32 0.0, %v2031
      %v2033 = vpop.f32.mrb[0].mxu0
      %2034 = vmatprep.mubr.f32.mxu0 0.0
      %2035 = vmatmul.mubr.f32.gmra.mrb[0].mxu0 %v1907
      %v2036 = vpop.f32.mrb[0].mxu0
      %v2037 = vadd.f32 0.0, %v2036
      %v2038 = vpop.f32.mrb[0].mxu0
      %2039 = vmatprep.mubr.f32.mxu0 0.0
      %2040 = vmatmul.mubr.f32.gmra.mrb[0].mxu0 %v1910
      %v2041 = vpop.f32.mrb[0].mxu0
      %v2042 = vadd.f32 0.0, %v2041
      %v2043 = vpop.f32.mrb[0].mxu0
      %2044 = vmatprep.mubr.f32.mxu0 0.0
      %2045 = vmatmul.mubr.f32.gmra.mrb[0].mxu0 %v1913
      %v2046 = vpop.f32.mrb[0].mxu0
      %v2047 = vadd.f32 0.0, %v2046
      %v2048 = vpop.f32.mrb[0].mxu0
      %2049 = vmatprep.mubr.f32.mxu0 0.0
      %2050 = vmatmul.mubr.f32.gmra.mrb[0].mxu0 %v1916
      %v2051 = vpop.f32.mrb[0].mxu0
      %v2052 = vadd.f32 0.0, %v2051
      %v2053 = vpop.f32.mrb[0].mxu0
      %2054 = vmatprep.mubr.f32.mxu0 0.0
      %2055 = vmatmul.mubr.f32.gmra.mrb[0].mxu0 %v1919
      %v2056 = vpop.f32.mrb[0].mxu0
      %v2057 = vadd.f32 0.0, %v2056
      %v2058 = vpop.f32.mrb[0].mxu0
      %2059 = vmatprep.mubr.f32.mxu0 0.0
      %2060 = vmatmul.mubr.f32.gmra.mrb[0].mxu0 %v1922
      %v2061 = vpop.f32.mrb[0].mxu0
      %v2062 = vadd.f32 0.0, %v2061
      %v2063 = vpop.f32.mrb[0].mxu0
      %2064 = vmatprep.mubr.f32.mxu0 0.0
      %2065 = vmatmul.mubr.f32.gmra.mrb[0].mxu0 %v1925
      %v2066 = vpop.f32.mrb[0].mxu0
      %v2067 = vadd.f32 0.0, %v2066
      %v2068 = vpop.f32.mrb[0].mxu0
      %2069 = vmatprep.mubr.f32.mxu0 0.0
      %2070 = vmatmul.mubr.f32.gmra.mrb[0].mxu0 %v1928
      %v2071 = vpop.f32.mrb[0].mxu0
      %v2072 = vadd.f32 0.0, %v2071
      %v2073 = vpop.f32.mrb[0].mxu0
      %2074 = vdwg.mxu0
      %2075 = vrot.lane.b32.xlu0 %v211, 104
      %v2076 = vpop.permute.xlu0 %2075
      %2077 = vrot.lane.b32.xlu0 %v212, 104
      %v2078 = vpop.permute.xlu0 %2077
      %2079 = vrot.lane.b32.xlu0 %v213, 104
      %v2080 = vpop.permute.xlu0 %2079
      %2081 = vrot.lane.b32.xlu0 %v214, 104
      %v2082 = vpop.permute.xlu0 %2081
      %2083 = vrot.lane.b32.xlu0 %v215, 104
      %v2084 = vpop.permute.xlu0 %2083
      %2085 = vrot.lane.b32.xlu0 %v216, 104
      %v2086 = vpop.permute.xlu0 %2085
      %2087 = vrot.lane.b32.xlu0 %v217, 104
      %v2088 = vpop.permute.xlu0 %2087
      %2089 = vrot.lane.b32.xlu0 %v218, 104
      %v2090 = vpop.permute.xlu0 %2089
      %2091 = vrot.lane.b32.xlu0 %v219, 104
      %v2092 = vpop.permute.xlu0 %2091
      %2093 = vrot.lane.b32.xlu0 %v220, 104
      %v2094 = vpop.permute.xlu0 %2093
      %2095 = vrot.lane.b32.xlu0 %v221, 104
      %v2096 = vpop.permute.xlu0 %2095
      %2097 = vrot.lane.b32.xlu0 %v222, 104
      %v2098 = vpop.permute.xlu0 %2097
      %2099 = vrot.lane.b32.xlu0 %v223, 104
      %v2100 = vpop.permute.xlu0 %2099
      %2101 = vrot.lane.b32.xlu0 %v224, 104
      %v2102 = vpop.permute.xlu0 %2101
      %2103 = vrot.lane.b32.xlu0 %v225, 104
      %v2104 = vpop.permute.xlu0 %2103
      %2105 = vrot.lane.b32.xlu0 %v226, 104
      %v2106 = vpop.permute.xlu0 %2105
      %2107 = vrot.lane.b32.xlu0 %v227, 104
      %v2108 = vpop.permute.xlu0 %2107
      %2109 = vrot.lane.b32.xlu0 %v228, 104
      %v2110 = vpop.permute.xlu0 %2109
      %2111 = vrot.lane.b32.xlu0 %v229, 104
      %v2112 = vpop.permute.xlu0 %2111
      %2113 = vrot.lane.b32.xlu0 %v230, 104
      %v2114 = vpop.permute.xlu0 %2113
      %v2115 = vsel %vm235, %v2076, 0
      %v2117 = vsel %vm235, %v2078, 0
      %v2119 = vsel %vm235, %v2080, 0
      %v2121 = vsel %vm235, %v2082, 0
      %v2123 = vsel %vm235, %v2084, 0
      %v2125 = vsel %vm235, %v2086, 0
      %v2127 = vsel %vm235, %v2088, 0
      %v2129 = vsel %vm235, %v2090, 0
      %v2131 = vsel %vm235, %v2092, 0
      %v2133 = vsel %vm235, %v2094, 0
      %v2135 = vsel %vm235, %v2096, 0
      %v2137 = vsel %vm235, %v2098, 0
      %v2139 = vsel %vm235, %v2100, 0
      %v2141 = vsel %vm235, %v2102, 0
      %v2143 = vsel %vm235, %v2104, 0
      %v2145 = vsel %vm235, %v2106, 0
      %v2147 = vsel %vm235, %v2108, 0
      %v2149 = vsel %vm235, %v2110, 0
      %v2151 = vsel %vm235, %v2112, 0
      %v2153 = vsel %vm235, %v2114, 0
      %2155 = vmatprep.subr.mxu0 0.0
      %2156 = vmatpush1.xpose.msra.mxu0 %v2147
      %2157 = vmatprep.subr.mxu0 0.0
      %2158 = vmatpush1.xpose.msra.mxu0 %v2149
      %2159 = vmatprep.subr.mxu0 0.0
      %2160 = vmatpush1.xpose.msra.mxu0 %v2151
      %2161 = vmatprep.subr.mxu0 0.0
      %2162 = vmatpush1.xpose.msra.mxu0 %v2153
      %2163 = vmatprep.subr.mxu0 0.0
      %2164 = vmatpush1.xpose.msra.mxu0 0.0
      %2165 = vmatprep.subr.mxu0 0.0
      %2166 = vmatpush1.xpose.msra.mxu0 0.0
      %2167 = vmatprep.subr.mxu0 0.0
      %2168 = vmatpush1.xpose.msra.mxu0 0.0
      %2169 = vmatprep.subr.mxu0 0.0
      %2170 = vmatpush1.xpose.msra.mxu0 0.0
      %2171 = vmatprep.subr.mxu0 0.0
      %2172 = vmatpush1.xpose.msra.mxu0 0.0
      %2173 = vmatprep.subr.mxu0 0.0
      %2174 = vmatpush1.xpose.msra.mxu0 0.0
      %2175 = vmatprep.subr.mxu0 0.0
      %2176 = vmatpush1.xpose.msra.mxu0 0.0
      %2177 = vmatprep.subr.mxu0 0.0
      %2178 = vmatpush1.xpose.msra.mxu0 0.0
      %2179 = vmatprep.subr.mxu0 0.0
      %2180 = vmatpush1.xpose.msra.mxu0 0.0
      %2181 = vmatprep.subr.mxu0 0.0
      %2182 = vmatpush1.xpose.msra.mxu0 0.0
      %2183 = vmatprep.subr.mxu0 0.0
      %2184 = vmatpush1.xpose.msra.mxu0 0.0
      %2185 = vmatprep.subr.mxu0 0.0
      %2186 = vmatpush1.xpose.msra.mxu0 0.0
      %2187 = vmatprep.subr.mxu0 0.0
      %2188 = vmatpush1.xpose.msra.mxu0 0.0
      %2189 = vmatprep.subr.mxu0 0.0
      %2190 = vmatpush1.xpose.msra.mxu0 0.0
      %2191 = vmatprep.subr.mxu0 0.0
      %2192 = vmatpush1.xpose.msra.mxu0 0.0
      %2193 = vmatprep.subr.mxu0 0.0
      %2194 = vmatpush1.xpose.msra.mxu0 0.0
      %2195 = vmatprep.subr.mxu0 0.0
      %2196 = vmatpush1.xpose.msra.mxu0 0.0
      %2197 = vmatprep.subr.mxu0 0.0
      %2198 = vmatpush1.xpose.msra.mxu0 0.0
      %2199 = vmatprep.subr.mxu0 0.0
      %2200 = vmatpush1.xpose.msra.mxu0 0.0
      %2201 = vmatprep.subr.mxu0 0.0
      %2202 = vmatpush1.xpose.msra.mxu0 0.0
      %2203 = vmatprep.subr.mxu0 0.0
      %2204 = vmatpush1.xpose.msra.mxu0 0.0
      %2205 = vmatprep.subr.mxu0 0.0
      %2206 = vmatpush1.xpose.msra.mxu0 0.0
      %2207 = vmatprep.subr.mxu0 0.0
      %2208 = vmatpush1.xpose.msra.mxu0 0.0
      %2209 = vmatprep.subr.mxu0 0.0
      %2210 = vmatpush1.xpose.msra.mxu0 0.0
      %2211 = vmatprep.subr.mxu0 0.0
      %2212 = vmatpush1.xpose.msra.mxu0 0.0
      %2213 = vmatprep.subr.mxu0 0.0
      %2214 = vmatpush1.xpose.msra.mxu0 0.0
      %2215 = vmatprep.subr.mxu0 0.0
      %2216 = vmatpush1.xpose.msra.mxu0 0.0
      %2217 = vmatprep.subr.mxu0 0.0
      %2218 = vmatpush1.xpose.msra.mxu0 0.0
      %2219 = vmatprep.mubr.f32.mxu0 0.0
      %2220 = vmatmul.mubr.f32.gmra.mrb[0].mxu0 %v2115
      %v2221 = vpop.f32.mrb[0].mxu0
      %v2222 = vadd.f32 0.0, %v2221
      %v2223 = vpop.f32.mrb[0].mxu0
      %2224 = vmatprep.mubr.f32.mxu0 0.0
      %2225 = vmatmul.mubr.f32.gmra.mrb[0].mxu0 %v2117
      %v2226 = vpop.f32.mrb[0].mxu0
      %v2227 = vadd.f32 0.0, %v2226
      %v2228 = vpop.f32.mrb[0].mxu0
      %2229 = vmatprep.mubr.f32.mxu0 0.0
      %2230 = vmatmul.mubr.f32.gmra.mrb[0].mxu0 %v2119
      %v2231 = vpop.f32.mrb[0].mxu0
      %v2232 = vadd.f32 0.0, %v2231
      %v2233 = vpop.f32.mrb[0].mxu0
      %2234 = vmatprep.mubr.f32.mxu0 0.0
      %2235 = vmatmul.mubr.f32.gmra.mrb[0].mxu0 %v2121
      %v2236 = vpop.f32.mrb[0].mxu0
      %v2237 = vadd.f32 0.0, %v2236
      %v2238 = vpop.f32.mrb[0].mxu0
      %2239 = vmatprep.mubr.f32.mxu0 0.0
      %2240 = vmatmul.mubr.f32.gmra.mrb[0].mxu0 %v2123
      %v2241 = vpop.f32.mrb[0].mxu0
      %v2242 = vadd.f32 0.0, %v2241
      %v2243 = vpop.f32.mrb[0].mxu0
      %2244 = vmatprep.mubr.f32.mxu0 0.0
      %2245 = vmatmul.mubr.f32.gmra.mrb[0].mxu0 %v2125
      %v2246 = vpop.f32.mrb[0].mxu0
      %v2247 = vadd.f32 0.0, %v2246
      %v2248 = vpop.f32.mrb[0].mxu0
      %2249 = vmatprep.mubr.f32.mxu0 0.0
      %2250 = vmatmul.mubr.f32.gmra.mrb[0].mxu0 %v2127
      %v2251 = vpop.f32.mrb[0].mxu0
      %v2252 = vadd.f32 0.0, %v2251
      %v2253 = vpop.f32.mrb[0].mxu0
      %2254 = vmatprep.mubr.f32.mxu0 0.0
      %2255 = vmatmul.mubr.f32.gmra.mrb[0].mxu0 %v2129
      %v2256 = vpop.f32.mrb[0].mxu0
      %v2257 = vadd.f32 0.0, %v2256
      %v2258 = vpop.f32.mrb[0].mxu0
      %2259 = vmatprep.mubr.f32.mxu0 0.0
      %2260 = vmatmul.mubr.f32.gmra.mrb[0].mxu0 %v2131
      %v2261 = vpop.f32.mrb[0].mxu0
      %v2262 = vadd.f32 0.0, %v2261
      %v2263 = vpop.f32.mrb[0].mxu0
      %2264 = vmatprep.mubr.f32.mxu0 0.0
      %2265 = vmatmul.mubr.f32.gmra.mrb[0].mxu0 %v2133
      %v2266 = vpop.f32.mrb[0].mxu0
      %v2267 = vadd.f32 0.0, %v2266
      %v2268 = vpop.f32.mrb[0].mxu0
      %2269 = vmatprep.mubr.f32.mxu0 0.0
      %2270 = vmatmul.mubr.f32.gmra.mrb[0].mxu0 %v2135
      %v2271 = vpop.f32.mrb[0].mxu0
      %v2272 = vadd.f32 0.0, %v2271
      %v2273 = vpop.f32.mrb[0].mxu0
      %2274 = vmatprep.mubr.f32.mxu0 0.0
      %2275 = vmatmul.mubr.f32.gmra.mrb[0].mxu0 %v2137
      %v2276 = vpop.f32.mrb[0].mxu0
      %v2277 = vadd.f32 0.0, %v2276
      %v2278 = vpop.f32.mrb[0].mxu0
      %2279 = vmatprep.mubr.f32.mxu0 0.0
      %2280 = vmatmul.mubr.f32.gmra.mrb[0].mxu0 %v2139
      %v2281 = vpop.f32.mrb[0].mxu0
      %v2282 = vadd.f32 0.0, %v2281
      %v2283 = vpop.f32.mrb[0].mxu0
      %2284 = vmatprep.mubr.f32.mxu0 0.0
      %2285 = vmatmul.mubr.f32.gmra.mrb[0].mxu0 %v2141
      %v2286 = vpop.f32.mrb[0].mxu0
      %v2287 = vadd.f32 0.0, %v2286
      %v2288 = vpop.f32.mrb[0].mxu0
      %2289 = vmatprep.mubr.f32.mxu0 0.0
      %2290 = vmatmul.mubr.f32.gmra.mrb[0].mxu0 %v2143
      %v2291 = vpop.f32.mrb[0].mxu0
      %v2292 = vadd.f32 0.0, %v2291
      %v2293 = vpop.f32.mrb[0].mxu0
      %2294 = vmatprep.mubr.f32.mxu0 0.0
      %2295 = vmatmul.mubr.f32.gmra.mrb[0].mxu0 %v2145
      %v2296 = vpop.f32.mrb[0].mxu0
      %v2297 = vadd.f32 0.0, %v2296
      %v2298 = vpop.f32.mrb[0].mxu0
      %2299 = vdwg.mxu0
      %v2300 = vmul.f32 %v2222, 0.35355338
      %v2301 = vmul.f32 %v2227, 0.35355338
      %v2302 = vmul.f32 %v2232, 0.35355338
      %v2303 = vmul.f32 %v2237, 0.35355338
      %v2304 = vmul.f32 %v2242, 0.35355338
      %v2305 = vmul.f32 %v2247, 0.35355338
      %v2306 = vmul.f32 %v2252, 0.35355338
      %v2307 = vmul.f32 %v2257, 0.35355338
      %v2308 = vmul.f32 %v2262, 0.35355338
      %v2309 = vmul.f32 %v2267, 0.35355338
      %v2310 = vmul.f32 %v2272, 0.35355338
      %v2311 = vmul.f32 %v2277, 0.35355338
      %v2312 = vmul.f32 %v2282, 0.35355338
      %v2313 = vmul.f32 %v2287, 0.35355338
      %v2314 = vmul.f32 %v2292, 0.35355338
      %v2315 = vmul.f32 %v2297, 0.35355338
      %v2316 = vsel %vm457, %v2300, -inf
      %2317 = vmax.xlane.f32.xlu0 %v2316
      %v2318 = vpop.xlane.xlu0 %2317
      %v2319 = vsel %vm457, %v2301, -inf
      %2320 = vmax.xlane.f32.xlu0 %v2319
      %v2321 = vpop.xlane.xlu0 %2320
      %v2322 = vsel %vm457, %v2302, -inf
      %2323 = vmax.xlane.f32.xlu0 %v2322
      %v2324 = vpop.xlane.xlu0 %2323
      %v2325 = vsel %vm457, %v2303, -inf
      %2326 = vmax.xlane.f32.xlu0 %v2325
      %v2327 = vpop.xlane.xlu0 %2326
      %v2328 = vsel %vm457, %v2304, -inf
      %2329 = vmax.xlane.f32.xlu0 %v2328
      %v2330 = vpop.xlane.xlu0 %2329
      %v2331 = vsel %vm457, %v2305, -inf
      %2332 = vmax.xlane.f32.xlu0 %v2331
      %v2333 = vpop.xlane.xlu0 %2332
      %v2334 = vsel %vm457, %v2306, -inf
      %2335 = vmax.xlane.f32.xlu0 %v2334
      %v2336 = vpop.xlane.xlu0 %2335
      %v2337 = vsel %vm457, %v2307, -inf
      %2338 = vmax.xlane.f32.xlu0 %v2337
      %v2339 = vpop.xlane.xlu0 %2338
      %v2340 = vsel %vm457, %v2308, -inf
      %2341 = vmax.xlane.f32.xlu0 %v2340
      %v2342 = vpop.xlane.xlu0 %2341
      %v2343 = vsel %vm457, %v2309, -inf
      %2344 = vmax.xlane.f32.xlu0 %v2343
      %v2345 = vpop.xlane.xlu0 %2344
      %v2346 = vsel %vm457, %v2310, -inf
      %2347 = vmax.xlane.f32.xlu0 %v2346
      %v2348 = vpop.xlane.xlu0 %2347
      %v2349 = vsel %vm457, %v2311, -inf
      %2350 = vmax.xlane.f32.xlu0 %v2349
      %v2351 = vpop.xlane.xlu0 %2350
      %v2352 = vsel %vm457, %v2312, -inf
      %2353 = vmax.xlane.f32.xlu0 %v2352
      %v2354 = vpop.xlane.xlu0 %2353
      %v2355 = vsel %vm457, %v2313, -inf
      %2356 = vmax.xlane.f32.xlu0 %v2355
      %v2357 = vpop.xlane.xlu0 %2356
      %v2358 = vsel %vm457, %v2314, -inf
      %2359 = vmax.xlane.f32.xlu0 %v2358
      %v2360 = vpop.xlane.xlu0 %2359
      %v2361 = vsel %vm457, %v2315, -inf
      %2362 = vmax.xlane.f32.xlu0 %v2361
      %v2363 = vpop.xlane.xlu0 %2362
      %v2364 = vsub.f32 %v2300, %v2318
      %v2365 = vsub.f32 %v2301, %v2321
      %v2366 = vsub.f32 %v2302, %v2324
      %v2367 = vsub.f32 %v2303, %v2327
      %v2368 = vsub.f32 %v2304, %v2330
      %v2369 = vsub.f32 %v2305, %v2333
      %v2370 = vsub.f32 %v2306, %v2336
      %v2371 = vsub.f32 %v2307, %v2339
      %v2372 = vsub.f32 %v2308, %v2342
      %v2373 = vsub.f32 %v2309, %v2345
      %v2374 = vsub.f32 %v2310, %v2348
      %v2375 = vsub.f32 %v2311, %v2351
      %v2376 = vsub.f32 %v2312, %v2354
      %v2377 = vsub.f32 %v2313, %v2357
      %v2378 = vsub.f32 %v2314, %v2360
      %v2379 = vsub.f32 %v2315, %v2363
      %v2380 = vmul.f32 %v2364, 1.442695
      %v2381 = vpow.pop %v2380
      %v2382 = vmul.f32 %v2365, 1.442695
      %v2383 = vpow.pop %v2382
      %v2384 = vmul.f32 %v2366, 1.442695
      %v2385 = vpow.pop %v2384
      %v2386 = vmul.f32 %v2367, 1.442695
      %v2387 = vpow.pop %v2386
      %v2388 = vmul.f32 %v2368, 1.442695
      %v2389 = vpow.pop %v2388
      %v2390 = vmul.f32 %v2369, 1.442695
      %v2391 = vpow.pop %v2390
      %v2392 = vmul.f32 %v2370, 1.442695
      %v2393 = vpow.pop %v2392
      %v2394 = vmul.f32 %v2371, 1.442695
      %v2395 = vpow.pop %v2394
      %v2396 = vmul.f32 %v2372, 1.442695
      %v2397 = vpow.pop %v2396
      %v2398 = vmul.f32 %v2373, 1.442695
      %v2399 = vpow.pop %v2398
      %v2400 = vmul.f32 %v2374, 1.442695
      %v2401 = vpow.pop %v2400
      %v2402 = vmul.f32 %v2375, 1.442695
      %v2403 = vpow.pop %v2402
      %v2404 = vmul.f32 %v2376, 1.442695
      %v2405 = vpow.pop %v2404
      %v2406 = vmul.f32 %v2377, 1.442695
      %v2407 = vpow.pop %v2406
      %v2408 = vmul.f32 %v2378, 1.442695
      %v2409 = vpow.pop %v2408
      %v2410 = vmul.f32 %v2379, 1.442695
      %v2411 = vpow.pop %v2410
      %v2412 = vsel %vm457, %v2381, 0.0
      %2413 = vadd.xlane.f32.xlu0 %v2412
      %v2414 = vpop.xlane.xlu0 %2413
      %v2415 = vsel %vm457, %v2383, 0.0
      %2416 = vadd.xlane.f32.xlu0 %v2415
      %v2417 = vpop.xlane.xlu0 %2416
      %v2418 = vsel %vm457, %v2385, 0.0
      %2419 = vadd.xlane.f32.xlu0 %v2418
      %v2420 = vpop.xlane.xlu0 %2419
      %v2421 = vsel %vm457, %v2387, 0.0
      %2422 = vadd.xlane.f32.xlu0 %v2421
      %v2423 = vpop.xlane.xlu0 %2422
      %v2424 = vsel %vm457, %v2389, 0.0
      %2425 = vadd.xlane.f32.xlu0 %v2424
      %v2426 = vpop.xlane.xlu0 %2425
      %v2427 = vsel %vm457, %v2391, 0.0
      %2428 = vadd.xlane.f32.xlu0 %v2427
      %v2429 = vpop.xlane.xlu0 %2428
      %v2430 = vsel %vm457, %v2393, 0.0
      %2431 = vadd.xlane.f32.xlu0 %v2430
      %v2432 = vpop.xlane.xlu0 %2431
      %v2433 = vsel %vm457, %v2395, 0.0
      %2434 = vadd.xlane.f32.xlu0 %v2433
      %v2435 = vpop.xlane.xlu0 %2434
      %v2436 = vsel %vm457, %v2397, 0.0
      %2437 = vadd.xlane.f32.xlu0 %v2436
      %v2438 = vpop.xlane.xlu0 %2437
      %v2439 = vsel %vm457, %v2399, 0.0
      %2440 = vadd.xlane.f32.xlu0 %v2439
      %v2441 = vpop.xlane.xlu0 %2440
      %v2442 = vsel %vm457, %v2401, 0.0
      %2443 = vadd.xlane.f32.xlu0 %v2442
      %v2444 = vpop.xlane.xlu0 %2443
      %v2445 = vsel %vm457, %v2403, 0.0
      %2446 = vadd.xlane.f32.xlu0 %v2445
      %v2447 = vpop.xlane.xlu0 %2446
      %v2448 = vsel %vm457, %v2405, 0.0
      %2449 = vadd.xlane.f32.xlu0 %v2448
      %v2450 = vpop.xlane.xlu0 %2449
      %v2451 = vsel %vm457, %v2407, 0.0
      %2452 = vadd.xlane.f32.xlu0 %v2451
      %v2453 = vpop.xlane.xlu0 %2452
      %v2454 = vsel %vm457, %v2409, 0.0
      %2455 = vadd.xlane.f32.xlu0 %v2454
      %v2456 = vpop.xlane.xlu0 %2455
      %v2457 = vsel %vm457, %v2411, 0.0
      %2458 = vadd.xlane.f32.xlu0 %v2457
      %v2459 = vpop.xlane.xlu0 %2458
      %v2460 = vrcp.pop %v2414
      %v2461 = vmul.f32 %v2381, %v2460
      %v2462 = vrcp.pop %v2417
      %v2463 = vmul.f32 %v2383, %v2462
      %v2464 = vrcp.pop %v2420
      %v2465 = vmul.f32 %v2385, %v2464
      %v2466 = vrcp.pop %v2423
      %v2467 = vmul.f32 %v2387, %v2466
      %v2468 = vrcp.pop %v2426
      %v2469 = vmul.f32 %v2389, %v2468
      %v2470 = vrcp.pop %v2429
      %v2471 = vmul.f32 %v2391, %v2470
      %v2472 = vrcp.pop %v2432
      %v2473 = vmul.f32 %v2393, %v2472
      %v2474 = vrcp.pop %v2435
      %v2475 = vmul.f32 %v2395, %v2474
      %v2476 = vrcp.pop %v2438
      %v2477 = vmul.f32 %v2397, %v2476
      %v2478 = vrcp.pop %v2441
      %v2479 = vmul.f32 %v2399, %v2478
      %v2480 = vrcp.pop %v2444
      %v2481 = vmul.f32 %v2401, %v2480
      %v2482 = vrcp.pop %v2447
      %v2483 = vmul.f32 %v2403, %v2482
      %v2484 = vrcp.pop %v2450
      %v2485 = vmul.f32 %v2405, %v2484
      %v2486 = vrcp.pop %v2453
      %v2487 = vmul.f32 %v2407, %v2486
      %v2488 = vrcp.pop %v2456
      %v2489 = vmul.f32 %v2409, %v2488
      %v2490 = vrcp.pop %v2459
      %v2491 = vmul.f32 %v2411, %v2490
      %2492 = vrot.lane.b32.xlu0 %v231, 104
      %v2493 = vpop.permute.xlu0 %2492
      %2494 = vrot.lane.b32.xlu0 %v232, 104
      %v2495 = vpop.permute.xlu0 %2494
      %2496 = vrot.lane.b32.xlu0 %v233, 104
      %v2497 = vpop.permute.xlu0 %2496
      %2498 = vrot.lane.b32.xlu0 %v234, 104
      %v2499 = vpop.permute.xlu0 %2498
      %v2505 = vsel %vm457, %v2461, 0
      %v2508 = vsel %vm457, %v2463, 0
      %v2511 = vsel %vm457, %v2465, 0
      %v2514 = vsel %vm457, %v2467, 0
      %v2517 = vsel %vm457, %v2469, 0
      %v2520 = vsel %vm457, %v2471, 0
      %v2523 = vsel %vm457, %v2473, 0
      %v2526 = vsel %vm457, %v2475, 0
      %v2529 = vsel %vm457, %v2477, 0
      %v2532 = vsel %vm457, %v2479, 0
      %v2535 = vsel %vm457, %v2481, 0
      %v2538 = vsel %vm457, %v2483, 0
      %v2541 = vsel %vm457, %v2485, 0
      %v2544 = vsel %vm457, %v2487, 0
      %v2547 = vsel %vm457, %v2489, 0
      %v2550 = vsel %vm457, %v2491, 0
      %2552 = vmatprep.subr.mxu0 0.0
      %2553 = vmatpush1.msra.mxu0 %v2493
      %2554 = vmatprep.subr.mxu0 0.0
      %2555 = vmatpush1.msra.mxu0 %v2495
      %2556 = vmatprep.subr.mxu0 0.0
      %2557 = vmatpush1.msra.mxu0 %v2497
      %2558 = vmatprep.subr.mxu0 0.0
      %2559 = vmatpush1.msra.mxu0 %v2499
      %2560 = vmatprep.subr.mxu0 0.0
      %2561 = vmatpush1.msra.mxu0 0.0
      %2562 = vmatprep.subr.mxu0 0.0
      %2563 = vmatpush1.msra.mxu0 0.0
      %2564 = vmatprep.subr.mxu0 0.0
      %2565 = vmatpush1.msra.mxu0 0.0
      %2566 = vmatprep.subr.mxu0 0.0
      %2567 = vmatpush1.msra.mxu0 0.0
      %2568 = vmatprep.subr.mxu0 0.0
      %2569 = vmatpush1.msra.mxu0 0.0
      %2570 = vmatprep.subr.mxu0 0.0
      %2571 = vmatpush1.msra.mxu0 0.0
      %2572 = vmatprep.subr.mxu0 0.0
      %2573 = vmatpush1.msra.mxu0 0.0
      %2574 = vmatprep.subr.mxu0 0.0
      %2575 = vmatpush1.msra.mxu0 0.0
      %2576 = vmatprep.subr.mxu0 0.0
      %2577 = vmatpush1.msra.mxu0 0.0
      %2578 = vmatprep.subr.mxu0 0.0
      %2579 = vmatpush1.msra.mxu0 0.0
      %2580 = vmatprep.subr.mxu0 0.0
      %2581 = vmatpush1.msra.mxu0 0.0
      %2582 = vmatprep.subr.mxu0 0.0
      %2583 = vmatpush1.msra.mxu0 0.0
      %2584 = vmatprep.subr.mxu0 0.0
      %2585 = vmatpush1.msra.mxu0 0.0
      %2586 = vmatprep.subr.mxu0 0.0
      %2587 = vmatpush1.msra.mxu0 0.0
      %2588 = vmatprep.subr.mxu0 0.0
      %2589 = vmatpush1.msra.mxu0 0.0
      %2590 = vmatprep.subr.mxu0 0.0
      %2591 = vmatpush1.msra.mxu0 0.0
      %2592 = vmatprep.subr.mxu0 0.0
      %2593 = vmatpush1.msra.mxu0 0.0
      %2594 = vmatprep.subr.mxu0 0.0
      %2595 = vmatpush1.msra.mxu0 0.0
      %2596 = vmatprep.subr.mxu0 0.0
      %2597 = vmatpush1.msra.mxu0 0.0
      %2598 = vmatprep.subr.mxu0 0.0
      %2599 = vmatpush1.msra.mxu0 0.0
      %2600 = vmatprep.subr.mxu0 0.0
      %2601 = vmatpush1.msra.mxu0 0.0
      %2602 = vmatprep.subr.mxu0 0.0
      %2603 = vmatpush1.msra.mxu0 0.0
      %2604 = vmatprep.subr.mxu0 0.0
      %2605 = vmatpush1.msra.mxu0 0.0
      %2606 = vmatprep.subr.mxu0 0.0
      %2607 = vmatpush1.msra.mxu0 0.0
      %2608 = vmatprep.subr.mxu0 0.0
      %2609 = vmatpush1.msra.mxu0 0.0
      %2610 = vmatprep.subr.mxu0 0.0
      %2611 = vmatpush1.msra.mxu0 0.0
      %2612 = vmatprep.subr.mxu0 0.0
      %2613 = vmatpush1.msra.mxu0 0.0
      %2614 = vmatprep.subr.mxu0 0.0
      %2615 = vmatpush1.msra.mxu0 0.0
      %2616 = vmatprep.mubr.f32.mxu0 0.0
      %2617 = vmatmul.mubr.f32.gmra.mrb[0].mxu0 %v2505
      %v2618 = vpop.f32.mrb[0].mxu0
      %v2619 = vadd.f32 0.0, %v2618
      %v2620 = vpop.f32.mrb[0].mxu0
      %2621 = vmatprep.mubr.f32.mxu0 0.0
      %2622 = vmatmul.mubr.f32.gmra.mrb[0].mxu0 %v2508
      %v2623 = vpop.f32.mrb[0].mxu0
      %v2624 = vadd.f32 0.0, %v2623
      %v2625 = vpop.f32.mrb[0].mxu0
      %2626 = vmatprep.mubr.f32.mxu0 0.0
      %2627 = vmatmul.mubr.f32.gmra.mrb[0].mxu0 %v2511
      %v2628 = vpop.f32.mrb[0].mxu0
      %v2629 = vadd.f32 0.0, %v2628
      %v2630 = vpop.f32.mrb[0].mxu0
      %2631 = vmatprep.mubr.f32.mxu0 0.0
      %2632 = vmatmul.mubr.f32.gmra.mrb[0].mxu0 %v2514
      %v2633 = vpop.f32.mrb[0].mxu0
      %v2634 = vadd.f32 0.0, %v2633
      %v2635 = vpop.f32.mrb[0].mxu0
      %2636 = vmatprep.mubr.f32.mxu0 0.0
      %2637 = vmatmul.mubr.f32.gmra.mrb[0].mxu0 %v2517
      %v2638 = vpop.f32.mrb[0].mxu0
      %v2639 = vadd.f32 0.0, %v2638
      %v2640 = vpop.f32.mrb[0].mxu0
      %2641 = vmatprep.mubr.f32.mxu0 0.0
      %2642 = vmatmul.mubr.f32.gmra.mrb[0].mxu0 %v2520
      %v2643 = vpop.f32.mrb[0].mxu0
      %v2644 = vadd.f32 0.0, %v2643
      %v2645 = vpop.f32.mrb[0].mxu0
      %2646 = vmatprep.mubr.f32.mxu0 0.0
      %2647 = vmatmul.mubr.f32.gmra.mrb[0].mxu0 %v2523
      %v2648 = vpop.f32.mrb[0].mxu0
      %v2649 = vadd.f32 0.0, %v2648
      %v2650 = vpop.f32.mrb[0].mxu0
      %2651 = vmatprep.mubr.f32.mxu0 0.0
      %2652 = vmatmul.mubr.f32.gmra.mrb[0].mxu0 %v2526
      %v2653 = vpop.f32.mrb[0].mxu0
      %v2654 = vadd.f32 0.0, %v2653
      %v2655 = vpop.f32.mrb[0].mxu0
      %2656 = vmatprep.mubr.f32.mxu0 0.0
      %2657 = vmatmul.mubr.f32.gmra.mrb[0].mxu0 %v2529
      %v2658 = vpop.f32.mrb[0].mxu0
      %v2659 = vadd.f32 0.0, %v2658
      %v2660 = vpop.f32.mrb[0].mxu0
      %2661 = vmatprep.mubr.f32.mxu0 0.0
      %2662 = vmatmul.mubr.f32.gmra.mrb[0].mxu0 %v2532
      %v2663 = vpop.f32.mrb[0].mxu0
      %v2664 = vadd.f32 0.0, %v2663
      %v2665 = vpop.f32.mrb[0].mxu0
      %2666 = vmatprep.mubr.f32.mxu0 0.0
      %2667 = vmatmul.mubr.f32.gmra.mrb[0].mxu0 %v2535
      %v2668 = vpop.f32.mrb[0].mxu0
      %v2669 = vadd.f32 0.0, %v2668
      %v2670 = vpop.f32.mrb[0].mxu0
      %2671 = vmatprep.mubr.f32.mxu0 0.0
      %2672 = vmatmul.mubr.f32.gmra.mrb[0].mxu0 %v2538
      %v2673 = vpop.f32.mrb[0].mxu0
      %v2674 = vadd.f32 0.0, %v2673
      %v2675 = vpop.f32.mrb[0].mxu0
      %2676 = vmatprep.mubr.f32.mxu0 0.0
      %2677 = vmatmul.mubr.f32.gmra.mrb[0].mxu0 %v2541
      %v2678 = vpop.f32.mrb[0].mxu0
      %v2679 = vadd.f32 0.0, %v2678
      %v2680 = vpop.f32.mrb[0].mxu0
      %2681 = vmatprep.mubr.f32.mxu0 0.0
      %2682 = vmatmul.mubr.f32.gmra.mrb[0].mxu0 %v2544
      %v2683 = vpop.f32.mrb[0].mxu0
      %v2684 = vadd.f32 0.0, %v2683
      %v2685 = vpop.f32.mrb[0].mxu0
      %2686 = vmatprep.mubr.f32.mxu0 0.0
      %2687 = vmatmul.mubr.f32.gmra.mrb[0].mxu0 %v2547
      %v2688 = vpop.f32.mrb[0].mxu0
      %v2689 = vadd.f32 0.0, %v2688
      %v2690 = vpop.f32.mrb[0].mxu0
      %2691 = vmatprep.mubr.f32.mxu0 0.0
      %2692 = vmatmul.mubr.f32.gmra.mrb[0].mxu0 %v2550
      %v2693 = vpop.f32.mrb[0].mxu0
      %v2694 = vadd.f32 0.0, %v2693
      %v2695 = vpop.f32.mrb[0].mxu0
      %2696 = vdwg.mxu0
      %2713 = vrot.lane.b32.xlu0 %v1375, 8
      %v2714 = vpop.permute.xlu0 %2713
      %2715 = vrot.lane.b32.xlu0 %v1380, 8
      %v2716 = vpop.permute.xlu0 %2715
      %2717 = vrot.lane.b32.xlu0 %v1385, 8
      %v2718 = vpop.permute.xlu0 %2717
      %2719 = vrot.lane.b32.xlu0 %v1390, 8
      %v2720 = vpop.permute.xlu0 %2719
      %2721 = vrot.lane.b32.xlu0 %v1395, 8
      %v2722 = vpop.permute.xlu0 %2721
      %2723 = vrot.lane.b32.xlu0 %v1400, 8
      %v2724 = vpop.permute.xlu0 %2723
      %2725 = vrot.lane.b32.xlu0 %v1405, 8
      %v2726 = vpop.permute.xlu0 %2725
      %2727 = vrot.lane.b32.xlu0 %v1410, 8
      %v2728 = vpop.permute.xlu0 %2727
      %2729 = vrot.lane.b32.xlu0 %v1415, 8
      %v2730 = vpop.permute.xlu0 %2729
      %2731 = vrot.lane.b32.xlu0 %v1420, 8
      %v2732 = vpop.permute.xlu0 %2731
      %2733 = vrot.lane.b32.xlu0 %v1425, 8
      %v2734 = vpop.permute.xlu0 %2733
      %2735 = vrot.lane.b32.xlu0 %v1430, 8
      %v2736 = vpop.permute.xlu0 %2735
      %2737 = vrot.lane.b32.xlu0 %v1435, 8
      %v2738 = vpop.permute.xlu0 %2737
      %2739 = vrot.lane.b32.xlu0 %v1440, 8
      %v2740 = vpop.permute.xlu0 %2739
      %2741 = vrot.lane.b32.xlu0 %v1445, 8
      %v2742 = vpop.permute.xlu0 %2741
      %2743 = vrot.lane.b32.xlu0 %v1450, 8
      %v2744 = vpop.permute.xlu0 %2743
      %2777 = vrot.lane.b32.xlu0 %v1997, 16
      %v2778 = vpop.permute.xlu0 %2777
      %2779 = vrot.lane.b32.xlu0 %v2002, 16
      %v2780 = vpop.permute.xlu0 %2779
      %2781 = vrot.lane.b32.xlu0 %v2007, 16
      %v2782 = vpop.permute.xlu0 %2781
      %2783 = vrot.lane.b32.xlu0 %v2012, 16
      %v2784 = vpop.permute.xlu0 %2783
      %2785 = vrot.lane.b32.xlu0 %v2017, 16
      %v2786 = vpop.permute.xlu0 %2785
      %2787 = vrot.lane.b32.xlu0 %v2022, 16
      %v2788 = vpop.permute.xlu0 %2787
      %2789 = vrot.lane.b32.xlu0 %v2027, 16
      %v2790 = vpop.permute.xlu0 %2789
      %2791 = vrot.lane.b32.xlu0 %v2032, 16
      %v2792 = vpop.permute.xlu0 %2791
      %2793 = vrot.lane.b32.xlu0 %v2037, 16
      %v2794 = vpop.permute.xlu0 %2793
      %2795 = vrot.lane.b32.xlu0 %v2042, 16
      %v2796 = vpop.permute.xlu0 %2795
      %2797 = vrot.lane.b32.xlu0 %v2047, 16
      %v2798 = vpop.permute.xlu0 %2797
      %2799 = vrot.lane.b32.xlu0 %v2052, 16
      %v2800 = vpop.permute.xlu0 %2799
      %2801 = vrot.lane.b32.xlu0 %v2057, 16
      %v2802 = vpop.permute.xlu0 %2801
      %2803 = vrot.lane.b32.xlu0 %v2062, 16
      %v2804 = vpop.permute.xlu0 %2803
      %2805 = vrot.lane.b32.xlu0 %v2067, 16
      %v2806 = vpop.permute.xlu0 %2805
      %2807 = vrot.lane.b32.xlu0 %v2072, 16
      %v2808 = vpop.permute.xlu0 %2807
      %2841 = vrot.lane.b32.xlu0 %v2619, 24
      %v2842 = vpop.permute.xlu0 %2841
      %2843 = vrot.lane.b32.xlu0 %v2624, 24
      %v2844 = vpop.permute.xlu0 %2843
      %2845 = vrot.lane.b32.xlu0 %v2629, 24
      %v2846 = vpop.permute.xlu0 %2845
      %2847 = vrot.lane.b32.xlu0 %v2634, 24
      %v2848 = vpop.permute.xlu0 %2847
      %2849 = vrot.lane.b32.xlu0 %v2639, 24
      %v2850 = vpop.permute.xlu0 %2849
      %2851 = vrot.lane.b32.xlu0 %v2644, 24
      %v2852 = vpop.permute.xlu0 %2851
      %2853 = vrot.lane.b32.xlu0 %v2649, 24
      %v2854 = vpop.permute.xlu0 %2853
      %2855 = vrot.lane.b32.xlu0 %v2654, 24
      %v2856 = vpop.permute.xlu0 %2855
      %2857 = vrot.lane.b32.xlu0 %v2659, 24
      %v2858 = vpop.permute.xlu0 %2857
      %2859 = vrot.lane.b32.xlu0 %v2664, 24
      %v2860 = vpop.permute.xlu0 %2859
      %2861 = vrot.lane.b32.xlu0 %v2669, 24
      %v2862 = vpop.permute.xlu0 %2861
      %2863 = vrot.lane.b32.xlu0 %v2674, 24
      %v2864 = vpop.permute.xlu0 %2863
      %2865 = vrot.lane.b32.xlu0 %v2679, 24
      %v2866 = vpop.permute.xlu0 %2865
      %2867 = vrot.lane.b32.xlu0 %v2684, 24
      %v2868 = vpop.permute.xlu0 %2867
      %2869 = vrot.lane.b32.xlu0 %v2689, 24
      %v2870 = vpop.permute.xlu0 %2869
      %2871 = vrot.lane.b32.xlu0 %v2694, 24
      %v2872 = vpop.permute.xlu0 %2871
      %v2889 = vsel %vm235, %v749, %v2714
      %v2890 = vsel %vm235, %v754, %v2716
      %v2891 = vsel %vm235, %v759, %v2718
      %v2892 = vsel %vm235, %v764, %v2720
      %v2893 = vsel %vm235, %v769, %v2722
      %v2894 = vsel %vm235, %v774, %v2724
      %v2895 = vsel %vm235, %v779, %v2726
      %v2896 = vsel %vm235, %v784, %v2728
      %v2897 = vsel %vm235, %v789, %v2730
      %v2898 = vsel %vm235, %v794, %v2732
      %v2899 = vsel %vm235, %v799, %v2734
      %v2900 = vsel %vm235, %v804, %v2736
      %v2901 = vsel %vm235, %v809, %v2738
      %v2902 = vsel %vm235, %v814, %v2740
      %v2903 = vsel %vm235, %v819, %v2742
      %v2904 = vsel %vm235, %v824, %v2744
      %vm2905 = vcmask 130048
      %v2906 = vsel %vm2905, %v2889, %v2778
      %v2907 = vsel %vm2905, %v2890, %v2780
      %v2908 = vsel %vm2905, %v2891, %v2782
      %v2909 = vsel %vm2905, %v2892, %v2784
      %v2910 = vsel %vm2905, %v2893, %v2786
      %v2911 = vsel %vm2905, %v2894, %v2788
      %v2912 = vsel %vm2905, %v2895, %v2790
      %v2913 = vsel %vm2905, %v2896, %v2792
      %v2914 = vsel %vm2905, %v2897, %v2794
      %v2915 = vsel %vm2905, %v2898, %v2796
      %v2916 = vsel %vm2905, %v2899, %v2798
      %v2917 = vsel %vm2905, %v2900, %v2800
      %v2918 = vsel %vm2905, %v2901, %v2802
      %v2919 = vsel %vm2905, %v2902, %v2804
      %v2920 = vsel %vm2905, %v2903, %v2806
      %v2921 = vsel %vm2905, %v2904, %v2808
      %vm2922 = vcmask 195584
      %v2923 = vsel %vm2922, %v2906, %v2842
      %v2924 = vsel %vm2922, %v2907, %v2844
      %v2925 = vsel %vm2922, %v2908, %v2846
      %v2926 = vsel %vm2922, %v2909, %v2848
      %v2927 = vsel %vm2922, %v2910, %v2850
      %v2928 = vsel %vm2922, %v2911, %v2852
      %v2929 = vsel %vm2922, %v2912, %v2854
      %v2930 = vsel %vm2922, %v2913, %v2856
      %v2931 = vsel %vm2922, %v2914, %v2858
      %v2932 = vsel %vm2922, %v2915, %v2860
      %v2933 = vsel %vm2922, %v2916, %v2862
      %v2934 = vsel %vm2922, %v2917, %v2864
      %v2935 = vsel %vm2922, %v2918, %v2866
      %v2936 = vsel %vm2922, %v2919, %v2868
      %v2937 = vsel %vm2922, %v2920, %v2870
      %v2938 = vsel %vm2922, %v2921, %v2872
      %2939 = vst.msk [vmem:[%s210] sm:$0xff] %vm457, %v2923
      %2940 = vst.msk [vmem:[%s210 + $0x8] sm:$0xff] %vm457, %v2924
      %2941 = vst.msk [vmem:[%s210 + $0x10] sm:$0xff] %vm457, %v2925
      %2942 = vst.msk [vmem:[%s210 + $0x18] sm:$0xff] %vm457, %v2926
      %2943 = vst.msk [vmem:[%s210 + $0x20] sm:$0xff] %vm457, %v2927
      %2944 = vst.msk [vmem:[%s210 + $0x28] sm:$0xff] %vm457, %v2928
      %2945 = vst.msk [vmem:[%s210 + $0x30] sm:$0xff] %vm457, %v2929
      %2946 = vst.msk [vmem:[%s210 + $0x38] sm:$0xff] %vm457, %v2930
      %2947 = vst.msk [vmem:[%s210 + $0x40] sm:$0xff] %vm457, %v2931
      %2948 = vst.msk [vmem:[%s210 + $0x48] sm:$0xff] %vm457, %v2932
      %2949 = vst.msk [vmem:[%s210 + $0x50] sm:$0xff] %vm457, %v2933
      %2950 = vst.msk [vmem:[%s210 + $0x58] sm:$0xff] %vm457, %v2934
      %2951 = vst.msk [vmem:[%s210 + $0x60] sm:$0xff] %vm457, %v2935
      %2952 = vst.msk [vmem:[%s210 + $0x68] sm:$0xff] %vm457, %v2936
      %2953 = vst.msk [vmem:[%s210 + $0x70] sm:$0xff] %vm457, %v2937
      %2954 = vst.msk [vmem:[%s210 + $0x78] sm:$0xff] %vm457, %v2938
      %p2955 = scmp.lt.s32.totalorder %s14, 3
      %s2956 = scalar_select %p2955, %s14, 3
      %s2957 = smul.addr %s2956, 16
      %s2958 = smul.addr %s2957, 8
      %s2959 = scalar_lea.vmem %s3, %s2958
      // Predicated region
      $region33: #{cross_view_swap_attention.32} parent=31 // pred_check
        %p2960 = pneg %p110
      $region34: #{cross_view_swap_attention.32} parent=31 // pred_check_branch
        %2962 = sbr.rel (%p2960) target = $region36
      $region35: #{cross_view_swap_attention.32} parent=31 // pred_region
        _
      $region36: #{cross_view_swap_attention.32} parent=31 // pred_fallthru
        _
    $region32: #{cross_view_swap_attention.32} parent=5 // pred_fallthru
      _
    %p2963 = scmp.le.s32.totalorder 2, %s9
    // Predicated region
    $region37: #{cross_view_swap_attention.32} parent=5 // pred_check
      %p2964 = pneg %p2963
    $region38: #{cross_view_swap_attention.32} parent=5 // pred_check_branch
      %2966 = sbr.rel (%p2964) target = $region40
    $region39: #{cross_view_swap_attention.32} parent=5 // pred_region
      %s2967 = ssub.s32 %s9, 2
      // Predicated region
      $region41: #{cross_view_swap_attention.32} parent=39 // pred_check
        %p2968 = pneg %p116
      $region42: #{cross_view_swap_attention.32} parent=39 // pred_check_branch
        %2970 = sbr.rel (%p2968) target = $region44
      $region43: #{cross_view_swap_attention.32} parent=39 // pred_region
        %p2971 = scmp.lt.s32.totalorder %s15, 3
        %s2972 = scalar_select %p2971, %s15, 3
        %s2973 = smul.addr %s2972, 16
        %s2974 = smul.addr %s2973, 8
        %s2975 = scalar_lea.vmem %s3, %s2974
      $region44: #{cross_view_swap_attention.32} parent=39 // pred_fallthru
        _
    $region40: #{cross_view_swap_attention.32} parent=5 // pred_fallthru
      _
  $region6: #{cross_view_swap_attention.32} parent=0 // loop_footer
    %s13 = sadd.s32 1, %s9
  $region7: #{cross_view_swap_attention.32} parent=0 // loop_footer_branch
    %8 = sbr.rel target = $region3
  $region8: #{cross_view_swap_attention.32} parent=0 // loop_exit
    _

// kernel: cross_view_swap_attention.34
$region0: #{cross_view_swap_attention.34}
  #allocation0 [shape = 'u32[]', space=smem, size = 0x4, offset = 0x4, fixed_abs, tag = 'smem constant byte address 0x4 - core index']
  #allocation1 [shape = 'u32[144,128]{1,0:T(1,128)}', space=vmem, size = 0x12000, scoped, tag = 'internal scratch']
  %s0 = inlined_call_operand.vmem [shape: f32[256,32], index: 0, kind: input, shape index: {}]
  %s1 = inlined_call_operand.vmem [shape: f32[1,32], index: 1, kind: input, shape index: {}]
  %s2 = inlined_call_operand.vmem [shape: f32[1,32], index: 2, kind: input, shape index: {}]
  %s3 = inlined_call_operand.vmem [shape: f32[32,64], index: 3, kind: input, shape index: {}]
  %s4 = inlined_call_operand.vmem [shape: f32[1,64], index: 4, kind: input, shape index: {}]
  %s5 = inlined_call_operand.vmem [shape: f32[256,64], index: 5, kind: output, shape index: {}]
  %s6 = sld [smem:[#allocation0]]
  $region30: #{cross_view_swap_attention.34} parent=0
    _
  %s8 = ssub.s32 1, %s6
  %s9 = scalar_select 0, %s8, %s6
  // Predicated region
  $region2: #{cross_view_swap_attention.34} parent=0 // pred_check
    _
  $region3: #{cross_view_swap_attention.34} parent=0 // pred_check_branch
    %11 = sbr.rel (0) target = $region5
  $region4: #{cross_view_swap_attention.34} parent=0 // pred_region
    _
  $region5: #{cross_view_swap_attention.34} parent=0 // pred_fallthru
    _
  // Predicated region
  $region6: #{cross_view_swap_attention.34} parent=0 // pred_check
    _
  $region7: #{cross_view_swap_attention.34} parent=0 // pred_check_branch
    %13 = sbr.rel (0) target = $region9
  $region8: #{cross_view_swap_attention.34} parent=0 // pred_region
    _
  $region9: #{cross_view_swap_attention.34} parent=0 // pred_fallthru
    _
  // Predicated region
  $region10: #{cross_view_swap_attention.34} parent=0 // pred_check
    _
  $region11: #{cross_view_swap_attention.34} parent=0 // pred_check_branch
    %15 = sbr.rel (0) target = $region13
  $region12: #{cross_view_swap_attention.34} parent=0 // pred_region
    _
  $region13: #{cross_view_swap_attention.34} parent=0 // pred_fallthru
    _
  // Predicated region
  $region14: #{cross_view_swap_attention.34} parent=0 // pred_check
    _
  $region15: #{cross_view_swap_attention.34} parent=0 // pred_check_branch
    %17 = sbr.rel (0) target = $region17
  $region16: #{cross_view_swap_attention.34} parent=0 // pred_region
    _
  $region17: #{cross_view_swap_attention.34} parent=0 // pred_fallthru
    _
  // Predicated region
  $region18: #{cross_view_swap_attention.34} parent=0 // pred_check
    _
  $region19: #{cross_view_swap_attention.34} parent=0 // pred_check_branch
    %19 = sbr.rel (0) target = $region21
  $region20: #{cross_view_swap_attention.34} parent=0 // pred_region
    _
  $region21: #{cross_view_swap_attention.34} parent=0 // pred_fallthru
    _
  %v20 = vld [vmem:[%s0] sm:$0xff]
  %v21 = vld [vmem:[%s0 + $0x8] sm:$0xff]
  %v22 = vld [vmem:[%s0 + $0x10] sm:$0xff]
  %v23 = vld [vmem:[%s0 + $0x18] sm:$0xff]
  %v24 = vld [vmem:[%s0 + $0x20] sm:$0xff]
  %v25 = vld [vmem:[%s0 + $0x28] sm:$0xff]
  %v26 = vld [vmem:[%s0 + $0x30] sm:$0xff]
  %v27 = vld [vmem:[%s0 + $0x38] sm:$0xff]
  %v28 = vld [vmem:[%s0 + $0x40] sm:$0xff]
  %v29 = vld [vmem:[%s0 + $0x48] sm:$0xff]
  %v30 = vld [vmem:[%s0 + $0x50] sm:$0xff]
  %v31 = vld [vmem:[%s0 + $0x58] sm:$0xff]
  %v32 = vld [vmem:[%s0 + $0x60] sm:$0xff]
  %v33 = vld [vmem:[%s0 + $0x68] sm:$0xff]
  %v34 = vld [vmem:[%s0 + $0x70] sm:$0xff]
  %v35 = vld [vmem:[%s0 + $0x78] sm:$0xff]
  %v36 = vld [vmem:[%s0 + $0x80] sm:$0xff]
  %v37 = vld [vmem:[%s0 + $0x88] sm:$0xff]
  %v38 = vld [vmem:[%s0 + $0x90] sm:$0xff]
  %v39 = vld [vmem:[%s0 + $0x98] sm:$0xff]
  %v40 = vld [vmem:[%s0 + $0xa0] sm:$0xff]
  %v41 = vld [vmem:[%s0 + $0xa8] sm:$0xff]
  %v42 = vld [vmem:[%s0 + $0xb0] sm:$0xff]
  %v43 = vld [vmem:[%s0 + $0xb8] sm:$0xff]
  %v44 = vld [vmem:[%s0 + $0xc0] sm:$0xff]
  %v45 = vld [vmem:[%s0 + $0xc8] sm:$0xff]
  %v46 = vld [vmem:[%s0 + $0xd0] sm:$0xff]
  %v47 = vld [vmem:[%s0 + $0xd8] sm:$0xff]
  %v48 = vld [vmem:[%s0 + $0xe0] sm:$0xff]
  %v49 = vld [vmem:[%s0 + $0xe8] sm:$0xff]
  %v50 = vld [vmem:[%s0 + $0xf0] sm:$0xff]
  %v51 = vld [vmem:[%s0 + $0xf8] sm:$0xff]
  %v52 = vld [vmem:[%s1] sm:$0x1]
  %v53 = vld [vmem:[%s2] sm:$0x1]
  %vm54 = vcmask 261120
  %v55 = vsel %vm54, %v20, 0.0
  %56 = vadd.xlane.f32.xlu0 %v55
  %v57 = vpop.xlane.xlu0 %56
  %v58 = vsel %vm54, %v21, 0.0
  %59 = vadd.xlane.f32.xlu0 %v58
  %v60 = vpop.xlane.xlu0 %59
  %v61 = vsel %vm54, %v22, 0.0
  %62 = vadd.xlane.f32.xlu0 %v61
  %v63 = vpop.xlane.xlu0 %62
  %v64 = vsel %vm54, %v23, 0.0
  %65 = vadd.xlane.f32.xlu0 %v64
  %v66 = vpop.xlane.xlu0 %65
  %v67 = vsel %vm54, %v24, 0.0
  %68 = vadd.xlane.f32.xlu0 %v67
  %v69 = vpop.xlane.xlu0 %68
  %v70 = vsel %vm54, %v25, 0.0
  %71 = vadd.xlane.f32.xlu0 %v70
  %v72 = vpop.xlane.xlu0 %71
  %v73 = vsel %vm54, %v26, 0.0
  %74 = vadd.xlane.f32.xlu0 %v73
  %v75 = vpop.xlane.xlu0 %74
  %v76 = vsel %vm54, %v27, 0.0
  %77 = vadd.xlane.f32.xlu0 %v76
  %v78 = vpop.xlane.xlu0 %77
  %v79 = vsel %vm54, %v28, 0.0
  %80 = vadd.xlane.f32.xlu0 %v79
  %v81 = vpop.xlane.xlu0 %80
  %v82 = vsel %vm54, %v29, 0.0
  %83 = vadd.xlane.f32.xlu0 %v82
  %v84 = vpop.xlane.xlu0 %83
  %v85 = vsel %vm54, %v30, 0.0
  %86 = vadd.xlane.f32.xlu0 %v85
  %v87 = vpop.xlane.xlu0 %86
  %v88 = vsel %vm54, %v31, 0.0
  %89 = vadd.xlane.f32.xlu0 %v88
  %v90 = vpop.xlane.xlu0 %89
  %v91 = vsel %vm54, %v32, 0.0
  %92 = vadd.xlane.f32.xlu0 %v91
  %v93 = vpop.xlane.xlu0 %92
  %v94 = vsel %vm54, %v33, 0.0
  %95 = vadd.xlane.f32.xlu0 %v94
  %v96 = vpop.xlane.xlu0 %95
  %v97 = vsel %vm54, %v34, 0.0
  %98 = vadd.xlane.f32.xlu0 %v97
  %v99 = vpop.xlane.xlu0 %98
  %v100 = vsel %vm54, %v35, 0.0
  %101 = vadd.xlane.f32.xlu0 %v100
  %v102 = vpop.xlane.xlu0 %101
  %v103 = vsel %vm54, %v36, 0.0
  %104 = vadd.xlane.f32.xlu0 %v103
  %v105 = vpop.xlane.xlu0 %104
  %v106 = vsel %vm54, %v37, 0.0
  %107 = vadd.xlane.f32.xlu0 %v106
  %v108 = vpop.xlane.xlu0 %107
  %v109 = vsel %vm54, %v38, 0.0
  %110 = vadd.xlane.f32.xlu0 %v109
  %v111 = vpop.xlane.xlu0 %110
  %v112 = vsel %vm54, %v39, 0.0
  %113 = vadd.xlane.f32.xlu0 %v112
  %v114 = vpop.xlane.xlu0 %113
  %v115 = vsel %vm54, %v40, 0.0
  %116 = vadd.xlane.f32.xlu0 %v115
  %v117 = vpop.xlane.xlu0 %116
  %v118 = vsel %vm54, %v41, 0.0
  %119 = vadd.xlane.f32.xlu0 %v118
  %v120 = vpop.xlane.xlu0 %119
  %v121 = vsel %vm54, %v42, 0.0
  %122 = vadd.xlane.f32.xlu0 %v121
  %v123 = vpop.xlane.xlu0 %122
  %v124 = vsel %vm54, %v43, 0.0
  %125 = vadd.xlane.f32.xlu0 %v124
  %v126 = vpop.xlane.xlu0 %125
  %v127 = vsel %vm54, %v44, 0.0
  %128 = vadd.xlane.f32.xlu0 %v127
  %v129 = vpop.xlane.xlu0 %128
  %v130 = vsel %vm54, %v45, 0.0
  %131 = vadd.xlane.f32.xlu0 %v130
  %v132 = vpop.xlane.xlu0 %131
  %v133 = vsel %vm54, %v46, 0.0
  %134 = vadd.xlane.f32.xlu0 %v133
  %v135 = vpop.xlane.xlu0 %134
  %v136 = vsel %vm54, %v47, 0.0
  %137 = vadd.xlane.f32.xlu0 %v136
  %v138 = vpop.xlane.xlu0 %137
  %v139 = vsel %vm54, %v48, 0.0
  %140 = vadd.xlane.f32.xlu0 %v139
  %v141 = vpop.xlane.xlu0 %140
  %v142 = vsel %vm54, %v49, 0.0
  %143 = vadd.xlane.f32.xlu0 %v142
  %v144 = vpop.xlane.xlu0 %143
  %v145 = vsel %vm54, %v50, 0.0
  %146 = vadd.xlane.f32.xlu0 %v145
  %v147 = vpop.xlane.xlu0 %146
  %v148 = vsel %vm54, %v51, 0.0
  %149 = vadd.xlane.f32.xlu0 %v148
  %v150 = vpop.xlane.xlu0 %149
  %v151 = vrcp.pop 32.0
  %v152 = vmul.f32 %v57, %v151
  %v153 = vmul.f32 %v60, %v151
  %v154 = vmul.f32 %v63, %v151
  %v155 = vmul.f32 %v66, %v151
  %v156 = vmul.f32 %v69, %v151
  %v157 = vmul.f32 %v72, %v151
  %v158 = vmul.f32 %v75, %v151
  %v159 = vmul.f32 %v78, %v151
  %v160 = vmul.f32 %v81, %v151
  %v161 = vmul.f32 %v84, %v151
  %v162 = vmul.f32 %v87, %v151
  %v163 = vmul.f32 %v90, %v151
  %v164 = vmul.f32 %v93, %v151
  %v165 = vmul.f32 %v96, %v151
  %v166 = vmul.f32 %v99, %v151
  %v167 = vmul.f32 %v102, %v151
  %v168 = vmul.f32 %v105, %v151
  %v169 = vmul.f32 %v108, %v151
  %v170 = vmul.f32 %v111, %v151
  %v171 = vmul.f32 %v114, %v151
  %v172 = vmul.f32 %v117, %v151
  %v173 = vmul.f32 %v120, %v151
  %v174 = vmul.f32 %v123, %v151
  %v175 = vmul.f32 %v126, %v151
  %v176 = vmul.f32 %v129, %v151
  %v177 = vmul.f32 %v132, %v151
  %v178 = vmul.f32 %v135, %v151
  %v179 = vmul.f32 %v138, %v151
  %v180 = vmul.f32 %v141, %v151
  %v181 = vmul.f32 %v144, %v151
  %v182 = vmul.f32 %v147, %v151
  %v183 = vmul.f32 %v150, %v151
  %v184 = vsub.f32 %v20, %v152
  %v185 = vsub.f32 %v21, %v153
  %v186 = vsub.f32 %v22, %v154
  %v187 = vsub.f32 %v23, %v155
  %v188 = vsub.f32 %v24, %v156
  %v189 = vsub.f32 %v25, %v157
  %v190 = vsub.f32 %v26, %v158
  %v191 = vsub.f32 %v27, %v159
  %v192 = vsub.f32 %v28, %v160
  %v193 = vsub.f32 %v29, %v161
  %v194 = vsub.f32 %v30, %v162
  %v195 = vsub.f32 %v31, %v163
  %v196 = vsub.f32 %v32, %v164
  %v197 = vsub.f32 %v33, %v165
  %v198 = vsub.f32 %v34, %v166
  %v199 = vsub.f32 %v35, %v167
  %v200 = vsub.f32 %v36, %v168
  %v201 = vsub.f32 %v37, %v169
  %v202 = vsub.f32 %v38, %v170
  %v203 = vsub.f32 %v39, %v171
  %v204 = vsub.f32 %v40, %v172
  %v205 = vsub.f32 %v41, %v173
  %v206 = vsub.f32 %v42, %v174
  %v207 = vsub.f32 %v43, %v175
  %v208 = vsub.f32 %v44, %v176
  %v209 = vsub.f32 %v45, %v177
  %v210 = vsub.f32 %v46, %v178
  %v211 = vsub.f32 %v47, %v179
  %v212 = vsub.f32 %v48, %v180
  %v213 = vsub.f32 %v49, %v181
  %v214 = vsub.f32 %v50, %v182
  %v215 = vsub.f32 %v51, %v183
  %v216 = vmul.f32 %v184, %v184
  %v217 = vmul.f32 %v185, %v185
  %v218 = vmul.f32 %v186, %v186
  %v219 = vmul.f32 %v187, %v187
  %v220 = vmul.f32 %v188, %v188
  %v221 = vmul.f32 %v189, %v189
  %v222 = vmul.f32 %v190, %v190
  %v223 = vmul.f32 %v191, %v191
  %v224 = vmul.f32 %v192, %v192
  %v225 = vmul.f32 %v193, %v193
  %v226 = vmul.f32 %v194, %v194
  %v227 = vmul.f32 %v195, %v195
  %v228 = vmul.f32 %v196, %v196
  %v229 = vmul.f32 %v197, %v197
  %v230 = vmul.f32 %v198, %v198
  %v231 = vmul.f32 %v199, %v199
  %v232 = vmul.f32 %v200, %v200
  %v233 = vmul.f32 %v201, %v201
  %v234 = vmul.f32 %v202, %v202
  %v235 = vmul.f32 %v203, %v203
  %v236 = vmul.f32 %v204, %v204
  %v237 = vmul.f32 %v205, %v205
  %v238 = vmul.f32 %v206, %v206
  %v239 = vmul.f32 %v207, %v207
  %v240 = vmul.f32 %v208, %v208
  %v241 = vmul.f32 %v209, %v209
  %v242 = vmul.f32 %v210, %v210
  %v243 = vmul.f32 %v211, %v211
  %v244 = vmul.f32 %v212, %v212
  %v245 = vmul.f32 %v213, %v213
  %v246 = vmul.f32 %v214, %v214
  %v247 = vmul.f32 %v215, %v215
  %v248 = vsel %vm54, %v216, 0.0
  %249 = vadd.xlane.f32.xlu0 %v248
  %v250 = vpop.xlane.xlu0 %249
  %v251 = vsel %vm54, %v217, 0.0
  %252 = vadd.xlane.f32.xlu0 %v251
  %v253 = vpop.xlane.xlu0 %252
  %v254 = vsel %vm54, %v218, 0.0
  %255 = vadd.xlane.f32.xlu0 %v254
  %v256 = vpop.xlane.xlu0 %255
  %v257 = vsel %vm54, %v219, 0.0
  %258 = vadd.xlane.f32.xlu0 %v257
  %v259 = vpop.xlane.xlu0 %258
  %v260 = vsel %vm54, %v220, 0.0
  %261 = vadd.xlane.f32.xlu0 %v260
  %v262 = vpop.xlane.xlu0 %261
  %v263 = vsel %vm54, %v221, 0.0
  %264 = vadd.xlane.f32.xlu0 %v263
  %v265 = vpop.xlane.xlu0 %264
  %v266 = vsel %vm54, %v222, 0.0
  %267 = vadd.xlane.f32.xlu0 %v266
  %v268 = vpop.xlane.xlu0 %267
  %v269 = vsel %vm54, %v223, 0.0
  %270 = vadd.xlane.f32.xlu0 %v269
  %v271 = vpop.xlane.xlu0 %270
  %v272 = vsel %vm54, %v224, 0.0
  %273 = vadd.xlane.f32.xlu0 %v272
  %v274 = vpop.xlane.xlu0 %273
  %v275 = vsel %vm54, %v225, 0.0
  %276 = vadd.xlane.f32.xlu0 %v275
  %v277 = vpop.xlane.xlu0 %276
  %v278 = vsel %vm54, %v226, 0.0
  %279 = vadd.xlane.f32.xlu0 %v278
  %v280 = vpop.xlane.xlu0 %279
  %v281 = vsel %vm54, %v227, 0.0
  %282 = vadd.xlane.f32.xlu0 %v281
  %v283 = vpop.xlane.xlu0 %282
  %v284 = vsel %vm54, %v228, 0.0
  %285 = vadd.xlane.f32.xlu0 %v284
  %v286 = vpop.xlane.xlu0 %285
  %v287 = vsel %vm54, %v229, 0.0
  %288 = vadd.xlane.f32.xlu0 %v287
  %v289 = vpop.xlane.xlu0 %288
  %v290 = vsel %vm54, %v230, 0.0
  %291 = vadd.xlane.f32.xlu0 %v290
  %v292 = vpop.xlane.xlu0 %291
  %v293 = vsel %vm54, %v231, 0.0
  %294 = vadd.xlane.f32.xlu0 %v293
  %v295 = vpop.xlane.xlu0 %294
  %v296 = vsel %vm54, %v232, 0.0
  %297 = vadd.xlane.f32.xlu0 %v296
  %v298 = vpop.xlane.xlu0 %297
  %v299 = vsel %vm54, %v233, 0.0
  %300 = vadd.xlane.f32.xlu0 %v299
  %v301 = vpop.xlane.xlu0 %300
  %v302 = vsel %vm54, %v234, 0.0
  %303 = vadd.xlane.f32.xlu0 %v302
  %v304 = vpop.xlane.xlu0 %303
  %v305 = vsel %vm54, %v235, 0.0
  %306 = vadd.xlane.f32.xlu0 %v305
  %v307 = vpop.xlane.xlu0 %306
  %v308 = vsel %vm54, %v236, 0.0
  %309 = vadd.xlane.f32.xlu0 %v308
  %v310 = vpop.xlane.xlu0 %309
  %v311 = vsel %vm54, %v237, 0.0
  %312 = vadd.xlane.f32.xlu0 %v311
  %v313 = vpop.xlane.xlu0 %312
  %v314 = vsel %vm54, %v238, 0.0
  %315 = vadd.xlane.f32.xlu0 %v314
  %v316 = vpop.xlane.xlu0 %315
  %v317 = vsel %vm54, %v239, 0.0
  %318 = vadd.xlane.f32.xlu0 %v317
  %v319 = vpop.xlane.xlu0 %318
  %v320 = vsel %vm54, %v240, 0.0
  %321 = vadd.xlane.f32.xlu0 %v320
  %v322 = vpop.xlane.xlu0 %321
  %v323 = vsel %vm54, %v241, 0.0
  %324 = vadd.xlane.f32.xlu0 %v323
  %v325 = vpop.xlane.xlu0 %324
  %v326 = vsel %vm54, %v242, 0.0
  %327 = vadd.xlane.f32.xlu0 %v326
  %v328 = vpop.xlane.xlu0 %327
  %v329 = vsel %vm54, %v243, 0.0
  %330 = vadd.xlane.f32.xlu0 %v329
  %v331 = vpop.xlane.xlu0 %330
  %v332 = vsel %vm54, %v244, 0.0
  %333 = vadd.xlane.f32.xlu0 %v332
  %v334 = vpop.xlane.xlu0 %333
  %v335 = vsel %vm54, %v245, 0.0
  %336 = vadd.xlane.f32.xlu0 %v335
  %v337 = vpop.xlane.xlu0 %336
  %v338 = vsel %vm54, %v246, 0.0
  %339 = vadd.xlane.f32.xlu0 %v338
  %v340 = vpop.xlane.xlu0 %339
  %v341 = vsel %vm54, %v247, 0.0
  %342 = vadd.xlane.f32.xlu0 %v341
  %v343 = vpop.xlane.xlu0 %342
  %v344 = vmul.f32 %v250, %v151
  %v345 = vmul.f32 %v253, %v151
  %v346 = vmul.f32 %v256, %v151
  %v347 = vmul.f32 %v259, %v151
  %v348 = vmul.f32 %v262, %v151
  %v349 = vmul.f32 %v265, %v151
  %v350 = vmul.f32 %v268, %v151
  %v351 = vmul.f32 %v271, %v151
  %v352 = vmul.f32 %v274, %v151
  %v353 = vmul.f32 %v277, %v151
  %v354 = vmul.f32 %v280, %v151
  %v355 = vmul.f32 %v283, %v151
  %v356 = vmul.f32 %v286, %v151
  %v357 = vmul.f32 %v289, %v151
  %v358 = vmul.f32 %v292, %v151
  %v359 = vmul.f32 %v295, %v151
  %v360 = vmul.f32 %v298, %v151
  %v361 = vmul.f32 %v301, %v151
  %v362 = vmul.f32 %v304, %v151
  %v363 = vmul.f32 %v307, %v151
  %v364 = vmul.f32 %v310, %v151
  %v365 = vmul.f32 %v313, %v151
  %v366 = vmul.f32 %v316, %v151
  %v367 = vmul.f32 %v319, %v151
  %v368 = vmul.f32 %v322, %v151
  %v369 = vmul.f32 %v325, %v151
  %v370 = vmul.f32 %v328, %v151
  %v371 = vmul.f32 %v331, %v151
  %v372 = vmul.f32 %v334, %v151
  %v373 = vmul.f32 %v337, %v151
  %v374 = vmul.f32 %v340, %v151
  %v375 = vmul.f32 %v343, %v151
  %v376 = vadd.f32 %v344, 1e-05
  %v377 = vadd.f32 %v345, 1e-05
  %v378 = vadd.f32 %v346, 1e-05
  %v379 = vadd.f32 %v347, 1e-05
  %v380 = vadd.f32 %v348, 1e-05
  %v381 = vadd.f32 %v349, 1e-05
  %v382 = vadd.f32 %v350, 1e-05
  %v383 = vadd.f32 %v351, 1e-05
  %v384 = vadd.f32 %v352, 1e-05
  %v385 = vadd.f32 %v353, 1e-05
  %v386 = vadd.f32 %v354, 1e-05
  %v387 = vadd.f32 %v355, 1e-05
  %v388 = vadd.f32 %v356, 1e-05
  %v389 = vadd.f32 %v357, 1e-05
  %v390 = vadd.f32 %v358, 1e-05
  %v391 = vadd.f32 %v359, 1e-05
  %v392 = vadd.f32 %v360, 1e-05
  %v393 = vadd.f32 %v361, 1e-05
  %v394 = vadd.f32 %v362, 1e-05
  %v395 = vadd.f32 %v363, 1e-05
  %v396 = vadd.f32 %v364, 1e-05
  %v397 = vadd.f32 %v365, 1e-05
  %v398 = vadd.f32 %v366, 1e-05
  %v399 = vadd.f32 %v367, 1e-05
  %v400 = vadd.f32 %v368, 1e-05
  %v401 = vadd.f32 %v369, 1e-05
  %v402 = vadd.f32 %v370, 1e-05
  %v403 = vadd.f32 %v371, 1e-05
  %v404 = vadd.f32 %v372, 1e-05
  %v405 = vadd.f32 %v373, 1e-05
  %v406 = vadd.f32 %v374, 1e-05
  %v407 = vadd.f32 %v375, 1e-05
  %v408 = vrsqrt.pop %v376
  %v409 = vrsqrt.pop %v377
  %v410 = vrsqrt.pop %v378
  %v411 = vrsqrt.pop %v379
  %v412 = vrsqrt.pop %v380
  %v413 = vrsqrt.pop %v381
  %v414 = vrsqrt.pop %v382
  %v415 = vrsqrt.pop %v383
  %v416 = vrsqrt.pop %v384
  %v417 = vrsqrt.pop %v385
  %v418 = vrsqrt.pop %v386
  %v419 = vrsqrt.pop %v387
  %v420 = vrsqrt.pop %v388
  %v421 = vrsqrt.pop %v389
  %v422 = vrsqrt.pop %v390
  %v423 = vrsqrt.pop %v391
  %v424 = vrsqrt.pop %v392
  %v425 = vrsqrt.pop %v393
  %v426 = vrsqrt.pop %v394
  %v427 = vrsqrt.pop %v395
  %v428 = vrsqrt.pop %v396
  %v429 = vrsqrt.pop %v397
  %v430 = vrsqrt.pop %v398
  %v431 = vrsqrt.pop %v399
  %v432 = vrsqrt.pop %v400
  %v433 = vrsqrt.pop %v401
  %v434 = vrsqrt.pop %v402
  %v435 = vrsqrt.pop %v403
  %v436 = vrsqrt.pop %v404
  %v437 = vrsqrt.pop %v405
  %v438 = vrsqrt.pop %v406
  %v439 = vrsqrt.pop %v407
  %v440 = vmul.f32 %v184, %v408
  %v441 = vmul.f32 %v185, %v409
  %v442 = vmul.f32 %v186, %v410
  %v443 = vmul.f32 %v187, %v411
  %v444 = vmul.f32 %v188, %v412
  %v445 = vmul.f32 %v189, %v413
  %v446 = vmul.f32 %v190, %v414
  %v447 = vmul.f32 %v191, %v415
  %v448 = vmul.f32 %v192, %v416
  %v449 = vmul.f32 %v193, %v417
  %v450 = vmul.f32 %v194, %v418
  %v451 = vmul.f32 %v195, %v419
  %v452 = vmul.f32 %v196, %v420
  %v453 = vmul.f32 %v197, %v421
  %v454 = vmul.f32 %v198, %v422
  %v455 = vmul.f32 %v199, %v423
  %v456 = vmul.f32 %v200, %v424
  %v457 = vmul.f32 %v201, %v425
  %v458 = vmul.f32 %v202, %v426
  %v459 = vmul.f32 %v203, %v427
  %v460 = vmul.f32 %v204, %v428
  %v461 = vmul.f32 %v205, %v429
  %v462 = vmul.f32 %v206, %v430
  %v463 = vmul.f32 %v207, %v431
  %v464 = vmul.f32 %v208, %v432
  %v465 = vmul.f32 %v209, %v433
  %v466 = vmul.f32 %v210, %v434
  %v467 = vmul.f32 %v211, %v435
  %v468 = vmul.f32 %v212, %v436
  %v469 = vmul.f32 %v213, %v437
  %v470 = vmul.f32 %v214, %v438
  %v471 = vmul.f32 %v215, %v439
  %v473 = vlaneseq
  %v474 = vshrl.u32 %v473, 7
  %v475 = vsub.s32 0, %v474
  %v476 = vrot.slane %v52, %v475
  %v478 = vmul.f32 %v440, %v476
  %v479 = vmul.f32 %v441, %v476
  %v480 = vmul.f32 %v442, %v476
  %v481 = vmul.f32 %v443, %v476
  %v482 = vmul.f32 %v444, %v476
  %v483 = vmul.f32 %v445, %v476
  %v484 = vmul.f32 %v446, %v476
  %v485 = vmul.f32 %v447, %v476
  %v486 = vmul.f32 %v448, %v476
  %v487 = vmul.f32 %v449, %v476
  %v488 = vmul.f32 %v450, %v476
  %v489 = vmul.f32 %v451, %v476
  %v490 = vmul.f32 %v452, %v476
  %v491 = vmul.f32 %v453, %v476
  %v492 = vmul.f32 %v454, %v476
  %v493 = vmul.f32 %v455, %v476
  %v494 = vmul.f32 %v456, %v476
  %v495 = vmul.f32 %v457, %v476
  %v496 = vmul.f32 %v458, %v476
  %v497 = vmul.f32 %v459, %v476
  %v498 = vmul.f32 %v460, %v476
  %v499 = vmul.f32 %v461, %v476
  %v500 = vmul.f32 %v462, %v476
  %v501 = vmul.f32 %v463, %v476
  %v502 = vmul.f32 %v464, %v476
  %v503 = vmul.f32 %v465, %v476
  %v504 = vmul.f32 %v466, %v476
  %v505 = vmul.f32 %v467, %v476
  %v506 = vmul.f32 %v468, %v476
  %v507 = vmul.f32 %v469, %v476
  %v508 = vmul.f32 %v470, %v476
  %v509 = vmul.f32 %v471, %v476
  %v511 = vlaneseq
  %v512 = vshrl.u32 %v511, 7
  %v513 = vsub.s32 0, %v512
  %v514 = vrot.slane %v53, %v513
  %v516 = vadd.f32 %v478, %v514
  %v517 = vadd.f32 %v479, %v514
  %v518 = vadd.f32 %v480, %v514
  %v519 = vadd.f32 %v481, %v514
  %v520 = vadd.f32 %v482, %v514
  %v521 = vadd.f32 %v483, %v514
  %v522 = vadd.f32 %v484, %v514
  %v523 = vadd.f32 %v485, %v514
  %v524 = vadd.f32 %v486, %v514
  %v525 = vadd.f32 %v487, %v514
  %v526 = vadd.f32 %v488, %v514
  %v527 = vadd.f32 %v489, %v514
  %v528 = vadd.f32 %v490, %v514
  %v529 = vadd.f32 %v491, %v514
  %v530 = vadd.f32 %v492, %v514
  %v531 = vadd.f32 %v493, %v514
  %v532 = vadd.f32 %v494, %v514
  %v533 = vadd.f32 %v495, %v514
  %v534 = vadd.f32 %v496, %v514
  %v535 = vadd.f32 %v497, %v514
  %v536 = vadd.f32 %v498, %v514
  %v537 = vadd.f32 %v499, %v514
  %v538 = vadd.f32 %v500, %v514
  %v539 = vadd.f32 %v501, %v514
  %v540 = vadd.f32 %v502, %v514
  %v541 = vadd.f32 %v503, %v514
  %v542 = vadd.f32 %v504, %v514
  %v543 = vadd.f32 %v505, %v514
  %v544 = vadd.f32 %v506, %v514
  %v545 = vadd.f32 %v507, %v514
  %v546 = vadd.f32 %v508, %v514
  %v547 = vadd.f32 %v509, %v514
  %v548 = vld [vmem:[%s3] sm:$0xff]
  %v549 = vld [vmem:[%s3 + $0x8] sm:$0xff]
  %v550 = vld [vmem:[%s3 + $0x10] sm:$0xff]
  %v551 = vld [vmem:[%s3 + $0x18] sm:$0xff]
  %v552 = vld [vmem:[%s4] sm:$0x1]
  %v554 = vlaneseq
  %v555 = vshrl.u32 %v554, 7
  %v556 = vsub.s32 0, %v555
  %v557 = vrot.slane %v552, %v556
  %v560 = vsel %vm54, %v516, 0
  %v563 = vsel %vm54, %v517, 0
  %v566 = vsel %vm54, %v518, 0
  %v569 = vsel %vm54, %v519, 0
  %v572 = vsel %vm54, %v520, 0
  %v575 = vsel %vm54, %v521, 0
  %v578 = vsel %vm54, %v522, 0
  %v581 = vsel %vm54, %v523, 0
  %v584 = vsel %vm54, %v524, 0
  %v587 = vsel %vm54, %v525, 0
  %v590 = vsel %vm54, %v526, 0
  %v593 = vsel %vm54, %v527, 0
  %v596 = vsel %vm54, %v528, 0
  %v599 = vsel %vm54, %v529, 0
  %v602 = vsel %vm54, %v530, 0
  %v605 = vsel %vm54, %v531, 0
  %v608 = vsel %vm54, %v532, 0
  %v611 = vsel %vm54, %v533, 0
  %v614 = vsel %vm54, %v534, 0
  %v617 = vsel %vm54, %v535, 0
  %v620 = vsel %vm54, %v536, 0
  %v623 = vsel %vm54, %v537, 0
  %v626 = vsel %vm54, %v538, 0
  %v629 = vsel %vm54, %v539, 0
  %v632 = vsel %vm54, %v540, 0
  %v635 = vsel %vm54, %v541, 0
  %v638 = vsel %vm54, %v542, 0
  %v641 = vsel %vm54, %v543, 0
  %v644 = vsel %vm54, %v544, 0
  %v647 = vsel %vm54, %v545, 0
  %v650 = vsel %vm54, %v546, 0
  %v653 = vsel %vm54, %v547, 0
  %655 = vmatprep.subr.mxu0 0.0
  %656 = vmatpush1.msra.mxu0 %v548
  %657 = vmatprep.subr.mxu0 0.0
  %658 = vmatpush1.msra.mxu0 %v549
  %659 = vmatprep.subr.mxu0 0.0
  %660 = vmatpush1.msra.mxu0 %v550
  %661 = vmatprep.subr.mxu0 0.0
  %662 = vmatpush1.msra.mxu0 %v551
  %663 = vmatprep.subr.mxu0 0.0
  %664 = vmatpush1.msra.mxu0 0.0
  %665 = vmatprep.subr.mxu0 0.0
  %666 = vmatpush1.msra.mxu0 0.0
  %667 = vmatprep.subr.mxu0 0.0
  %668 = vmatpush1.msra.mxu0 0.0
  %669 = vmatprep.subr.mxu0 0.0
  %670 = vmatpush1.msra.mxu0 0.0
  %671 = vmatprep.subr.mxu0 0.0
  %672 = vmatpush1.msra.mxu0 0.0
  %673 = vmatprep.subr.mxu0 0.0
  %674 = vmatpush1.msra.mxu0 0.0
  %675 = vmatprep.subr.mxu0 0.0
  %676 = vmatpush1.msra.mxu0 0.0
  %677 = vmatprep.subr.mxu0 0.0
  %678 = vmatpush1.msra.mxu0 0.0
  %679 = vmatprep.subr.mxu0 0.0
  %680 = vmatpush1.msra.mxu0 0.0
  %681 = vmatprep.subr.mxu0 0.0
  %682 = vmatpush1.msra.mxu0 0.0
  %683 = vmatprep.subr.mxu0 0.0
  %684 = vmatpush1.msra.mxu0 0.0
  %685 = vmatprep.subr.mxu0 0.0
  %686 = vmatpush1.msra.mxu0 0.0
  %687 = vmatprep.subr.mxu0 0.0
  %688 = vmatpush1.msra.mxu0 0.0
  %689 = vmatprep.subr.mxu0 0.0
  %690 = vmatpush1.msra.mxu0 0.0
  %691 = vmatprep.subr.mxu0 0.0
  %692 = vmatpush1.msra.mxu0 0.0
  %693 = vmatprep.subr.mxu0 0.0
  %694 = vmatpush1.msra.mxu0 0.0
  %695 = vmatprep.subr.mxu0 0.0
  %696 = vmatpush1.msra.mxu0 0.0
  %697 = vmatprep.subr.mxu0 0.0
  %698 = vmatpush1.msra.mxu0 0.0
  %699 = vmatprep.subr.mxu0 0.0
  %700 = vmatpush1.msra.mxu0 0.0
  %701 = vmatprep.subr.mxu0 0.0
  %702 = vmatpush1.msra.mxu0 0.0
  %703 = vmatprep.subr.mxu0 0.0
  %704 = vmatpush1.msra.mxu0 0.0
  %705 = vmatprep.subr.mxu0 0.0
  %706 = vmatpush1.msra.mxu0 0.0
  %707 = vmatprep.subr.mxu0 0.0
  %708 = vmatpush1.msra.mxu0 0.0
  %709 = vmatprep.subr.mxu0 0.0
  %710 = vmatpush1.msra.mxu0 0.0
  %711 = vmatprep.subr.mxu0 0.0
  %712 = vmatpush1.msra.mxu0 0.0
  %713 = vmatprep.subr.mxu0 0.0
  %714 = vmatpush1.msra.mxu0 0.0
  %715 = vmatprep.subr.mxu0 0.0
  %716 = vmatpush1.msra.mxu0 0.0
  %717 = vmatprep.subr.mxu0 0.0
  %718 = vmatpush1.msra.mxu0 0.0
  %719 = vmatprep.mubr.f32.mxu0 0.0
  %720 = vmatmul.mubr.f32.gmra.mrb[0].mxu0 %v560
  %v721 = vpop.f32.mrb[0].mxu0
  %v722 = vadd.f32 %v557, %v721
  %v723 = vpop.f32.mrb[0].mxu0
  %724 = vmatprep.mubr.f32.mxu0 0.0
  %725 = vmatmul.mubr.f32.gmra.mrb[0].mxu0 %v563
  %v726 = vpop.f32.mrb[0].mxu0
  %v727 = vadd.f32 %v557, %v726
  %v728 = vpop.f32.mrb[0].mxu0
  %729 = vmatprep.mubr.f32.mxu0 0.0
  %730 = vmatmul.mubr.f32.gmra.mrb[0].mxu0 %v566
  %v731 = vpop.f32.mrb[0].mxu0
  %v732 = vadd.f32 %v557, %v731
  %v733 = vpop.f32.mrb[0].mxu0
  %734 = vmatprep.mubr.f32.mxu0 0.0
  %735 = vmatmul.mubr.f32.gmra.mrb[0].mxu0 %v569
  %v736 = vpop.f32.mrb[0].mxu0
  %v737 = vadd.f32 %v557, %v736
  %v738 = vpop.f32.mrb[0].mxu0
  %739 = vmatprep.mubr.f32.mxu0 0.0
  %740 = vmatmul.mubr.f32.gmra.mrb[0].mxu0 %v572
  %v741 = vpop.f32.mrb[0].mxu0
  %v742 = vadd.f32 %v557, %v741
  %v743 = vpop.f32.mrb[0].mxu0
  %744 = vmatprep.mubr.f32.mxu0 0.0
  %745 = vmatmul.mubr.f32.gmra.mrb[0].mxu0 %v575
  %v746 = vpop.f32.mrb[0].mxu0
  %v747 = vadd.f32 %v557, %v746
  %v748 = vpop.f32.mrb[0].mxu0
  %749 = vmatprep.mubr.f32.mxu0 0.0
  %750 = vmatmul.mubr.f32.gmra.mrb[0].mxu0 %v578
  %v751 = vpop.f32.mrb[0].mxu0
  %v752 = vadd.f32 %v557, %v751
  %v753 = vpop.f32.mrb[0].mxu0
  %754 = vmatprep.mubr.f32.mxu0 0.0
  %755 = vmatmul.mubr.f32.gmra.mrb[0].mxu0 %v581
  %v756 = vpop.f32.mrb[0].mxu0
  %v757 = vadd.f32 %v557, %v756
  %v758 = vpop.f32.mrb[0].mxu0
  %759 = vmatprep.mubr.f32.mxu0 0.0
  %760 = vmatmul.mubr.f32.gmra.mrb[0].mxu0 %v584
  %v761 = vpop.f32.mrb[0].mxu0
  %v762 = vadd.f32 %v557, %v761
  %v763 = vpop.f32.mrb[0].mxu0
  %764 = vmatprep.mubr.f32.mxu0 0.0
  %765 = vmatmul.mubr.f32.gmra.mrb[0].mxu0 %v587
  %v766 = vpop.f32.mrb[0].mxu0
  %v767 = vadd.f32 %v557, %v766
  %v768 = vpop.f32.mrb[0].mxu0
  %769 = vmatprep.mubr.f32.mxu0 0.0
  %770 = vmatmul.mubr.f32.gmra.mrb[0].mxu0 %v590
  %v771 = vpop.f32.mrb[0].mxu0
  %v772 = vadd.f32 %v557, %v771
  %v773 = vpop.f32.mrb[0].mxu0
  %774 = vmatprep.mubr.f32.mxu0 0.0
  %775 = vmatmul.mubr.f32.gmra.mrb[0].mxu0 %v593
  %v776 = vpop.f32.mrb[0].mxu0
  %v777 = vadd.f32 %v557, %v776
  %v778 = vpop.f32.mrb[0].mxu0
  %779 = vmatprep.mubr.f32.mxu0 0.0
  %780 = vmatmul.mubr.f32.gmra.mrb[0].mxu0 %v596
  %v781 = vpop.f32.mrb[0].mxu0
  %v782 = vadd.f32 %v557, %v781
  %v783 = vpop.f32.mrb[0].mxu0
  %784 = vmatprep.mubr.f32.mxu0 0.0
  %785 = vmatmul.mubr.f32.gmra.mrb[0].mxu0 %v599
  %v786 = vpop.f32.mrb[0].mxu0
  %v787 = vadd.f32 %v557, %v786
  %v788 = vpop.f32.mrb[0].mxu0
  %789 = vmatprep.mubr.f32.mxu0 0.0
  %790 = vmatmul.mubr.f32.gmra.mrb[0].mxu0 %v602
  %v791 = vpop.f32.mrb[0].mxu0
  %v792 = vadd.f32 %v557, %v791
  %v793 = vpop.f32.mrb[0].mxu0
  %794 = vmatprep.mubr.f32.mxu0 0.0
  %795 = vmatmul.mubr.f32.gmra.mrb[0].mxu0 %v605
  %v796 = vpop.f32.mrb[0].mxu0
  %v797 = vadd.f32 %v557, %v796
  %v798 = vpop.f32.mrb[0].mxu0
  %799 = vmatprep.mubr.f32.mxu0 0.0
  %800 = vmatmul.mubr.f32.gmra.mrb[0].mxu0 %v608
  %v801 = vpop.f32.mrb[0].mxu0
  %v802 = vadd.f32 %v557, %v801
  %v803 = vpop.f32.mrb[0].mxu0
  %804 = vmatprep.mubr.f32.mxu0 0.0
  %805 = vmatmul.mubr.f32.gmra.mrb[0].mxu0 %v611
  %v806 = vpop.f32.mrb[0].mxu0
  %v807 = vadd.f32 %v557, %v806
  %v808 = vpop.f32.mrb[0].mxu0
  %809 = vmatprep.mubr.f32.mxu0 0.0
  %810 = vmatmul.mubr.f32.gmra.mrb[0].mxu0 %v614
  %v811 = vpop.f32.mrb[0].mxu0
  %v812 = vadd.f32 %v557, %v811
  %v813 = vpop.f32.mrb[0].mxu0
  %814 = vmatprep.mubr.f32.mxu0 0.0
  %815 = vmatmul.mubr.f32.gmra.mrb[0].mxu0 %v617
  %v816 = vpop.f32.mrb[0].mxu0
  %v817 = vadd.f32 %v557, %v816
  %v818 = vpop.f32.mrb[0].mxu0
  %819 = vmatprep.mubr.f32.mxu0 0.0
  %820 = vmatmul.mubr.f32.gmra.mrb[0].mxu0 %v620
  %v821 = vpop.f32.mrb[0].mxu0
  %v822 = vadd.f32 %v557, %v821
  %v823 = vpop.f32.mrb[0].mxu0
  %824 = vmatprep.mubr.f32.mxu0 0.0
  %825 = vmatmul.mubr.f32.gmra.mrb[0].mxu0 %v623
  %v826 = vpop.f32.mrb[0].mxu0
  %v827 = vadd.f32 %v557, %v826
  %v828 = vpop.f32.mrb[0].mxu0
  %829 = vmatprep.mubr.f32.mxu0 0.0
  %830 = vmatmul.mubr.f32.gmra.mrb[0].mxu0 %v626
  %v831 = vpop.f32.mrb[0].mxu0
  %v832 = vadd.f32 %v557, %v831
  %v833 = vpop.f32.mrb[0].mxu0
  %834 = vmatprep.mubr.f32.mxu0 0.0
  %835 = vmatmul.mubr.f32.gmra.mrb[0].mxu0 %v629
  %v836 = vpop.f32.mrb[0].mxu0
  %v837 = vadd.f32 %v557, %v836
  %v838 = vpop.f32.mrb[0].mxu0
  %839 = vmatprep.mubr.f32.mxu0 0.0
  %840 = vmatmul.mubr.f32.gmra.mrb[0].mxu0 %v632
  %v841 = vpop.f32.mrb[0].mxu0
  %v842 = vadd.f32 %v557, %v841
  %v843 = vpop.f32.mrb[0].mxu0
  %844 = vmatprep.mubr.f32.mxu0 0.0
  %845 = vmatmul.mubr.f32.gmra.mrb[0].mxu0 %v635
  %v846 = vpop.f32.mrb[0].mxu0
  %v847 = vadd.f32 %v557, %v846
  %v848 = vpop.f32.mrb[0].mxu0
  %849 = vmatprep.mubr.f32.mxu0 0.0
  %850 = vmatmul.mubr.f32.gmra.mrb[0].mxu0 %v638
  %v851 = vpop.f32.mrb[0].mxu0
  %v852 = vadd.f32 %v557, %v851
  %v853 = vpop.f32.mrb[0].mxu0
  %854 = vmatprep.mubr.f32.mxu0 0.0
  %855 = vmatmul.mubr.f32.gmra.mrb[0].mxu0 %v641
  %v856 = vpop.f32.mrb[0].mxu0
  %v857 = vadd.f32 %v557, %v856
  %v858 = vpop.f32.mrb[0].mxu0
  %859 = vmatprep.mubr.f32.mxu0 0.0
  %860 = vmatmul.mubr.f32.gmra.mrb[0].mxu0 %v644
  %v861 = vpop.f32.mrb[0].mxu0
  %v862 = vadd.f32 %v557, %v861
  %v863 = vpop.f32.mrb[0].mxu0
  %864 = vmatprep.mubr.f32.mxu0 0.0
  %865 = vmatmul.mubr.f32.gmra.mrb[0].mxu0 %v647
  %v866 = vpop.f32.mrb[0].mxu0
  %v867 = vadd.f32 %v557, %v866
  %v868 = vpop.f32.mrb[0].mxu0
  %869 = vmatprep.mubr.f32.mxu0 0.0
  %870 = vmatmul.mubr.f32.gmra.mrb[0].mxu0 %v650
  %v871 = vpop.f32.mrb[0].mxu0
  %v872 = vadd.f32 %v557, %v871
  %v873 = vpop.f32.mrb[0].mxu0
  %874 = vmatprep.mubr.f32.mxu0 0.0
  %875 = vmatmul.mubr.f32.gmra.mrb[0].mxu0 %v653
  %v876 = vpop.f32.mrb[0].mxu0
  %v877 = vadd.f32 %v557, %v876
  %v878 = vpop.f32.mrb[0].mxu0
  %879 = vdwg.mxu0
  %vm880 = vcmask 523264
  %881 = vst.msk [vmem:[%s5] sm:$0xff] %vm880, %v722
  %882 = vst.msk [vmem:[%s5 + $0x8] sm:$0xff] %vm880, %v727
  %883 = vst.msk [vmem:[%s5 + $0x10] sm:$0xff] %vm880, %v732
  %884 = vst.msk [vmem:[%s5 + $0x18] sm:$0xff] %vm880, %v737
  %885 = vst.msk [vmem:[%s5 + $0x20] sm:$0xff] %vm880, %v742
  %886 = vst.msk [vmem:[%s5 + $0x28] sm:$0xff] %vm880, %v747
  %887 = vst.msk [vmem:[%s5 + $0x30] sm:$0xff] %vm880, %v752
  %888 = vst.msk [vmem:[%s5 + $0x38] sm:$0xff] %vm880, %v757
  %889 = vst.msk [vmem:[%s5 + $0x40] sm:$0xff] %vm880, %v762
  %890 = vst.msk [vmem:[%s5 + $0x48] sm:$0xff] %vm880, %v767
  %891 = vst.msk [vmem:[%s5 + $0x50] sm:$0xff] %vm880, %v772
  %892 = vst.msk [vmem:[%s5 + $0x58] sm:$0xff] %vm880, %v777
  %893 = vst.msk [vmem:[%s5 + $0x60] sm:$0xff] %vm880, %v782
  %894 = vst.msk [vmem:[%s5 + $0x68] sm:$0xff] %vm880, %v787
  %895 = vst.msk [vmem:[%s5 + $0x70] sm:$0xff] %vm880, %v792
  %896 = vst.msk [vmem:[%s5 + $0x78] sm:$0xff] %vm880, %v797
  %897 = vst.msk [vmem:[%s5 + $0x80] sm:$0xff] %vm880, %v802
  %898 = vst.msk [vmem:[%s5 + $0x88] sm:$0xff] %vm880, %v807
  %899 = vst.msk [vmem:[%s5 + $0x90] sm:$0xff] %vm880, %v812
  %900 = vst.msk [vmem:[%s5 + $0x98] sm:$0xff] %vm880, %v817
  %901 = vst.msk [vmem:[%s5 + $0xa0] sm:$0xff] %vm880, %v822
  %902 = vst.msk [vmem:[%s5 + $0xa8] sm:$0xff] %vm880, %v827
  %903 = vst.msk [vmem:[%s5 + $0xb0] sm:$0xff] %vm880, %v832
  %904 = vst.msk [vmem:[%s5 + $0xb8] sm:$0xff] %vm880, %v837
  %905 = vst.msk [vmem:[%s5 + $0xc0] sm:$0xff] %vm880, %v842
  %906 = vst.msk [vmem:[%s5 + $0xc8] sm:$0xff] %vm880, %v847
  %907 = vst.msk [vmem:[%s5 + $0xd0] sm:$0xff] %vm880, %v852
  %908 = vst.msk [vmem:[%s5 + $0xd8] sm:$0xff] %vm880, %v857
  %909 = vst.msk [vmem:[%s5 + $0xe0] sm:$0xff] %vm880, %v862
  %910 = vst.msk [vmem:[%s5 + $0xe8] sm:$0xff] %vm880, %v867
  %911 = vst.msk [vmem:[%s5 + $0xf0] sm:$0xff] %vm880, %v872
  %912 = vst.msk [vmem:[%s5 + $0xf8] sm:$0xff] %vm880, %v877
  // Predicated region
  $region22: #{cross_view_swap_attention.34} parent=0 // pred_check
    _
  $region23: #{cross_view_swap_attention.34} parent=0 // pred_check_branch
    %914 = sbr.rel (0) target = $region25
  $region24: #{cross_view_swap_attention.34} parent=0 // pred_region
    _
  $region25: #{cross_view_swap_attention.34} parent=0 // pred_fallthru
    _
  // Predicated region
  $region26: #{cross_view_swap_attention.34} parent=0 // pred_check
    _
  $region27: #{cross_view_swap_attention.34} parent=0 // pred_check_branch
    %916 = sbr.rel (0) target = $region29
  $region28: #{cross_view_swap_attention.34} parent=0 // pred_region
    _
  $region29: #{cross_view_swap_attention.34} parent=0 // pred_fallthru
    _

// kernel: cross_view_swap_attention.35
$region0: #{cross_view_swap_attention.35}
  #allocation0 [shape = 'u32[]', space=smem, size = 0x4, offset = 0x4, fixed_abs, tag = 'smem constant byte address 0x4 - core index']
  #allocation1 [shape = 'u32[144,128]{1,0:T(1,128)}', space=vmem, size = 0x12000, scoped, tag = 'internal scratch']
  %s0 = inlined_call_operand.vmem [shape: f32[256,64], index: 0, kind: input, shape index: {}]
  %s1 = inlined_call_operand.vmem [shape: f32[64,32], index: 1, kind: input, shape index: {}]
  %s2 = inlined_call_operand.vmem [shape: f32[1,32], index: 2, kind: input, shape index: {}]
  %s3 = inlined_call_operand.vmem [shape: f32[256,32], index: 3, kind: output, shape index: {}]
  %s4 = sld [smem:[#allocation0]]
  $region22: #{cross_view_swap_attention.35} parent=0
    _
  %s6 = ssub.s32 1, %s4
  %s7 = scalar_select 0, %s6, %s4
  // Predicated region
  $region2: #{cross_view_swap_attention.35} parent=0 // pred_check
    _
  $region3: #{cross_view_swap_attention.35} parent=0 // pred_check_branch
    %9 = sbr.rel (0) target = $region5
  $region4: #{cross_view_swap_attention.35} parent=0 // pred_region
    _
  $region5: #{cross_view_swap_attention.35} parent=0 // pred_fallthru
    _
  // Predicated region
  $region6: #{cross_view_swap_attention.35} parent=0 // pred_check
    _
  $region7: #{cross_view_swap_attention.35} parent=0 // pred_check_branch
    %11 = sbr.rel (0) target = $region9
  $region8: #{cross_view_swap_attention.35} parent=0 // pred_region
    _
  $region9: #{cross_view_swap_attention.35} parent=0 // pred_fallthru
    _
  // Predicated region
  $region10: #{cross_view_swap_attention.35} parent=0 // pred_check
    _
  $region11: #{cross_view_swap_attention.35} parent=0 // pred_check_branch
    %13 = sbr.rel (0) target = $region13
  $region12: #{cross_view_swap_attention.35} parent=0 // pred_region
    _
  $region13: #{cross_view_swap_attention.35} parent=0 // pred_fallthru
    _
  %v14 = vld [vmem:[%s0] sm:$0xff]
  %v15 = vld [vmem:[%s0 + $0x8] sm:$0xff]
  %v16 = vld [vmem:[%s0 + $0x10] sm:$0xff]
  %v17 = vld [vmem:[%s0 + $0x18] sm:$0xff]
  %v18 = vld [vmem:[%s0 + $0x20] sm:$0xff]
  %v19 = vld [vmem:[%s0 + $0x28] sm:$0xff]
  %v20 = vld [vmem:[%s0 + $0x30] sm:$0xff]
  %v21 = vld [vmem:[%s0 + $0x38] sm:$0xff]
  %v22 = vld [vmem:[%s0 + $0x40] sm:$0xff]
  %v23 = vld [vmem:[%s0 + $0x48] sm:$0xff]
  %v24 = vld [vmem:[%s0 + $0x50] sm:$0xff]
  %v25 = vld [vmem:[%s0 + $0x58] sm:$0xff]
  %v26 = vld [vmem:[%s0 + $0x60] sm:$0xff]
  %v27 = vld [vmem:[%s0 + $0x68] sm:$0xff]
  %v28 = vld [vmem:[%s0 + $0x70] sm:$0xff]
  %v29 = vld [vmem:[%s0 + $0x78] sm:$0xff]
  %v30 = vld [vmem:[%s0 + $0x80] sm:$0xff]
  %v31 = vld [vmem:[%s0 + $0x88] sm:$0xff]
  %v32 = vld [vmem:[%s0 + $0x90] sm:$0xff]
  %v33 = vld [vmem:[%s0 + $0x98] sm:$0xff]
  %v34 = vld [vmem:[%s0 + $0xa0] sm:$0xff]
  %v35 = vld [vmem:[%s0 + $0xa8] sm:$0xff]
  %v36 = vld [vmem:[%s0 + $0xb0] sm:$0xff]
  %v37 = vld [vmem:[%s0 + $0xb8] sm:$0xff]
  %v38 = vld [vmem:[%s0 + $0xc0] sm:$0xff]
  %v39 = vld [vmem:[%s0 + $0xc8] sm:$0xff]
  %v40 = vld [vmem:[%s0 + $0xd0] sm:$0xff]
  %v41 = vld [vmem:[%s0 + $0xd8] sm:$0xff]
  %v42 = vld [vmem:[%s0 + $0xe0] sm:$0xff]
  %v43 = vld [vmem:[%s0 + $0xe8] sm:$0xff]
  %v44 = vld [vmem:[%s0 + $0xf0] sm:$0xff]
  %v45 = vld [vmem:[%s0 + $0xf8] sm:$0xff]
  %v46 = vld [vmem:[%s1] sm:$0xff]
  %v47 = vld [vmem:[%s1 + $0x8] sm:$0xff]
  %v48 = vld [vmem:[%s1 + $0x10] sm:$0xff]
  %v49 = vld [vmem:[%s1 + $0x18] sm:$0xff]
  %v50 = vld [vmem:[%s1 + $0x20] sm:$0xff]
  %v51 = vld [vmem:[%s1 + $0x28] sm:$0xff]
  %v52 = vld [vmem:[%s1 + $0x30] sm:$0xff]
  %v53 = vld [vmem:[%s1 + $0x38] sm:$0xff]
  %v54 = vld [vmem:[%s2] sm:$0x1]
  %v56 = vlaneseq
  %v57 = vshrl.u32 %v56, 7
  %v58 = vsub.s32 0, %v57
  %v59 = vrot.slane %v54, %v58
  %vm61 = vcmask 523264
  %v63 = vsel %vm61, %v14, 0
  %v66 = vsel %vm61, %v15, 0
  %v69 = vsel %vm61, %v16, 0
  %v72 = vsel %vm61, %v17, 0
  %v75 = vsel %vm61, %v18, 0
  %v78 = vsel %vm61, %v19, 0
  %v81 = vsel %vm61, %v20, 0
  %v84 = vsel %vm61, %v21, 0
  %v87 = vsel %vm61, %v22, 0
  %v90 = vsel %vm61, %v23, 0
  %v93 = vsel %vm61, %v24, 0
  %v96 = vsel %vm61, %v25, 0
  %v99 = vsel %vm61, %v26, 0
  %v102 = vsel %vm61, %v27, 0
  %v105 = vsel %vm61, %v28, 0
  %v108 = vsel %vm61, %v29, 0
  %v111 = vsel %vm61, %v30, 0
  %v114 = vsel %vm61, %v31, 0
  %v117 = vsel %vm61, %v32, 0
  %v120 = vsel %vm61, %v33, 0
  %v123 = vsel %vm61, %v34, 0
  %v126 = vsel %vm61, %v35, 0
  %v129 = vsel %vm61, %v36, 0
  %v132 = vsel %vm61, %v37, 0
  %v135 = vsel %vm61, %v38, 0
  %v138 = vsel %vm61, %v39, 0
  %v141 = vsel %vm61, %v40, 0
  %v144 = vsel %vm61, %v41, 0
  %v147 = vsel %vm61, %v42, 0
  %v150 = vsel %vm61, %v43, 0
  %v153 = vsel %vm61, %v44, 0
  %v156 = vsel %vm61, %v45, 0
  %158 = vmatprep.subr.mxu0 0.0
  %159 = vmatpush1.msra.mxu0 %v46
  %160 = vmatprep.subr.mxu0 0.0
  %161 = vmatpush1.msra.mxu0 %v47
  %162 = vmatprep.subr.mxu0 0.0
  %163 = vmatpush1.msra.mxu0 %v48
  %164 = vmatprep.subr.mxu0 0.0
  %165 = vmatpush1.msra.mxu0 %v49
  %166 = vmatprep.subr.mxu0 0.0
  %167 = vmatpush1.msra.mxu0 %v50
  %168 = vmatprep.subr.mxu0 0.0
  %169 = vmatpush1.msra.mxu0 %v51
  %170 = vmatprep.subr.mxu0 0.0
  %171 = vmatpush1.msra.mxu0 %v52
  %172 = vmatprep.subr.mxu0 0.0
  %173 = vmatpush1.msra.mxu0 %v53
  %174 = vmatprep.subr.mxu0 0.0
  %175 = vmatpush1.msra.mxu0 0.0
  %176 = vmatprep.subr.mxu0 0.0
  %177 = vmatpush1.msra.mxu0 0.0
  %178 = vmatprep.subr.mxu0 0.0
  %179 = vmatpush1.msra.mxu0 0.0
  %180 = vmatprep.subr.mxu0 0.0
  %181 = vmatpush1.msra.mxu0 0.0
  %182 = vmatprep.subr.mxu0 0.0
  %183 = vmatpush1.msra.mxu0 0.0
  %184 = vmatprep.subr.mxu0 0.0
  %185 = vmatpush1.msra.mxu0 0.0
  %186 = vmatprep.subr.mxu0 0.0
  %187 = vmatpush1.msra.mxu0 0.0
  %188 = vmatprep.subr.mxu0 0.0
  %189 = vmatpush1.msra.mxu0 0.0
  %190 = vmatprep.subr.mxu0 0.0
  %191 = vmatpush1.msra.mxu0 0.0
  %192 = vmatprep.subr.mxu0 0.0
  %193 = vmatpush1.msra.mxu0 0.0
  %194 = vmatprep.subr.mxu0 0.0
  %195 = vmatpush1.msra.mxu0 0.0
  %196 = vmatprep.subr.mxu0 0.0
  %197 = vmatpush1.msra.mxu0 0.0
  %198 = vmatprep.subr.mxu0 0.0
  %199 = vmatpush1.msra.mxu0 0.0
  %200 = vmatprep.subr.mxu0 0.0
  %201 = vmatpush1.msra.mxu0 0.0
  %202 = vmatprep.subr.mxu0 0.0
  %203 = vmatpush1.msra.mxu0 0.0
  %204 = vmatprep.subr.mxu0 0.0
  %205 = vmatpush1.msra.mxu0 0.0
  %206 = vmatprep.subr.mxu0 0.0
  %207 = vmatpush1.msra.mxu0 0.0
  %208 = vmatprep.subr.mxu0 0.0
  %209 = vmatpush1.msra.mxu0 0.0
  %210 = vmatprep.subr.mxu0 0.0
  %211 = vmatpush1.msra.mxu0 0.0
  %212 = vmatprep.subr.mxu0 0.0
  %213 = vmatpush1.msra.mxu0 0.0
  %214 = vmatprep.subr.mxu0 0.0
  %215 = vmatpush1.msra.mxu0 0.0
  %216 = vmatprep.subr.mxu0 0.0
  %217 = vmatpush1.msra.mxu0 0.0
  %218 = vmatprep.subr.mxu0 0.0
  %219 = vmatpush1.msra.mxu0 0.0
  %220 = vmatprep.subr.mxu0 0.0
  %221 = vmatpush1.msra.mxu0 0.0
  %222 = vmatprep.mubr.f32.mxu0 0.0
  %223 = vmatmul.mubr.f32.gmra.mrb[0].mxu0 %v63
  %v224 = vpop.f32.mrb[0].mxu0
  %v225 = vadd.f32 %v59, %v224
  %v226 = vpop.f32.mrb[0].mxu0
  %227 = vmatprep.mubr.f32.mxu0 0.0
  %228 = vmatmul.mubr.f32.gmra.mrb[0].mxu0 %v66
  %v229 = vpop.f32.mrb[0].mxu0
  %v230 = vadd.f32 %v59, %v229
  %v231 = vpop.f32.mrb[0].mxu0
  %232 = vmatprep.mubr.f32.mxu0 0.0
  %233 = vmatmul.mubr.f32.gmra.mrb[0].mxu0 %v69
  %v234 = vpop.f32.mrb[0].mxu0
  %v235 = vadd.f32 %v59, %v234
  %v236 = vpop.f32.mrb[0].mxu0
  %237 = vmatprep.mubr.f32.mxu0 0.0
  %238 = vmatmul.mubr.f32.gmra.mrb[0].mxu0 %v72
  %v239 = vpop.f32.mrb[0].mxu0
  %v240 = vadd.f32 %v59, %v239
  %v241 = vpop.f32.mrb[0].mxu0
  %242 = vmatprep.mubr.f32.mxu0 0.0
  %243 = vmatmul.mubr.f32.gmra.mrb[0].mxu0 %v75
  %v244 = vpop.f32.mrb[0].mxu0
  %v245 = vadd.f32 %v59, %v244
  %v246 = vpop.f32.mrb[0].mxu0
  %247 = vmatprep.mubr.f32.mxu0 0.0
  %248 = vmatmul.mubr.f32.gmra.mrb[0].mxu0 %v78
  %v249 = vpop.f32.mrb[0].mxu0
  %v250 = vadd.f32 %v59, %v249
  %v251 = vpop.f32.mrb[0].mxu0
  %252 = vmatprep.mubr.f32.mxu0 0.0
  %253 = vmatmul.mubr.f32.gmra.mrb[0].mxu0 %v81
  %v254 = vpop.f32.mrb[0].mxu0
  %v255 = vadd.f32 %v59, %v254
  %v256 = vpop.f32.mrb[0].mxu0
  %257 = vmatprep.mubr.f32.mxu0 0.0
  %258 = vmatmul.mubr.f32.gmra.mrb[0].mxu0 %v84
  %v259 = vpop.f32.mrb[0].mxu0
  %v260 = vadd.f32 %v59, %v259
  %v261 = vpop.f32.mrb[0].mxu0
  %262 = vmatprep.mubr.f32.mxu0 0.0
  %263 = vmatmul.mubr.f32.gmra.mrb[0].mxu0 %v87
  %v264 = vpop.f32.mrb[0].mxu0
  %v265 = vadd.f32 %v59, %v264
  %v266 = vpop.f32.mrb[0].mxu0
  %267 = vmatprep.mubr.f32.mxu0 0.0
  %268 = vmatmul.mubr.f32.gmra.mrb[0].mxu0 %v90
  %v269 = vpop.f32.mrb[0].mxu0
  %v270 = vadd.f32 %v59, %v269
  %v271 = vpop.f32.mrb[0].mxu0
  %272 = vmatprep.mubr.f32.mxu0 0.0
  %273 = vmatmul.mubr.f32.gmra.mrb[0].mxu0 %v93
  %v274 = vpop.f32.mrb[0].mxu0
  %v275 = vadd.f32 %v59, %v274
  %v276 = vpop.f32.mrb[0].mxu0
  %277 = vmatprep.mubr.f32.mxu0 0.0
  %278 = vmatmul.mubr.f32.gmra.mrb[0].mxu0 %v96
  %v279 = vpop.f32.mrb[0].mxu0
  %v280 = vadd.f32 %v59, %v279
  %v281 = vpop.f32.mrb[0].mxu0
  %282 = vmatprep.mubr.f32.mxu0 0.0
  %283 = vmatmul.mubr.f32.gmra.mrb[0].mxu0 %v99
  %v284 = vpop.f32.mrb[0].mxu0
  %v285 = vadd.f32 %v59, %v284
  %v286 = vpop.f32.mrb[0].mxu0
  %287 = vmatprep.mubr.f32.mxu0 0.0
  %288 = vmatmul.mubr.f32.gmra.mrb[0].mxu0 %v102
  %v289 = vpop.f32.mrb[0].mxu0
  %v290 = vadd.f32 %v59, %v289
  %v291 = vpop.f32.mrb[0].mxu0
  %292 = vmatprep.mubr.f32.mxu0 0.0
  %293 = vmatmul.mubr.f32.gmra.mrb[0].mxu0 %v105
  %v294 = vpop.f32.mrb[0].mxu0
  %v295 = vadd.f32 %v59, %v294
  %v296 = vpop.f32.mrb[0].mxu0
  %297 = vmatprep.mubr.f32.mxu0 0.0
  %298 = vmatmul.mubr.f32.gmra.mrb[0].mxu0 %v108
  %v299 = vpop.f32.mrb[0].mxu0
  %v300 = vadd.f32 %v59, %v299
  %v301 = vpop.f32.mrb[0].mxu0
  %302 = vmatprep.mubr.f32.mxu0 0.0
  %303 = vmatmul.mubr.f32.gmra.mrb[0].mxu0 %v111
  %v304 = vpop.f32.mrb[0].mxu0
  %v305 = vadd.f32 %v59, %v304
  %v306 = vpop.f32.mrb[0].mxu0
  %307 = vmatprep.mubr.f32.mxu0 0.0
  %308 = vmatmul.mubr.f32.gmra.mrb[0].mxu0 %v114
  %v309 = vpop.f32.mrb[0].mxu0
  %v310 = vadd.f32 %v59, %v309
  %v311 = vpop.f32.mrb[0].mxu0
  %312 = vmatprep.mubr.f32.mxu0 0.0
  %313 = vmatmul.mubr.f32.gmra.mrb[0].mxu0 %v117
  %v314 = vpop.f32.mrb[0].mxu0
  %v315 = vadd.f32 %v59, %v314
  %v316 = vpop.f32.mrb[0].mxu0
  %317 = vmatprep.mubr.f32.mxu0 0.0
  %318 = vmatmul.mubr.f32.gmra.mrb[0].mxu0 %v120
  %v319 = vpop.f32.mrb[0].mxu0
  %v320 = vadd.f32 %v59, %v319
  %v321 = vpop.f32.mrb[0].mxu0
  %322 = vmatprep.mubr.f32.mxu0 0.0
  %323 = vmatmul.mubr.f32.gmra.mrb[0].mxu0 %v123
  %v324 = vpop.f32.mrb[0].mxu0
  %v325 = vadd.f32 %v59, %v324
  %v326 = vpop.f32.mrb[0].mxu0
  %327 = vmatprep.mubr.f32.mxu0 0.0
  %328 = vmatmul.mubr.f32.gmra.mrb[0].mxu0 %v126
  %v329 = vpop.f32.mrb[0].mxu0
  %v330 = vadd.f32 %v59, %v329
  %v331 = vpop.f32.mrb[0].mxu0
  %332 = vmatprep.mubr.f32.mxu0 0.0
  %333 = vmatmul.mubr.f32.gmra.mrb[0].mxu0 %v129
  %v334 = vpop.f32.mrb[0].mxu0
  %v335 = vadd.f32 %v59, %v334
  %v336 = vpop.f32.mrb[0].mxu0
  %337 = vmatprep.mubr.f32.mxu0 0.0
  %338 = vmatmul.mubr.f32.gmra.mrb[0].mxu0 %v132
  %v339 = vpop.f32.mrb[0].mxu0
  %v340 = vadd.f32 %v59, %v339
  %v341 = vpop.f32.mrb[0].mxu0
  %342 = vmatprep.mubr.f32.mxu0 0.0
  %343 = vmatmul.mubr.f32.gmra.mrb[0].mxu0 %v135
  %v344 = vpop.f32.mrb[0].mxu0
  %v345 = vadd.f32 %v59, %v344
  %v346 = vpop.f32.mrb[0].mxu0
  %347 = vmatprep.mubr.f32.mxu0 0.0
  %348 = vmatmul.mubr.f32.gmra.mrb[0].mxu0 %v138
  %v349 = vpop.f32.mrb[0].mxu0
  %v350 = vadd.f32 %v59, %v349
  %v351 = vpop.f32.mrb[0].mxu0
  %352 = vmatprep.mubr.f32.mxu0 0.0
  %353 = vmatmul.mubr.f32.gmra.mrb[0].mxu0 %v141
  %v354 = vpop.f32.mrb[0].mxu0
  %v355 = vadd.f32 %v59, %v354
  %v356 = vpop.f32.mrb[0].mxu0
  %357 = vmatprep.mubr.f32.mxu0 0.0
  %358 = vmatmul.mubr.f32.gmra.mrb[0].mxu0 %v144
  %v359 = vpop.f32.mrb[0].mxu0
  %v360 = vadd.f32 %v59, %v359
  %v361 = vpop.f32.mrb[0].mxu0
  %362 = vmatprep.mubr.f32.mxu0 0.0
  %363 = vmatmul.mubr.f32.gmra.mrb[0].mxu0 %v147
  %v364 = vpop.f32.mrb[0].mxu0
  %v365 = vadd.f32 %v59, %v364
  %v366 = vpop.f32.mrb[0].mxu0
  %367 = vmatprep.mubr.f32.mxu0 0.0
  %368 = vmatmul.mubr.f32.gmra.mrb[0].mxu0 %v150
  %v369 = vpop.f32.mrb[0].mxu0
  %v370 = vadd.f32 %v59, %v369
  %v371 = vpop.f32.mrb[0].mxu0
  %372 = vmatprep.mubr.f32.mxu0 0.0
  %373 = vmatmul.mubr.f32.gmra.mrb[0].mxu0 %v153
  %v374 = vpop.f32.mrb[0].mxu0
  %v375 = vadd.f32 %v59, %v374
  %v376 = vpop.f32.mrb[0].mxu0
  %377 = vmatprep.mubr.f32.mxu0 0.0
  %378 = vmatmul.mubr.f32.gmra.mrb[0].mxu0 %v156
  %v379 = vpop.f32.mrb[0].mxu0
  %v380 = vadd.f32 %v59, %v379
  %v381 = vpop.f32.mrb[0].mxu0
  %382 = vdwg.mxu0
  %vm383 = vcmask 261120
  %384 = vst.msk [vmem:[%s3] sm:$0xff] %vm383, %v225
  %385 = vst.msk [vmem:[%s3 + $0x8] sm:$0xff] %vm383, %v230
  %386 = vst.msk [vmem:[%s3 + $0x10] sm:$0xff] %vm383, %v235
  %387 = vst.msk [vmem:[%s3 + $0x18] sm:$0xff] %vm383, %v240
  %388 = vst.msk [vmem:[%s3 + $0x20] sm:$0xff] %vm383, %v245
  %389 = vst.msk [vmem:[%s3 + $0x28] sm:$0xff] %vm383, %v250
  %390 = vst.msk [vmem:[%s3 + $0x30] sm:$0xff] %vm383, %v255
  %391 = vst.msk [vmem:[%s3 + $0x38] sm:$0xff] %vm383, %v260
  %392 = vst.msk [vmem:[%s3 + $0x40] sm:$0xff] %vm383, %v265
  %393 = vst.msk [vmem:[%s3 + $0x48] sm:$0xff] %vm383, %v270
  %394 = vst.msk [vmem:[%s3 + $0x50] sm:$0xff] %vm383, %v275
  %395 = vst.msk [vmem:[%s3 + $0x58] sm:$0xff] %vm383, %v280
  %396 = vst.msk [vmem:[%s3 + $0x60] sm:$0xff] %vm383, %v285
  %397 = vst.msk [vmem:[%s3 + $0x68] sm:$0xff] %vm383, %v290
  %398 = vst.msk [vmem:[%s3 + $0x70] sm:$0xff] %vm383, %v295
  %399 = vst.msk [vmem:[%s3 + $0x78] sm:$0xff] %vm383, %v300
  %400 = vst.msk [vmem:[%s3 + $0x80] sm:$0xff] %vm383, %v305
  %401 = vst.msk [vmem:[%s3 + $0x88] sm:$0xff] %vm383, %v310
  %402 = vst.msk [vmem:[%s3 + $0x90] sm:$0xff] %vm383, %v315
  %403 = vst.msk [vmem:[%s3 + $0x98] sm:$0xff] %vm383, %v320
  %404 = vst.msk [vmem:[%s3 + $0xa0] sm:$0xff] %vm383, %v325
  %405 = vst.msk [vmem:[%s3 + $0xa8] sm:$0xff] %vm383, %v330
  %406 = vst.msk [vmem:[%s3 + $0xb0] sm:$0xff] %vm383, %v335
  %407 = vst.msk [vmem:[%s3 + $0xb8] sm:$0xff] %vm383, %v340
  %408 = vst.msk [vmem:[%s3 + $0xc0] sm:$0xff] %vm383, %v345
  %409 = vst.msk [vmem:[%s3 + $0xc8] sm:$0xff] %vm383, %v350
  %410 = vst.msk [vmem:[%s3 + $0xd0] sm:$0xff] %vm383, %v355
  %411 = vst.msk [vmem:[%s3 + $0xd8] sm:$0xff] %vm383, %v360
  %412 = vst.msk [vmem:[%s3 + $0xe0] sm:$0xff] %vm383, %v365
  %413 = vst.msk [vmem:[%s3 + $0xe8] sm:$0xff] %vm383, %v370
  %414 = vst.msk [vmem:[%s3 + $0xf0] sm:$0xff] %vm383, %v375
  %415 = vst.msk [vmem:[%s3 + $0xf8] sm:$0xff] %vm383, %v380
  // Predicated region
  $region14: #{cross_view_swap_attention.35} parent=0 // pred_check
    _
  $region15: #{cross_view_swap_attention.35} parent=0 // pred_check_branch
    %417 = sbr.rel (0) target = $region17
  $region16: #{cross_view_swap_attention.35} parent=0 // pred_region
    _
  $region17: #{cross_view_swap_attention.35} parent=0 // pred_fallthru
    _
  // Predicated region
  $region18: #{cross_view_swap_attention.35} parent=0 // pred_check
    _
  $region19: #{cross_view_swap_attention.35} parent=0 // pred_check_branch
    %419 = sbr.rel (0) target = $region21
  $region20: #{cross_view_swap_attention.35} parent=0 // pred_region
    _
  $region21: #{cross_view_swap_attention.35} parent=0 // pred_fallthru
    _

// kernel: cross_view_swap_attention.43
$region0: #{cross_view_swap_attention.43}
  #allocation0 [shape = 'u32[]', space=smem, size = 0x4, offset = 0x4, fixed_abs, tag = 'smem constant byte address 0x4 - core index']
  #allocation1 [shape = 'u32[144,128]{1,0:T(1,128)}', space=vmem, size = 0x12000, scoped, tag = 'internal scratch']
  %s0 = inlined_call_operand.vmem [shape: f32[256,32], index: 0, kind: input, shape index: {}]
  %s1 = inlined_call_operand.vmem [shape: f32[1,32], index: 1, kind: input, shape index: {}]
  %s2 = inlined_call_operand.vmem [shape: f32[1,32], index: 2, kind: input, shape index: {}]
  %s3 = inlined_call_operand.hbm [shape: f32[256,32], index: 3, kind: output, shape index: {}]
  %s4 = sld [smem:[#allocation0]]
  $region22: #{cross_view_swap_attention.43} parent=0
    _
  %s6 = ssub.s32 1, %s4
  %s7 = scalar_select 0, %s6, %s4
  $region1: #{cross_view_swap_attention.43} parent=0
    #allocation2 [shape = 'u8[131072]{0}', space=vmem, size = 0x20000, scoped, tag = 'output window, operand 0, single buffered']
    #allocation3 [shape = 's32[1]{0}', space=sflag, size = 0x4, scoped, tag = 'scoped memory for cross_view_swap_attention.43']
    %8 = vsyncpa [#allocation3], 0
    // Predicated region
    $region2: #{cross_view_swap_attention.43} parent=1 // pred_check
      _
    $region3: #{cross_view_swap_attention.43} parent=1 // pred_check_branch
      %10 = sbr.rel (0) target = $region5
    $region4: #{cross_view_swap_attention.43} parent=1 // pred_region
      _
    $region5: #{cross_view_swap_attention.43} parent=1 // pred_fallthru
      _
    // Predicated region
    $region6: #{cross_view_swap_attention.43} parent=1 // pred_check
      _
    $region7: #{cross_view_swap_attention.43} parent=1 // pred_check_branch
      %12 = sbr.rel (0) target = $region9
    $region8: #{cross_view_swap_attention.43} parent=1 // pred_region
      _
    $region9: #{cross_view_swap_attention.43} parent=1 // pred_fallthru
      _
    // Predicated region
    $region10: #{cross_view_swap_attention.43} parent=1 // pred_check
      _
    $region11: #{cross_view_swap_attention.43} parent=1 // pred_check_branch
      %14 = sbr.rel (0) target = $region13
    $region12: #{cross_view_swap_attention.43} parent=1 // pred_region
      _
    $region13: #{cross_view_swap_attention.43} parent=1 // pred_fallthru
      _
    %v15 = vld [vmem:[%s0] sm:$0xff]
    %v16 = vld [vmem:[%s0 + $0x8] sm:$0xff]
    %v17 = vld [vmem:[%s0 + $0x10] sm:$0xff]
    %v18 = vld [vmem:[%s0 + $0x18] sm:$0xff]
    %v19 = vld [vmem:[%s0 + $0x20] sm:$0xff]
    %v20 = vld [vmem:[%s0 + $0x28] sm:$0xff]
    %v21 = vld [vmem:[%s0 + $0x30] sm:$0xff]
    %v22 = vld [vmem:[%s0 + $0x38] sm:$0xff]
    %v23 = vld [vmem:[%s0 + $0x40] sm:$0xff]
    %v24 = vld [vmem:[%s0 + $0x48] sm:$0xff]
    %v25 = vld [vmem:[%s0 + $0x50] sm:$0xff]
    %v26 = vld [vmem:[%s0 + $0x58] sm:$0xff]
    %v27 = vld [vmem:[%s0 + $0x60] sm:$0xff]
    %v28 = vld [vmem:[%s0 + $0x68] sm:$0xff]
    %v29 = vld [vmem:[%s0 + $0x70] sm:$0xff]
    %v30 = vld [vmem:[%s0 + $0x78] sm:$0xff]
    %v31 = vld [vmem:[%s0 + $0x80] sm:$0xff]
    %v32 = vld [vmem:[%s0 + $0x88] sm:$0xff]
    %v33 = vld [vmem:[%s0 + $0x90] sm:$0xff]
    %v34 = vld [vmem:[%s0 + $0x98] sm:$0xff]
    %v35 = vld [vmem:[%s0 + $0xa0] sm:$0xff]
    %v36 = vld [vmem:[%s0 + $0xa8] sm:$0xff]
    %v37 = vld [vmem:[%s0 + $0xb0] sm:$0xff]
    %v38 = vld [vmem:[%s0 + $0xb8] sm:$0xff]
    %v39 = vld [vmem:[%s0 + $0xc0] sm:$0xff]
    %v40 = vld [vmem:[%s0 + $0xc8] sm:$0xff]
    %v41 = vld [vmem:[%s0 + $0xd0] sm:$0xff]
    %v42 = vld [vmem:[%s0 + $0xd8] sm:$0xff]
    %v43 = vld [vmem:[%s0 + $0xe0] sm:$0xff]
    %v44 = vld [vmem:[%s0 + $0xe8] sm:$0xff]
    %v45 = vld [vmem:[%s0 + $0xf0] sm:$0xff]
    %v46 = vld [vmem:[%s0 + $0xf8] sm:$0xff]
    %v47 = vld [vmem:[%s1] sm:$0x1]
    %v48 = vld [vmem:[%s2] sm:$0x1]
    %vm49 = vcmask 261120
    %v50 = vsel %vm49, %v15, 0.0
    %51 = vadd.xlane.f32.xlu0 %v50
    %v52 = vpop.xlane.xlu0 %51
    %v53 = vsel %vm49, %v16, 0.0
    %54 = vadd.xlane.f32.xlu0 %v53
    %v55 = vpop.xlane.xlu0 %54
    %v56 = vsel %vm49, %v17, 0.0
    %57 = vadd.xlane.f32.xlu0 %v56
    %v58 = vpop.xlane.xlu0 %57
    %v59 = vsel %vm49, %v18, 0.0
    %60 = vadd.xlane.f32.xlu0 %v59
    %v61 = vpop.xlane.xlu0 %60
    %v62 = vsel %vm49, %v19, 0.0
    %63 = vadd.xlane.f32.xlu0 %v62
    %v64 = vpop.xlane.xlu0 %63
    %v65 = vsel %vm49, %v20, 0.0
    %66 = vadd.xlane.f32.xlu0 %v65
    %v67 = vpop.xlane.xlu0 %66
    %v68 = vsel %vm49, %v21, 0.0
    %69 = vadd.xlane.f32.xlu0 %v68
    %v70 = vpop.xlane.xlu0 %69
    %v71 = vsel %vm49, %v22, 0.0
    %72 = vadd.xlane.f32.xlu0 %v71
    %v73 = vpop.xlane.xlu0 %72
    %v74 = vsel %vm49, %v23, 0.0
    %75 = vadd.xlane.f32.xlu0 %v74
    %v76 = vpop.xlane.xlu0 %75
    %v77 = vsel %vm49, %v24, 0.0
    %78 = vadd.xlane.f32.xlu0 %v77
    %v79 = vpop.xlane.xlu0 %78
    %v80 = vsel %vm49, %v25, 0.0
    %81 = vadd.xlane.f32.xlu0 %v80
    %v82 = vpop.xlane.xlu0 %81
    %v83 = vsel %vm49, %v26, 0.0
    %84 = vadd.xlane.f32.xlu0 %v83
    %v85 = vpop.xlane.xlu0 %84
    %v86 = vsel %vm49, %v27, 0.0
    %87 = vadd.xlane.f32.xlu0 %v86
    %v88 = vpop.xlane.xlu0 %87
    %v89 = vsel %vm49, %v28, 0.0
    %90 = vadd.xlane.f32.xlu0 %v89
    %v91 = vpop.xlane.xlu0 %90
    %v92 = vsel %vm49, %v29, 0.0
    %93 = vadd.xlane.f32.xlu0 %v92
    %v94 = vpop.xlane.xlu0 %93
    %v95 = vsel %vm49, %v30, 0.0
    %96 = vadd.xlane.f32.xlu0 %v95
    %v97 = vpop.xlane.xlu0 %96
    %v98 = vsel %vm49, %v31, 0.0
    %99 = vadd.xlane.f32.xlu0 %v98
    %v100 = vpop.xlane.xlu0 %99
    %v101 = vsel %vm49, %v32, 0.0
    %102 = vadd.xlane.f32.xlu0 %v101
    %v103 = vpop.xlane.xlu0 %102
    %v104 = vsel %vm49, %v33, 0.0
    %105 = vadd.xlane.f32.xlu0 %v104
    %v106 = vpop.xlane.xlu0 %105
    %v107 = vsel %vm49, %v34, 0.0
    %108 = vadd.xlane.f32.xlu0 %v107
    %v109 = vpop.xlane.xlu0 %108
    %v110 = vsel %vm49, %v35, 0.0
    %111 = vadd.xlane.f32.xlu0 %v110
    %v112 = vpop.xlane.xlu0 %111
    %v113 = vsel %vm49, %v36, 0.0
    %114 = vadd.xlane.f32.xlu0 %v113
    %v115 = vpop.xlane.xlu0 %114
    %v116 = vsel %vm49, %v37, 0.0
    %117 = vadd.xlane.f32.xlu0 %v116
    %v118 = vpop.xlane.xlu0 %117
    %v119 = vsel %vm49, %v38, 0.0
    %120 = vadd.xlane.f32.xlu0 %v119
    %v121 = vpop.xlane.xlu0 %120
    %v122 = vsel %vm49, %v39, 0.0
    %123 = vadd.xlane.f32.xlu0 %v122
    %v124 = vpop.xlane.xlu0 %123
    %v125 = vsel %vm49, %v40, 0.0
    %126 = vadd.xlane.f32.xlu0 %v125
    %v127 = vpop.xlane.xlu0 %126
    %v128 = vsel %vm49, %v41, 0.0
    %129 = vadd.xlane.f32.xlu0 %v128
    %v130 = vpop.xlane.xlu0 %129
    %v131 = vsel %vm49, %v42, 0.0
    %132 = vadd.xlane.f32.xlu0 %v131
    %v133 = vpop.xlane.xlu0 %132
    %v134 = vsel %vm49, %v43, 0.0
    %135 = vadd.xlane.f32.xlu0 %v134
    %v136 = vpop.xlane.xlu0 %135
    %v137 = vsel %vm49, %v44, 0.0
    %138 = vadd.xlane.f32.xlu0 %v137
    %v139 = vpop.xlane.xlu0 %138
    %v140 = vsel %vm49, %v45, 0.0
    %141 = vadd.xlane.f32.xlu0 %v140
    %v142 = vpop.xlane.xlu0 %141
    %v143 = vsel %vm49, %v46, 0.0
    %144 = vadd.xlane.f32.xlu0 %v143
    %v145 = vpop.xlane.xlu0 %144
    %v146 = vrcp.pop 32.0
    %v147 = vmul.f32 %v52, %v146
    %v148 = vmul.f32 %v55, %v146
    %v149 = vmul.f32 %v58, %v146
    %v150 = vmul.f32 %v61, %v146
    %v151 = vmul.f32 %v64, %v146
    %v152 = vmul.f32 %v67, %v146
    %v153 = vmul.f32 %v70, %v146
    %v154 = vmul.f32 %v73, %v146
    %v155 = vmul.f32 %v76, %v146
    %v156 = vmul.f32 %v79, %v146
    %v157 = vmul.f32 %v82, %v146
    %v158 = vmul.f32 %v85, %v146
    %v159 = vmul.f32 %v88, %v146
    %v160 = vmul.f32 %v91, %v146
    %v161 = vmul.f32 %v94, %v146
    %v162 = vmul.f32 %v97, %v146
    %v163 = vmul.f32 %v100, %v146
    %v164 = vmul.f32 %v103, %v146
    %v165 = vmul.f32 %v106, %v146
    %v166 = vmul.f32 %v109, %v146
    %v167 = vmul.f32 %v112, %v146
    %v168 = vmul.f32 %v115, %v146
    %v169 = vmul.f32 %v118, %v146
    %v170 = vmul.f32 %v121, %v146
    %v171 = vmul.f32 %v124, %v146
    %v172 = vmul.f32 %v127, %v146
    %v173 = vmul.f32 %v130, %v146
    %v174 = vmul.f32 %v133, %v146
    %v175 = vmul.f32 %v136, %v146
    %v176 = vmul.f32 %v139, %v146
    %v177 = vmul.f32 %v142, %v146
    %v178 = vmul.f32 %v145, %v146
    %v179 = vsub.f32 %v15, %v147
    %v180 = vsub.f32 %v16, %v148
    %v181 = vsub.f32 %v17, %v149
    %v182 = vsub.f32 %v18, %v150
    %v183 = vsub.f32 %v19, %v151
    %v184 = vsub.f32 %v20, %v152
    %v185 = vsub.f32 %v21, %v153
    %v186 = vsub.f32 %v22, %v154
    %v187 = vsub.f32 %v23, %v155
    %v188 = vsub.f32 %v24, %v156
    %v189 = vsub.f32 %v25, %v157
    %v190 = vsub.f32 %v26, %v158
    %v191 = vsub.f32 %v27, %v159
    %v192 = vsub.f32 %v28, %v160
    %v193 = vsub.f32 %v29, %v161
    %v194 = vsub.f32 %v30, %v162
    %v195 = vsub.f32 %v31, %v163
    %v196 = vsub.f32 %v32, %v164
    %v197 = vsub.f32 %v33, %v165
    %v198 = vsub.f32 %v34, %v166
    %v199 = vsub.f32 %v35, %v167
    %v200 = vsub.f32 %v36, %v168
    %v201 = vsub.f32 %v37, %v169
    %v202 = vsub.f32 %v38, %v170
    %v203 = vsub.f32 %v39, %v171
    %v204 = vsub.f32 %v40, %v172
    %v205 = vsub.f32 %v41, %v173
    %v206 = vsub.f32 %v42, %v174
    %v207 = vsub.f32 %v43, %v175
    %v208 = vsub.f32 %v44, %v176
    %v209 = vsub.f32 %v45, %v177
    %v210 = vsub.f32 %v46, %v178
    %v211 = vmul.f32 %v179, %v179
    %v212 = vmul.f32 %v180, %v180
    %v213 = vmul.f32 %v181, %v181
    %v214 = vmul.f32 %v182, %v182
    %v215 = vmul.f32 %v183, %v183
    %v216 = vmul.f32 %v184, %v184
    %v217 = vmul.f32 %v185, %v185
    %v218 = vmul.f32 %v186, %v186
    %v219 = vmul.f32 %v187, %v187
    %v220 = vmul.f32 %v188, %v188
    %v221 = vmul.f32 %v189, %v189
    %v222 = vmul.f32 %v190, %v190
    %v223 = vmul.f32 %v191, %v191
    %v224 = vmul.f32 %v192, %v192
    %v225 = vmul.f32 %v193, %v193
    %v226 = vmul.f32 %v194, %v194
    %v227 = vmul.f32 %v195, %v195
    %v228 = vmul.f32 %v196, %v196
    %v229 = vmul.f32 %v197, %v197
    %v230 = vmul.f32 %v198, %v198
    %v231 = vmul.f32 %v199, %v199
    %v232 = vmul.f32 %v200, %v200
    %v233 = vmul.f32 %v201, %v201
    %v234 = vmul.f32 %v202, %v202
    %v235 = vmul.f32 %v203, %v203
    %v236 = vmul.f32 %v204, %v204
    %v237 = vmul.f32 %v205, %v205
    %v238 = vmul.f32 %v206, %v206
    %v239 = vmul.f32 %v207, %v207
    %v240 = vmul.f32 %v208, %v208
    %v241 = vmul.f32 %v209, %v209
    %v242 = vmul.f32 %v210, %v210
    %v243 = vsel %vm49, %v211, 0.0
    %244 = vadd.xlane.f32.xlu0 %v243
    %v245 = vpop.xlane.xlu0 %244
    %v246 = vsel %vm49, %v212, 0.0
    %247 = vadd.xlane.f32.xlu0 %v246
    %v248 = vpop.xlane.xlu0 %247
    %v249 = vsel %vm49, %v213, 0.0
    %250 = vadd.xlane.f32.xlu0 %v249
    %v251 = vpop.xlane.xlu0 %250
    %v252 = vsel %vm49, %v214, 0.0
    %253 = vadd.xlane.f32.xlu0 %v252
    %v254 = vpop.xlane.xlu0 %253
    %v255 = vsel %vm49, %v215, 0.0
    %256 = vadd.xlane.f32.xlu0 %v255
    %v257 = vpop.xlane.xlu0 %256
    %v258 = vsel %vm49, %v216, 0.0
    %259 = vadd.xlane.f32.xlu0 %v258
    %v260 = vpop.xlane.xlu0 %259
    %v261 = vsel %vm49, %v217, 0.0
    %262 = vadd.xlane.f32.xlu0 %v261
    %v263 = vpop.xlane.xlu0 %262
    %v264 = vsel %vm49, %v218, 0.0
    %265 = vadd.xlane.f32.xlu0 %v264
    %v266 = vpop.xlane.xlu0 %265
    %v267 = vsel %vm49, %v219, 0.0
    %268 = vadd.xlane.f32.xlu0 %v267
    %v269 = vpop.xlane.xlu0 %268
    %v270 = vsel %vm49, %v220, 0.0
    %271 = vadd.xlane.f32.xlu0 %v270
    %v272 = vpop.xlane.xlu0 %271
    %v273 = vsel %vm49, %v221, 0.0
    %274 = vadd.xlane.f32.xlu0 %v273
    %v275 = vpop.xlane.xlu0 %274
    %v276 = vsel %vm49, %v222, 0.0
    %277 = vadd.xlane.f32.xlu0 %v276
    %v278 = vpop.xlane.xlu0 %277
    %v279 = vsel %vm49, %v223, 0.0
    %280 = vadd.xlane.f32.xlu0 %v279
    %v281 = vpop.xlane.xlu0 %280
    %v282 = vsel %vm49, %v224, 0.0
    %283 = vadd.xlane.f32.xlu0 %v282
    %v284 = vpop.xlane.xlu0 %283
    %v285 = vsel %vm49, %v225, 0.0
    %286 = vadd.xlane.f32.xlu0 %v285
    %v287 = vpop.xlane.xlu0 %286
    %v288 = vsel %vm49, %v226, 0.0
    %289 = vadd.xlane.f32.xlu0 %v288
    %v290 = vpop.xlane.xlu0 %289
    %v291 = vsel %vm49, %v227, 0.0
    %292 = vadd.xlane.f32.xlu0 %v291
    %v293 = vpop.xlane.xlu0 %292
    %v294 = vsel %vm49, %v228, 0.0
    %295 = vadd.xlane.f32.xlu0 %v294
    %v296 = vpop.xlane.xlu0 %295
    %v297 = vsel %vm49, %v229, 0.0
    %298 = vadd.xlane.f32.xlu0 %v297
    %v299 = vpop.xlane.xlu0 %298
    %v300 = vsel %vm49, %v230, 0.0
    %301 = vadd.xlane.f32.xlu0 %v300
    %v302 = vpop.xlane.xlu0 %301
    %v303 = vsel %vm49, %v231, 0.0
    %304 = vadd.xlane.f32.xlu0 %v303
    %v305 = vpop.xlane.xlu0 %304
    %v306 = vsel %vm49, %v232, 0.0
    %307 = vadd.xlane.f32.xlu0 %v306
    %v308 = vpop.xlane.xlu0 %307
    %v309 = vsel %vm49, %v233, 0.0
    %310 = vadd.xlane.f32.xlu0 %v309
    %v311 = vpop.xlane.xlu0 %310
    %v312 = vsel %vm49, %v234, 0.0
    %313 = vadd.xlane.f32.xlu0 %v312
    %v314 = vpop.xlane.xlu0 %313
    %v315 = vsel %vm49, %v235, 0.0
    %316 = vadd.xlane.f32.xlu0 %v315
    %v317 = vpop.xlane.xlu0 %316
    %v318 = vsel %vm49, %v236, 0.0
    %319 = vadd.xlane.f32.xlu0 %v318
    %v320 = vpop.xlane.xlu0 %319
    %v321 = vsel %vm49, %v237, 0.0
    %322 = vadd.xlane.f32.xlu0 %v321
    %v323 = vpop.xlane.xlu0 %322
    %v324 = vsel %vm49, %v238, 0.0
    %325 = vadd.xlane.f32.xlu0 %v324
    %v326 = vpop.xlane.xlu0 %325
    %v327 = vsel %vm49, %v239, 0.0
    %328 = vadd.xlane.f32.xlu0 %v327
    %v329 = vpop.xlane.xlu0 %328
    %v330 = vsel %vm49, %v240, 0.0
    %331 = vadd.xlane.f32.xlu0 %v330
    %v332 = vpop.xlane.xlu0 %331
    %v333 = vsel %vm49, %v241, 0.0
    %334 = vadd.xlane.f32.xlu0 %v333
    %v335 = vpop.xlane.xlu0 %334
    %v336 = vsel %vm49, %v242, 0.0
    %337 = vadd.xlane.f32.xlu0 %v336
    %v338 = vpop.xlane.xlu0 %337
    %v339 = vmul.f32 %v245, %v146
    %v340 = vmul.f32 %v248, %v146
    %v341 = vmul.f32 %v251, %v146
    %v342 = vmul.f32 %v254, %v146
    %v343 = vmul.f32 %v257, %v146
    %v344 = vmul.f32 %v260, %v146
    %v345 = vmul.f32 %v263, %v146
    %v346 = vmul.f32 %v266, %v146
    %v347 = vmul.f32 %v269, %v146
    %v348 = vmul.f32 %v272, %v146
    %v349 = vmul.f32 %v275, %v146
    %v350 = vmul.f32 %v278, %v146
    %v351 = vmul.f32 %v281, %v146
    %v352 = vmul.f32 %v284, %v146
    %v353 = vmul.f32 %v287, %v146
    %v354 = vmul.f32 %v290, %v146
    %v355 = vmul.f32 %v293, %v146
    %v356 = vmul.f32 %v296, %v146
    %v357 = vmul.f32 %v299, %v146
    %v358 = vmul.f32 %v302, %v146
    %v359 = vmul.f32 %v305, %v146
    %v360 = vmul.f32 %v308, %v146
    %v361 = vmul.f32 %v311, %v146
    %v362 = vmul.f32 %v314, %v146
    %v363 = vmul.f32 %v317, %v146
    %v364 = vmul.f32 %v320, %v146
    %v365 = vmul.f32 %v323, %v146
    %v366 = vmul.f32 %v326, %v146
    %v367 = vmul.f32 %v329, %v146
    %v368 = vmul.f32 %v332, %v146
    %v369 = vmul.f32 %v335, %v146
    %v370 = vmul.f32 %v338, %v146
    %v371 = vadd.f32 %v339, 1e-05
    %v372 = vadd.f32 %v340, 1e-05
    %v373 = vadd.f32 %v341, 1e-05
    %v374 = vadd.f32 %v342, 1e-05
    %v375 = vadd.f32 %v343, 1e-05
    %v376 = vadd.f32 %v344, 1e-05
    %v377 = vadd.f32 %v345, 1e-05
    %v378 = vadd.f32 %v346, 1e-05
    %v379 = vadd.f32 %v347, 1e-05
    %v380 = vadd.f32 %v348, 1e-05
    %v381 = vadd.f32 %v349, 1e-05
    %v382 = vadd.f32 %v350, 1e-05
    %v383 = vadd.f32 %v351, 1e-05
    %v384 = vadd.f32 %v352, 1e-05
    %v385 = vadd.f32 %v353, 1e-05
    %v386 = vadd.f32 %v354, 1e-05
    %v387 = vadd.f32 %v355, 1e-05
    %v388 = vadd.f32 %v356, 1e-05
    %v389 = vadd.f32 %v357, 1e-05
    %v390 = vadd.f32 %v358, 1e-05
    %v391 = vadd.f32 %v359, 1e-05
    %v392 = vadd.f32 %v360, 1e-05
    %v393 = vadd.f32 %v361, 1e-05
    %v394 = vadd.f32 %v362, 1e-05
    %v395 = vadd.f32 %v363, 1e-05
    %v396 = vadd.f32 %v364, 1e-05
    %v397 = vadd.f32 %v365, 1e-05
    %v398 = vadd.f32 %v366, 1e-05
    %v399 = vadd.f32 %v367, 1e-05
    %v400 = vadd.f32 %v368, 1e-05
    %v401 = vadd.f32 %v369, 1e-05
    %v402 = vadd.f32 %v370, 1e-05
    %v403 = vrsqrt.pop %v371
    %v404 = vrsqrt.pop %v372
    %v405 = vrsqrt.pop %v373
    %v406 = vrsqrt.pop %v374
    %v407 = vrsqrt.pop %v375
    %v408 = vrsqrt.pop %v376
    %v409 = vrsqrt.pop %v377
    %v410 = vrsqrt.pop %v378
    %v411 = vrsqrt.pop %v379
    %v412 = vrsqrt.pop %v380
    %v413 = vrsqrt.pop %v381
    %v414 = vrsqrt.pop %v382
    %v415 = vrsqrt.pop %v383
    %v416 = vrsqrt.pop %v384
    %v417 = vrsqrt.pop %v385
    %v418 = vrsqrt.pop %v386
    %v419 = vrsqrt.pop %v387
    %v420 = vrsqrt.pop %v388
    %v421 = vrsqrt.pop %v389
    %v422 = vrsqrt.pop %v390
    %v423 = vrsqrt.pop %v391
    %v424 = vrsqrt.pop %v392
    %v425 = vrsqrt.pop %v393
    %v426 = vrsqrt.pop %v394
    %v427 = vrsqrt.pop %v395
    %v428 = vrsqrt.pop %v396
    %v429 = vrsqrt.pop %v397
    %v430 = vrsqrt.pop %v398
    %v431 = vrsqrt.pop %v399
    %v432 = vrsqrt.pop %v400
    %v433 = vrsqrt.pop %v401
    %v434 = vrsqrt.pop %v402
    %v435 = vmul.f32 %v179, %v403
    %v436 = vmul.f32 %v180, %v404
    %v437 = vmul.f32 %v181, %v405
    %v438 = vmul.f32 %v182, %v406
    %v439 = vmul.f32 %v183, %v407
    %v440 = vmul.f32 %v184, %v408
    %v441 = vmul.f32 %v185, %v409
    %v442 = vmul.f32 %v186, %v410
    %v443 = vmul.f32 %v187, %v411
    %v444 = vmul.f32 %v188, %v412
    %v445 = vmul.f32 %v189, %v413
    %v446 = vmul.f32 %v190, %v414
    %v447 = vmul.f32 %v191, %v415
    %v448 = vmul.f32 %v192, %v416
    %v449 = vmul.f32 %v193, %v417
    %v450 = vmul.f32 %v194, %v418
    %v451 = vmul.f32 %v195, %v419
    %v452 = vmul.f32 %v196, %v420
    %v453 = vmul.f32 %v197, %v421
    %v454 = vmul.f32 %v198, %v422
    %v455 = vmul.f32 %v199, %v423
    %v456 = vmul.f32 %v200, %v424
    %v457 = vmul.f32 %v201, %v425
    %v458 = vmul.f32 %v202, %v426
    %v459 = vmul.f32 %v203, %v427
    %v460 = vmul.f32 %v204, %v428
    %v461 = vmul.f32 %v205, %v429
    %v462 = vmul.f32 %v206, %v430
    %v463 = vmul.f32 %v207, %v431
    %v464 = vmul.f32 %v208, %v432
    %v465 = vmul.f32 %v209, %v433
    %v466 = vmul.f32 %v210, %v434
    %v468 = vlaneseq
    %v469 = vshrl.u32 %v468, 7
    %v470 = vsub.s32 0, %v469
    %v471 = vrot.slane %v47, %v470
    %v473 = vmul.f32 %v435, %v471
    %v474 = vmul.f32 %v436, %v471
    %v475 = vmul.f32 %v437, %v471
    %v476 = vmul.f32 %v438, %v471
    %v477 = vmul.f32 %v439, %v471
    %v478 = vmul.f32 %v440, %v471
    %v479 = vmul.f32 %v441, %v471
    %v480 = vmul.f32 %v442, %v471
    %v481 = vmul.f32 %v443, %v471
    %v482 = vmul.f32 %v444, %v471
    %v483 = vmul.f32 %v445, %v471
    %v484 = vmul.f32 %v446, %v471
    %v485 = vmul.f32 %v447, %v471
    %v486 = vmul.f32 %v448, %v471
    %v487 = vmul.f32 %v449, %v471
    %v488 = vmul.f32 %v450, %v471
    %v489 = vmul.f32 %v451, %v471
    %v490 = vmul.f32 %v452, %v471
    %v491 = vmul.f32 %v453, %v471
    %v492 = vmul.f32 %v454, %v471
    %v493 = vmul.f32 %v455, %v471
    %v494 = vmul.f32 %v456, %v471
    %v495 = vmul.f32 %v457, %v471
    %v496 = vmul.f32 %v458, %v471
    %v497 = vmul.f32 %v459, %v471
    %v498 = vmul.f32 %v460, %v471
    %v499 = vmul.f32 %v461, %v471
    %v500 = vmul.f32 %v462, %v471
    %v501 = vmul.f32 %v463, %v471
    %v502 = vmul.f32 %v464, %v471
    %v503 = vmul.f32 %v465, %v471
    %v504 = vmul.f32 %v466, %v471
    %v506 = vlaneseq
    %v507 = vshrl.u32 %v506, 7
    %v508 = vsub.s32 0, %v507
    %v509 = vrot.slane %v48, %v508
    %v511 = vadd.f32 %v473, %v509
    %v512 = vadd.f32 %v474, %v509
    %v513 = vadd.f32 %v475, %v509
    %v514 = vadd.f32 %v476, %v509
    %v515 = vadd.f32 %v477, %v509
    %v516 = vadd.f32 %v478, %v509
    %v517 = vadd.f32 %v479, %v509
    %v518 = vadd.f32 %v480, %v509
    %v519 = vadd.f32 %v481, %v509
    %v520 = vadd.f32 %v482, %v509
    %v521 = vadd.f32 %v483, %v509
    %v522 = vadd.f32 %v484, %v509
    %v523 = vadd.f32 %v485, %v509
    %v524 = vadd.f32 %v486, %v509
    %v525 = vadd.f32 %v487, %v509
    %v526 = vadd.f32 %v488, %v509
    %v527 = vadd.f32 %v489, %v509
    %v528 = vadd.f32 %v490, %v509
    %v529 = vadd.f32 %v491, %v509
    %v530 = vadd.f32 %v492, %v509
    %v531 = vadd.f32 %v493, %v509
    %v532 = vadd.f32 %v494, %v509
    %v533 = vadd.f32 %v495, %v509
    %v534 = vadd.f32 %v496, %v509
    %v535 = vadd.f32 %v497, %v509
    %v536 = vadd.f32 %v498, %v509
    %v537 = vadd.f32 %v499, %v509
    %v538 = vadd.f32 %v500, %v509
    %v539 = vadd.f32 %v501, %v509
    %v540 = vadd.f32 %v502, %v509
    %v541 = vadd.f32 %v503, %v509
    %v542 = vadd.f32 %v504, %v509
    %543 = vst.msk [vmem:[#allocation2] sm:$0xff] %vm49, %v511
    %544 = vst.msk [vmem:[#allocation2 + $0x8] sm:$0xff] %vm49, %v512
    %545 = vst.msk [vmem:[#allocation2 + $0x10] sm:$0xff] %vm49, %v513
    %546 = vst.msk [vmem:[#allocation2 + $0x18] sm:$0xff] %vm49, %v514
    %547 = vst.msk [vmem:[#allocation2 + $0x20] sm:$0xff] %vm49, %v515
    %548 = vst.msk [vmem:[#allocation2 + $0x28] sm:$0xff] %vm49, %v516
    %549 = vst.msk [vmem:[#allocation2 + $0x30] sm:$0xff] %vm49, %v517
    %550 = vst.msk [vmem:[#allocation2 + $0x38] sm:$0xff] %vm49, %v518
    %551 = vst.msk [vmem:[#allocation2 + $0x40] sm:$0xff] %vm49, %v519
    %552 = vst.msk [vmem:[#allocation2 + $0x48] sm:$0xff] %vm49, %v520
    %553 = vst.msk [vmem:[#allocation2 + $0x50] sm:$0xff] %vm49, %v521
    %554 = vst.msk [vmem:[#allocation2 + $0x58] sm:$0xff] %vm49, %v522
    %555 = vst.msk [vmem:[#allocation2 + $0x60] sm:$0xff] %vm49, %v523
    %556 = vst.msk [vmem:[#allocation2 + $0x68] sm:$0xff] %vm49, %v524
    %557 = vst.msk [vmem:[#allocation2 + $0x70] sm:$0xff] %vm49, %v525
    %558 = vst.msk [vmem:[#allocation2 + $0x78] sm:$0xff] %vm49, %v526
    %559 = vst.msk [vmem:[#allocation2 + $0x80] sm:$0xff] %vm49, %v527
    %560 = vst.msk [vmem:[#allocation2 + $0x88] sm:$0xff] %vm49, %v528
    %561 = vst.msk [vmem:[#allocation2 + $0x90] sm:$0xff] %vm49, %v529
    %562 = vst.msk [vmem:[#allocation2 + $0x98] sm:$0xff] %vm49, %v530
    %563 = vst.msk [vmem:[#allocation2 + $0xa0] sm:$0xff] %vm49, %v531
    %564 = vst.msk [vmem:[#allocation2 + $0xa8] sm:$0xff] %vm49, %v532
    %565 = vst.msk [vmem:[#allocation2 + $0xb0] sm:$0xff] %vm49, %v533
    %566 = vst.msk [vmem:[#allocation2 + $0xb8] sm:$0xff] %vm49, %v534
    %567 = vst.msk [vmem:[#allocation2 + $0xc0] sm:$0xff] %vm49, %v535
    %568 = vst.msk [vmem:[#allocation2 + $0xc8] sm:$0xff] %vm49, %v536
    %569 = vst.msk [vmem:[#allocation2 + $0xd0] sm:$0xff] %vm49, %v537
    %570 = vst.msk [vmem:[#allocation2 + $0xd8] sm:$0xff] %vm49, %v538
    %571 = vst.msk [vmem:[#allocation2 + $0xe0] sm:$0xff] %vm49, %v539
    %572 = vst.msk [vmem:[#allocation2 + $0xe8] sm:$0xff] %vm49, %v540
    %573 = vst.msk [vmem:[#allocation2 + $0xf0] sm:$0xff] %vm49, %v541
    %574 = vst.msk [vmem:[#allocation2 + $0xf8] sm:$0xff] %vm49, %v542
    // Predicated region
    $region14: #{cross_view_swap_attention.43} parent=1 // pred_check
      _
    $region15: #{cross_view_swap_attention.43} parent=1 // pred_check_branch
      %576 = sbr.rel (0) target = $region17
    $region16: #{cross_view_swap_attention.43} parent=1 // pred_region
      %s578 = ssub.s32 4096, 4096
      %579 = vsyncadd [#allocation3], %s578
      %s580 = sshll.u32 [#allocation2], 4
      %s581 = int_to_ptr.vmem [resolvable:$true] %s580
      %586 = dma.vmem_to_hbm [thread:$0]  %s581, 4096, %s3, [#allocation3], 128, 128, 8
    $region17: #{cross_view_swap_attention.43} parent=1 // pred_fallthru
      _
    // Predicated region
    $region18: #{cross_view_swap_attention.43} parent=1 // pred_check
      _
    $region19: #{cross_view_swap_attention.43} parent=1 // pred_check_branch
      %588 = sbr.rel (0) target = $region21
    $region20: #{cross_view_swap_attention.43} parent=1 // pred_region
      %589 = dma.done [#allocation3], 4096
    $region21: #{cross_view_swap_attention.43} parent=1 // pred_fallthru
      _
    %590 = vsyncpa [#allocation3], 1

</llo_original>
